<compile_context>
chip_gen: v7x
topology: tpu7x:2x2x1
jax: 0.10.0
libtpu: 0.0.40
codegen_flags: <defaults>
</compile_context>

<pallas_src>
import functools
import math

import jax
import jax.numpy as jnp
from jax import lax
from jax.experimental import pallas as pl
from jax.experimental.pallas import tpu as pltpu

# ---- static hyper-parameters (module __init__ args) ----
IN_CHANNELS = 32
HIDDEN_CHANNELS = 64
KERNEL_SIZE = 3          # must be odd
NUM_HEADS = 4
WINDOW_SIZE = 4
P_DROPOUT = 0.0          # eval / p=0 -> dropout is identity
EPS = 1e-5               # TODO(synk): exact eps of ChannelLayerNorm unknown; using 1e-5


def _layer_norm(x, gamma, beta):
    # Normalize over the channel (last) axis == PyTorch LayerNorm over dim=1 of (B,C,T).
    mean = jnp.mean(x, axis=-1, keepdims=True)
    var = jnp.mean((x - mean) ** 2, axis=-1, keepdims=True)
    return (x - mean) * lax.rsqrt(var + EPS) * gamma + beta


def rel_pos_transformer_block_kernel(
    x_ref, mcol_ref, mrow_ref,
    wqkv_ref, bqkv_ref, wo_ref, cvec_ref,
    w1_ref, cb1_ref, w2_ref,
    ekT_ref, ev_ref,
    out_ref,
    attn_sc,
    *, num_heads, kernel_size, window_size):
    BB, C, T = x_ref.shape
    D = C // num_heads
    W = window_size
    R = 2 * W + 1
    pad = kernel_size // 2
    Hd = cb1_ref.shape[-1]
    N = BB * T
    scale = 1.0 / math.sqrt(D)

    # ---- bring the batch block channels-last and flatten: (Bb*T, C) ----
    x2d = jnp.concatenate([x_ref[b].T for b in range(BB)], axis=0)        # (N, C)
    mflat = jnp.concatenate([mcol_ref[b] for b in range(BB)], axis=0)     # (N, 1)

    # ---- fused QKV projection (single MXU push, 3C-wide output) ----
    qkv = jnp.dot(x2d, wqkv_ref[...], preferred_element_type=jnp.float32) + bqkv_ref[...]
    q = qkv[:, 0:C] * scale
    k = qkv[:, C:2 * C]
    v = qkv[:, 2 * C:3 * C]

    ekT = ekT_ref[...]        # (D, 2W+1)  E_k^T
    ev = ev_ref[...]          # (2W+1, D)  E_v

    rows = lax.broadcasted_iota(jnp.int32, (T, T), 0)
    cols = lax.broadcasted_iota(jnp.int32, (T, T), 1)
    rel = cols - rows         # rel[i, j] = j - i

    # ---- relative-positional multi-head self-attention ----
    for b in range(BB):
        am = mcol_ref[b] * mrow_ref[b]            # (T, T) mask[i] * mask[j]
        add_mask = (am - 1.0) * 1e4               # 0 where valid, -1e4 where masked
        r0, r1 = b * T, (b + 1) * T
        for h in range(num_heads):
            c0, c1 = h * D, (h + 1) * D
            qh = q[r0:r1, c0:c1]                  # (T, D) (already scaled)
            kh = k[r0:r1, c0:c1]
            vh = v[r0:r1, c0:c1]

            scores = jnp.dot(qh, kh.T, preferred_element_type=jnp.float32)   # (T, T)
            # relative-key logits: (T, 2W+1) band added onto the 2W+1 diagonals
            L = jnp.dot(qh, ekT, preferred_element_type=jnp.float32)         # (T, R)
            for r in range(R):
                d = r - W
                scores = scores + jnp.where(rel == d, L[:, r:r + 1], 0.0)
            scores = scores + add_mask

            smax = jnp.max(scores, axis=-1, keepdims=True)
            e = jnp.exp(scores - smax)
            ssum = jnp.sum(e, axis=-1, keepdims=True)
            p = e * pl.reciprocal(ssum, approx=True)                          # softmax

            oh = jnp.dot(p, vh, preferred_element_type=jnp.float32)          # (T, D)
            # relative-value term: band of p (T, 2W+1) against E_v (2W+1, D)
            relv = jnp.zeros((T, D), jnp.float32)
            for r in range(R):
                d = r - W
                bc = jnp.sum(jnp.where(rel == d, p, 0.0), axis=1, keepdims=True)  # (T,1)
                relv = relv + bc * ev[r:r + 1, :]
            attn_sc[r0:r1, c0:c1] = oh + relv

    cv = cvec_ref[...]                                  # (6, C)
    bo, g1, be1, g2, be2, cb2 = (cv[i:i + 1, :] for i in range(6))

    attn_out = (jnp.dot(attn_sc[...], wo_ref[...], preferred_element_type=jnp.float32)
                + bo)

    # ---- residual + ChannelLayerNorm 1 ----
    y = _layer_norm((attn_out + x2d) * mflat, g1, be1)  # (N, C)

    # ---- conv1d -> relu -> conv1d (padding='same'), im2col form ----
    t_loc = lax.broadcasted_iota(jnp.int32, (T, 1), 0)
    t_idx = jnp.concatenate([t_loc for _ in range(BB)], axis=0)           # (N, 1)

    def im2col(z, cin):
        zp = jnp.concatenate(
            [jnp.zeros((pad, cin), jnp.float32), z, jnp.zeros((pad, cin), jnp.float32)],
            axis=0)
        views = []
        for kk in range(kernel_size):
            s = kk - pad
            view = zp[kk:kk + N, :]
            if s != 0:
                # zero contributions that would leak across per-sequence boundaries
                valid = jnp.logical_and(t_idx + s >= 0, t_idx + s < T)
                view = jnp.where(valid, view, 0.0)
            views.append(view)
        return jnp.concatenate(views, axis=1)           # (N, kernel_size * cin)

    z = y * mflat
    zc = im2col(z, C)                                   # (N, K*C)
    h1 = jnp.maximum(
        jnp.dot(zc, w1_ref[...], preferred_element_type=jnp.float32) + cb1_ref[...], 0.0)
    h1 = h1 * mflat
    hc = im2col(h1, Hd)                                 # (N, K*Hd)
    z2 = jnp.dot(hc, w2_ref[...], preferred_element_type=jnp.float32) + cb2

    # ---- residual + ChannelLayerNorm 2 ----
    out2d = _layer_norm((z2 + y) * mflat, g2, be2)      # (N, C)

    # ---- lane-dense NCL output: write (Bb, C, T) directly ----
    for b in range(BB):
        out_ref[b] = out2d[b * T:(b + 1) * T, :].T.astype(out_ref.dtype)


# -------------------- glue: parameters & wrapper --------------------

def make_params(key):
    C, Hd, K, W = IN_CHANNELS, HIDDEN_CHANNELS, KERNEL_SIZE, WINDOW_SIZE
    D = C // NUM_HEADS
    ks = jax.random.split(key, 14)
    n = lambda k, s, std=0.1: jax.random.normal(k, s, jnp.float32) * std
    return dict(
        # 1x1 conv projections stored as (C_in, C_out) so the kernel does x @ W
        wq=n(ks[0], (C, C)), bq=n(ks[1], (1, C)),
        wk=n(ks[2], (C, C)), bk=n(ks[3], (1, C)),
        wv=n(ks[4], (C, C)), bv=n(ks[5], (1, C)),
        wo=n(ks[6], (C, C)), bo=n(ks[7], (1, C)),
        # shared-head relative position embeddings (1, 2W+1, head_dim)
        emb_rel_k=n(ks[8], (1, 2 * W + 1, D), D ** -0.5),
        emb_rel_v=n(ks[9], (1, 2 * W + 1, D), D ** -0.5),
        g1=jnp.ones((1, C), jnp.float32), beta1=jnp.zeros((1, C), jnp.float32),
        # conv weights stored as (K, C_in, C_out)
        w1=n(ks[10], (K, C, Hd)), cb1=n(ks[11], (1, Hd)),
        w2=n(ks[12], (K, Hd, C)), cb2=n(ks[13], (1, C)),
        g2=jnp.ones((1, C), jnp.float32), beta2=jnp.zeros((1, C), jnp.float32),
    )


def _choose_block_batch(B, max_bb=8):
    bb = 1
    for d in range(1, min(B, max_bb) + 1):
        if B % d == 0:
            bb = d
    return bb


def rel_pos_transformer_block(seq, mask, params):
    """seq: (B, C, T), mask: (B, 1, T)  (PyTorch NCL).  Returns (B, C, T)."""
    B, C, T = seq.shape
    BB = _choose_block_batch(B)
    Hd, K, W = HIDDEN_CHANNELS, KERNEL_SIZE, WINDOW_SIZE
    D = C // NUM_HEADS

    x = seq.astype(jnp.float32)                      # keep NCL; kernel transposes
    mrow = mask.astype(jnp.float32)                  # (B, 1, T)
    mcol = jnp.transpose(mrow, (0, 2, 1))            # (B, T, 1)

    # fused / packed parameters
    wqkv = jnp.concatenate([params["wq"], params["wk"], params["wv"]], axis=1)   # (C, 3C)
    bqkv = jnp.concatenate([params["bq"], params["bk"], params["bv"]], axis=1)   # (1, 3C)
    cvec = jnp.concatenate([params["bo"], params["g1"], params["beta1"],
                            params["g2"], params["beta2"], params["cb2"]], axis=0)  # (6, C)
    w1m = params["w1"].reshape(K * C, Hd)
    w2m = params["w2"].reshape(K * Hd, C)
    ekT = jnp.transpose(params["emb_rel_k"][0])      # (D, 2W+1)
    ev = params["emb_rel_v"][0]                      # (2W+1, D)

    def full_spec(shape):
        nd = len(shape)
        return pl.BlockSpec(shape, lambda i, _nd=nd: (0,) * _nd)

    in_specs = [
        pl.BlockSpec((BB, C, T), lambda i: (i, 0, 0)),   # x (NCL)
        pl.BlockSpec((BB, T, 1), lambda i: (i, 0, 0)),   # mask (column form)
        pl.BlockSpec((BB, 1, T), lambda i: (i, 0, 0)),   # mask (row form)
        full_spec((C, 3 * C)), full_spec((1, 3 * C)),    # fused QKV w / b
        full_spec((C, C)), full_spec((6, C)),            # wo, packed per-channel vectors
        full_spec((K * C, Hd)), full_spec((1, Hd)),      # conv1 (im2col) w / b
        full_spec((K * Hd, C)),                          # conv2 (im2col) w
        full_spec((D, 2 * W + 1)), full_spec((2 * W + 1, D)),   # E_k^T, E_v
    ]

    kernel = functools.partial(rel_pos_transformer_block_kernel,
                               num_heads=NUM_HEADS, kernel_size=K, window_size=W)
    out = pl.pallas_call(
        kernel,
        out_shape=jax.ShapeDtypeStruct((B, C, T), jnp.float32),
        grid=(B // BB,),
        in_specs=in_specs,
        out_specs=pl.BlockSpec((BB, C, T), lambda i: (i, 0, 0)),
        scratch_shapes=[pltpu.VMEM((BB * T, C), jnp.float32)],
        compiler_params=pltpu.CompilerParams(dimension_semantics=("parallel",)),
    )(x, mcol, mrow, wqkv, bqkv, params["wo"], cvec, w1m,
      params["cb1"], w2m, ekT, ev)
    return out                                         # already (B, C, T)


# -------------------- pure-JAX reference (for correctness check) --------------------

def build_rel_matrix(emb_rel, T, W):
    # emb_rel: (1, 2W+1, D) -> (T, T, D) with [i, j] = E[j - i], zero if |j - i| > W.
    rel = jnp.arange(T)[None, :] - jnp.arange(T)[:, None]      # (T, T)
    idx = jnp.clip(rel + W, 0, 2 * W)
    e = emb_rel[0][idx]                                        # (T, T, D)
    valid = (jnp.abs(rel) <= W)[..., None]
    return jnp.where(valid, e, 0.0).astype(jnp.float32)


def reference(seq, mask, params):
    B, C, T = seq.shape
    x = jnp.transpose(seq, (0, 2, 1)).astype(jnp.float32)      # (B, T, C)
    m = jnp.transpose(mask, (0, 2, 1)).astype(jnp.float32)     # (B, T, 1)
    H, D = NUM_HEADS, C // NUM_HEADS
    scale = 1.0 / math.sqrt(D)
    ekm = build_rel_matrix(params["emb_rel_k"], T, WINDOW_SIZE)
    evm = build_rel_matrix(params["emb_rel_v"], T, WINDOW_SIZE)

    q = x @ params["wq"] + params["bq"]
    k = x @ params["wk"] + params["bk"]
    v = x @ params["wv"] + params["bv"]
    qh = q.reshape(B, T, H, D).transpose(0, 2, 1, 3) * scale
    kh = k.reshape(B, T, H, D).transpose(0, 2, 1, 3)
    vh = v.reshape(B, T, H, D).transpose(0, 2, 1, 3)
    scores = jnp.einsum("bhid,bhjd->bhij", qh, kh)
    scores = scores + jnp.einsum("bhid,ijd->bhij", qh, ekm)
    am = m[:, :, 0][:, None, :, None] * m[:, :, 0][:, None, None, :]
    scores = jnp.where(am > 0, scores, -1e4)
    p = jax.nn.softmax(scores, axis=-1)
    o = jnp.einsum("bhij,bhjd->bhid", p, vh) + jnp.einsum("bhij,ijd->bhid", p, evm)
    o = o.transpose(0, 2, 1, 3).reshape(B, T, C)
    o = o @ params["wo"] + params["bo"]

    y = _layer_norm((o + x) * m, params["g1"], params["beta1"])

    pad = KERNEL_SIZE // 2
    z = y * m
    zp = jnp.pad(z, ((0, 0), (pad, pad), (0, 0)))
    h1 = sum(zp[:, kk:kk + T, :] @ params["w1"][kk] for kk in range(KERNEL_SIZE)) + params["cb1"]
    h1 = jnp.maximum(h1, 0.0) * m
    hp = jnp.pad(h1, ((0, 0), (pad, pad), (0, 0)))
    z2 = sum(hp[:, kk:kk + T, :] @ params["w2"][kk] for kk in range(KERNEL_SIZE)) + params["cb2"]
    out = _layer_norm((z2 + y) * m, params["g2"], params["beta2"])
    return jnp.transpose(out, (0, 2, 1))


if __name__ == "__main__":
    B, C, T = 2, IN_CHANNELS, 16
    key = jax.random.PRNGKey(0)
    kx, kp = jax.random.split(key)
    seq = jax.random.normal(kx, (B, C, T), jnp.float32)
    lengths = jnp.array([T, T - 5])
    mask = (jnp.arange(T)[None, :] < lengths[:, None]).astype(jnp.float32)[:, None, :]  # (B,1,T)
    params = make_params(kp)

    out = rel_pos_transformer_block(seq, mask, params)
    out = jax.block_until_ready(out)
    assert out.shape == (B, C, T)

    ref = reference(seq, mask, params)
    err = float(jnp.max(jnp.abs(out - ref)))
    # tolerance slightly loosened for the EUP approximate-reciprocal softmax normalization
    if not jnp.allclose(out, ref, atol=5e-3, rtol=5e-3):
        raise AssertionError(f"Pallas kernel mismatch vs reference, max_err={err}")
    print("KERNEL_OK")
</pallas_src>

<mosaic_0001>
module attributes {stable_mosaic.version = 11 : i64} {
  func.func @rel_pos_transformer_block_kernel(%arg0: i32, %arg1: memref<2x32x16xf32, #tpu.memory_space<vmem>>, %arg2: memref<2x16x1xf32, #tpu.memory_space<vmem>>, %arg3: memref<2x1x16xf32, #tpu.memory_space<vmem>>, %arg4: memref<32x96xf32, #tpu.memory_space<vmem>>, %arg5: memref<1x96xf32, #tpu.memory_space<vmem>>, %arg6: memref<32x32xf32, #tpu.memory_space<vmem>>, %arg7: memref<6x32xf32, #tpu.memory_space<vmem>>, %arg8: memref<96x64xf32, #tpu.memory_space<vmem>>, %arg9: memref<1x64xf32, #tpu.memory_space<vmem>>, %arg10: memref<192x32xf32, #tpu.memory_space<vmem>>, %arg11: memref<8x9xf32, #tpu.memory_space<vmem>>, %arg12: memref<9x8xf32, #tpu.memory_space<vmem>>, %arg13: memref<2x32x16xf32, #tpu.memory_space<vmem>>, %arg14: memref<32x32xf32, #tpu.memory_space<vmem>>) attributes {dimension_semantics = [#tpu.dimension_semantics<parallel>], iteration_bounds = array<i64: 1>, scalar_prefetch = 0 : i64, scratch_operands = 1 : i64, tpu.core_type = #tpu.core_type<tc>, window_params = [{transform_indices = @transform_0, window_bounds = array<i64: 2, 32, 16>}, {transform_indices = @transform_1, window_bounds = array<i64: 2, 16, 1>}, {transform_indices = @transform_2, window_bounds = array<i64: 2, 1, 16>}, {pipeline_mode = #tpu.pipeline_mode<synchronous>, transform_indices = @transform_3, window_bounds = array<i64: 32, 96>}, {pipeline_mode = #tpu.pipeline_mode<synchronous>, transform_indices = @transform_4, window_bounds = array<i64: 1, 96>}, {pipeline_mode = #tpu.pipeline_mode<synchronous>, transform_indices = @transform_5, window_bounds = array<i64: 32, 32>}, {pipeline_mode = #tpu.pipeline_mode<synchronous>, transform_indices = @transform_6, window_bounds = array<i64: 6, 32>}, {pipeline_mode = #tpu.pipeline_mode<synchronous>, transform_indices = @transform_7, window_bounds = array<i64: 96, 64>}, {pipeline_mode = #tpu.pipeline_mode<synchronous>, transform_indices = @transform_8, window_bounds = array<i64: 1, 64>}, {pipeline_mode = #tpu.pipeline_mode<synchronous>, transform_indices = @transform_9, window_bounds = array<i64: 192, 32>}, {pipeline_mode = #tpu.pipeline_mode<synchronous>, transform_indices = @transform_10, window_bounds = array<i64: 8, 9>}, {pipeline_mode = #tpu.pipeline_mode<synchronous>, transform_indices = @transform_11, window_bounds = array<i64: 9, 8>}, {transform_indices = @transform_12, window_bounds = array<i64: 2, 32, 16>}]} {
    %c0 = arith.constant 0 : index
    %c0_0 = arith.constant 0 : index
    %c0_1 = arith.constant 0 : index
    %0 = vector.load %arg1[%c0, %c0_0, %c0_1] : memref<2x32x16xf32, #tpu.memory_space<vmem>>, vector<1x32x16xf32>
    %1 = vector.shape_cast %0 : vector<1x32x16xf32> to vector<32x16xf32>
    %2 = tpu.transpose %1, [1, 0] : vector<32x16xf32> -> vector<16x32xf32>
    %c1 = arith.constant 1 : index
    %c0_2 = arith.constant 0 : index
    %c0_3 = arith.constant 0 : index
    %3 = vector.load %arg1[%c1, %c0_2, %c0_3] : memref<2x32x16xf32, #tpu.memory_space<vmem>>, vector<1x32x16xf32>
    %4 = vector.shape_cast %3 : vector<1x32x16xf32> to vector<32x16xf32>
    %5 = tpu.transpose %4, [1, 0] : vector<32x16xf32> -> vector<16x32xf32>
    %6 = tpu.concatenate %2, %5 in 0 : vector<16x32xf32>, vector<16x32xf32> -> vector<32x32xf32>
    %c0_4 = arith.constant 0 : index
    %c0_5 = arith.constant 0 : index
    %c0_6 = arith.constant 0 : index
    %7 = vector.load %arg2[%c0_4, %c0_5, %c0_6] : memref<2x16x1xf32, #tpu.memory_space<vmem>>, vector<1x16x1xf32>
    %8 = vector.shape_cast %7 : vector<1x16x1xf32> to vector<16x1xf32>
    %c1_7 = arith.constant 1 : index
    %c0_8 = arith.constant 0 : index
    %c0_9 = arith.constant 0 : index
    %9 = vector.load %arg2[%c1_7, %c0_8, %c0_9] : memref<2x16x1xf32, #tpu.memory_space<vmem>>, vector<1x16x1xf32>
    %10 = vector.shape_cast %9 : vector<1x16x1xf32> to vector<16x1xf32>
    %11 = tpu.concatenate %8, %10 in 0 : vector<16x1xf32>, vector<16x1xf32> -> vector<32x1xf32>
    %c0_10 = arith.constant 0 : index
    %c0_11 = arith.constant 0 : index
    %12 = vector.load %arg4[%c0_10, %c0_11] : memref<32x96xf32, #tpu.memory_space<vmem>>, vector<32x96xf32>
    %cst = arith.constant dense<0.000000e+00> : vector<32x96xf32>
    %13 = tpu.matmul %6, %12, %cst {dimension_numbers = #tpu.dot_dimension_numbers<[1], [0], [0], [1], [0, 0, 1, 1], [], []>} : vector<32x32xf32>, vector<32x96xf32>, vector<32x96xf32> -> vector<32x96xf32>
    %c0_12 = arith.constant 0 : index
    %c0_13 = arith.constant 0 : index
    %14 = vector.load %arg5[%c0_12, %c0_13] : memref<1x96xf32, #tpu.memory_space<vmem>>, vector<1x96xf32>
    %15 = vector.broadcast %14 : vector<1x96xf32> to vector<32x96xf32>
    %16 = arith.addf %13, %15 : vector<32x96xf32>
    %17 = vector.extract_strided_slice %16 {offsets = [0, 0], sizes = [32, 32], strides = [1, 1]} : vector<32x96xf32> to vector<32x32xf32>
    %cst_14 = arith.constant 0.353553385 : f32
    %18 = vector.broadcast %cst_14 : f32 to vector<32x32xf32>
    %19 = arith.mulf %17, %18 : vector<32x32xf32>
    %20 = vector.extract_strided_slice %16 {offsets = [0, 32], sizes = [32, 32], strides = [1, 1]} : vector<32x96xf32> to vector<32x32xf32>
    %21 = vector.extract_strided_slice %16 {offsets = [0, 64], sizes = [32, 32], strides = [1, 1]} : vector<32x96xf32> to vector<32x32xf32>
    %c0_15 = arith.constant 0 : index
    %c0_16 = arith.constant 0 : index
    %22 = vector.load %arg11[%c0_15, %c0_16] : memref<8x9xf32, #tpu.memory_space<vmem>>, vector<8x9xf32>
    %c0_17 = arith.constant 0 : index
    %c0_18 = arith.constant 0 : index
    %23 = vector.load %arg12[%c0_17, %c0_18] : memref<9x8xf32, #tpu.memory_space<vmem>>, vector<9x8xf32>
    %24 = tpu.iota {dimensions = array<i32: 0>} : vector<16x16xi32>
    %25 = tpu.iota {dimensions = array<i32: 1>} : vector<16x16xi32>
    %26 = arith.subi %25, %24 : vector<16x16xi32>
    %c0_19 = arith.constant 0 : index
    %c0_20 = arith.constant 0 : index
    %c0_21 = arith.constant 0 : index
    %27 = vector.load %arg2[%c0_19, %c0_20, %c0_21] : memref<2x16x1xf32, #tpu.memory_space<vmem>>, vector<1x16x1xf32>
    %28 = vector.shape_cast %27 : vector<1x16x1xf32> to vector<16x1xf32>
    %c0_22 = arith.constant 0 : index
    %c0_23 = arith.constant 0 : index
    %c0_24 = arith.constant 0 : index
    %29 = vector.load %arg3[%c0_22, %c0_23, %c0_24] : memref<2x1x16xf32, #tpu.memory_space<vmem>>, vector<1x1x16xf32>
    %30 = vector.shape_cast %29 : vector<1x1x16xf32> to vector<1x16xf32>
    %31 = vector.broadcast %28 : vector<16x1xf32> to vector<16x16xf32>
    %32 = vector.broadcast %30 : vector<1x16xf32> to vector<16x16xf32>
    %33 = arith.mulf %31, %32 : vector<16x16xf32>
    %cst_25 = arith.constant 1.000000e+00 : f32
    %34 = vector.broadcast %cst_25 : f32 to vector<16x16xf32>
    %35 = arith.subf %33, %34 : vector<16x16xf32>
    %cst_26 = arith.constant 1.000000e+04 : f32
    %36 = vector.broadcast %cst_26 : f32 to vector<16x16xf32>
    %37 = arith.mulf %35, %36 : vector<16x16xf32>
    %38 = vector.extract_strided_slice %19 {offsets = [0, 0], sizes = [16, 8], strides = [1, 1]} : vector<32x32xf32> to vector<16x8xf32>
    %39 = vector.extract_strided_slice %20 {offsets = [0, 0], sizes = [16, 8], strides = [1, 1]} : vector<32x32xf32> to vector<16x8xf32>
    %40 = vector.extract_strided_slice %21 {offsets = [0, 0], sizes = [16, 8], strides = [1, 1]} : vector<32x32xf32> to vector<16x8xf32>
    %41 = tpu.transpose %39, [1, 0] : vector<16x8xf32> -> vector<8x16xf32>
    %cst_27 = arith.constant dense<0.000000e+00> : vector<16x16xf32>
    %42 = tpu.matmul %38, %41, %cst_27 {dimension_numbers = #tpu.dot_dimension_numbers<[1], [0], [0], [1], [0, 0, 1, 1], [], []>} : vector<16x8xf32>, vector<8x16xf32>, vector<16x16xf32> -> vector<16x16xf32>
    %cst_28 = arith.constant dense<0.000000e+00> : vector<16x9xf32>
    %43 = tpu.matmul %38, %22, %cst_28 {dimension_numbers = #tpu.dot_dimension_numbers<[1], [0], [0], [1], [0, 0, 1, 1], [], []>} : vector<16x8xf32>, vector<8x9xf32>, vector<16x9xf32> -> vector<16x9xf32>
    %c-4_i32 = arith.constant -4 : i32
    %44 = vector.broadcast %c-4_i32 : i32 to vector<16x16xi32>
    %45 = arith.cmpi eq, %26, %44 : vector<16x16xi32>
    %46 = vector.extract_strided_slice %43 {offsets = [0, 0], sizes = [16, 1], strides = [1, 1]} : vector<16x9xf32> to vector<16x1xf32>
    %cst_29 = arith.constant 0.000000e+00 : f32
    %47 = vector.shape_cast %46 : vector<16x1xf32> to vector<16x1xf32>
    %48 = vector.broadcast %47 : vector<16x1xf32> to vector<16x16xf32>
    %49 = vector.broadcast %cst_29 : f32 to vector<16x16xf32>
    %50 = arith.select %45, %48, %49 : vector<16x16xi1>, vector<16x16xf32>
    %51 = arith.addf %42, %50 : vector<16x16xf32>
    %c-3_i32 = arith.constant -3 : i32
    %52 = vector.broadcast %c-3_i32 : i32 to vector<16x16xi32>
    %53 = arith.cmpi eq, %26, %52 : vector<16x16xi32>
    %54 = vector.extract_strided_slice %43 {offsets = [0, 1], sizes = [16, 1], strides = [1, 1]} : vector<16x9xf32> to vector<16x1xf32>
    %cst_30 = arith.constant 0.000000e+00 : f32
    %55 = vector.shape_cast %54 : vector<16x1xf32> to vector<16x1xf32>
    %56 = vector.broadcast %55 : vector<16x1xf32> to vector<16x16xf32>
    %57 = vector.broadcast %cst_30 : f32 to vector<16x16xf32>
    %58 = arith.select %53, %56, %57 : vector<16x16xi1>, vector<16x16xf32>
    %59 = arith.addf %51, %58 : vector<16x16xf32>
    %c-2_i32 = arith.constant -2 : i32
    %60 = vector.broadcast %c-2_i32 : i32 to vector<16x16xi32>
    %61 = arith.cmpi eq, %26, %60 : vector<16x16xi32>
    %62 = vector.extract_strided_slice %43 {offsets = [0, 2], sizes = [16, 1], strides = [1, 1]} : vector<16x9xf32> to vector<16x1xf32>
    %cst_31 = arith.constant 0.000000e+00 : f32
    %63 = vector.shape_cast %62 : vector<16x1xf32> to vector<16x1xf32>
    %64 = vector.broadcast %63 : vector<16x1xf32> to vector<16x16xf32>
    %65 = vector.broadcast %cst_31 : f32 to vector<16x16xf32>
    %66 = arith.select %61, %64, %65 : vector<16x16xi1>, vector<16x16xf32>
    %67 = arith.addf %59, %66 : vector<16x16xf32>
    %c-1_i32 = arith.constant -1 : i32
    %68 = vector.broadcast %c-1_i32 : i32 to vector<16x16xi32>
    %69 = arith.cmpi eq, %26, %68 : vector<16x16xi32>
    %70 = vector.extract_strided_slice %43 {offsets = [0, 3], sizes = [16, 1], strides = [1, 1]} : vector<16x9xf32> to vector<16x1xf32>
    %cst_32 = arith.constant 0.000000e+00 : f32
    %71 = vector.shape_cast %70 : vector<16x1xf32> to vector<16x1xf32>
    %72 = vector.broadcast %71 : vector<16x1xf32> to vector<16x16xf32>
    %73 = vector.broadcast %cst_32 : f32 to vector<16x16xf32>
    %74 = arith.select %69, %72, %73 : vector<16x16xi1>, vector<16x16xf32>
    %75 = arith.addf %67, %74 : vector<16x16xf32>
    %c0_i32 = arith.constant 0 : i32
    %76 = vector.broadcast %c0_i32 : i32 to vector<16x16xi32>
    %77 = arith.cmpi eq, %26, %76 : vector<16x16xi32>
    %78 = vector.extract_strided_slice %43 {offsets = [0, 4], sizes = [16, 1], strides = [1, 1]} : vector<16x9xf32> to vector<16x1xf32>
    %cst_33 = arith.constant 0.000000e+00 : f32
    %79 = vector.shape_cast %78 : vector<16x1xf32> to vector<16x1xf32>
    %80 = vector.broadcast %79 : vector<16x1xf32> to vector<16x16xf32>
    %81 = vector.broadcast %cst_33 : f32 to vector<16x16xf32>
    %82 = arith.select %77, %80, %81 : vector<16x16xi1>, vector<16x16xf32>
    %83 = arith.addf %75, %82 : vector<16x16xf32>
    %c1_i32 = arith.constant 1 : i32
    %84 = vector.broadcast %c1_i32 : i32 to vector<16x16xi32>
    %85 = arith.cmpi eq, %26, %84 : vector<16x16xi32>
    %86 = vector.extract_strided_slice %43 {offsets = [0, 5], sizes = [16, 1], strides = [1, 1]} : vector<16x9xf32> to vector<16x1xf32>
    %cst_34 = arith.constant 0.000000e+00 : f32
    %87 = vector.shape_cast %86 : vector<16x1xf32> to vector<16x1xf32>
    %88 = vector.broadcast %87 : vector<16x1xf32> to vector<16x16xf32>
    %89 = vector.broadcast %cst_34 : f32 to vector<16x16xf32>
    %90 = arith.select %85, %88, %89 : vector<16x16xi1>, vector<16x16xf32>
    %91 = arith.addf %83, %90 : vector<16x16xf32>
    %c2_i32 = arith.constant 2 : i32
    %92 = vector.broadcast %c2_i32 : i32 to vector<16x16xi32>
    %93 = arith.cmpi eq, %26, %92 : vector<16x16xi32>
    %94 = vector.extract_strided_slice %43 {offsets = [0, 6], sizes = [16, 1], strides = [1, 1]} : vector<16x9xf32> to vector<16x1xf32>
    %cst_35 = arith.constant 0.000000e+00 : f32
    %95 = vector.shape_cast %94 : vector<16x1xf32> to vector<16x1xf32>
    %96 = vector.broadcast %95 : vector<16x1xf32> to vector<16x16xf32>
    %97 = vector.broadcast %cst_35 : f32 to vector<16x16xf32>
    %98 = arith.select %93, %96, %97 : vector<16x16xi1>, vector<16x16xf32>
    %99 = arith.addf %91, %98 : vector<16x16xf32>
    %c3_i32 = arith.constant 3 : i32
    %100 = vector.broadcast %c3_i32 : i32 to vector<16x16xi32>
    %101 = arith.cmpi eq, %26, %100 : vector<16x16xi32>
    %102 = vector.extract_strided_slice %43 {offsets = [0, 7], sizes = [16, 1], strides = [1, 1]} : vector<16x9xf32> to vector<16x1xf32>
    %cst_36 = arith.constant 0.000000e+00 : f32
    %103 = vector.shape_cast %102 : vector<16x1xf32> to vector<16x1xf32>
    %104 = vector.broadcast %103 : vector<16x1xf32> to vector<16x16xf32>
    %105 = vector.broadcast %cst_36 : f32 to vector<16x16xf32>
    %106 = arith.select %101, %104, %105 : vector<16x16xi1>, vector<16x16xf32>
    %107 = arith.addf %99, %106 : vector<16x16xf32>
    %c4_i32 = arith.constant 4 : i32
    %108 = vector.broadcast %c4_i32 : i32 to vector<16x16xi32>
    %109 = arith.cmpi eq, %26, %108 : vector<16x16xi32>
    %110 = vector.extract_strided_slice %43 {offsets = [0, 8], sizes = [16, 1], strides = [1, 1]} : vector<16x9xf32> to vector<16x1xf32>
    %cst_37 = arith.constant 0.000000e+00 : f32
    %111 = vector.shape_cast %110 : vector<16x1xf32> to vector<16x1xf32>
    %112 = vector.broadcast %111 : vector<16x1xf32> to vector<16x16xf32>
    %113 = vector.broadcast %cst_37 : f32 to vector<16x16xf32>
    %114 = arith.select %109, %112, %113 : vector<16x16xi1>, vector<16x16xf32>
    %115 = arith.addf %107, %114 : vector<16x16xf32>
    %116 = arith.addf %115, %37 : vector<16x16xf32>
    %cst_38 = arith.constant dense<0xFF800000> : vector<16xf32>
    %117 = vector.multi_reduction <maximumf>, %116, %cst_38 [1] : vector<16x16xf32> to vector<16xf32>
    %118 = vector.shape_cast %117 : vector<16xf32> to vector<16x1xf32>
    %119 = vector.broadcast %118 : vector<16x1xf32> to vector<16x16xf32>
    %120 = arith.subf %116, %119 : vector<16x16xf32>
    %121 = math.exp %120 : vector<16x16xf32>
    %cst_39 = arith.constant dense<0.000000e+00> : vector<16xf32>
    %122 = vector.multi_reduction <add>, %121, %cst_39 [1] : vector<16x16xf32> to vector<16xf32>
    %123 = vector.shape_cast %122 : vector<16xf32> to vector<16x1xf32>
    %124 = tpu.reciprocal %123 {approx = true} : vector<16x1xf32> -> vector<16x1xf32>
    %125 = vector.broadcast %124 : vector<16x1xf32> to vector<16x16xf32>
    %126 = arith.mulf %121, %125 : vector<16x16xf32>
    %cst_40 = arith.constant dense<0.000000e+00> : vector<16x8xf32>
    %127 = tpu.matmul %126, %40, %cst_40 {dimension_numbers = #tpu.dot_dimension_numbers<[1], [0], [0], [1], [0, 0, 1, 1], [], []>} : vector<16x16xf32>, vector<16x8xf32>, vector<16x8xf32> -> vector<16x8xf32>
    %cst_41 = arith.constant 0.000000e+00 : f32
    %128 = vector.broadcast %cst_41 : f32 to vector<16x8xf32>
    %c-4_i32_42 = arith.constant -4 : i32
    %129 = vector.broadcast %c-4_i32_42 : i32 to vector<16x16xi32>
    %130 = arith.cmpi eq, %26, %129 : vector<16x16xi32>
    %cst_43 = arith.constant 0.000000e+00 : f32
    %131 = vector.broadcast %cst_43 : f32 to vector<16x16xf32>
    %132 = arith.select %130, %126, %131 : vector<16x16xi1>, vector<16x16xf32>
    %cst_44 = arith.constant dense<0.000000e+00> : vector<16xf32>
    %133 = vector.multi_reduction <add>, %132, %cst_44 [1] : vector<16x16xf32> to vector<16xf32>
    %134 = vector.shape_cast %133 : vector<16xf32> to vector<16x1xf32>
    %135 = vector.extract_strided_slice %23 {offsets = [0, 0], sizes = [1, 8], strides = [1, 1]} : vector<9x8xf32> to vector<1x8xf32>
    %136 = vector.broadcast %134 : vector<16x1xf32> to vector<16x8xf32>
    %137 = vector.broadcast %135 : vector<1x8xf32> to vector<16x8xf32>
    %138 = arith.mulf %136, %137 : vector<16x8xf32>
    %139 = arith.addf %128, %138 : vector<16x8xf32>
    %c-3_i32_45 = arith.constant -3 : i32
    %140 = vector.broadcast %c-3_i32_45 : i32 to vector<16x16xi32>
    %141 = arith.cmpi eq, %26, %140 : vector<16x16xi32>
    %cst_46 = arith.constant 0.000000e+00 : f32
    %142 = vector.broadcast %cst_46 : f32 to vector<16x16xf32>
    %143 = arith.select %141, %126, %142 : vector<16x16xi1>, vector<16x16xf32>
    %cst_47 = arith.constant dense<0.000000e+00> : vector<16xf32>
    %144 = vector.multi_reduction <add>, %143, %cst_47 [1] : vector<16x16xf32> to vector<16xf32>
    %145 = vector.shape_cast %144 : vector<16xf32> to vector<16x1xf32>
    %146 = vector.extract_strided_slice %23 {offsets = [1, 0], sizes = [1, 8], strides = [1, 1]} : vector<9x8xf32> to vector<1x8xf32>
    %147 = vector.broadcast %145 : vector<16x1xf32> to vector<16x8xf32>
    %148 = vector.broadcast %146 : vector<1x8xf32> to vector<16x8xf32>
    %149 = arith.mulf %147, %148 : vector<16x8xf32>
    %150 = arith.addf %139, %149 : vector<16x8xf32>
    %c-2_i32_48 = arith.constant -2 : i32
    %151 = vector.broadcast %c-2_i32_48 : i32 to vector<16x16xi32>
    %152 = arith.cmpi eq, %26, %151 : vector<16x16xi32>
    %cst_49 = arith.constant 0.000000e+00 : f32
    %153 = vector.broadcast %cst_49 : f32 to vector<16x16xf32>
    %154 = arith.select %152, %126, %153 : vector<16x16xi1>, vector<16x16xf32>
    %cst_50 = arith.constant dense<0.000000e+00> : vector<16xf32>
    %155 = vector.multi_reduction <add>, %154, %cst_50 [1] : vector<16x16xf32> to vector<16xf32>
    %156 = vector.shape_cast %155 : vector<16xf32> to vector<16x1xf32>
    %157 = vector.extract_strided_slice %23 {offsets = [2, 0], sizes = [1, 8], strides = [1, 1]} : vector<9x8xf32> to vector<1x8xf32>
    %158 = vector.broadcast %156 : vector<16x1xf32> to vector<16x8xf32>
    %159 = vector.broadcast %157 : vector<1x8xf32> to vector<16x8xf32>
    %160 = arith.mulf %158, %159 : vector<16x8xf32>
    %161 = arith.addf %150, %160 : vector<16x8xf32>
    %c-1_i32_51 = arith.constant -1 : i32
    %162 = vector.broadcast %c-1_i32_51 : i32 to vector<16x16xi32>
    %163 = arith.cmpi eq, %26, %162 : vector<16x16xi32>
    %cst_52 = arith.constant 0.000000e+00 : f32
    %164 = vector.broadcast %cst_52 : f32 to vector<16x16xf32>
    %165 = arith.select %163, %126, %164 : vector<16x16xi1>, vector<16x16xf32>
    %cst_53 = arith.constant dense<0.000000e+00> : vector<16xf32>
    %166 = vector.multi_reduction <add>, %165, %cst_53 [1] : vector<16x16xf32> to vector<16xf32>
    %167 = vector.shape_cast %166 : vector<16xf32> to vector<16x1xf32>
    %168 = vector.extract_strided_slice %23 {offsets = [3, 0], sizes = [1, 8], strides = [1, 1]} : vector<9x8xf32> to vector<1x8xf32>
    %169 = vector.broadcast %167 : vector<16x1xf32> to vector<16x8xf32>
    %170 = vector.broadcast %168 : vector<1x8xf32> to vector<16x8xf32>
    %171 = arith.mulf %169, %170 : vector<16x8xf32>
    %172 = arith.addf %161, %171 : vector<16x8xf32>
    %c0_i32_54 = arith.constant 0 : i32
    %173 = vector.broadcast %c0_i32_54 : i32 to vector<16x16xi32>
    %174 = arith.cmpi eq, %26, %173 : vector<16x16xi32>
    %cst_55 = arith.constant 0.000000e+00 : f32
    %175 = vector.broadcast %cst_55 : f32 to vector<16x16xf32>
    %176 = arith.select %174, %126, %175 : vector<16x16xi1>, vector<16x16xf32>
    %cst_56 = arith.constant dense<0.000000e+00> : vector<16xf32>
    %177 = vector.multi_reduction <add>, %176, %cst_56 [1] : vector<16x16xf32> to vector<16xf32>
    %178 = vector.shape_cast %177 : vector<16xf32> to vector<16x1xf32>
    %179 = vector.extract_strided_slice %23 {offsets = [4, 0], sizes = [1, 8], strides = [1, 1]} : vector<9x8xf32> to vector<1x8xf32>
    %180 = vector.broadcast %178 : vector<16x1xf32> to vector<16x8xf32>
    %181 = vector.broadcast %179 : vector<1x8xf32> to vector<16x8xf32>
    %182 = arith.mulf %180, %181 : vector<16x8xf32>
    %183 = arith.addf %172, %182 : vector<16x8xf32>
    %c1_i32_57 = arith.constant 1 : i32
    %184 = vector.broadcast %c1_i32_57 : i32 to vector<16x16xi32>
    %185 = arith.cmpi eq, %26, %184 : vector<16x16xi32>
    %cst_58 = arith.constant 0.000000e+00 : f32
    %186 = vector.broadcast %cst_58 : f32 to vector<16x16xf32>
    %187 = arith.select %185, %126, %186 : vector<16x16xi1>, vector<16x16xf32>
    %cst_59 = arith.constant dense<0.000000e+00> : vector<16xf32>
    %188 = vector.multi_reduction <add>, %187, %cst_59 [1] : vector<16x16xf32> to vector<16xf32>
    %189 = vector.shape_cast %188 : vector<16xf32> to vector<16x1xf32>
    %190 = vector.extract_strided_slice %23 {offsets = [5, 0], sizes = [1, 8], strides = [1, 1]} : vector<9x8xf32> to vector<1x8xf32>
    %191 = vector.broadcast %189 : vector<16x1xf32> to vector<16x8xf32>
    %192 = vector.broadcast %190 : vector<1x8xf32> to vector<16x8xf32>
    %193 = arith.mulf %191, %192 : vector<16x8xf32>
    %194 = arith.addf %183, %193 : vector<16x8xf32>
    %c2_i32_60 = arith.constant 2 : i32
    %195 = vector.broadcast %c2_i32_60 : i32 to vector<16x16xi32>
    %196 = arith.cmpi eq, %26, %195 : vector<16x16xi32>
    %cst_61 = arith.constant 0.000000e+00 : f32
    %197 = vector.broadcast %cst_61 : f32 to vector<16x16xf32>
    %198 = arith.select %196, %126, %197 : vector<16x16xi1>, vector<16x16xf32>
    %cst_62 = arith.constant dense<0.000000e+00> : vector<16xf32>
    %199 = vector.multi_reduction <add>, %198, %cst_62 [1] : vector<16x16xf32> to vector<16xf32>
    %200 = vector.shape_cast %199 : vector<16xf32> to vector<16x1xf32>
    %201 = vector.extract_strided_slice %23 {offsets = [6, 0], sizes = [1, 8], strides = [1, 1]} : vector<9x8xf32> to vector<1x8xf32>
    %202 = vector.broadcast %200 : vector<16x1xf32> to vector<16x8xf32>
    %203 = vector.broadcast %201 : vector<1x8xf32> to vector<16x8xf32>
    %204 = arith.mulf %202, %203 : vector<16x8xf32>
    %205 = arith.addf %194, %204 : vector<16x8xf32>
    %c3_i32_63 = arith.constant 3 : i32
    %206 = vector.broadcast %c3_i32_63 : i32 to vector<16x16xi32>
    %207 = arith.cmpi eq, %26, %206 : vector<16x16xi32>
    %cst_64 = arith.constant 0.000000e+00 : f32
    %208 = vector.broadcast %cst_64 : f32 to vector<16x16xf32>
    %209 = arith.select %207, %126, %208 : vector<16x16xi1>, vector<16x16xf32>
    %cst_65 = arith.constant dense<0.000000e+00> : vector<16xf32>
    %210 = vector.multi_reduction <add>, %209, %cst_65 [1] : vector<16x16xf32> to vector<16xf32>
    %211 = vector.shape_cast %210 : vector<16xf32> to vector<16x1xf32>
    %212 = vector.extract_strided_slice %23 {offsets = [7, 0], sizes = [1, 8], strides = [1, 1]} : vector<9x8xf32> to vector<1x8xf32>
    %213 = vector.broadcast %211 : vector<16x1xf32> to vector<16x8xf32>
    %214 = vector.broadcast %212 : vector<1x8xf32> to vector<16x8xf32>
    %215 = arith.mulf %213, %214 : vector<16x8xf32>
    %216 = arith.addf %205, %215 : vector<16x8xf32>
    %c4_i32_66 = arith.constant 4 : i32
    %217 = vector.broadcast %c4_i32_66 : i32 to vector<16x16xi32>
    %218 = arith.cmpi eq, %26, %217 : vector<16x16xi32>
    %cst_67 = arith.constant 0.000000e+00 : f32
    %219 = vector.broadcast %cst_67 : f32 to vector<16x16xf32>
    %220 = arith.select %218, %126, %219 : vector<16x16xi1>, vector<16x16xf32>
    %cst_68 = arith.constant dense<0.000000e+00> : vector<16xf32>
    %221 = vector.multi_reduction <add>, %220, %cst_68 [1] : vector<16x16xf32> to vector<16xf32>
    %222 = vector.shape_cast %221 : vector<16xf32> to vector<16x1xf32>
    %223 = vector.extract_strided_slice %23 {offsets = [8, 0], sizes = [1, 8], strides = [1, 1]} : vector<9x8xf32> to vector<1x8xf32>
    %224 = vector.broadcast %222 : vector<16x1xf32> to vector<16x8xf32>
    %225 = vector.broadcast %223 : vector<1x8xf32> to vector<16x8xf32>
    %226 = arith.mulf %224, %225 : vector<16x8xf32>
    %227 = arith.addf %216, %226 : vector<16x8xf32>
    %228 = arith.addf %127, %227 : vector<16x8xf32>
    %c0_69 = arith.constant 0 : index
    %c0_70 = arith.constant 0 : index
    %229 = vector.load %arg14[%c0_69, %c0_70] : memref<32x32xf32, #tpu.memory_space<vmem>>, vector<16x8xf32>
    tpu.vector_store %arg14[%c0_69, %c0_70], %228 {strides = array<i32>} : memref<32x32xf32, #tpu.memory_space<vmem>>, vector<16x8xf32>,
    %230 = vector.extract_strided_slice %19 {offsets = [0, 8], sizes = [16, 8], strides = [1, 1]} : vector<32x32xf32> to vector<16x8xf32>
    %231 = vector.extract_strided_slice %20 {offsets = [0, 8], sizes = [16, 8], strides = [1, 1]} : vector<32x32xf32> to vector<16x8xf32>
    %232 = vector.extract_strided_slice %21 {offsets = [0, 8], sizes = [16, 8], strides = [1, 1]} : vector<32x32xf32> to vector<16x8xf32>
    %233 = tpu.transpose %231, [1, 0] : vector<16x8xf32> -> vector<8x16xf32>
    %cst_71 = arith.constant dense<0.000000e+00> : vector<16x16xf32>
    %234 = tpu.matmul %230, %233, %cst_71 {dimension_numbers = #tpu.dot_dimension_numbers<[1], [0], [0], [1], [0, 0, 1, 1], [], []>} : vector<16x8xf32>, vector<8x16xf32>, vector<16x16xf32> -> vector<16x16xf32>
    %cst_72 = arith.constant dense<0.000000e+00> : vector<16x9xf32>
    %235 = tpu.matmul %230, %22, %cst_72 {dimension_numbers = #tpu.dot_dimension_numbers<[1], [0], [0], [1], [0, 0, 1, 1], [], []>} : vector<16x8xf32>, vector<8x9xf32>, vector<16x9xf32> -> vector<16x9xf32>
    %c-4_i32_73 = arith.constant -4 : i32
    %236 = vector.broadcast %c-4_i32_73 : i32 to vector<16x16xi32>
    %237 = arith.cmpi eq, %26, %236 : vector<16x16xi32>
    %238 = vector.extract_strided_slice %235 {offsets = [0, 0], sizes = [16, 1], strides = [1, 1]} : vector<16x9xf32> to vector<16x1xf32>
    %cst_74 = arith.constant 0.000000e+00 : f32
    %239 = vector.shape_cast %238 : vector<16x1xf32> to vector<16x1xf32>
    %240 = vector.broadcast %239 : vector<16x1xf32> to vector<16x16xf32>
    %241 = vector.broadcast %cst_74 : f32 to vector<16x16xf32>
    %242 = arith.select %237, %240, %241 : vector<16x16xi1>, vector<16x16xf32>
    %243 = arith.addf %234, %242 : vector<16x16xf32>
    %c-3_i32_75 = arith.constant -3 : i32
    %244 = vector.broadcast %c-3_i32_75 : i32 to vector<16x16xi32>
    %245 = arith.cmpi eq, %26, %244 : vector<16x16xi32>
    %246 = vector.extract_strided_slice %235 {offsets = [0, 1], sizes = [16, 1], strides = [1, 1]} : vector<16x9xf32> to vector<16x1xf32>
    %cst_76 = arith.constant 0.000000e+00 : f32
    %247 = vector.shape_cast %246 : vector<16x1xf32> to vector<16x1xf32>
    %248 = vector.broadcast %247 : vector<16x1xf32> to vector<16x16xf32>
    %249 = vector.broadcast %cst_76 : f32 to vector<16x16xf32>
    %250 = arith.select %245, %248, %249 : vector<16x16xi1>, vector<16x16xf32>
    %251 = arith.addf %243, %250 : vector<16x16xf32>
    %c-2_i32_77 = arith.constant -2 : i32
    %252 = vector.broadcast %c-2_i32_77 : i32 to vector<16x16xi32>
    %253 = arith.cmpi eq, %26, %252 : vector<16x16xi32>
    %254 = vector.extract_strided_slice %235 {offsets = [0, 2], sizes = [16, 1], strides = [1, 1]} : vector<16x9xf32> to vector<16x1xf32>
    %cst_78 = arith.constant 0.000000e+00 : f32
    %255 = vector.shape_cast %254 : vector<16x1xf32> to vector<16x1xf32>
    %256 = vector.broadcast %255 : vector<16x1xf32> to vector<16x16xf32>
    %257 = vector.broadcast %cst_78 : f32 to vector<16x16xf32>
    %258 = arith.select %253, %256, %257 : vector<16x16xi1>, vector<16x16xf32>
    %259 = arith.addf %251, %258 : vector<16x16xf32>
    %c-1_i32_79 = arith.constant -1 : i32
    %260 = vector.broadcast %c-1_i32_79 : i32 to vector<16x16xi32>
    %261 = arith.cmpi eq, %26, %260 : vector<16x16xi32>
    %262 = vector.extract_strided_slice %235 {offsets = [0, 3], sizes = [16, 1], strides = [1, 1]} : vector<16x9xf32> to vector<16x1xf32>
    %cst_80 = arith.constant 0.000000e+00 : f32
    %263 = vector.shape_cast %262 : vector<16x1xf32> to vector<16x1xf32>
    %264 = vector.broadcast %263 : vector<16x1xf32> to vector<16x16xf32>
    %265 = vector.broadcast %cst_80 : f32 to vector<16x16xf32>
    %266 = arith.select %261, %264, %265 : vector<16x16xi1>, vector<16x16xf32>
    %267 = arith.addf %259, %266 : vector<16x16xf32>
    %c0_i32_81 = arith.constant 0 : i32
    %268 = vector.broadcast %c0_i32_81 : i32 to vector<16x16xi32>
    %269 = arith.cmpi eq, %26, %268 : vector<16x16xi32>
    %270 = vector.extract_strided_slice %235 {offsets = [0, 4], sizes = [16, 1], strides = [1, 1]} : vector<16x9xf32> to vector<16x1xf32>
    %cst_82 = arith.constant 0.000000e+00 : f32
    %271 = vector.shape_cast %270 : vector<16x1xf32> to vector<16x1xf32>
    %272 = vector.broadcast %271 : vector<16x1xf32> to vector<16x16xf32>
    %273 = vector.broadcast %cst_82 : f32 to vector<16x16xf32>
    %274 = arith.select %269, %272, %273 : vector<16x16xi1>, vector<16x16xf32>
    %275 = arith.addf %267, %274 : vector<16x16xf32>
    %c1_i32_83 = arith.constant 1 : i32
    %276 = vector.broadcast %c1_i32_83 : i32 to vector<16x16xi32>
    %277 = arith.cmpi eq, %26, %276 : vector<16x16xi32>
    %278 = vector.extract_strided_slice %235 {offsets = [0, 5], sizes = [16, 1], strides = [1, 1]} : vector<16x9xf32> to vector<16x1xf32>
    %cst_84 = arith.constant 0.000000e+00 : f32
    %279 = vector.shape_cast %278 : vector<16x1xf32> to vector<16x1xf32>
    %280 = vector.broadcast %279 : vector<16x1xf32> to vector<16x16xf32>
    %281 = vector.broadcast %cst_84 : f32 to vector<16x16xf32>
    %282 = arith.select %277, %280, %281 : vector<16x16xi1>, vector<16x16xf32>
    %283 = arith.addf %275, %282 : vector<16x16xf32>
    %c2_i32_85 = arith.constant 2 : i32
    %284 = vector.broadcast %c2_i32_85 : i32 to vector<16x16xi32>
    %285 = arith.cmpi eq, %26, %284 : vector<16x16xi32>
    %286 = vector.extract_strided_slice %235 {offsets = [0, 6], sizes = [16, 1], strides = [1, 1]} : vector<16x9xf32> to vector<16x1xf32>
    %cst_86 = arith.constant 0.000000e+00 : f32
    %287 = vector.shape_cast %286 : vector<16x1xf32> to vector<16x1xf32>
    %288 = vector.broadcast %287 : vector<16x1xf32> to vector<16x16xf32>
    %289 = vector.broadcast %cst_86 : f32 to vector<16x16xf32>
    %290 = arith.select %285, %288, %289 : vector<16x16xi1>, vector<16x16xf32>
    %291 = arith.addf %283, %290 : vector<16x16xf32>
    %c3_i32_87 = arith.constant 3 : i32
    %292 = vector.broadcast %c3_i32_87 : i32 to vector<16x16xi32>
    %293 = arith.cmpi eq, %26, %292 : vector<16x16xi32>
    %294 = vector.extract_strided_slice %235 {offsets = [0, 7], sizes = [16, 1], strides = [1, 1]} : vector<16x9xf32> to vector<16x1xf32>
    %cst_88 = arith.constant 0.000000e+00 : f32
    %295 = vector.shape_cast %294 : vector<16x1xf32> to vector<16x1xf32>
    %296 = vector.broadcast %295 : vector<16x1xf32> to vector<16x16xf32>
    %297 = vector.broadcast %cst_88 : f32 to vector<16x16xf32>
    %298 = arith.select %293, %296, %297 : vector<16x16xi1>, vector<16x16xf32>
    %299 = arith.addf %291, %298 : vector<16x16xf32>
    %c4_i32_89 = arith.constant 4 : i32
    %300 = vector.broadcast %c4_i32_89 : i32 to vector<16x16xi32>
    %301 = arith.cmpi eq, %26, %300 : vector<16x16xi32>
    %302 = vector.extract_strided_slice %235 {offsets = [0, 8], sizes = [16, 1], strides = [1, 1]} : vector<16x9xf32> to vector<16x1xf32>
    %cst_90 = arith.constant 0.000000e+00 : f32
    %303 = vector.shape_cast %302 : vector<16x1xf32> to vector<16x1xf32>
    %304 = vector.broadcast %303 : vector<16x1xf32> to vector<16x16xf32>
    %305 = vector.broadcast %cst_90 : f32 to vector<16x16xf32>
    %306 = arith.select %301, %304, %305 : vector<16x16xi1>, vector<16x16xf32>
    %307 = arith.addf %299, %306 : vector<16x16xf32>
    %308 = arith.addf %307, %37 : vector<16x16xf32>
    %cst_91 = arith.constant dense<0xFF800000> : vector<16xf32>
    %309 = vector.multi_reduction <maximumf>, %308, %cst_91 [1] : vector<16x16xf32> to vector<16xf32>
    %310 = vector.shape_cast %309 : vector<16xf32> to vector<16x1xf32>
    %311 = vector.broadcast %310 : vector<16x1xf32> to vector<16x16xf32>
    %312 = arith.subf %308, %311 : vector<16x16xf32>
    %313 = math.exp %312 : vector<16x16xf32>
    %cst_92 = arith.constant dense<0.000000e+00> : vector<16xf32>
    %314 = vector.multi_reduction <add>, %313, %cst_92 [1] : vector<16x16xf32> to vector<16xf32>
    %315 = vector.shape_cast %314 : vector<16xf32> to vector<16x1xf32>
    %316 = tpu.reciprocal %315 {approx = true} : vector<16x1xf32> -> vector<16x1xf32>
    %317 = vector.broadcast %316 : vector<16x1xf32> to vector<16x16xf32>
    %318 = arith.mulf %313, %317 : vector<16x16xf32>
    %cst_93 = arith.constant dense<0.000000e+00> : vector<16x8xf32>
    %319 = tpu.matmul %318, %232, %cst_93 {dimension_numbers = #tpu.dot_dimension_numbers<[1], [0], [0], [1], [0, 0, 1, 1], [], []>} : vector<16x16xf32>, vector<16x8xf32>, vector<16x8xf32> -> vector<16x8xf32>
    %cst_94 = arith.constant 0.000000e+00 : f32
    %320 = vector.broadcast %cst_94 : f32 to vector<16x8xf32>
    %c-4_i32_95 = arith.constant -4 : i32
    %321 = vector.broadcast %c-4_i32_95 : i32 to vector<16x16xi32>
    %322 = arith.cmpi eq, %26, %321 : vector<16x16xi32>
    %cst_96 = arith.constant 0.000000e+00 : f32
    %323 = vector.broadcast %cst_96 : f32 to vector<16x16xf32>
    %324 = arith.select %322, %318, %323 : vector<16x16xi1>, vector<16x16xf32>
    %cst_97 = arith.constant dense<0.000000e+00> : vector<16xf32>
    %325 = vector.multi_reduction <add>, %324, %cst_97 [1] : vector<16x16xf32> to vector<16xf32>
    %326 = vector.shape_cast %325 : vector<16xf32> to vector<16x1xf32>
    %327 = vector.extract_strided_slice %23 {offsets = [0, 0], sizes = [1, 8], strides = [1, 1]} : vector<9x8xf32> to vector<1x8xf32>
    %328 = vector.broadcast %326 : vector<16x1xf32> to vector<16x8xf32>
    %329 = vector.broadcast %327 : vector<1x8xf32> to vector<16x8xf32>
    %330 = arith.mulf %328, %329 : vector<16x8xf32>
    %331 = arith.addf %320, %330 : vector<16x8xf32>
    %c-3_i32_98 = arith.constant -3 : i32
    %332 = vector.broadcast %c-3_i32_98 : i32 to vector<16x16xi32>
    %333 = arith.cmpi eq, %26, %332 : vector<16x16xi32>
    %cst_99 = arith.constant 0.000000e+00 : f32
    %334 = vector.broadcast %cst_99 : f32 to vector<16x16xf32>
    %335 = arith.select %333, %318, %334 : vector<16x16xi1>, vector<16x16xf32>
    %cst_100 = arith.constant dense<0.000000e+00> : vector<16xf32>
    %336 = vector.multi_reduction <add>, %335, %cst_100 [1] : vector<16x16xf32> to vector<16xf32>
    %337 = vector.shape_cast %336 : vector<16xf32> to vector<16x1xf32>
    %338 = vector.extract_strided_slice %23 {offsets = [1, 0], sizes = [1, 8], strides = [1, 1]} : vector<9x8xf32> to vector<1x8xf32>
    %339 = vector.broadcast %337 : vector<16x1xf32> to vector<16x8xf32>
    %340 = vector.broadcast %338 : vector<1x8xf32> to vector<16x8xf32>
    %341 = arith.mulf %339, %340 : vector<16x8xf32>
    %342 = arith.addf %331, %341 : vector<16x8xf32>
    %c-2_i32_101 = arith.constant -2 : i32
    %343 = vector.broadcast %c-2_i32_101 : i32 to vector<16x16xi32>
    %344 = arith.cmpi eq, %26, %343 : vector<16x16xi32>
    %cst_102 = arith.constant 0.000000e+00 : f32
    %345 = vector.broadcast %cst_102 : f32 to vector<16x16xf32>
    %346 = arith.select %344, %318, %345 : vector<16x16xi1>, vector<16x16xf32>
    %cst_103 = arith.constant dense<0.000000e+00> : vector<16xf32>
    %347 = vector.multi_reduction <add>, %346, %cst_103 [1] : vector<16x16xf32> to vector<16xf32>
    %348 = vector.shape_cast %347 : vector<16xf32> to vector<16x1xf32>
    %349 = vector.extract_strided_slice %23 {offsets = [2, 0], sizes = [1, 8], strides = [1, 1]} : vector<9x8xf32> to vector<1x8xf32>
    %350 = vector.broadcast %348 : vector<16x1xf32> to vector<16x8xf32>
    %351 = vector.broadcast %349 : vector<1x8xf32> to vector<16x8xf32>
    %352 = arith.mulf %350, %351 : vector<16x8xf32>
    %353 = arith.addf %342, %352 : vector<16x8xf32>
    %c-1_i32_104 = arith.constant -1 : i32
    %354 = vector.broadcast %c-1_i32_104 : i32 to vector<16x16xi32>
    %355 = arith.cmpi eq, %26, %354 : vector<16x16xi32>
    %cst_105 = arith.constant 0.000000e+00 : f32
    %356 = vector.broadcast %cst_105 : f32 to vector<16x16xf32>
    %357 = arith.select %355, %318, %356 : vector<16x16xi1>, vector<16x16xf32>
    %cst_106 = arith.constant dense<0.000000e+00> : vector<16xf32>
    %358 = vector.multi_reduction <add>, %357, %cst_106 [1] : vector<16x16xf32> to vector<16xf32>
    %359 = vector.shape_cast %358 : vector<16xf32> to vector<16x1xf32>
    %360 = vector.extract_strided_slice %23 {offsets = [3, 0], sizes = [1, 8], strides = [1, 1]} : vector<9x8xf32> to vector<1x8xf32>
    %361 = vector.broadcast %359 : vector<16x1xf32> to vector<16x8xf32>
    %362 = vector.broadcast %360 : vector<1x8xf32> to vector<16x8xf32>
    %363 = arith.mulf %361, %362 : vector<16x8xf32>
    %364 = arith.addf %353, %363 : vector<16x8xf32>
    %c0_i32_107 = arith.constant 0 : i32
    %365 = vector.broadcast %c0_i32_107 : i32 to vector<16x16xi32>
    %366 = arith.cmpi eq, %26, %365 : vector<16x16xi32>
    %cst_108 = arith.constant 0.000000e+00 : f32
    %367 = vector.broadcast %cst_108 : f32 to vector<16x16xf32>
    %368 = arith.select %366, %318, %367 : vector<16x16xi1>, vector<16x16xf32>
    %cst_109 = arith.constant dense<0.000000e+00> : vector<16xf32>
    %369 = vector.multi_reduction <add>, %368, %cst_109 [1] : vector<16x16xf32> to vector<16xf32>
    %370 = vector.shape_cast %369 : vector<16xf32> to vector<16x1xf32>
    %371 = vector.extract_strided_slice %23 {offsets = [4, 0], sizes = [1, 8], strides = [1, 1]} : vector<9x8xf32> to vector<1x8xf32>
    %372 = vector.broadcast %370 : vector<16x1xf32> to vector<16x8xf32>
    %373 = vector.broadcast %371 : vector<1x8xf32> to vector<16x8xf32>
    %374 = arith.mulf %372, %373 : vector<16x8xf32>
    %375 = arith.addf %364, %374 : vector<16x8xf32>
    %c1_i32_110 = arith.constant 1 : i32
    %376 = vector.broadcast %c1_i32_110 : i32 to vector<16x16xi32>
    %377 = arith.cmpi eq, %26, %376 : vector<16x16xi32>
    %cst_111 = arith.constant 0.000000e+00 : f32
    %378 = vector.broadcast %cst_111 : f32 to vector<16x16xf32>
    %379 = arith.select %377, %318, %378 : vector<16x16xi1>, vector<16x16xf32>
    %cst_112 = arith.constant dense<0.000000e+00> : vector<16xf32>
    %380 = vector.multi_reduction <add>, %379, %cst_112 [1] : vector<16x16xf32> to vector<16xf32>
    %381 = vector.shape_cast %380 : vector<16xf32> to vector<16x1xf32>
    %382 = vector.extract_strided_slice %23 {offsets = [5, 0], sizes = [1, 8], strides = [1, 1]} : vector<9x8xf32> to vector<1x8xf32>
    %383 = vector.broadcast %381 : vector<16x1xf32> to vector<16x8xf32>
    %384 = vector.broadcast %382 : vector<1x8xf32> to vector<16x8xf32>
    %385 = arith.mulf %383, %384 : vector<16x8xf32>
    %386 = arith.addf %375, %385 : vector<16x8xf32>
    %c2_i32_113 = arith.constant 2 : i32
    %387 = vector.broadcast %c2_i32_113 : i32 to vector<16x16xi32>
    %388 = arith.cmpi eq, %26, %387 : vector<16x16xi32>
    %cst_114 = arith.constant 0.000000e+00 : f32
    %389 = vector.broadcast %cst_114 : f32 to vector<16x16xf32>
    %390 = arith.select %388, %318, %389 : vector<16x16xi1>, vector<16x16xf32>
    %cst_115 = arith.constant dense<0.000000e+00> : vector<16xf32>
    %391 = vector.multi_reduction <add>, %390, %cst_115 [1] : vector<16x16xf32> to vector<16xf32>
    %392 = vector.shape_cast %391 : vector<16xf32> to vector<16x1xf32>
    %393 = vector.extract_strided_slice %23 {offsets = [6, 0], sizes = [1, 8], strides = [1, 1]} : vector<9x8xf32> to vector<1x8xf32>
    %394 = vector.broadcast %392 : vector<16x1xf32> to vector<16x8xf32>
    %395 = vector.broadcast %393 : vector<1x8xf32> to vector<16x8xf32>
    %396 = arith.mulf %394, %395 : vector<16x8xf32>
    %397 = arith.addf %386, %396 : vector<16x8xf32>
    %c3_i32_116 = arith.constant 3 : i32
    %398 = vector.broadcast %c3_i32_116 : i32 to vector<16x16xi32>
    %399 = arith.cmpi eq, %26, %398 : vector<16x16xi32>
    %cst_117 = arith.constant 0.000000e+00 : f32
    %400 = vector.broadcast %cst_117 : f32 to vector<16x16xf32>
    %401 = arith.select %399, %318, %400 : vector<16x16xi1>, vector<16x16xf32>
    %cst_118 = arith.constant dense<0.000000e+00> : vector<16xf32>
    %402 = vector.multi_reduction <add>, %401, %cst_118 [1] : vector<16x16xf32> to vector<16xf32>
    %403 = vector.shape_cast %402 : vector<16xf32> to vector<16x1xf32>
    %404 = vector.extract_strided_slice %23 {offsets = [7, 0], sizes = [1, 8], strides = [1, 1]} : vector<9x8xf32> to vector<1x8xf32>
    %405 = vector.broadcast %403 : vector<16x1xf32> to vector<16x8xf32>
    %406 = vector.broadcast %404 : vector<1x8xf32> to vector<16x8xf32>
    %407 = arith.mulf %405, %406 : vector<16x8xf32>
    %408 = arith.addf %397, %407 : vector<16x8xf32>
    %c4_i32_119 = arith.constant 4 : i32
    %409 = vector.broadcast %c4_i32_119 : i32 to vector<16x16xi32>
    %410 = arith.cmpi eq, %26, %409 : vector<16x16xi32>
    %cst_120 = arith.constant 0.000000e+00 : f32
    %411 = vector.broadcast %cst_120 : f32 to vector<16x16xf32>
    %412 = arith.select %410, %318, %411 : vector<16x16xi1>, vector<16x16xf32>
    %cst_121 = arith.constant dense<0.000000e+00> : vector<16xf32>
    %413 = vector.multi_reduction <add>, %412, %cst_121 [1] : vector<16x16xf32> to vector<16xf32>
    %414 = vector.shape_cast %413 : vector<16xf32> to vector<16x1xf32>
    %415 = vector.extract_strided_slice %23 {offsets = [8, 0], sizes = [1, 8], strides = [1, 1]} : vector<9x8xf32> to vector<1x8xf32>
    %416 = vector.broadcast %414 : vector<16x1xf32> to vector<16x8xf32>
    %417 = vector.broadcast %415 : vector<1x8xf32> to vector<16x8xf32>
    %418 = arith.mulf %416, %417 : vector<16x8xf32>
    %419 = arith.addf %408, %418 : vector<16x8xf32>
    %420 = arith.addf %319, %419 : vector<16x8xf32>
    %c0_122 = arith.constant 0 : index
    %c8 = arith.constant 8 : index
    %421 = vector.load %arg14[%c0_122, %c8] : memref<32x32xf32, #tpu.memory_space<vmem>>, vector<16x8xf32>
    tpu.vector_store %arg14[%c0_122, %c8], %420 {strides = array<i32>} : memref<32x32xf32, #tpu.memory_space<vmem>>, vector<16x8xf32>,
    %422 = vector.extract_strided_slice %19 {offsets = [0, 16], sizes = [16, 8], strides = [1, 1]} : vector<32x32xf32> to vector<16x8xf32>
    %423 = vector.extract_strided_slice %20 {offsets = [0, 16], sizes = [16, 8], strides = [1, 1]} : vector<32x32xf32> to vector<16x8xf32>
    %424 = vector.extract_strided_slice %21 {offsets = [0, 16], sizes = [16, 8], strides = [1, 1]} : vector<32x32xf32> to vector<16x8xf32>
    %425 = tpu.transpose %423, [1, 0] : vector<16x8xf32> -> vector<8x16xf32>
    %cst_123 = arith.constant dense<0.000000e+00> : vector<16x16xf32>
    %426 = tpu.matmul %422, %425, %cst_123 {dimension_numbers = #tpu.dot_dimension_numbers<[1], [0], [0], [1], [0, 0, 1, 1], [], []>} : vector<16x8xf32>, vector<8x16xf32>, vector<16x16xf32> -> vector<16x16xf32>
    %cst_124 = arith.constant dense<0.000000e+00> : vector<16x9xf32>
    %427 = tpu.matmul %422, %22, %cst_124 {dimension_numbers = #tpu.dot_dimension_numbers<[1], [0], [0], [1], [0, 0, 1, 1], [], []>} : vector<16x8xf32>, vector<8x9xf32>, vector<16x9xf32> -> vector<16x9xf32>
    %c-4_i32_125 = arith.constant -4 : i32
    %428 = vector.broadcast %c-4_i32_125 : i32 to vector<16x16xi32>
    %429 = arith.cmpi eq, %26, %428 : vector<16x16xi32>
    %430 = vector.extract_strided_slice %427 {offsets = [0, 0], sizes = [16, 1], strides = [1, 1]} : vector<16x9xf32> to vector<16x1xf32>
    %cst_126 = arith.constant 0.000000e+00 : f32
    %431 = vector.shape_cast %430 : vector<16x1xf32> to vector<16x1xf32>
    %432 = vector.broadcast %431 : vector<16x1xf32> to vector<16x16xf32>
    %433 = vector.broadcast %cst_126 : f32 to vector<16x16xf32>
    %434 = arith.select %429, %432, %433 : vector<16x16xi1>, vector<16x16xf32>
    %435 = arith.addf %426, %434 : vector<16x16xf32>
    %c-3_i32_127 = arith.constant -3 : i32
    %436 = vector.broadcast %c-3_i32_127 : i32 to vector<16x16xi32>
    %437 = arith.cmpi eq, %26, %436 : vector<16x16xi32>
    %438 = vector.extract_strided_slice %427 {offsets = [0, 1], sizes = [16, 1], strides = [1, 1]} : vector<16x9xf32> to vector<16x1xf32>
    %cst_128 = arith.constant 0.000000e+00 : f32
    %439 = vector.shape_cast %438 : vector<16x1xf32> to vector<16x1xf32>
    %440 = vector.broadcast %439 : vector<16x1xf32> to vector<16x16xf32>
    %441 = vector.broadcast %cst_128 : f32 to vector<16x16xf32>
    %442 = arith.select %437, %440, %441 : vector<16x16xi1>, vector<16x16xf32>
    %443 = arith.addf %435, %442 : vector<16x16xf32>
    %c-2_i32_129 = arith.constant -2 : i32
    %444 = vector.broadcast %c-2_i32_129 : i32 to vector<16x16xi32>
    %445 = arith.cmpi eq, %26, %444 : vector<16x16xi32>
    %446 = vector.extract_strided_slice %427 {offsets = [0, 2], sizes = [16, 1], strides = [1, 1]} : vector<16x9xf32> to vector<16x1xf32>
    %cst_130 = arith.constant 0.000000e+00 : f32
    %447 = vector.shape_cast %446 : vector<16x1xf32> to vector<16x1xf32>
    %448 = vector.broadcast %447 : vector<16x1xf32> to vector<16x16xf32>
    %449 = vector.broadcast %cst_130 : f32 to vector<16x16xf32>
    %450 = arith.select %445, %448, %449 : vector<16x16xi1>, vector<16x16xf32>
    %451 = arith.addf %443, %450 : vector<16x16xf32>
    %c-1_i32_131 = arith.constant -1 : i32
    %452 = vector.broadcast %c-1_i32_131 : i32 to vector<16x16xi32>
    %453 = arith.cmpi eq, %26, %452 : vector<16x16xi32>
    %454 = vector.extract_strided_slice %427 {offsets = [0, 3], sizes = [16, 1], strides = [1, 1]} : vector<16x9xf32> to vector<16x1xf32>
    %cst_132 = arith.constant 0.000000e+00 : f32
    %455 = vector.shape_cast %454 : vector<16x1xf32> to vector<16x1xf32>
    %456 = vector.broadcast %455 : vector<16x1xf32> to vector<16x16xf32>
    %457 = vector.broadcast %cst_132 : f32 to vector<16x16xf32>
    %458 = arith.select %453, %456, %457 : vector<16x16xi1>, vector<16x16xf32>
    %459 = arith.addf %451, %458 : vector<16x16xf32>
    %c0_i32_133 = arith.constant 0 : i32
    %460 = vector.broadcast %c0_i32_133 : i32 to vector<16x16xi32>
    %461 = arith.cmpi eq, %26, %460 : vector<16x16xi32>
    %462 = vector.extract_strided_slice %427 {offsets = [0, 4], sizes = [16, 1], strides = [1, 1]} : vector<16x9xf32> to vector<16x1xf32>
    %cst_134 = arith.constant 0.000000e+00 : f32
    %463 = vector.shape_cast %462 : vector<16x1xf32> to vector<16x1xf32>
    %464 = vector.broadcast %463 : vector<16x1xf32> to vector<16x16xf32>
    %465 = vector.broadcast %cst_134 : f32 to vector<16x16xf32>
    %466 = arith.select %461, %464, %465 : vector<16x16xi1>, vector<16x16xf32>
    %467 = arith.addf %459, %466 : vector<16x16xf32>
    %c1_i32_135 = arith.constant 1 : i32
    %468 = vector.broadcast %c1_i32_135 : i32 to vector<16x16xi32>
    %469 = arith.cmpi eq, %26, %468 : vector<16x16xi32>
    %470 = vector.extract_strided_slice %427 {offsets = [0, 5], sizes = [16, 1], strides = [1, 1]} : vector<16x9xf32> to vector<16x1xf32>
    %cst_136 = arith.constant 0.000000e+00 : f32
    %471 = vector.shape_cast %470 : vector<16x1xf32> to vector<16x1xf32>
    %472 = vector.broadcast %471 : vector<16x1xf32> to vector<16x16xf32>
    %473 = vector.broadcast %cst_136 : f32 to vector<16x16xf32>
    %474 = arith.select %469, %472, %473 : vector<16x16xi1>, vector<16x16xf32>
    %475 = arith.addf %467, %474 : vector<16x16xf32>
    %c2_i32_137 = arith.constant 2 : i32
    %476 = vector.broadcast %c2_i32_137 : i32 to vector<16x16xi32>
    %477 = arith.cmpi eq, %26, %476 : vector<16x16xi32>
    %478 = vector.extract_strided_slice %427 {offsets = [0, 6], sizes = [16, 1], strides = [1, 1]} : vector<16x9xf32> to vector<16x1xf32>
    %cst_138 = arith.constant 0.000000e+00 : f32
    %479 = vector.shape_cast %478 : vector<16x1xf32> to vector<16x1xf32>
    %480 = vector.broadcast %479 : vector<16x1xf32> to vector<16x16xf32>
    %481 = vector.broadcast %cst_138 : f32 to vector<16x16xf32>
    %482 = arith.select %477, %480, %481 : vector<16x16xi1>, vector<16x16xf32>
    %483 = arith.addf %475, %482 : vector<16x16xf32>
    %c3_i32_139 = arith.constant 3 : i32
    %484 = vector.broadcast %c3_i32_139 : i32 to vector<16x16xi32>
    %485 = arith.cmpi eq, %26, %484 : vector<16x16xi32>
    %486 = vector.extract_strided_slice %427 {offsets = [0, 7], sizes = [16, 1], strides = [1, 1]} : vector<16x9xf32> to vector<16x1xf32>
    %cst_140 = arith.constant 0.000000e+00 : f32
    %487 = vector.shape_cast %486 : vector<16x1xf32> to vector<16x1xf32>
    %488 = vector.broadcast %487 : vector<16x1xf32> to vector<16x16xf32>
    %489 = vector.broadcast %cst_140 : f32 to vector<16x16xf32>
    %490 = arith.select %485, %488, %489 : vector<16x16xi1>, vector<16x16xf32>
    %491 = arith.addf %483, %490 : vector<16x16xf32>
    %c4_i32_141 = arith.constant 4 : i32
    %492 = vector.broadcast %c4_i32_141 : i32 to vector<16x16xi32>
    %493 = arith.cmpi eq, %26, %492 : vector<16x16xi32>
    %494 = vector.extract_strided_slice %427 {offsets = [0, 8], sizes = [16, 1], strides = [1, 1]} : vector<16x9xf32> to vector<16x1xf32>
    %cst_142 = arith.constant 0.000000e+00 : f32
    %495 = vector.shape_cast %494 : vector<16x1xf32> to vector<16x1xf32>
    %496 = vector.broadcast %495 : vector<16x1xf32> to vector<16x16xf32>
    %497 = vector.broadcast %cst_142 : f32 to vector<16x16xf32>
    %498 = arith.select %493, %496, %497 : vector<16x16xi1>, vector<16x16xf32>
    %499 = arith.addf %491, %498 : vector<16x16xf32>
    %500 = arith.addf %499, %37 : vector<16x16xf32>
    %cst_143 = arith.constant dense<0xFF800000> : vector<16xf32>
    %501 = vector.multi_reduction <maximumf>, %500, %cst_143 [1] : vector<16x16xf32> to vector<16xf32>
    %502 = vector.shape_cast %501 : vector<16xf32> to vector<16x1xf32>
    %503 = vector.broadcast %502 : vector<16x1xf32> to vector<16x16xf32>
    %504 = arith.subf %500, %503 : vector<16x16xf32>
    %505 = math.exp %504 : vector<16x16xf32>
    %cst_144 = arith.constant dense<0.000000e+00> : vector<16xf32>
    %506 = vector.multi_reduction <add>, %505, %cst_144 [1] : vector<16x16xf32> to vector<16xf32>
    %507 = vector.shape_cast %506 : vector<16xf32> to vector<16x1xf32>
    %508 = tpu.reciprocal %507 {approx = true} : vector<16x1xf32> -> vector<16x1xf32>
    %509 = vector.broadcast %508 : vector<16x1xf32> to vector<16x16xf32>
    %510 = arith.mulf %505, %509 : vector<16x16xf32>
    %cst_145 = arith.constant dense<0.000000e+00> : vector<16x8xf32>
    %511 = tpu.matmul %510, %424, %cst_145 {dimension_numbers = #tpu.dot_dimension_numbers<[1], [0], [0], [1], [0, 0, 1, 1], [], []>} : vector<16x16xf32>, vector<16x8xf32>, vector<16x8xf32> -> vector<16x8xf32>
    %cst_146 = arith.constant 0.000000e+00 : f32
    %512 = vector.broadcast %cst_146 : f32 to vector<16x8xf32>
    %c-4_i32_147 = arith.constant -4 : i32
    %513 = vector.broadcast %c-4_i32_147 : i32 to vector<16x16xi32>
    %514 = arith.cmpi eq, %26, %513 : vector<16x16xi32>
    %cst_148 = arith.constant 0.000000e+00 : f32
    %515 = vector.broadcast %cst_148 : f32 to vector<16x16xf32>
    %516 = arith.select %514, %510, %515 : vector<16x16xi1>, vector<16x16xf32>
    %cst_149 = arith.constant dense<0.000000e+00> : vector<16xf32>
    %517 = vector.multi_reduction <add>, %516, %cst_149 [1] : vector<16x16xf32> to vector<16xf32>
    %518 = vector.shape_cast %517 : vector<16xf32> to vector<16x1xf32>
    %519 = vector.extract_strided_slice %23 {offsets = [0, 0], sizes = [1, 8], strides = [1, 1]} : vector<9x8xf32> to vector<1x8xf32>
    %520 = vector.broadcast %518 : vector<16x1xf32> to vector<16x8xf32>
    %521 = vector.broadcast %519 : vector<1x8xf32> to vector<16x8xf32>
    %522 = arith.mulf %520, %521 : vector<16x8xf32>
    %523 = arith.addf %512, %522 : vector<16x8xf32>
    %c-3_i32_150 = arith.constant -3 : i32
    %524 = vector.broadcast %c-3_i32_150 : i32 to vector<16x16xi32>
    %525 = arith.cmpi eq, %26, %524 : vector<16x16xi32>
    %cst_151 = arith.constant 0.000000e+00 : f32
    %526 = vector.broadcast %cst_151 : f32 to vector<16x16xf32>
    %527 = arith.select %525, %510, %526 : vector<16x16xi1>, vector<16x16xf32>
    %cst_152 = arith.constant dense<0.000000e+00> : vector<16xf32>
    %528 = vector.multi_reduction <add>, %527, %cst_152 [1] : vector<16x16xf32> to vector<16xf32>
    %529 = vector.shape_cast %528 : vector<16xf32> to vector<16x1xf32>
    %530 = vector.extract_strided_slice %23 {offsets = [1, 0], sizes = [1, 8], strides = [1, 1]} : vector<9x8xf32> to vector<1x8xf32>
    %531 = vector.broadcast %529 : vector<16x1xf32> to vector<16x8xf32>
    %532 = vector.broadcast %530 : vector<1x8xf32> to vector<16x8xf32>
    %533 = arith.mulf %531, %532 : vector<16x8xf32>
    %534 = arith.addf %523, %533 : vector<16x8xf32>
    %c-2_i32_153 = arith.constant -2 : i32
    %535 = vector.broadcast %c-2_i32_153 : i32 to vector<16x16xi32>
    %536 = arith.cmpi eq, %26, %535 : vector<16x16xi32>
    %cst_154 = arith.constant 0.000000e+00 : f32
    %537 = vector.broadcast %cst_154 : f32 to vector<16x16xf32>
    %538 = arith.select %536, %510, %537 : vector<16x16xi1>, vector<16x16xf32>
    %cst_155 = arith.constant dense<0.000000e+00> : vector<16xf32>
    %539 = vector.multi_reduction <add>, %538, %cst_155 [1] : vector<16x16xf32> to vector<16xf32>
    %540 = vector.shape_cast %539 : vector<16xf32> to vector<16x1xf32>
    %541 = vector.extract_strided_slice %23 {offsets = [2, 0], sizes = [1, 8], strides = [1, 1]} : vector<9x8xf32> to vector<1x8xf32>
    %542 = vector.broadcast %540 : vector<16x1xf32> to vector<16x8xf32>
    %543 = vector.broadcast %541 : vector<1x8xf32> to vector<16x8xf32>
    %544 = arith.mulf %542, %543 : vector<16x8xf32>
    %545 = arith.addf %534, %544 : vector<16x8xf32>
    %c-1_i32_156 = arith.constant -1 : i32
    %546 = vector.broadcast %c-1_i32_156 : i32 to vector<16x16xi32>
    %547 = arith.cmpi eq, %26, %546 : vector<16x16xi32>
    %cst_157 = arith.constant 0.000000e+00 : f32
    %548 = vector.broadcast %cst_157 : f32 to vector<16x16xf32>
    %549 = arith.select %547, %510, %548 : vector<16x16xi1>, vector<16x16xf32>
    %cst_158 = arith.constant dense<0.000000e+00> : vector<16xf32>
    %550 = vector.multi_reduction <add>, %549, %cst_158 [1] : vector<16x16xf32> to vector<16xf32>
    %551 = vector.shape_cast %550 : vector<16xf32> to vector<16x1xf32>
    %552 = vector.extract_strided_slice %23 {offsets = [3, 0], sizes = [1, 8], strides = [1, 1]} : vector<9x8xf32> to vector<1x8xf32>
    %553 = vector.broadcast %551 : vector<16x1xf32> to vector<16x8xf32>
    %554 = vector.broadcast %552 : vector<1x8xf32> to vector<16x8xf32>
    %555 = arith.mulf %553, %554 : vector<16x8xf32>
    %556 = arith.addf %545, %555 : vector<16x8xf32>
    %c0_i32_159 = arith.constant 0 : i32
    %557 = vector.broadcast %c0_i32_159 : i32 to vector<16x16xi32>
    %558 = arith.cmpi eq, %26, %557 : vector<16x16xi32>
    %cst_160 = arith.constant 0.000000e+00 : f32
    %559 = vector.broadcast %cst_160 : f32 to vector<16x16xf32>
    %560 = arith.select %558, %510, %559 : vector<16x16xi1>, vector<16x16xf32>
    %cst_161 = arith.constant dense<0.000000e+00> : vector<16xf32>
    %561 = vector.multi_reduction <add>, %560, %cst_161 [1] : vector<16x16xf32> to vector<16xf32>
    %562 = vector.shape_cast %561 : vector<16xf32> to vector<16x1xf32>
    %563 = vector.extract_strided_slice %23 {offsets = [4, 0], sizes = [1, 8], strides = [1, 1]} : vector<9x8xf32> to vector<1x8xf32>
    %564 = vector.broadcast %562 : vector<16x1xf32> to vector<16x8xf32>
    %565 = vector.broadcast %563 : vector<1x8xf32> to vector<16x8xf32>
    %566 = arith.mulf %564, %565 : vector<16x8xf32>
    %567 = arith.addf %556, %566 : vector<16x8xf32>
    %c1_i32_162 = arith.constant 1 : i32
    %568 = vector.broadcast %c1_i32_162 : i32 to vector<16x16xi32>
    %569 = arith.cmpi eq, %26, %568 : vector<16x16xi32>
    %cst_163 = arith.constant 0.000000e+00 : f32
    %570 = vector.broadcast %cst_163 : f32 to vector<16x16xf32>
    %571 = arith.select %569, %510, %570 : vector<16x16xi1>, vector<16x16xf32>
    %cst_164 = arith.constant dense<0.000000e+00> : vector<16xf32>
    %572 = vector.multi_reduction <add>, %571, %cst_164 [1] : vector<16x16xf32> to vector<16xf32>
    %573 = vector.shape_cast %572 : vector<16xf32> to vector<16x1xf32>
    %574 = vector.extract_strided_slice %23 {offsets = [5, 0], sizes = [1, 8], strides = [1, 1]} : vector<9x8xf32> to vector<1x8xf32>
    %575 = vector.broadcast %573 : vector<16x1xf32> to vector<16x8xf32>
    %576 = vector.broadcast %574 : vector<1x8xf32> to vector<16x8xf32>
    %577 = arith.mulf %575, %576 : vector<16x8xf32>
    %578 = arith.addf %567, %577 : vector<16x8xf32>
    %c2_i32_165 = arith.constant 2 : i32
    %579 = vector.broadcast %c2_i32_165 : i32 to vector<16x16xi32>
    %580 = arith.cmpi eq, %26, %579 : vector<16x16xi32>
    %cst_166 = arith.constant 0.000000e+00 : f32
    %581 = vector.broadcast %cst_166 : f32 to vector<16x16xf32>
    %582 = arith.select %580, %510, %581 : vector<16x16xi1>, vector<16x16xf32>
    %cst_167 = arith.constant dense<0.000000e+00> : vector<16xf32>
    %583 = vector.multi_reduction <add>, %582, %cst_167 [1] : vector<16x16xf32> to vector<16xf32>
    %584 = vector.shape_cast %583 : vector<16xf32> to vector<16x1xf32>
    %585 = vector.extract_strided_slice %23 {offsets = [6, 0], sizes = [1, 8], strides = [1, 1]} : vector<9x8xf32> to vector<1x8xf32>
    %586 = vector.broadcast %584 : vector<16x1xf32> to vector<16x8xf32>
    %587 = vector.broadcast %585 : vector<1x8xf32> to vector<16x8xf32>
    %588 = arith.mulf %586, %587 : vector<16x8xf32>
    %589 = arith.addf %578, %588 : vector<16x8xf32>
    %c3_i32_168 = arith.constant 3 : i32
    %590 = vector.broadcast %c3_i32_168 : i32 to vector<16x16xi32>
    %591 = arith.cmpi eq, %26, %590 : vector<16x16xi32>
    %cst_169 = arith.constant 0.000000e+00 : f32
    %592 = vector.broadcast %cst_169 : f32 to vector<16x16xf32>
    %593 = arith.select %591, %510, %592 : vector<16x16xi1>, vector<16x16xf32>
    %cst_170 = arith.constant dense<0.000000e+00> : vector<16xf32>
    %594 = vector.multi_reduction <add>, %593, %cst_170 [1] : vector<16x16xf32> to vector<16xf32>
    %595 = vector.shape_cast %594 : vector<16xf32> to vector<16x1xf32>
    %596 = vector.extract_strided_slice %23 {offsets = [7, 0], sizes = [1, 8], strides = [1, 1]} : vector<9x8xf32> to vector<1x8xf32>
    %597 = vector.broadcast %595 : vector<16x1xf32> to vector<16x8xf32>
    %598 = vector.broadcast %596 : vector<1x8xf32> to vector<16x8xf32>
    %599 = arith.mulf %597, %598 : vector<16x8xf32>
    %600 = arith.addf %589, %599 : vector<16x8xf32>
    %c4_i32_171 = arith.constant 4 : i32
    %601 = vector.broadcast %c4_i32_171 : i32 to vector<16x16xi32>
    %602 = arith.cmpi eq, %26, %601 : vector<16x16xi32>
    %cst_172 = arith.constant 0.000000e+00 : f32
    %603 = vector.broadcast %cst_172 : f32 to vector<16x16xf32>
    %604 = arith.select %602, %510, %603 : vector<16x16xi1>, vector<16x16xf32>
    %cst_173 = arith.constant dense<0.000000e+00> : vector<16xf32>
    %605 = vector.multi_reduction <add>, %604, %cst_173 [1] : vector<16x16xf32> to vector<16xf32>
    %606 = vector.shape_cast %605 : vector<16xf32> to vector<16x1xf32>
    %607 = vector.extract_strided_slice %23 {offsets = [8, 0], sizes = [1, 8], strides = [1, 1]} : vector<9x8xf32> to vector<1x8xf32>
    %608 = vector.broadcast %606 : vector<16x1xf32> to vector<16x8xf32>
    %609 = vector.broadcast %607 : vector<1x8xf32> to vector<16x8xf32>
    %610 = arith.mulf %608, %609 : vector<16x8xf32>
    %611 = arith.addf %600, %610 : vector<16x8xf32>
    %612 = arith.addf %511, %611 : vector<16x8xf32>
    %c0_174 = arith.constant 0 : index
    %c16 = arith.constant 16 : index
    %613 = vector.load %arg14[%c0_174, %c16] : memref<32x32xf32, #tpu.memory_space<vmem>>, vector<16x8xf32>
    tpu.vector_store %arg14[%c0_174, %c16], %612 {strides = array<i32>} : memref<32x32xf32, #tpu.memory_space<vmem>>, vector<16x8xf32>,
    %614 = vector.extract_strided_slice %19 {offsets = [0, 24], sizes = [16, 8], strides = [1, 1]} : vector<32x32xf32> to vector<16x8xf32>
    %615 = vector.extract_strided_slice %20 {offsets = [0, 24], sizes = [16, 8], strides = [1, 1]} : vector<32x32xf32> to vector<16x8xf32>
    %616 = vector.extract_strided_slice %21 {offsets = [0, 24], sizes = [16, 8], strides = [1, 1]} : vector<32x32xf32> to vector<16x8xf32>
    %617 = tpu.transpose %615, [1, 0] : vector<16x8xf32> -> vector<8x16xf32>
    %cst_175 = arith.constant dense<0.000000e+00> : vector<16x16xf32>
    %618 = tpu.matmul %614, %617, %cst_175 {dimension_numbers = #tpu.dot_dimension_numbers<[1], [0], [0], [1], [0, 0, 1, 1], [], []>} : vector<16x8xf32>, vector<8x16xf32>, vector<16x16xf32> -> vector<16x16xf32>
    %cst_176 = arith.constant dense<0.000000e+00> : vector<16x9xf32>
    %619 = tpu.matmul %614, %22, %cst_176 {dimension_numbers = #tpu.dot_dimension_numbers<[1], [0], [0], [1], [0, 0, 1, 1], [], []>} : vector<16x8xf32>, vector<8x9xf32>, vector<16x9xf32> -> vector<16x9xf32>
    %c-4_i32_177 = arith.constant -4 : i32
    %620 = vector.broadcast %c-4_i32_177 : i32 to vector<16x16xi32>
    %621 = arith.cmpi eq, %26, %620 : vector<16x16xi32>
    %622 = vector.extract_strided_slice %619 {offsets = [0, 0], sizes = [16, 1], strides = [1, 1]} : vector<16x9xf32> to vector<16x1xf32>
    %cst_178 = arith.constant 0.000000e+00 : f32
    %623 = vector.shape_cast %622 : vector<16x1xf32> to vector<16x1xf32>
    %624 = vector.broadcast %623 : vector<16x1xf32> to vector<16x16xf32>
    %625 = vector.broadcast %cst_178 : f32 to vector<16x16xf32>
    %626 = arith.select %621, %624, %625 : vector<16x16xi1>, vector<16x16xf32>
    %627 = arith.addf %618, %626 : vector<16x16xf32>
    %c-3_i32_179 = arith.constant -3 : i32
    %628 = vector.broadcast %c-3_i32_179 : i32 to vector<16x16xi32>
    %629 = arith.cmpi eq, %26, %628 : vector<16x16xi32>
    %630 = vector.extract_strided_slice %619 {offsets = [0, 1], sizes = [16, 1], strides = [1, 1]} : vector<16x9xf32> to vector<16x1xf32>
    %cst_180 = arith.constant 0.000000e+00 : f32
    %631 = vector.shape_cast %630 : vector<16x1xf32> to vector<16x1xf32>
    %632 = vector.broadcast %631 : vector<16x1xf32> to vector<16x16xf32>
    %633 = vector.broadcast %cst_180 : f32 to vector<16x16xf32>
    %634 = arith.select %629, %632, %633 : vector<16x16xi1>, vector<16x16xf32>
    %635 = arith.addf %627, %634 : vector<16x16xf32>
    %c-2_i32_181 = arith.constant -2 : i32
    %636 = vector.broadcast %c-2_i32_181 : i32 to vector<16x16xi32>
    %637 = arith.cmpi eq, %26, %636 : vector<16x16xi32>
    %638 = vector.extract_strided_slice %619 {offsets = [0, 2], sizes = [16, 1], strides = [1, 1]} : vector<16x9xf32> to vector<16x1xf32>
    %cst_182 = arith.constant 0.000000e+00 : f32
    %639 = vector.shape_cast %638 : vector<16x1xf32> to vector<16x1xf32>
    %640 = vector.broadcast %639 : vector<16x1xf32> to vector<16x16xf32>
    %641 = vector.broadcast %cst_182 : f32 to vector<16x16xf32>
    %642 = arith.select %637, %640, %641 : vector<16x16xi1>, vector<16x16xf32>
    %643 = arith.addf %635, %642 : vector<16x16xf32>
    %c-1_i32_183 = arith.constant -1 : i32
    %644 = vector.broadcast %c-1_i32_183 : i32 to vector<16x16xi32>
    %645 = arith.cmpi eq, %26, %644 : vector<16x16xi32>
    %646 = vector.extract_strided_slice %619 {offsets = [0, 3], sizes = [16, 1], strides = [1, 1]} : vector<16x9xf32> to vector<16x1xf32>
    %cst_184 = arith.constant 0.000000e+00 : f32
    %647 = vector.shape_cast %646 : vector<16x1xf32> to vector<16x1xf32>
    %648 = vector.broadcast %647 : vector<16x1xf32> to vector<16x16xf32>
    %649 = vector.broadcast %cst_184 : f32 to vector<16x16xf32>
    %650 = arith.select %645, %648, %649 : vector<16x16xi1>, vector<16x16xf32>
    %651 = arith.addf %643, %650 : vector<16x16xf32>
    %c0_i32_185 = arith.constant 0 : i32
    %652 = vector.broadcast %c0_i32_185 : i32 to vector<16x16xi32>
    %653 = arith.cmpi eq, %26, %652 : vector<16x16xi32>
    %654 = vector.extract_strided_slice %619 {offsets = [0, 4], sizes = [16, 1], strides = [1, 1]} : vector<16x9xf32> to vector<16x1xf32>
    %cst_186 = arith.constant 0.000000e+00 : f32
    %655 = vector.shape_cast %654 : vector<16x1xf32> to vector<16x1xf32>
    %656 = vector.broadcast %655 : vector<16x1xf32> to vector<16x16xf32>
    %657 = vector.broadcast %cst_186 : f32 to vector<16x16xf32>
    %658 = arith.select %653, %656, %657 : vector<16x16xi1>, vector<16x16xf32>
    %659 = arith.addf %651, %658 : vector<16x16xf32>
    %c1_i32_187 = arith.constant 1 : i32
    %660 = vector.broadcast %c1_i32_187 : i32 to vector<16x16xi32>
    %661 = arith.cmpi eq, %26, %660 : vector<16x16xi32>
    %662 = vector.extract_strided_slice %619 {offsets = [0, 5], sizes = [16, 1], strides = [1, 1]} : vector<16x9xf32> to vector<16x1xf32>
    %cst_188 = arith.constant 0.000000e+00 : f32
    %663 = vector.shape_cast %662 : vector<16x1xf32> to vector<16x1xf32>
    %664 = vector.broadcast %663 : vector<16x1xf32> to vector<16x16xf32>
    %665 = vector.broadcast %cst_188 : f32 to vector<16x16xf32>
    %666 = arith.select %661, %664, %665 : vector<16x16xi1>, vector<16x16xf32>
    %667 = arith.addf %659, %666 : vector<16x16xf32>
    %c2_i32_189 = arith.constant 2 : i32
    %668 = vector.broadcast %c2_i32_189 : i32 to vector<16x16xi32>
    %669 = arith.cmpi eq, %26, %668 : vector<16x16xi32>
    %670 = vector.extract_strided_slice %619 {offsets = [0, 6], sizes = [16, 1], strides = [1, 1]} : vector<16x9xf32> to vector<16x1xf32>
    %cst_190 = arith.constant 0.000000e+00 : f32
    %671 = vector.shape_cast %670 : vector<16x1xf32> to vector<16x1xf32>
    %672 = vector.broadcast %671 : vector<16x1xf32> to vector<16x16xf32>
    %673 = vector.broadcast %cst_190 : f32 to vector<16x16xf32>
    %674 = arith.select %669, %672, %673 : vector<16x16xi1>, vector<16x16xf32>
    %675 = arith.addf %667, %674 : vector<16x16xf32>
    %c3_i32_191 = arith.constant 3 : i32
    %676 = vector.broadcast %c3_i32_191 : i32 to vector<16x16xi32>
    %677 = arith.cmpi eq, %26, %676 : vector<16x16xi32>
    %678 = vector.extract_strided_slice %619 {offsets = [0, 7], sizes = [16, 1], strides = [1, 1]} : vector<16x9xf32> to vector<16x1xf32>
    %cst_192 = arith.constant 0.000000e+00 : f32
    %679 = vector.shape_cast %678 : vector<16x1xf32> to vector<16x1xf32>
    %680 = vector.broadcast %679 : vector<16x1xf32> to vector<16x16xf32>
    %681 = vector.broadcast %cst_192 : f32 to vector<16x16xf32>
    %682 = arith.select %677, %680, %681 : vector<16x16xi1>, vector<16x16xf32>
    %683 = arith.addf %675, %682 : vector<16x16xf32>
    %c4_i32_193 = arith.constant 4 : i32
    %684 = vector.broadcast %c4_i32_193 : i32 to vector<16x16xi32>
    %685 = arith.cmpi eq, %26, %684 : vector<16x16xi32>
    %686 = vector.extract_strided_slice %619 {offsets = [0, 8], sizes = [16, 1], strides = [1, 1]} : vector<16x9xf32> to vector<16x1xf32>
    %cst_194 = arith.constant 0.000000e+00 : f32
    %687 = vector.shape_cast %686 : vector<16x1xf32> to vector<16x1xf32>
    %688 = vector.broadcast %687 : vector<16x1xf32> to vector<16x16xf32>
    %689 = vector.broadcast %cst_194 : f32 to vector<16x16xf32>
    %690 = arith.select %685, %688, %689 : vector<16x16xi1>, vector<16x16xf32>
    %691 = arith.addf %683, %690 : vector<16x16xf32>
    %692 = arith.addf %691, %37 : vector<16x16xf32>
    %cst_195 = arith.constant dense<0xFF800000> : vector<16xf32>
    %693 = vector.multi_reduction <maximumf>, %692, %cst_195 [1] : vector<16x16xf32> to vector<16xf32>
    %694 = vector.shape_cast %693 : vector<16xf32> to vector<16x1xf32>
    %695 = vector.broadcast %694 : vector<16x1xf32> to vector<16x16xf32>
    %696 = arith.subf %692, %695 : vector<16x16xf32>
    %697 = math.exp %696 : vector<16x16xf32>
    %cst_196 = arith.constant dense<0.000000e+00> : vector<16xf32>
    %698 = vector.multi_reduction <add>, %697, %cst_196 [1] : vector<16x16xf32> to vector<16xf32>
    %699 = vector.shape_cast %698 : vector<16xf32> to vector<16x1xf32>
    %700 = tpu.reciprocal %699 {approx = true} : vector<16x1xf32> -> vector<16x1xf32>
    %701 = vector.broadcast %700 : vector<16x1xf32> to vector<16x16xf32>
    %702 = arith.mulf %697, %701 : vector<16x16xf32>
    %cst_197 = arith.constant dense<0.000000e+00> : vector<16x8xf32>
    %703 = tpu.matmul %702, %616, %cst_197 {dimension_numbers = #tpu.dot_dimension_numbers<[1], [0], [0], [1], [0, 0, 1, 1], [], []>} : vector<16x16xf32>, vector<16x8xf32>, vector<16x8xf32> -> vector<16x8xf32>
    %cst_198 = arith.constant 0.000000e+00 : f32
    %704 = vector.broadcast %cst_198 : f32 to vector<16x8xf32>
    %c-4_i32_199 = arith.constant -4 : i32
    %705 = vector.broadcast %c-4_i32_199 : i32 to vector<16x16xi32>
    %706 = arith.cmpi eq, %26, %705 : vector<16x16xi32>
    %cst_200 = arith.constant 0.000000e+00 : f32
    %707 = vector.broadcast %cst_200 : f32 to vector<16x16xf32>
    %708 = arith.select %706, %702, %707 : vector<16x16xi1>, vector<16x16xf32>
    %cst_201 = arith.constant dense<0.000000e+00> : vector<16xf32>
    %709 = vector.multi_reduction <add>, %708, %cst_201 [1] : vector<16x16xf32> to vector<16xf32>
    %710 = vector.shape_cast %709 : vector<16xf32> to vector<16x1xf32>
    %711 = vector.extract_strided_slice %23 {offsets = [0, 0], sizes = [1, 8], strides = [1, 1]} : vector<9x8xf32> to vector<1x8xf32>
    %712 = vector.broadcast %710 : vector<16x1xf32> to vector<16x8xf32>
    %713 = vector.broadcast %711 : vector<1x8xf32> to vector<16x8xf32>
    %714 = arith.mulf %712, %713 : vector<16x8xf32>
    %715 = arith.addf %704, %714 : vector<16x8xf32>
    %c-3_i32_202 = arith.constant -3 : i32
    %716 = vector.broadcast %c-3_i32_202 : i32 to vector<16x16xi32>
    %717 = arith.cmpi eq, %26, %716 : vector<16x16xi32>
    %cst_203 = arith.constant 0.000000e+00 : f32
    %718 = vector.broadcast %cst_203 : f32 to vector<16x16xf32>
    %719 = arith.select %717, %702, %718 : vector<16x16xi1>, vector<16x16xf32>
    %cst_204 = arith.constant dense<0.000000e+00> : vector<16xf32>
    %720 = vector.multi_reduction <add>, %719, %cst_204 [1] : vector<16x16xf32> to vector<16xf32>
    %721 = vector.shape_cast %720 : vector<16xf32> to vector<16x1xf32>
    %722 = vector.extract_strided_slice %23 {offsets = [1, 0], sizes = [1, 8], strides = [1, 1]} : vector<9x8xf32> to vector<1x8xf32>
    %723 = vector.broadcast %721 : vector<16x1xf32> to vector<16x8xf32>
    %724 = vector.broadcast %722 : vector<1x8xf32> to vector<16x8xf32>
    %725 = arith.mulf %723, %724 : vector<16x8xf32>
    %726 = arith.addf %715, %725 : vector<16x8xf32>
    %c-2_i32_205 = arith.constant -2 : i32
    %727 = vector.broadcast %c-2_i32_205 : i32 to vector<16x16xi32>
    %728 = arith.cmpi eq, %26, %727 : vector<16x16xi32>
    %cst_206 = arith.constant 0.000000e+00 : f32
    %729 = vector.broadcast %cst_206 : f32 to vector<16x16xf32>
    %730 = arith.select %728, %702, %729 : vector<16x16xi1>, vector<16x16xf32>
    %cst_207 = arith.constant dense<0.000000e+00> : vector<16xf32>
    %731 = vector.multi_reduction <add>, %730, %cst_207 [1] : vector<16x16xf32> to vector<16xf32>
    %732 = vector.shape_cast %731 : vector<16xf32> to vector<16x1xf32>
    %733 = vector.extract_strided_slice %23 {offsets = [2, 0], sizes = [1, 8], strides = [1, 1]} : vector<9x8xf32> to vector<1x8xf32>
    %734 = vector.broadcast %732 : vector<16x1xf32> to vector<16x8xf32>
    %735 = vector.broadcast %733 : vector<1x8xf32> to vector<16x8xf32>
    %736 = arith.mulf %734, %735 : vector<16x8xf32>
    %737 = arith.addf %726, %736 : vector<16x8xf32>
    %c-1_i32_208 = arith.constant -1 : i32
    %738 = vector.broadcast %c-1_i32_208 : i32 to vector<16x16xi32>
    %739 = arith.cmpi eq, %26, %738 : vector<16x16xi32>
    %cst_209 = arith.constant 0.000000e+00 : f32
    %740 = vector.broadcast %cst_209 : f32 to vector<16x16xf32>
    %741 = arith.select %739, %702, %740 : vector<16x16xi1>, vector<16x16xf32>
    %cst_210 = arith.constant dense<0.000000e+00> : vector<16xf32>
    %742 = vector.multi_reduction <add>, %741, %cst_210 [1] : vector<16x16xf32> to vector<16xf32>
    %743 = vector.shape_cast %742 : vector<16xf32> to vector<16x1xf32>
    %744 = vector.extract_strided_slice %23 {offsets = [3, 0], sizes = [1, 8], strides = [1, 1]} : vector<9x8xf32> to vector<1x8xf32>
    %745 = vector.broadcast %743 : vector<16x1xf32> to vector<16x8xf32>
    %746 = vector.broadcast %744 : vector<1x8xf32> to vector<16x8xf32>
    %747 = arith.mulf %745, %746 : vector<16x8xf32>
    %748 = arith.addf %737, %747 : vector<16x8xf32>
    %c0_i32_211 = arith.constant 0 : i32
    %749 = vector.broadcast %c0_i32_211 : i32 to vector<16x16xi32>
    %750 = arith.cmpi eq, %26, %749 : vector<16x16xi32>
    %cst_212 = arith.constant 0.000000e+00 : f32
    %751 = vector.broadcast %cst_212 : f32 to vector<16x16xf32>
    %752 = arith.select %750, %702, %751 : vector<16x16xi1>, vector<16x16xf32>
    %cst_213 = arith.constant dense<0.000000e+00> : vector<16xf32>
    %753 = vector.multi_reduction <add>, %752, %cst_213 [1] : vector<16x16xf32> to vector<16xf32>
    %754 = vector.shape_cast %753 : vector<16xf32> to vector<16x1xf32>
    %755 = vector.extract_strided_slice %23 {offsets = [4, 0], sizes = [1, 8], strides = [1, 1]} : vector<9x8xf32> to vector<1x8xf32>
    %756 = vector.broadcast %754 : vector<16x1xf32> to vector<16x8xf32>
    %757 = vector.broadcast %755 : vector<1x8xf32> to vector<16x8xf32>
    %758 = arith.mulf %756, %757 : vector<16x8xf32>
    %759 = arith.addf %748, %758 : vector<16x8xf32>
    %c1_i32_214 = arith.constant 1 : i32
    %760 = vector.broadcast %c1_i32_214 : i32 to vector<16x16xi32>
    %761 = arith.cmpi eq, %26, %760 : vector<16x16xi32>
    %cst_215 = arith.constant 0.000000e+00 : f32
    %762 = vector.broadcast %cst_215 : f32 to vector<16x16xf32>
    %763 = arith.select %761, %702, %762 : vector<16x16xi1>, vector<16x16xf32>
    %cst_216 = arith.constant dense<0.000000e+00> : vector<16xf32>
    %764 = vector.multi_reduction <add>, %763, %cst_216 [1] : vector<16x16xf32> to vector<16xf32>
    %765 = vector.shape_cast %764 : vector<16xf32> to vector<16x1xf32>
    %766 = vector.extract_strided_slice %23 {offsets = [5, 0], sizes = [1, 8], strides = [1, 1]} : vector<9x8xf32> to vector<1x8xf32>
    %767 = vector.broadcast %765 : vector<16x1xf32> to vector<16x8xf32>
    %768 = vector.broadcast %766 : vector<1x8xf32> to vector<16x8xf32>
    %769 = arith.mulf %767, %768 : vector<16x8xf32>
    %770 = arith.addf %759, %769 : vector<16x8xf32>
    %c2_i32_217 = arith.constant 2 : i32
    %771 = vector.broadcast %c2_i32_217 : i32 to vector<16x16xi32>
    %772 = arith.cmpi eq, %26, %771 : vector<16x16xi32>
    %cst_218 = arith.constant 0.000000e+00 : f32
    %773 = vector.broadcast %cst_218 : f32 to vector<16x16xf32>
    %774 = arith.select %772, %702, %773 : vector<16x16xi1>, vector<16x16xf32>
    %cst_219 = arith.constant dense<0.000000e+00> : vector<16xf32>
    %775 = vector.multi_reduction <add>, %774, %cst_219 [1] : vector<16x16xf32> to vector<16xf32>
    %776 = vector.shape_cast %775 : vector<16xf32> to vector<16x1xf32>
    %777 = vector.extract_strided_slice %23 {offsets = [6, 0], sizes = [1, 8], strides = [1, 1]} : vector<9x8xf32> to vector<1x8xf32>
    %778 = vector.broadcast %776 : vector<16x1xf32> to vector<16x8xf32>
    %779 = vector.broadcast %777 : vector<1x8xf32> to vector<16x8xf32>
    %780 = arith.mulf %778, %779 : vector<16x8xf32>
    %781 = arith.addf %770, %780 : vector<16x8xf32>
    %c3_i32_220 = arith.constant 3 : i32
    %782 = vector.broadcast %c3_i32_220 : i32 to vector<16x16xi32>
    %783 = arith.cmpi eq, %26, %782 : vector<16x16xi32>
    %cst_221 = arith.constant 0.000000e+00 : f32
    %784 = vector.broadcast %cst_221 : f32 to vector<16x16xf32>
    %785 = arith.select %783, %702, %784 : vector<16x16xi1>, vector<16x16xf32>
    %cst_222 = arith.constant dense<0.000000e+00> : vector<16xf32>
    %786 = vector.multi_reduction <add>, %785, %cst_222 [1] : vector<16x16xf32> to vector<16xf32>
    %787 = vector.shape_cast %786 : vector<16xf32> to vector<16x1xf32>
    %788 = vector.extract_strided_slice %23 {offsets = [7, 0], sizes = [1, 8], strides = [1, 1]} : vector<9x8xf32> to vector<1x8xf32>
    %789 = vector.broadcast %787 : vector<16x1xf32> to vector<16x8xf32>
    %790 = vector.broadcast %788 : vector<1x8xf32> to vector<16x8xf32>
    %791 = arith.mulf %789, %790 : vector<16x8xf32>
    %792 = arith.addf %781, %791 : vector<16x8xf32>
    %c4_i32_223 = arith.constant 4 : i32
    %793 = vector.broadcast %c4_i32_223 : i32 to vector<16x16xi32>
    %794 = arith.cmpi eq, %26, %793 : vector<16x16xi32>
    %cst_224 = arith.constant 0.000000e+00 : f32
    %795 = vector.broadcast %cst_224 : f32 to vector<16x16xf32>
    %796 = arith.select %794, %702, %795 : vector<16x16xi1>, vector<16x16xf32>
    %cst_225 = arith.constant dense<0.000000e+00> : vector<16xf32>
    %797 = vector.multi_reduction <add>, %796, %cst_225 [1] : vector<16x16xf32> to vector<16xf32>
    %798 = vector.shape_cast %797 : vector<16xf32> to vector<16x1xf32>
    %799 = vector.extract_strided_slice %23 {offsets = [8, 0], sizes = [1, 8], strides = [1, 1]} : vector<9x8xf32> to vector<1x8xf32>
    %800 = vector.broadcast %798 : vector<16x1xf32> to vector<16x8xf32>
    %801 = vector.broadcast %799 : vector<1x8xf32> to vector<16x8xf32>
    %802 = arith.mulf %800, %801 : vector<16x8xf32>
    %803 = arith.addf %792, %802 : vector<16x8xf32>
    %804 = arith.addf %703, %803 : vector<16x8xf32>
    %c0_226 = arith.constant 0 : index
    %c24 = arith.constant 24 : index
    %805 = vector.load %arg14[%c0_226, %c24] : memref<32x32xf32, #tpu.memory_space<vmem>>, vector<16x8xf32>
    tpu.vector_store %arg14[%c0_226, %c24], %804 {strides = array<i32>} : memref<32x32xf32, #tpu.memory_space<vmem>>, vector<16x8xf32>,
    %c1_227 = arith.constant 1 : index
    %c0_228 = arith.constant 0 : index
    %c0_229 = arith.constant 0 : index
    %806 = vector.load %arg2[%c1_227, %c0_228, %c0_229] : memref<2x16x1xf32, #tpu.memory_space<vmem>>, vector<1x16x1xf32>
    %807 = vector.shape_cast %806 : vector<1x16x1xf32> to vector<16x1xf32>
    %c1_230 = arith.constant 1 : index
    %c0_231 = arith.constant 0 : index
    %c0_232 = arith.constant 0 : index
    %808 = vector.load %arg3[%c1_230, %c0_231, %c0_232] : memref<2x1x16xf32, #tpu.memory_space<vmem>>, vector<1x1x16xf32>
    %809 = vector.shape_cast %808 : vector<1x1x16xf32> to vector<1x16xf32>
    %810 = vector.broadcast %807 : vector<16x1xf32> to vector<16x16xf32>
    %811 = vector.broadcast %809 : vector<1x16xf32> to vector<16x16xf32>
    %812 = arith.mulf %810, %811 : vector<16x16xf32>
    %cst_233 = arith.constant 1.000000e+00 : f32
    %813 = vector.broadcast %cst_233 : f32 to vector<16x16xf32>
    %814 = arith.subf %812, %813 : vector<16x16xf32>
    %cst_234 = arith.constant 1.000000e+04 : f32
    %815 = vector.broadcast %cst_234 : f32 to vector<16x16xf32>
    %816 = arith.mulf %814, %815 : vector<16x16xf32>
    %817 = vector.extract_strided_slice %19 {offsets = [16, 0], sizes = [16, 8], strides = [1, 1]} : vector<32x32xf32> to vector<16x8xf32>
    %818 = vector.extract_strided_slice %20 {offsets = [16, 0], sizes = [16, 8], strides = [1, 1]} : vector<32x32xf32> to vector<16x8xf32>
    %819 = vector.extract_strided_slice %21 {offsets = [16, 0], sizes = [16, 8], strides = [1, 1]} : vector<32x32xf32> to vector<16x8xf32>
    %820 = tpu.transpose %818, [1, 0] : vector<16x8xf32> -> vector<8x16xf32>
    %cst_235 = arith.constant dense<0.000000e+00> : vector<16x16xf32>
    %821 = tpu.matmul %817, %820, %cst_235 {dimension_numbers = #tpu.dot_dimension_numbers<[1], [0], [0], [1], [0, 0, 1, 1], [], []>} : vector<16x8xf32>, vector<8x16xf32>, vector<16x16xf32> -> vector<16x16xf32>
    %cst_236 = arith.constant dense<0.000000e+00> : vector<16x9xf32>
    %822 = tpu.matmul %817, %22, %cst_236 {dimension_numbers = #tpu.dot_dimension_numbers<[1], [0], [0], [1], [0, 0, 1, 1], [], []>} : vector<16x8xf32>, vector<8x9xf32>, vector<16x9xf32> -> vector<16x9xf32>
    %c-4_i32_237 = arith.constant -4 : i32
    %823 = vector.broadcast %c-4_i32_237 : i32 to vector<16x16xi32>
    %824 = arith.cmpi eq, %26, %823 : vector<16x16xi32>
    %825 = vector.extract_strided_slice %822 {offsets = [0, 0], sizes = [16, 1], strides = [1, 1]} : vector<16x9xf32> to vector<16x1xf32>
    %cst_238 = arith.constant 0.000000e+00 : f32
    %826 = vector.shape_cast %825 : vector<16x1xf32> to vector<16x1xf32>
    %827 = vector.broadcast %826 : vector<16x1xf32> to vector<16x16xf32>
    %828 = vector.broadcast %cst_238 : f32 to vector<16x16xf32>
    %829 = arith.select %824, %827, %828 : vector<16x16xi1>, vector<16x16xf32>
    %830 = arith.addf %821, %829 : vector<16x16xf32>
    %c-3_i32_239 = arith.constant -3 : i32
    %831 = vector.broadcast %c-3_i32_239 : i32 to vector<16x16xi32>
    %832 = arith.cmpi eq, %26, %831 : vector<16x16xi32>
    %833 = vector.extract_strided_slice %822 {offsets = [0, 1], sizes = [16, 1], strides = [1, 1]} : vector<16x9xf32> to vector<16x1xf32>
    %cst_240 = arith.constant 0.000000e+00 : f32
    %834 = vector.shape_cast %833 : vector<16x1xf32> to vector<16x1xf32>
    %835 = vector.broadcast %834 : vector<16x1xf32> to vector<16x16xf32>
    %836 = vector.broadcast %cst_240 : f32 to vector<16x16xf32>
    %837 = arith.select %832, %835, %836 : vector<16x16xi1>, vector<16x16xf32>
    %838 = arith.addf %830, %837 : vector<16x16xf32>
    %c-2_i32_241 = arith.constant -2 : i32
    %839 = vector.broadcast %c-2_i32_241 : i32 to vector<16x16xi32>
    %840 = arith.cmpi eq, %26, %839 : vector<16x16xi32>
    %841 = vector.extract_strided_slice %822 {offsets = [0, 2], sizes = [16, 1], strides = [1, 1]} : vector<16x9xf32> to vector<16x1xf32>
    %cst_242 = arith.constant 0.000000e+00 : f32
    %842 = vector.shape_cast %841 : vector<16x1xf32> to vector<16x1xf32>
    %843 = vector.broadcast %842 : vector<16x1xf32> to vector<16x16xf32>
    %844 = vector.broadcast %cst_242 : f32 to vector<16x16xf32>
    %845 = arith.select %840, %843, %844 : vector<16x16xi1>, vector<16x16xf32>
    %846 = arith.addf %838, %845 : vector<16x16xf32>
    %c-1_i32_243 = arith.constant -1 : i32
    %847 = vector.broadcast %c-1_i32_243 : i32 to vector<16x16xi32>
    %848 = arith.cmpi eq, %26, %847 : vector<16x16xi32>
    %849 = vector.extract_strided_slice %822 {offsets = [0, 3], sizes = [16, 1], strides = [1, 1]} : vector<16x9xf32> to vector<16x1xf32>
    %cst_244 = arith.constant 0.000000e+00 : f32
    %850 = vector.shape_cast %849 : vector<16x1xf32> to vector<16x1xf32>
    %851 = vector.broadcast %850 : vector<16x1xf32> to vector<16x16xf32>
    %852 = vector.broadcast %cst_244 : f32 to vector<16x16xf32>
    %853 = arith.select %848, %851, %852 : vector<16x16xi1>, vector<16x16xf32>
    %854 = arith.addf %846, %853 : vector<16x16xf32>
    %c0_i32_245 = arith.constant 0 : i32
    %855 = vector.broadcast %c0_i32_245 : i32 to vector<16x16xi32>
    %856 = arith.cmpi eq, %26, %855 : vector<16x16xi32>
    %857 = vector.extract_strided_slice %822 {offsets = [0, 4], sizes = [16, 1], strides = [1, 1]} : vector<16x9xf32> to vector<16x1xf32>
    %cst_246 = arith.constant 0.000000e+00 : f32
    %858 = vector.shape_cast %857 : vector<16x1xf32> to vector<16x1xf32>
    %859 = vector.broadcast %858 : vector<16x1xf32> to vector<16x16xf32>
    %860 = vector.broadcast %cst_246 : f32 to vector<16x16xf32>
    %861 = arith.select %856, %859, %860 : vector<16x16xi1>, vector<16x16xf32>
    %862 = arith.addf %854, %861 : vector<16x16xf32>
    %c1_i32_247 = arith.constant 1 : i32
    %863 = vector.broadcast %c1_i32_247 : i32 to vector<16x16xi32>
    %864 = arith.cmpi eq, %26, %863 : vector<16x16xi32>
    %865 = vector.extract_strided_slice %822 {offsets = [0, 5], sizes = [16, 1], strides = [1, 1]} : vector<16x9xf32> to vector<16x1xf32>
    %cst_248 = arith.constant 0.000000e+00 : f32
    %866 = vector.shape_cast %865 : vector<16x1xf32> to vector<16x1xf32>
    %867 = vector.broadcast %866 : vector<16x1xf32> to vector<16x16xf32>
    %868 = vector.broadcast %cst_248 : f32 to vector<16x16xf32>
    %869 = arith.select %864, %867, %868 : vector<16x16xi1>, vector<16x16xf32>
    %870 = arith.addf %862, %869 : vector<16x16xf32>
    %c2_i32_249 = arith.constant 2 : i32
    %871 = vector.broadcast %c2_i32_249 : i32 to vector<16x16xi32>
    %872 = arith.cmpi eq, %26, %871 : vector<16x16xi32>
    %873 = vector.extract_strided_slice %822 {offsets = [0, 6], sizes = [16, 1], strides = [1, 1]} : vector<16x9xf32> to vector<16x1xf32>
    %cst_250 = arith.constant 0.000000e+00 : f32
    %874 = vector.shape_cast %873 : vector<16x1xf32> to vector<16x1xf32>
    %875 = vector.broadcast %874 : vector<16x1xf32> to vector<16x16xf32>
    %876 = vector.broadcast %cst_250 : f32 to vector<16x16xf32>
    %877 = arith.select %872, %875, %876 : vector<16x16xi1>, vector<16x16xf32>
    %878 = arith.addf %870, %877 : vector<16x16xf32>
    %c3_i32_251 = arith.constant 3 : i32
    %879 = vector.broadcast %c3_i32_251 : i32 to vector<16x16xi32>
    %880 = arith.cmpi eq, %26, %879 : vector<16x16xi32>
    %881 = vector.extract_strided_slice %822 {offsets = [0, 7], sizes = [16, 1], strides = [1, 1]} : vector<16x9xf32> to vector<16x1xf32>
    %cst_252 = arith.constant 0.000000e+00 : f32
    %882 = vector.shape_cast %881 : vector<16x1xf32> to vector<16x1xf32>
    %883 = vector.broadcast %882 : vector<16x1xf32> to vector<16x16xf32>
    %884 = vector.broadcast %cst_252 : f32 to vector<16x16xf32>
    %885 = arith.select %880, %883, %884 : vector<16x16xi1>, vector<16x16xf32>
    %886 = arith.addf %878, %885 : vector<16x16xf32>
    %c4_i32_253 = arith.constant 4 : i32
    %887 = vector.broadcast %c4_i32_253 : i32 to vector<16x16xi32>
    %888 = arith.cmpi eq, %26, %887 : vector<16x16xi32>
    %889 = vector.extract_strided_slice %822 {offsets = [0, 8], sizes = [16, 1], strides = [1, 1]} : vector<16x9xf32> to vector<16x1xf32>
    %cst_254 = arith.constant 0.000000e+00 : f32
    %890 = vector.shape_cast %889 : vector<16x1xf32> to vector<16x1xf32>
    %891 = vector.broadcast %890 : vector<16x1xf32> to vector<16x16xf32>
    %892 = vector.broadcast %cst_254 : f32 to vector<16x16xf32>
    %893 = arith.select %888, %891, %892 : vector<16x16xi1>, vector<16x16xf32>
    %894 = arith.addf %886, %893 : vector<16x16xf32>
    %895 = arith.addf %894, %816 : vector<16x16xf32>
    %cst_255 = arith.constant dense<0xFF800000> : vector<16xf32>
    %896 = vector.multi_reduction <maximumf>, %895, %cst_255 [1] : vector<16x16xf32> to vector<16xf32>
    %897 = vector.shape_cast %896 : vector<16xf32> to vector<16x1xf32>
    %898 = vector.broadcast %897 : vector<16x1xf32> to vector<16x16xf32>
    %899 = arith.subf %895, %898 : vector<16x16xf32>
    %900 = math.exp %899 : vector<16x16xf32>
    %cst_256 = arith.constant dense<0.000000e+00> : vector<16xf32>
    %901 = vector.multi_reduction <add>, %900, %cst_256 [1] : vector<16x16xf32> to vector<16xf32>
    %902 = vector.shape_cast %901 : vector<16xf32> to vector<16x1xf32>
    %903 = tpu.reciprocal %902 {approx = true} : vector<16x1xf32> -> vector<16x1xf32>
    %904 = vector.broadcast %903 : vector<16x1xf32> to vector<16x16xf32>
    %905 = arith.mulf %900, %904 : vector<16x16xf32>
    %cst_257 = arith.constant dense<0.000000e+00> : vector<16x8xf32>
    %906 = tpu.matmul %905, %819, %cst_257 {dimension_numbers = #tpu.dot_dimension_numbers<[1], [0], [0], [1], [0, 0, 1, 1], [], []>} : vector<16x16xf32>, vector<16x8xf32>, vector<16x8xf32> -> vector<16x8xf32>
    %cst_258 = arith.constant 0.000000e+00 : f32
    %907 = vector.broadcast %cst_258 : f32 to vector<16x8xf32>
    %c-4_i32_259 = arith.constant -4 : i32
    %908 = vector.broadcast %c-4_i32_259 : i32 to vector<16x16xi32>
    %909 = arith.cmpi eq, %26, %908 : vector<16x16xi32>
    %cst_260 = arith.constant 0.000000e+00 : f32
    %910 = vector.broadcast %cst_260 : f32 to vector<16x16xf32>
    %911 = arith.select %909, %905, %910 : vector<16x16xi1>, vector<16x16xf32>
    %cst_261 = arith.constant dense<0.000000e+00> : vector<16xf32>
    %912 = vector.multi_reduction <add>, %911, %cst_261 [1] : vector<16x16xf32> to vector<16xf32>
    %913 = vector.shape_cast %912 : vector<16xf32> to vector<16x1xf32>
    %914 = vector.extract_strided_slice %23 {offsets = [0, 0], sizes = [1, 8], strides = [1, 1]} : vector<9x8xf32> to vector<1x8xf32>
    %915 = vector.broadcast %913 : vector<16x1xf32> to vector<16x8xf32>
    %916 = vector.broadcast %914 : vector<1x8xf32> to vector<16x8xf32>
    %917 = arith.mulf %915, %916 : vector<16x8xf32>
    %918 = arith.addf %907, %917 : vector<16x8xf32>
    %c-3_i32_262 = arith.constant -3 : i32
    %919 = vector.broadcast %c-3_i32_262 : i32 to vector<16x16xi32>
    %920 = arith.cmpi eq, %26, %919 : vector<16x16xi32>
    %cst_263 = arith.constant 0.000000e+00 : f32
    %921 = vector.broadcast %cst_263 : f32 to vector<16x16xf32>
    %922 = arith.select %920, %905, %921 : vector<16x16xi1>, vector<16x16xf32>
    %cst_264 = arith.constant dense<0.000000e+00> : vector<16xf32>
    %923 = vector.multi_reduction <add>, %922, %cst_264 [1] : vector<16x16xf32> to vector<16xf32>
    %924 = vector.shape_cast %923 : vector<16xf32> to vector<16x1xf32>
    %925 = vector.extract_strided_slice %23 {offsets = [1, 0], sizes = [1, 8], strides = [1, 1]} : vector<9x8xf32> to vector<1x8xf32>
    %926 = vector.broadcast %924 : vector<16x1xf32> to vector<16x8xf32>
    %927 = vector.broadcast %925 : vector<1x8xf32> to vector<16x8xf32>
    %928 = arith.mulf %926, %927 : vector<16x8xf32>
    %929 = arith.addf %918, %928 : vector<16x8xf32>
    %c-2_i32_265 = arith.constant -2 : i32
    %930 = vector.broadcast %c-2_i32_265 : i32 to vector<16x16xi32>
    %931 = arith.cmpi eq, %26, %930 : vector<16x16xi32>
    %cst_266 = arith.constant 0.000000e+00 : f32
    %932 = vector.broadcast %cst_266 : f32 to vector<16x16xf32>
    %933 = arith.select %931, %905, %932 : vector<16x16xi1>, vector<16x16xf32>
    %cst_267 = arith.constant dense<0.000000e+00> : vector<16xf32>
    %934 = vector.multi_reduction <add>, %933, %cst_267 [1] : vector<16x16xf32> to vector<16xf32>
    %935 = vector.shape_cast %934 : vector<16xf32> to vector<16x1xf32>
    %936 = vector.extract_strided_slice %23 {offsets = [2, 0], sizes = [1, 8], strides = [1, 1]} : vector<9x8xf32> to vector<1x8xf32>
    %937 = vector.broadcast %935 : vector<16x1xf32> to vector<16x8xf32>
    %938 = vector.broadcast %936 : vector<1x8xf32> to vector<16x8xf32>
    %939 = arith.mulf %937, %938 : vector<16x8xf32>
    %940 = arith.addf %929, %939 : vector<16x8xf32>
    %c-1_i32_268 = arith.constant -1 : i32
    %941 = vector.broadcast %c-1_i32_268 : i32 to vector<16x16xi32>
    %942 = arith.cmpi eq, %26, %941 : vector<16x16xi32>
    %cst_269 = arith.constant 0.000000e+00 : f32
    %943 = vector.broadcast %cst_269 : f32 to vector<16x16xf32>
    %944 = arith.select %942, %905, %943 : vector<16x16xi1>, vector<16x16xf32>
    %cst_270 = arith.constant dense<0.000000e+00> : vector<16xf32>
    %945 = vector.multi_reduction <add>, %944, %cst_270 [1] : vector<16x16xf32> to vector<16xf32>
    %946 = vector.shape_cast %945 : vector<16xf32> to vector<16x1xf32>
    %947 = vector.extract_strided_slice %23 {offsets = [3, 0], sizes = [1, 8], strides = [1, 1]} : vector<9x8xf32> to vector<1x8xf32>
    %948 = vector.broadcast %946 : vector<16x1xf32> to vector<16x8xf32>
    %949 = vector.broadcast %947 : vector<1x8xf32> to vector<16x8xf32>
    %950 = arith.mulf %948, %949 : vector<16x8xf32>
    %951 = arith.addf %940, %950 : vector<16x8xf32>
    %c0_i32_271 = arith.constant 0 : i32
    %952 = vector.broadcast %c0_i32_271 : i32 to vector<16x16xi32>
    %953 = arith.cmpi eq, %26, %952 : vector<16x16xi32>
    %cst_272 = arith.constant 0.000000e+00 : f32
    %954 = vector.broadcast %cst_272 : f32 to vector<16x16xf32>
    %955 = arith.select %953, %905, %954 : vector<16x16xi1>, vector<16x16xf32>
    %cst_273 = arith.constant dense<0.000000e+00> : vector<16xf32>
    %956 = vector.multi_reduction <add>, %955, %cst_273 [1] : vector<16x16xf32> to vector<16xf32>
    %957 = vector.shape_cast %956 : vector<16xf32> to vector<16x1xf32>
    %958 = vector.extract_strided_slice %23 {offsets = [4, 0], sizes = [1, 8], strides = [1, 1]} : vector<9x8xf32> to vector<1x8xf32>
    %959 = vector.broadcast %957 : vector<16x1xf32> to vector<16x8xf32>
    %960 = vector.broadcast %958 : vector<1x8xf32> to vector<16x8xf32>
    %961 = arith.mulf %959, %960 : vector<16x8xf32>
    %962 = arith.addf %951, %961 : vector<16x8xf32>
    %c1_i32_274 = arith.constant 1 : i32
    %963 = vector.broadcast %c1_i32_274 : i32 to vector<16x16xi32>
    %964 = arith.cmpi eq, %26, %963 : vector<16x16xi32>
    %cst_275 = arith.constant 0.000000e+00 : f32
    %965 = vector.broadcast %cst_275 : f32 to vector<16x16xf32>
    %966 = arith.select %964, %905, %965 : vector<16x16xi1>, vector<16x16xf32>
    %cst_276 = arith.constant dense<0.000000e+00> : vector<16xf32>
    %967 = vector.multi_reduction <add>, %966, %cst_276 [1] : vector<16x16xf32> to vector<16xf32>
    %968 = vector.shape_cast %967 : vector<16xf32> to vector<16x1xf32>
    %969 = vector.extract_strided_slice %23 {offsets = [5, 0], sizes = [1, 8], strides = [1, 1]} : vector<9x8xf32> to vector<1x8xf32>
    %970 = vector.broadcast %968 : vector<16x1xf32> to vector<16x8xf32>
    %971 = vector.broadcast %969 : vector<1x8xf32> to vector<16x8xf32>
    %972 = arith.mulf %970, %971 : vector<16x8xf32>
    %973 = arith.addf %962, %972 : vector<16x8xf32>
    %c2_i32_277 = arith.constant 2 : i32
    %974 = vector.broadcast %c2_i32_277 : i32 to vector<16x16xi32>
    %975 = arith.cmpi eq, %26, %974 : vector<16x16xi32>
    %cst_278 = arith.constant 0.000000e+00 : f32
    %976 = vector.broadcast %cst_278 : f32 to vector<16x16xf32>
    %977 = arith.select %975, %905, %976 : vector<16x16xi1>, vector<16x16xf32>
    %cst_279 = arith.constant dense<0.000000e+00> : vector<16xf32>
    %978 = vector.multi_reduction <add>, %977, %cst_279 [1] : vector<16x16xf32> to vector<16xf32>
    %979 = vector.shape_cast %978 : vector<16xf32> to vector<16x1xf32>
    %980 = vector.extract_strided_slice %23 {offsets = [6, 0], sizes = [1, 8], strides = [1, 1]} : vector<9x8xf32> to vector<1x8xf32>
    %981 = vector.broadcast %979 : vector<16x1xf32> to vector<16x8xf32>
    %982 = vector.broadcast %980 : vector<1x8xf32> to vector<16x8xf32>
    %983 = arith.mulf %981, %982 : vector<16x8xf32>
    %984 = arith.addf %973, %983 : vector<16x8xf32>
    %c3_i32_280 = arith.constant 3 : i32
    %985 = vector.broadcast %c3_i32_280 : i32 to vector<16x16xi32>
    %986 = arith.cmpi eq, %26, %985 : vector<16x16xi32>
    %cst_281 = arith.constant 0.000000e+00 : f32
    %987 = vector.broadcast %cst_281 : f32 to vector<16x16xf32>
    %988 = arith.select %986, %905, %987 : vector<16x16xi1>, vector<16x16xf32>
    %cst_282 = arith.constant dense<0.000000e+00> : vector<16xf32>
    %989 = vector.multi_reduction <add>, %988, %cst_282 [1] : vector<16x16xf32> to vector<16xf32>
    %990 = vector.shape_cast %989 : vector<16xf32> to vector<16x1xf32>
    %991 = vector.extract_strided_slice %23 {offsets = [7, 0], sizes = [1, 8], strides = [1, 1]} : vector<9x8xf32> to vector<1x8xf32>
    %992 = vector.broadcast %990 : vector<16x1xf32> to vector<16x8xf32>
    %993 = vector.broadcast %991 : vector<1x8xf32> to vector<16x8xf32>
    %994 = arith.mulf %992, %993 : vector<16x8xf32>
    %995 = arith.addf %984, %994 : vector<16x8xf32>
    %c4_i32_283 = arith.constant 4 : i32
    %996 = vector.broadcast %c4_i32_283 : i32 to vector<16x16xi32>
    %997 = arith.cmpi eq, %26, %996 : vector<16x16xi32>
    %cst_284 = arith.constant 0.000000e+00 : f32
    %998 = vector.broadcast %cst_284 : f32 to vector<16x16xf32>
    %999 = arith.select %997, %905, %998 : vector<16x16xi1>, vector<16x16xf32>
    %cst_285 = arith.constant dense<0.000000e+00> : vector<16xf32>
    %1000 = vector.multi_reduction <add>, %999, %cst_285 [1] : vector<16x16xf32> to vector<16xf32>
    %1001 = vector.shape_cast %1000 : vector<16xf32> to vector<16x1xf32>
    %1002 = vector.extract_strided_slice %23 {offsets = [8, 0], sizes = [1, 8], strides = [1, 1]} : vector<9x8xf32> to vector<1x8xf32>
    %1003 = vector.broadcast %1001 : vector<16x1xf32> to vector<16x8xf32>
    %1004 = vector.broadcast %1002 : vector<1x8xf32> to vector<16x8xf32>
    %1005 = arith.mulf %1003, %1004 : vector<16x8xf32>
    %1006 = arith.addf %995, %1005 : vector<16x8xf32>
    %1007 = arith.addf %906, %1006 : vector<16x8xf32>
    %c16_286 = arith.constant 16 : index
    %c0_287 = arith.constant 0 : index
    %1008 = vector.load %arg14[%c16_286, %c0_287] : memref<32x32xf32, #tpu.memory_space<vmem>>, vector<16x8xf32>
    tpu.vector_store %arg14[%c16_286, %c0_287], %1007 {strides = array<i32>} : memref<32x32xf32, #tpu.memory_space<vmem>>, vector<16x8xf32>,
    %1009 = vector.extract_strided_slice %19 {offsets = [16, 8], sizes = [16, 8], strides = [1, 1]} : vector<32x32xf32> to vector<16x8xf32>
    %1010 = vector.extract_strided_slice %20 {offsets = [16, 8], sizes = [16, 8], strides = [1, 1]} : vector<32x32xf32> to vector<16x8xf32>
    %1011 = vector.extract_strided_slice %21 {offsets = [16, 8], sizes = [16, 8], strides = [1, 1]} : vector<32x32xf32> to vector<16x8xf32>
    %1012 = tpu.transpose %1010, [1, 0] : vector<16x8xf32> -> vector<8x16xf32>
    %cst_288 = arith.constant dense<0.000000e+00> : vector<16x16xf32>
    %1013 = tpu.matmul %1009, %1012, %cst_288 {dimension_numbers = #tpu.dot_dimension_numbers<[1], [0], [0], [1], [0, 0, 1, 1], [], []>} : vector<16x8xf32>, vector<8x16xf32>, vector<16x16xf32> -> vector<16x16xf32>
    %cst_289 = arith.constant dense<0.000000e+00> : vector<16x9xf32>
    %1014 = tpu.matmul %1009, %22, %cst_289 {dimension_numbers = #tpu.dot_dimension_numbers<[1], [0], [0], [1], [0, 0, 1, 1], [], []>} : vector<16x8xf32>, vector<8x9xf32>, vector<16x9xf32> -> vector<16x9xf32>
    %c-4_i32_290 = arith.constant -4 : i32
    %1015 = vector.broadcast %c-4_i32_290 : i32 to vector<16x16xi32>
    %1016 = arith.cmpi eq, %26, %1015 : vector<16x16xi32>
    %1017 = vector.extract_strided_slice %1014 {offsets = [0, 0], sizes = [16, 1], strides = [1, 1]} : vector<16x9xf32> to vector<16x1xf32>
    %cst_291 = arith.constant 0.000000e+00 : f32
    %1018 = vector.shape_cast %1017 : vector<16x1xf32> to vector<16x1xf32>
    %1019 = vector.broadcast %1018 : vector<16x1xf32> to vector<16x16xf32>
    %1020 = vector.broadcast %cst_291 : f32 to vector<16x16xf32>
    %1021 = arith.select %1016, %1019, %1020 : vector<16x16xi1>, vector<16x16xf32>
    %1022 = arith.addf %1013, %1021 : vector<16x16xf32>
    %c-3_i32_292 = arith.constant -3 : i32
    %1023 = vector.broadcast %c-3_i32_292 : i32 to vector<16x16xi32>
    %1024 = arith.cmpi eq, %26, %1023 : vector<16x16xi32>
    %1025 = vector.extract_strided_slice %1014 {offsets = [0, 1], sizes = [16, 1], strides = [1, 1]} : vector<16x9xf32> to vector<16x1xf32>
    %cst_293 = arith.constant 0.000000e+00 : f32
    %1026 = vector.shape_cast %1025 : vector<16x1xf32> to vector<16x1xf32>
    %1027 = vector.broadcast %1026 : vector<16x1xf32> to vector<16x16xf32>
    %1028 = vector.broadcast %cst_293 : f32 to vector<16x16xf32>
    %1029 = arith.select %1024, %1027, %1028 : vector<16x16xi1>, vector<16x16xf32>
    %1030 = arith.addf %1022, %1029 : vector<16x16xf32>
    %c-2_i32_294 = arith.constant -2 : i32
    %1031 = vector.broadcast %c-2_i32_294 : i32 to vector<16x16xi32>
    %1032 = arith.cmpi eq, %26, %1031 : vector<16x16xi32>
    %1033 = vector.extract_strided_slice %1014 {offsets = [0, 2], sizes = [16, 1], strides = [1, 1]} : vector<16x9xf32> to vector<16x1xf32>
    %cst_295 = arith.constant 0.000000e+00 : f32
    %1034 = vector.shape_cast %1033 : vector<16x1xf32> to vector<16x1xf32>
    %1035 = vector.broadcast %1034 : vector<16x1xf32> to vector<16x16xf32>
    %1036 = vector.broadcast %cst_295 : f32 to vector<16x16xf32>
    %1037 = arith.select %1032, %1035, %1036 : vector<16x16xi1>, vector<16x16xf32>
    %1038 = arith.addf %1030, %1037 : vector<16x16xf32>
    %c-1_i32_296 = arith.constant -1 : i32
    %1039 = vector.broadcast %c-1_i32_296 : i32 to vector<16x16xi32>
    %1040 = arith.cmpi eq, %26, %1039 : vector<16x16xi32>
    %1041 = vector.extract_strided_slice %1014 {offsets = [0, 3], sizes = [16, 1], strides = [1, 1]} : vector<16x9xf32> to vector<16x1xf32>
    %cst_297 = arith.constant 0.000000e+00 : f32
    %1042 = vector.shape_cast %1041 : vector<16x1xf32> to vector<16x1xf32>
    %1043 = vector.broadcast %1042 : vector<16x1xf32> to vector<16x16xf32>
    %1044 = vector.broadcast %cst_297 : f32 to vector<16x16xf32>
    %1045 = arith.select %1040, %1043, %1044 : vector<16x16xi1>, vector<16x16xf32>
    %1046 = arith.addf %1038, %1045 : vector<16x16xf32>
    %c0_i32_298 = arith.constant 0 : i32
    %1047 = vector.broadcast %c0_i32_298 : i32 to vector<16x16xi32>
    %1048 = arith.cmpi eq, %26, %1047 : vector<16x16xi32>
    %1049 = vector.extract_strided_slice %1014 {offsets = [0, 4], sizes = [16, 1], strides = [1, 1]} : vector<16x9xf32> to vector<16x1xf32>
    %cst_299 = arith.constant 0.000000e+00 : f32
    %1050 = vector.shape_cast %1049 : vector<16x1xf32> to vector<16x1xf32>
    %1051 = vector.broadcast %1050 : vector<16x1xf32> to vector<16x16xf32>
    %1052 = vector.broadcast %cst_299 : f32 to vector<16x16xf32>
    %1053 = arith.select %1048, %1051, %1052 : vector<16x16xi1>, vector<16x16xf32>
    %1054 = arith.addf %1046, %1053 : vector<16x16xf32>
    %c1_i32_300 = arith.constant 1 : i32
    %1055 = vector.broadcast %c1_i32_300 : i32 to vector<16x16xi32>
    %1056 = arith.cmpi eq, %26, %1055 : vector<16x16xi32>
    %1057 = vector.extract_strided_slice %1014 {offsets = [0, 5], sizes = [16, 1], strides = [1, 1]} : vector<16x9xf32> to vector<16x1xf32>
    %cst_301 = arith.constant 0.000000e+00 : f32
    %1058 = vector.shape_cast %1057 : vector<16x1xf32> to vector<16x1xf32>
    %1059 = vector.broadcast %1058 : vector<16x1xf32> to vector<16x16xf32>
    %1060 = vector.broadcast %cst_301 : f32 to vector<16x16xf32>
    %1061 = arith.select %1056, %1059, %1060 : vector<16x16xi1>, vector<16x16xf32>
    %1062 = arith.addf %1054, %1061 : vector<16x16xf32>
    %c2_i32_302 = arith.constant 2 : i32
    %1063 = vector.broadcast %c2_i32_302 : i32 to vector<16x16xi32>
    %1064 = arith.cmpi eq, %26, %1063 : vector<16x16xi32>
    %1065 = vector.extract_strided_slice %1014 {offsets = [0, 6], sizes = [16, 1], strides = [1, 1]} : vector<16x9xf32> to vector<16x1xf32>
    %cst_303 = arith.constant 0.000000e+00 : f32
    %1066 = vector.shape_cast %1065 : vector<16x1xf32> to vector<16x1xf32>
    %1067 = vector.broadcast %1066 : vector<16x1xf32> to vector<16x16xf32>
    %1068 = vector.broadcast %cst_303 : f32 to vector<16x16xf32>
    %1069 = arith.select %1064, %1067, %1068 : vector<16x16xi1>, vector<16x16xf32>
    %1070 = arith.addf %1062, %1069 : vector<16x16xf32>
    %c3_i32_304 = arith.constant 3 : i32
    %1071 = vector.broadcast %c3_i32_304 : i32 to vector<16x16xi32>
    %1072 = arith.cmpi eq, %26, %1071 : vector<16x16xi32>
    %1073 = vector.extract_strided_slice %1014 {offsets = [0, 7], sizes = [16, 1], strides = [1, 1]} : vector<16x9xf32> to vector<16x1xf32>
    %cst_305 = arith.constant 0.000000e+00 : f32
    %1074 = vector.shape_cast %1073 : vector<16x1xf32> to vector<16x1xf32>
    %1075 = vector.broadcast %1074 : vector<16x1xf32> to vector<16x16xf32>
    %1076 = vector.broadcast %cst_305 : f32 to vector<16x16xf32>
    %1077 = arith.select %1072, %1075, %1076 : vector<16x16xi1>, vector<16x16xf32>
    %1078 = arith.addf %1070, %1077 : vector<16x16xf32>
    %c4_i32_306 = arith.constant 4 : i32
    %1079 = vector.broadcast %c4_i32_306 : i32 to vector<16x16xi32>
    %1080 = arith.cmpi eq, %26, %1079 : vector<16x16xi32>
    %1081 = vector.extract_strided_slice %1014 {offsets = [0, 8], sizes = [16, 1], strides = [1, 1]} : vector<16x9xf32> to vector<16x1xf32>
    %cst_307 = arith.constant 0.000000e+00 : f32
    %1082 = vector.shape_cast %1081 : vector<16x1xf32> to vector<16x1xf32>
    %1083 = vector.broadcast %1082 : vector<16x1xf32> to vector<16x16xf32>
    %1084 = vector.broadcast %cst_307 : f32 to vector<16x16xf32>
    %1085 = arith.select %1080, %1083, %1084 : vector<16x16xi1>, vector<16x16xf32>
    %1086 = arith.addf %1078, %1085 : vector<16x16xf32>
    %1087 = arith.addf %1086, %816 : vector<16x16xf32>
    %cst_308 = arith.constant dense<0xFF800000> : vector<16xf32>
    %1088 = vector.multi_reduction <maximumf>, %1087, %cst_308 [1] : vector<16x16xf32> to vector<16xf32>
    %1089 = vector.shape_cast %1088 : vector<16xf32> to vector<16x1xf32>
    %1090 = vector.broadcast %1089 : vector<16x1xf32> to vector<16x16xf32>
    %1091 = arith.subf %1087, %1090 : vector<16x16xf32>
    %1092 = math.exp %1091 : vector<16x16xf32>
    %cst_309 = arith.constant dense<0.000000e+00> : vector<16xf32>
    %1093 = vector.multi_reduction <add>, %1092, %cst_309 [1] : vector<16x16xf32> to vector<16xf32>
    %1094 = vector.shape_cast %1093 : vector<16xf32> to vector<16x1xf32>
    %1095 = tpu.reciprocal %1094 {approx = true} : vector<16x1xf32> -> vector<16x1xf32>
    %1096 = vector.broadcast %1095 : vector<16x1xf32> to vector<16x16xf32>
    %1097 = arith.mulf %1092, %1096 : vector<16x16xf32>
    %cst_310 = arith.constant dense<0.000000e+00> : vector<16x8xf32>
    %1098 = tpu.matmul %1097, %1011, %cst_310 {dimension_numbers = #tpu.dot_dimension_numbers<[1], [0], [0], [1], [0, 0, 1, 1], [], []>} : vector<16x16xf32>, vector<16x8xf32>, vector<16x8xf32> -> vector<16x8xf32>
    %cst_311 = arith.constant 0.000000e+00 : f32
    %1099 = vector.broadcast %cst_311 : f32 to vector<16x8xf32>
    %c-4_i32_312 = arith.constant -4 : i32
    %1100 = vector.broadcast %c-4_i32_312 : i32 to vector<16x16xi32>
    %1101 = arith.cmpi eq, %26, %1100 : vector<16x16xi32>
    %cst_313 = arith.constant 0.000000e+00 : f32
    %1102 = vector.broadcast %cst_313 : f32 to vector<16x16xf32>
    %1103 = arith.select %1101, %1097, %1102 : vector<16x16xi1>, vector<16x16xf32>
    %cst_314 = arith.constant dense<0.000000e+00> : vector<16xf32>
    %1104 = vector.multi_reduction <add>, %1103, %cst_314 [1] : vector<16x16xf32> to vector<16xf32>
    %1105 = vector.shape_cast %1104 : vector<16xf32> to vector<16x1xf32>
    %1106 = vector.extract_strided_slice %23 {offsets = [0, 0], sizes = [1, 8], strides = [1, 1]} : vector<9x8xf32> to vector<1x8xf32>
    %1107 = vector.broadcast %1105 : vector<16x1xf32> to vector<16x8xf32>
    %1108 = vector.broadcast %1106 : vector<1x8xf32> to vector<16x8xf32>
    %1109 = arith.mulf %1107, %1108 : vector<16x8xf32>
    %1110 = arith.addf %1099, %1109 : vector<16x8xf32>
    %c-3_i32_315 = arith.constant -3 : i32
    %1111 = vector.broadcast %c-3_i32_315 : i32 to vector<16x16xi32>
    %1112 = arith.cmpi eq, %26, %1111 : vector<16x16xi32>
    %cst_316 = arith.constant 0.000000e+00 : f32
    %1113 = vector.broadcast %cst_316 : f32 to vector<16x16xf32>
    %1114 = arith.select %1112, %1097, %1113 : vector<16x16xi1>, vector<16x16xf32>
    %cst_317 = arith.constant dense<0.000000e+00> : vector<16xf32>
    %1115 = vector.multi_reduction <add>, %1114, %cst_317 [1] : vector<16x16xf32> to vector<16xf32>
    %1116 = vector.shape_cast %1115 : vector<16xf32> to vector<16x1xf32>
    %1117 = vector.extract_strided_slice %23 {offsets = [1, 0], sizes = [1, 8], strides = [1, 1]} : vector<9x8xf32> to vector<1x8xf32>
    %1118 = vector.broadcast %1116 : vector<16x1xf32> to vector<16x8xf32>
    %1119 = vector.broadcast %1117 : vector<1x8xf32> to vector<16x8xf32>
    %1120 = arith.mulf %1118, %1119 : vector<16x8xf32>
    %1121 = arith.addf %1110, %1120 : vector<16x8xf32>
    %c-2_i32_318 = arith.constant -2 : i32
    %1122 = vector.broadcast %c-2_i32_318 : i32 to vector<16x16xi32>
    %1123 = arith.cmpi eq, %26, %1122 : vector<16x16xi32>
    %cst_319 = arith.constant 0.000000e+00 : f32
    %1124 = vector.broadcast %cst_319 : f32 to vector<16x16xf32>
    %1125 = arith.select %1123, %1097, %1124 : vector<16x16xi1>, vector<16x16xf32>
    %cst_320 = arith.constant dense<0.000000e+00> : vector<16xf32>
    %1126 = vector.multi_reduction <add>, %1125, %cst_320 [1] : vector<16x16xf32> to vector<16xf32>
    %1127 = vector.shape_cast %1126 : vector<16xf32> to vector<16x1xf32>
    %1128 = vector.extract_strided_slice %23 {offsets = [2, 0], sizes = [1, 8], strides = [1, 1]} : vector<9x8xf32> to vector<1x8xf32>
    %1129 = vector.broadcast %1127 : vector<16x1xf32> to vector<16x8xf32>
    %1130 = vector.broadcast %1128 : vector<1x8xf32> to vector<16x8xf32>
    %1131 = arith.mulf %1129, %1130 : vector<16x8xf32>
    %1132 = arith.addf %1121, %1131 : vector<16x8xf32>
    %c-1_i32_321 = arith.constant -1 : i32
    %1133 = vector.broadcast %c-1_i32_321 : i32 to vector<16x16xi32>
    %1134 = arith.cmpi eq, %26, %1133 : vector<16x16xi32>
    %cst_322 = arith.constant 0.000000e+00 : f32
    %1135 = vector.broadcast %cst_322 : f32 to vector<16x16xf32>
    %1136 = arith.select %1134, %1097, %1135 : vector<16x16xi1>, vector<16x16xf32>
    %cst_323 = arith.constant dense<0.000000e+00> : vector<16xf32>
    %1137 = vector.multi_reduction <add>, %1136, %cst_323 [1] : vector<16x16xf32> to vector<16xf32>
    %1138 = vector.shape_cast %1137 : vector<16xf32> to vector<16x1xf32>
    %1139 = vector.extract_strided_slice %23 {offsets = [3, 0], sizes = [1, 8], strides = [1, 1]} : vector<9x8xf32> to vector<1x8xf32>
    %1140 = vector.broadcast %1138 : vector<16x1xf32> to vector<16x8xf32>
    %1141 = vector.broadcast %1139 : vector<1x8xf32> to vector<16x8xf32>
    %1142 = arith.mulf %1140, %1141 : vector<16x8xf32>
    %1143 = arith.addf %1132, %1142 : vector<16x8xf32>
    %c0_i32_324 = arith.constant 0 : i32
    %1144 = vector.broadcast %c0_i32_324 : i32 to vector<16x16xi32>
    %1145 = arith.cmpi eq, %26, %1144 : vector<16x16xi32>
    %cst_325 = arith.constant 0.000000e+00 : f32
    %1146 = vector.broadcast %cst_325 : f32 to vector<16x16xf32>
    %1147 = arith.select %1145, %1097, %1146 : vector<16x16xi1>, vector<16x16xf32>
    %cst_326 = arith.constant dense<0.000000e+00> : vector<16xf32>
    %1148 = vector.multi_reduction <add>, %1147, %cst_326 [1] : vector<16x16xf32> to vector<16xf32>
    %1149 = vector.shape_cast %1148 : vector<16xf32> to vector<16x1xf32>
    %1150 = vector.extract_strided_slice %23 {offsets = [4, 0], sizes = [1, 8], strides = [1, 1]} : vector<9x8xf32> to vector<1x8xf32>
    %1151 = vector.broadcast %1149 : vector<16x1xf32> to vector<16x8xf32>
    %1152 = vector.broadcast %1150 : vector<1x8xf32> to vector<16x8xf32>
    %1153 = arith.mulf %1151, %1152 : vector<16x8xf32>
    %1154 = arith.addf %1143, %1153 : vector<16x8xf32>
    %c1_i32_327 = arith.constant 1 : i32
    %1155 = vector.broadcast %c1_i32_327 : i32 to vector<16x16xi32>
    %1156 = arith.cmpi eq, %26, %1155 : vector<16x16xi32>
    %cst_328 = arith.constant 0.000000e+00 : f32
    %1157 = vector.broadcast %cst_328 : f32 to vector<16x16xf32>
    %1158 = arith.select %1156, %1097, %1157 : vector<16x16xi1>, vector<16x16xf32>
    %cst_329 = arith.constant dense<0.000000e+00> : vector<16xf32>
    %1159 = vector.multi_reduction <add>, %1158, %cst_329 [1] : vector<16x16xf32> to vector<16xf32>
    %1160 = vector.shape_cast %1159 : vector<16xf32> to vector<16x1xf32>
    %1161 = vector.extract_strided_slice %23 {offsets = [5, 0], sizes = [1, 8], strides = [1, 1]} : vector<9x8xf32> to vector<1x8xf32>
    %1162 = vector.broadcast %1160 : vector<16x1xf32> to vector<16x8xf32>
    %1163 = vector.broadcast %1161 : vector<1x8xf32> to vector<16x8xf32>
    %1164 = arith.mulf %1162, %1163 : vector<16x8xf32>
    %1165 = arith.addf %1154, %1164 : vector<16x8xf32>
    %c2_i32_330 = arith.constant 2 : i32
    %1166 = vector.broadcast %c2_i32_330 : i32 to vector<16x16xi32>
    %1167 = arith.cmpi eq, %26, %1166 : vector<16x16xi32>
    %cst_331 = arith.constant 0.000000e+00 : f32
    %1168 = vector.broadcast %cst_331 : f32 to vector<16x16xf32>
    %1169 = arith.select %1167, %1097, %1168 : vector<16x16xi1>, vector<16x16xf32>
    %cst_332 = arith.constant dense<0.000000e+00> : vector<16xf32>
    %1170 = vector.multi_reduction <add>, %1169, %cst_332 [1] : vector<16x16xf32> to vector<16xf32>
    %1171 = vector.shape_cast %1170 : vector<16xf32> to vector<16x1xf32>
    %1172 = vector.extract_strided_slice %23 {offsets = [6, 0], sizes = [1, 8], strides = [1, 1]} : vector<9x8xf32> to vector<1x8xf32>
    %1173 = vector.broadcast %1171 : vector<16x1xf32> to vector<16x8xf32>
    %1174 = vector.broadcast %1172 : vector<1x8xf32> to vector<16x8xf32>
    %1175 = arith.mulf %1173, %1174 : vector<16x8xf32>
    %1176 = arith.addf %1165, %1175 : vector<16x8xf32>
    %c3_i32_333 = arith.constant 3 : i32
    %1177 = vector.broadcast %c3_i32_333 : i32 to vector<16x16xi32>
    %1178 = arith.cmpi eq, %26, %1177 : vector<16x16xi32>
    %cst_334 = arith.constant 0.000000e+00 : f32
    %1179 = vector.broadcast %cst_334 : f32 to vector<16x16xf32>
    %1180 = arith.select %1178, %1097, %1179 : vector<16x16xi1>, vector<16x16xf32>
    %cst_335 = arith.constant dense<0.000000e+00> : vector<16xf32>
    %1181 = vector.multi_reduction <add>, %1180, %cst_335 [1] : vector<16x16xf32> to vector<16xf32>
    %1182 = vector.shape_cast %1181 : vector<16xf32> to vector<16x1xf32>
    %1183 = vector.extract_strided_slice %23 {offsets = [7, 0], sizes = [1, 8], strides = [1, 1]} : vector<9x8xf32> to vector<1x8xf32>
    %1184 = vector.broadcast %1182 : vector<16x1xf32> to vector<16x8xf32>
    %1185 = vector.broadcast %1183 : vector<1x8xf32> to vector<16x8xf32>
    %1186 = arith.mulf %1184, %1185 : vector<16x8xf32>
    %1187 = arith.addf %1176, %1186 : vector<16x8xf32>
    %c4_i32_336 = arith.constant 4 : i32
    %1188 = vector.broadcast %c4_i32_336 : i32 to vector<16x16xi32>
    %1189 = arith.cmpi eq, %26, %1188 : vector<16x16xi32>
    %cst_337 = arith.constant 0.000000e+00 : f32
    %1190 = vector.broadcast %cst_337 : f32 to vector<16x16xf32>
    %1191 = arith.select %1189, %1097, %1190 : vector<16x16xi1>, vector<16x16xf32>
    %cst_338 = arith.constant dense<0.000000e+00> : vector<16xf32>
    %1192 = vector.multi_reduction <add>, %1191, %cst_338 [1] : vector<16x16xf32> to vector<16xf32>
    %1193 = vector.shape_cast %1192 : vector<16xf32> to vector<16x1xf32>
    %1194 = vector.extract_strided_slice %23 {offsets = [8, 0], sizes = [1, 8], strides = [1, 1]} : vector<9x8xf32> to vector<1x8xf32>
    %1195 = vector.broadcast %1193 : vector<16x1xf32> to vector<16x8xf32>
    %1196 = vector.broadcast %1194 : vector<1x8xf32> to vector<16x8xf32>
    %1197 = arith.mulf %1195, %1196 : vector<16x8xf32>
    %1198 = arith.addf %1187, %1197 : vector<16x8xf32>
    %1199 = arith.addf %1098, %1198 : vector<16x8xf32>
    %c16_339 = arith.constant 16 : index
    %c8_340 = arith.constant 8 : index
    %1200 = vector.load %arg14[%c16_339, %c8_340] : memref<32x32xf32, #tpu.memory_space<vmem>>, vector<16x8xf32>
    tpu.vector_store %arg14[%c16_339, %c8_340], %1199 {strides = array<i32>} : memref<32x32xf32, #tpu.memory_space<vmem>>, vector<16x8xf32>,
    %1201 = vector.extract_strided_slice %19 {offsets = [16, 16], sizes = [16, 8], strides = [1, 1]} : vector<32x32xf32> to vector<16x8xf32>
    %1202 = vector.extract_strided_slice %20 {offsets = [16, 16], sizes = [16, 8], strides = [1, 1]} : vector<32x32xf32> to vector<16x8xf32>
    %1203 = vector.extract_strided_slice %21 {offsets = [16, 16], sizes = [16, 8], strides = [1, 1]} : vector<32x32xf32> to vector<16x8xf32>
    %1204 = tpu.transpose %1202, [1, 0] : vector<16x8xf32> -> vector<8x16xf32>
    %cst_341 = arith.constant dense<0.000000e+00> : vector<16x16xf32>
    %1205 = tpu.matmul %1201, %1204, %cst_341 {dimension_numbers = #tpu.dot_dimension_numbers<[1], [0], [0], [1], [0, 0, 1, 1], [], []>} : vector<16x8xf32>, vector<8x16xf32>, vector<16x16xf32> -> vector<16x16xf32>
    %cst_342 = arith.constant dense<0.000000e+00> : vector<16x9xf32>
    %1206 = tpu.matmul %1201, %22, %cst_342 {dimension_numbers = #tpu.dot_dimension_numbers<[1], [0], [0], [1], [0, 0, 1, 1], [], []>} : vector<16x8xf32>, vector<8x9xf32>, vector<16x9xf32> -> vector<16x9xf32>
    %c-4_i32_343 = arith.constant -4 : i32
    %1207 = vector.broadcast %c-4_i32_343 : i32 to vector<16x16xi32>
    %1208 = arith.cmpi eq, %26, %1207 : vector<16x16xi32>
    %1209 = vector.extract_strided_slice %1206 {offsets = [0, 0], sizes = [16, 1], strides = [1, 1]} : vector<16x9xf32> to vector<16x1xf32>
    %cst_344 = arith.constant 0.000000e+00 : f32
    %1210 = vector.shape_cast %1209 : vector<16x1xf32> to vector<16x1xf32>
    %1211 = vector.broadcast %1210 : vector<16x1xf32> to vector<16x16xf32>
    %1212 = vector.broadcast %cst_344 : f32 to vector<16x16xf32>
    %1213 = arith.select %1208, %1211, %1212 : vector<16x16xi1>, vector<16x16xf32>
    %1214 = arith.addf %1205, %1213 : vector<16x16xf32>
    %c-3_i32_345 = arith.constant -3 : i32
    %1215 = vector.broadcast %c-3_i32_345 : i32 to vector<16x16xi32>
    %1216 = arith.cmpi eq, %26, %1215 : vector<16x16xi32>
    %1217 = vector.extract_strided_slice %1206 {offsets = [0, 1], sizes = [16, 1], strides = [1, 1]} : vector<16x9xf32> to vector<16x1xf32>
    %cst_346 = arith.constant 0.000000e+00 : f32
    %1218 = vector.shape_cast %1217 : vector<16x1xf32> to vector<16x1xf32>
    %1219 = vector.broadcast %1218 : vector<16x1xf32> to vector<16x16xf32>
    %1220 = vector.broadcast %cst_346 : f32 to vector<16x16xf32>
    %1221 = arith.select %1216, %1219, %1220 : vector<16x16xi1>, vector<16x16xf32>
    %1222 = arith.addf %1214, %1221 : vector<16x16xf32>
    %c-2_i32_347 = arith.constant -2 : i32
    %1223 = vector.broadcast %c-2_i32_347 : i32 to vector<16x16xi32>
    %1224 = arith.cmpi eq, %26, %1223 : vector<16x16xi32>
    %1225 = vector.extract_strided_slice %1206 {offsets = [0, 2], sizes = [16, 1], strides = [1, 1]} : vector<16x9xf32> to vector<16x1xf32>
    %cst_348 = arith.constant 0.000000e+00 : f32
    %1226 = vector.shape_cast %1225 : vector<16x1xf32> to vector<16x1xf32>
    %1227 = vector.broadcast %1226 : vector<16x1xf32> to vector<16x16xf32>
    %1228 = vector.broadcast %cst_348 : f32 to vector<16x16xf32>
    %1229 = arith.select %1224, %1227, %1228 : vector<16x16xi1>, vector<16x16xf32>
    %1230 = arith.addf %1222, %1229 : vector<16x16xf32>
    %c-1_i32_349 = arith.constant -1 : i32
    %1231 = vector.broadcast %c-1_i32_349 : i32 to vector<16x16xi32>
    %1232 = arith.cmpi eq, %26, %1231 : vector<16x16xi32>
    %1233 = vector.extract_strided_slice %1206 {offsets = [0, 3], sizes = [16, 1], strides = [1, 1]} : vector<16x9xf32> to vector<16x1xf32>
    %cst_350 = arith.constant 0.000000e+00 : f32
    %1234 = vector.shape_cast %1233 : vector<16x1xf32> to vector<16x1xf32>
    %1235 = vector.broadcast %1234 : vector<16x1xf32> to vector<16x16xf32>
    %1236 = vector.broadcast %cst_350 : f32 to vector<16x16xf32>
    %1237 = arith.select %1232, %1235, %1236 : vector<16x16xi1>, vector<16x16xf32>
    %1238 = arith.addf %1230, %1237 : vector<16x16xf32>
    %c0_i32_351 = arith.constant 0 : i32
    %1239 = vector.broadcast %c0_i32_351 : i32 to vector<16x16xi32>
    %1240 = arith.cmpi eq, %26, %1239 : vector<16x16xi32>
    %1241 = vector.extract_strided_slice %1206 {offsets = [0, 4], sizes = [16, 1], strides = [1, 1]} : vector<16x9xf32> to vector<16x1xf32>
    %cst_352 = arith.constant 0.000000e+00 : f32
    %1242 = vector.shape_cast %1241 : vector<16x1xf32> to vector<16x1xf32>
    %1243 = vector.broadcast %1242 : vector<16x1xf32> to vector<16x16xf32>
    %1244 = vector.broadcast %cst_352 : f32 to vector<16x16xf32>
    %1245 = arith.select %1240, %1243, %1244 : vector<16x16xi1>, vector<16x16xf32>
    %1246 = arith.addf %1238, %1245 : vector<16x16xf32>
    %c1_i32_353 = arith.constant 1 : i32
    %1247 = vector.broadcast %c1_i32_353 : i32 to vector<16x16xi32>
    %1248 = arith.cmpi eq, %26, %1247 : vector<16x16xi32>
    %1249 = vector.extract_strided_slice %1206 {offsets = [0, 5], sizes = [16, 1], strides = [1, 1]} : vector<16x9xf32> to vector<16x1xf32>
    %cst_354 = arith.constant 0.000000e+00 : f32
    %1250 = vector.shape_cast %1249 : vector<16x1xf32> to vector<16x1xf32>
    %1251 = vector.broadcast %1250 : vector<16x1xf32> to vector<16x16xf32>
    %1252 = vector.broadcast %cst_354 : f32 to vector<16x16xf32>
    %1253 = arith.select %1248, %1251, %1252 : vector<16x16xi1>, vector<16x16xf32>
    %1254 = arith.addf %1246, %1253 : vector<16x16xf32>
    %c2_i32_355 = arith.constant 2 : i32
    %1255 = vector.broadcast %c2_i32_355 : i32 to vector<16x16xi32>
    %1256 = arith.cmpi eq, %26, %1255 : vector<16x16xi32>
    %1257 = vector.extract_strided_slice %1206 {offsets = [0, 6], sizes = [16, 1], strides = [1, 1]} : vector<16x9xf32> to vector<16x1xf32>
    %cst_356 = arith.constant 0.000000e+00 : f32
    %1258 = vector.shape_cast %1257 : vector<16x1xf32> to vector<16x1xf32>
    %1259 = vector.broadcast %1258 : vector<16x1xf32> to vector<16x16xf32>
    %1260 = vector.broadcast %cst_356 : f32 to vector<16x16xf32>
    %1261 = arith.select %1256, %1259, %1260 : vector<16x16xi1>, vector<16x16xf32>
    %1262 = arith.addf %1254, %1261 : vector<16x16xf32>
    %c3_i32_357 = arith.constant 3 : i32
    %1263 = vector.broadcast %c3_i32_357 : i32 to vector<16x16xi32>
    %1264 = arith.cmpi eq, %26, %1263 : vector<16x16xi32>
    %1265 = vector.extract_strided_slice %1206 {offsets = [0, 7], sizes = [16, 1], strides = [1, 1]} : vector<16x9xf32> to vector<16x1xf32>
    %cst_358 = arith.constant 0.000000e+00 : f32
    %1266 = vector.shape_cast %1265 : vector<16x1xf32> to vector<16x1xf32>
    %1267 = vector.broadcast %1266 : vector<16x1xf32> to vector<16x16xf32>
    %1268 = vector.broadcast %cst_358 : f32 to vector<16x16xf32>
    %1269 = arith.select %1264, %1267, %1268 : vector<16x16xi1>, vector<16x16xf32>
    %1270 = arith.addf %1262, %1269 : vector<16x16xf32>
    %c4_i32_359 = arith.constant 4 : i32
    %1271 = vector.broadcast %c4_i32_359 : i32 to vector<16x16xi32>
    %1272 = arith.cmpi eq, %26, %1271 : vector<16x16xi32>
    %1273 = vector.extract_strided_slice %1206 {offsets = [0, 8], sizes = [16, 1], strides = [1, 1]} : vector<16x9xf32> to vector<16x1xf32>
    %cst_360 = arith.constant 0.000000e+00 : f32
    %1274 = vector.shape_cast %1273 : vector<16x1xf32> to vector<16x1xf32>
    %1275 = vector.broadcast %1274 : vector<16x1xf32> to vector<16x16xf32>
    %1276 = vector.broadcast %cst_360 : f32 to vector<16x16xf32>
    %1277 = arith.select %1272, %1275, %1276 : vector<16x16xi1>, vector<16x16xf32>
    %1278 = arith.addf %1270, %1277 : vector<16x16xf32>
    %1279 = arith.addf %1278, %816 : vector<16x16xf32>
    %cst_361 = arith.constant dense<0xFF800000> : vector<16xf32>
    %1280 = vector.multi_reduction <maximumf>, %1279, %cst_361 [1] : vector<16x16xf32> to vector<16xf32>
    %1281 = vector.shape_cast %1280 : vector<16xf32> to vector<16x1xf32>
    %1282 = vector.broadcast %1281 : vector<16x1xf32> to vector<16x16xf32>
    %1283 = arith.subf %1279, %1282 : vector<16x16xf32>
    %1284 = math.exp %1283 : vector<16x16xf32>
    %cst_362 = arith.constant dense<0.000000e+00> : vector<16xf32>
    %1285 = vector.multi_reduction <add>, %1284, %cst_362 [1] : vector<16x16xf32> to vector<16xf32>
    %1286 = vector.shape_cast %1285 : vector<16xf32> to vector<16x1xf32>
    %1287 = tpu.reciprocal %1286 {approx = true} : vector<16x1xf32> -> vector<16x1xf32>
    %1288 = vector.broadcast %1287 : vector<16x1xf32> to vector<16x16xf32>
    %1289 = arith.mulf %1284, %1288 : vector<16x16xf32>
    %cst_363 = arith.constant dense<0.000000e+00> : vector<16x8xf32>
    %1290 = tpu.matmul %1289, %1203, %cst_363 {dimension_numbers = #tpu.dot_dimension_numbers<[1], [0], [0], [1], [0, 0, 1, 1], [], []>} : vector<16x16xf32>, vector<16x8xf32>, vector<16x8xf32> -> vector<16x8xf32>
    %cst_364 = arith.constant 0.000000e+00 : f32
    %1291 = vector.broadcast %cst_364 : f32 to vector<16x8xf32>
    %c-4_i32_365 = arith.constant -4 : i32
    %1292 = vector.broadcast %c-4_i32_365 : i32 to vector<16x16xi32>
    %1293 = arith.cmpi eq, %26, %1292 : vector<16x16xi32>
    %cst_366 = arith.constant 0.000000e+00 : f32
    %1294 = vector.broadcast %cst_366 : f32 to vector<16x16xf32>
    %1295 = arith.select %1293, %1289, %1294 : vector<16x16xi1>, vector<16x16xf32>
    %cst_367 = arith.constant dense<0.000000e+00> : vector<16xf32>
    %1296 = vector.multi_reduction <add>, %1295, %cst_367 [1] : vector<16x16xf32> to vector<16xf32>
    %1297 = vector.shape_cast %1296 : vector<16xf32> to vector<16x1xf32>
    %1298 = vector.extract_strided_slice %23 {offsets = [0, 0], sizes = [1, 8], strides = [1, 1]} : vector<9x8xf32> to vector<1x8xf32>
    %1299 = vector.broadcast %1297 : vector<16x1xf32> to vector<16x8xf32>
    %1300 = vector.broadcast %1298 : vector<1x8xf32> to vector<16x8xf32>
    %1301 = arith.mulf %1299, %1300 : vector<16x8xf32>
    %1302 = arith.addf %1291, %1301 : vector<16x8xf32>
    %c-3_i32_368 = arith.constant -3 : i32
    %1303 = vector.broadcast %c-3_i32_368 : i32 to vector<16x16xi32>
    %1304 = arith.cmpi eq, %26, %1303 : vector<16x16xi32>
    %cst_369 = arith.constant 0.000000e+00 : f32
    %1305 = vector.broadcast %cst_369 : f32 to vector<16x16xf32>
    %1306 = arith.select %1304, %1289, %1305 : vector<16x16xi1>, vector<16x16xf32>
    %cst_370 = arith.constant dense<0.000000e+00> : vector<16xf32>
    %1307 = vector.multi_reduction <add>, %1306, %cst_370 [1] : vector<16x16xf32> to vector<16xf32>
    %1308 = vector.shape_cast %1307 : vector<16xf32> to vector<16x1xf32>
    %1309 = vector.extract_strided_slice %23 {offsets = [1, 0], sizes = [1, 8], strides = [1, 1]} : vector<9x8xf32> to vector<1x8xf32>
    %1310 = vector.broadcast %1308 : vector<16x1xf32> to vector<16x8xf32>
    %1311 = vector.broadcast %1309 : vector<1x8xf32> to vector<16x8xf32>
    %1312 = arith.mulf %1310, %1311 : vector<16x8xf32>
    %1313 = arith.addf %1302, %1312 : vector<16x8xf32>
    %c-2_i32_371 = arith.constant -2 : i32
    %1314 = vector.broadcast %c-2_i32_371 : i32 to vector<16x16xi32>
    %1315 = arith.cmpi eq, %26, %1314 : vector<16x16xi32>
    %cst_372 = arith.constant 0.000000e+00 : f32
    %1316 = vector.broadcast %cst_372 : f32 to vector<16x16xf32>
    %1317 = arith.select %1315, %1289, %1316 : vector<16x16xi1>, vector<16x16xf32>
    %cst_373 = arith.constant dense<0.000000e+00> : vector<16xf32>
    %1318 = vector.multi_reduction <add>, %1317, %cst_373 [1] : vector<16x16xf32> to vector<16xf32>
    %1319 = vector.shape_cast %1318 : vector<16xf32> to vector<16x1xf32>
    %1320 = vector.extract_strided_slice %23 {offsets = [2, 0], sizes = [1, 8], strides = [1, 1]} : vector<9x8xf32> to vector<1x8xf32>
    %1321 = vector.broadcast %1319 : vector<16x1xf32> to vector<16x8xf32>
    %1322 = vector.broadcast %1320 : vector<1x8xf32> to vector<16x8xf32>
    %1323 = arith.mulf %1321, %1322 : vector<16x8xf32>
    %1324 = arith.addf %1313, %1323 : vector<16x8xf32>
    %c-1_i32_374 = arith.constant -1 : i32
    %1325 = vector.broadcast %c-1_i32_374 : i32 to vector<16x16xi32>
    %1326 = arith.cmpi eq, %26, %1325 : vector<16x16xi32>
    %cst_375 = arith.constant 0.000000e+00 : f32
    %1327 = vector.broadcast %cst_375 : f32 to vector<16x16xf32>
    %1328 = arith.select %1326, %1289, %1327 : vector<16x16xi1>, vector<16x16xf32>
    %cst_376 = arith.constant dense<0.000000e+00> : vector<16xf32>
    %1329 = vector.multi_reduction <add>, %1328, %cst_376 [1] : vector<16x16xf32> to vector<16xf32>
    %1330 = vector.shape_cast %1329 : vector<16xf32> to vector<16x1xf32>
    %1331 = vector.extract_strided_slice %23 {offsets = [3, 0], sizes = [1, 8], strides = [1, 1]} : vector<9x8xf32> to vector<1x8xf32>
    %1332 = vector.broadcast %1330 : vector<16x1xf32> to vector<16x8xf32>
    %1333 = vector.broadcast %1331 : vector<1x8xf32> to vector<16x8xf32>
    %1334 = arith.mulf %1332, %1333 : vector<16x8xf32>
    %1335 = arith.addf %1324, %1334 : vector<16x8xf32>
    %c0_i32_377 = arith.constant 0 : i32
    %1336 = vector.broadcast %c0_i32_377 : i32 to vector<16x16xi32>
    %1337 = arith.cmpi eq, %26, %1336 : vector<16x16xi32>
    %cst_378 = arith.constant 0.000000e+00 : f32
    %1338 = vector.broadcast %cst_378 : f32 to vector<16x16xf32>
    %1339 = arith.select %1337, %1289, %1338 : vector<16x16xi1>, vector<16x16xf32>
    %cst_379 = arith.constant dense<0.000000e+00> : vector<16xf32>
    %1340 = vector.multi_reduction <add>, %1339, %cst_379 [1] : vector<16x16xf32> to vector<16xf32>
    %1341 = vector.shape_cast %1340 : vector<16xf32> to vector<16x1xf32>
    %1342 = vector.extract_strided_slice %23 {offsets = [4, 0], sizes = [1, 8], strides = [1, 1]} : vector<9x8xf32> to vector<1x8xf32>
    %1343 = vector.broadcast %1341 : vector<16x1xf32> to vector<16x8xf32>
    %1344 = vector.broadcast %1342 : vector<1x8xf32> to vector<16x8xf32>
    %1345 = arith.mulf %1343, %1344 : vector<16x8xf32>
    %1346 = arith.addf %1335, %1345 : vector<16x8xf32>
    %c1_i32_380 = arith.constant 1 : i32
    %1347 = vector.broadcast %c1_i32_380 : i32 to vector<16x16xi32>
    %1348 = arith.cmpi eq, %26, %1347 : vector<16x16xi32>
    %cst_381 = arith.constant 0.000000e+00 : f32
    %1349 = vector.broadcast %cst_381 : f32 to vector<16x16xf32>
    %1350 = arith.select %1348, %1289, %1349 : vector<16x16xi1>, vector<16x16xf32>
    %cst_382 = arith.constant dense<0.000000e+00> : vector<16xf32>
    %1351 = vector.multi_reduction <add>, %1350, %cst_382 [1] : vector<16x16xf32> to vector<16xf32>
    %1352 = vector.shape_cast %1351 : vector<16xf32> to vector<16x1xf32>
    %1353 = vector.extract_strided_slice %23 {offsets = [5, 0], sizes = [1, 8], strides = [1, 1]} : vector<9x8xf32> to vector<1x8xf32>
    %1354 = vector.broadcast %1352 : vector<16x1xf32> to vector<16x8xf32>
    %1355 = vector.broadcast %1353 : vector<1x8xf32> to vector<16x8xf32>
    %1356 = arith.mulf %1354, %1355 : vector<16x8xf32>
    %1357 = arith.addf %1346, %1356 : vector<16x8xf32>
    %c2_i32_383 = arith.constant 2 : i32
    %1358 = vector.broadcast %c2_i32_383 : i32 to vector<16x16xi32>
    %1359 = arith.cmpi eq, %26, %1358 : vector<16x16xi32>
    %cst_384 = arith.constant 0.000000e+00 : f32
    %1360 = vector.broadcast %cst_384 : f32 to vector<16x16xf32>
    %1361 = arith.select %1359, %1289, %1360 : vector<16x16xi1>, vector<16x16xf32>
    %cst_385 = arith.constant dense<0.000000e+00> : vector<16xf32>
    %1362 = vector.multi_reduction <add>, %1361, %cst_385 [1] : vector<16x16xf32> to vector<16xf32>
    %1363 = vector.shape_cast %1362 : vector<16xf32> to vector<16x1xf32>
    %1364 = vector.extract_strided_slice %23 {offsets = [6, 0], sizes = [1, 8], strides = [1, 1]} : vector<9x8xf32> to vector<1x8xf32>
    %1365 = vector.broadcast %1363 : vector<16x1xf32> to vector<16x8xf32>
    %1366 = vector.broadcast %1364 : vector<1x8xf32> to vector<16x8xf32>
    %1367 = arith.mulf %1365, %1366 : vector<16x8xf32>
    %1368 = arith.addf %1357, %1367 : vector<16x8xf32>
    %c3_i32_386 = arith.constant 3 : i32
    %1369 = vector.broadcast %c3_i32_386 : i32 to vector<16x16xi32>
    %1370 = arith.cmpi eq, %26, %1369 : vector<16x16xi32>
    %cst_387 = arith.constant 0.000000e+00 : f32
    %1371 = vector.broadcast %cst_387 : f32 to vector<16x16xf32>
    %1372 = arith.select %1370, %1289, %1371 : vector<16x16xi1>, vector<16x16xf32>
    %cst_388 = arith.constant dense<0.000000e+00> : vector<16xf32>
    %1373 = vector.multi_reduction <add>, %1372, %cst_388 [1] : vector<16x16xf32> to vector<16xf32>
    %1374 = vector.shape_cast %1373 : vector<16xf32> to vector<16x1xf32>
    %1375 = vector.extract_strided_slice %23 {offsets = [7, 0], sizes = [1, 8], strides = [1, 1]} : vector<9x8xf32> to vector<1x8xf32>
    %1376 = vector.broadcast %1374 : vector<16x1xf32> to vector<16x8xf32>
    %1377 = vector.broadcast %1375 : vector<1x8xf32> to vector<16x8xf32>
    %1378 = arith.mulf %1376, %1377 : vector<16x8xf32>
    %1379 = arith.addf %1368, %1378 : vector<16x8xf32>
    %c4_i32_389 = arith.constant 4 : i32
    %1380 = vector.broadcast %c4_i32_389 : i32 to vector<16x16xi32>
    %1381 = arith.cmpi eq, %26, %1380 : vector<16x16xi32>
    %cst_390 = arith.constant 0.000000e+00 : f32
    %1382 = vector.broadcast %cst_390 : f32 to vector<16x16xf32>
    %1383 = arith.select %1381, %1289, %1382 : vector<16x16xi1>, vector<16x16xf32>
    %cst_391 = arith.constant dense<0.000000e+00> : vector<16xf32>
    %1384 = vector.multi_reduction <add>, %1383, %cst_391 [1] : vector<16x16xf32> to vector<16xf32>
    %1385 = vector.shape_cast %1384 : vector<16xf32> to vector<16x1xf32>
    %1386 = vector.extract_strided_slice %23 {offsets = [8, 0], sizes = [1, 8], strides = [1, 1]} : vector<9x8xf32> to vector<1x8xf32>
    %1387 = vector.broadcast %1385 : vector<16x1xf32> to vector<16x8xf32>
    %1388 = vector.broadcast %1386 : vector<1x8xf32> to vector<16x8xf32>
    %1389 = arith.mulf %1387, %1388 : vector<16x8xf32>
    %1390 = arith.addf %1379, %1389 : vector<16x8xf32>
    %1391 = arith.addf %1290, %1390 : vector<16x8xf32>
    %c16_392 = arith.constant 16 : index
    %c16_393 = arith.constant 16 : index
    %1392 = vector.load %arg14[%c16_392, %c16_393] : memref<32x32xf32, #tpu.memory_space<vmem>>, vector<16x8xf32>
    tpu.vector_store %arg14[%c16_392, %c16_393], %1391 {strides = array<i32>} : memref<32x32xf32, #tpu.memory_space<vmem>>, vector<16x8xf32>,
    %1393 = vector.extract_strided_slice %19 {offsets = [16, 24], sizes = [16, 8], strides = [1, 1]} : vector<32x32xf32> to vector<16x8xf32>
    %1394 = vector.extract_strided_slice %20 {offsets = [16, 24], sizes = [16, 8], strides = [1, 1]} : vector<32x32xf32> to vector<16x8xf32>
    %1395 = vector.extract_strided_slice %21 {offsets = [16, 24], sizes = [16, 8], strides = [1, 1]} : vector<32x32xf32> to vector<16x8xf32>
    %1396 = tpu.transpose %1394, [1, 0] : vector<16x8xf32> -> vector<8x16xf32>
    %cst_394 = arith.constant dense<0.000000e+00> : vector<16x16xf32>
    %1397 = tpu.matmul %1393, %1396, %cst_394 {dimension_numbers = #tpu.dot_dimension_numbers<[1], [0], [0], [1], [0, 0, 1, 1], [], []>} : vector<16x8xf32>, vector<8x16xf32>, vector<16x16xf32> -> vector<16x16xf32>
    %cst_395 = arith.constant dense<0.000000e+00> : vector<16x9xf32>
    %1398 = tpu.matmul %1393, %22, %cst_395 {dimension_numbers = #tpu.dot_dimension_numbers<[1], [0], [0], [1], [0, 0, 1, 1], [], []>} : vector<16x8xf32>, vector<8x9xf32>, vector<16x9xf32> -> vector<16x9xf32>
    %c-4_i32_396 = arith.constant -4 : i32
    %1399 = vector.broadcast %c-4_i32_396 : i32 to vector<16x16xi32>
    %1400 = arith.cmpi eq, %26, %1399 : vector<16x16xi32>
    %1401 = vector.extract_strided_slice %1398 {offsets = [0, 0], sizes = [16, 1], strides = [1, 1]} : vector<16x9xf32> to vector<16x1xf32>
    %cst_397 = arith.constant 0.000000e+00 : f32
    %1402 = vector.shape_cast %1401 : vector<16x1xf32> to vector<16x1xf32>
    %1403 = vector.broadcast %1402 : vector<16x1xf32> to vector<16x16xf32>
    %1404 = vector.broadcast %cst_397 : f32 to vector<16x16xf32>
    %1405 = arith.select %1400, %1403, %1404 : vector<16x16xi1>, vector<16x16xf32>
    %1406 = arith.addf %1397, %1405 : vector<16x16xf32>
    %c-3_i32_398 = arith.constant -3 : i32
    %1407 = vector.broadcast %c-3_i32_398 : i32 to vector<16x16xi32>
    %1408 = arith.cmpi eq, %26, %1407 : vector<16x16xi32>
    %1409 = vector.extract_strided_slice %1398 {offsets = [0, 1], sizes = [16, 1], strides = [1, 1]} : vector<16x9xf32> to vector<16x1xf32>
    %cst_399 = arith.constant 0.000000e+00 : f32
    %1410 = vector.shape_cast %1409 : vector<16x1xf32> to vector<16x1xf32>
    %1411 = vector.broadcast %1410 : vector<16x1xf32> to vector<16x16xf32>
    %1412 = vector.broadcast %cst_399 : f32 to vector<16x16xf32>
    %1413 = arith.select %1408, %1411, %1412 : vector<16x16xi1>, vector<16x16xf32>
    %1414 = arith.addf %1406, %1413 : vector<16x16xf32>
    %c-2_i32_400 = arith.constant -2 : i32
    %1415 = vector.broadcast %c-2_i32_400 : i32 to vector<16x16xi32>
    %1416 = arith.cmpi eq, %26, %1415 : vector<16x16xi32>
    %1417 = vector.extract_strided_slice %1398 {offsets = [0, 2], sizes = [16, 1], strides = [1, 1]} : vector<16x9xf32> to vector<16x1xf32>
    %cst_401 = arith.constant 0.000000e+00 : f32
    %1418 = vector.shape_cast %1417 : vector<16x1xf32> to vector<16x1xf32>
    %1419 = vector.broadcast %1418 : vector<16x1xf32> to vector<16x16xf32>
    %1420 = vector.broadcast %cst_401 : f32 to vector<16x16xf32>
    %1421 = arith.select %1416, %1419, %1420 : vector<16x16xi1>, vector<16x16xf32>
    %1422 = arith.addf %1414, %1421 : vector<16x16xf32>
    %c-1_i32_402 = arith.constant -1 : i32
    %1423 = vector.broadcast %c-1_i32_402 : i32 to vector<16x16xi32>
    %1424 = arith.cmpi eq, %26, %1423 : vector<16x16xi32>
    %1425 = vector.extract_strided_slice %1398 {offsets = [0, 3], sizes = [16, 1], strides = [1, 1]} : vector<16x9xf32> to vector<16x1xf32>
    %cst_403 = arith.constant 0.000000e+00 : f32
    %1426 = vector.shape_cast %1425 : vector<16x1xf32> to vector<16x1xf32>
    %1427 = vector.broadcast %1426 : vector<16x1xf32> to vector<16x16xf32>
    %1428 = vector.broadcast %cst_403 : f32 to vector<16x16xf32>
    %1429 = arith.select %1424, %1427, %1428 : vector<16x16xi1>, vector<16x16xf32>
    %1430 = arith.addf %1422, %1429 : vector<16x16xf32>
    %c0_i32_404 = arith.constant 0 : i32
    %1431 = vector.broadcast %c0_i32_404 : i32 to vector<16x16xi32>
    %1432 = arith.cmpi eq, %26, %1431 : vector<16x16xi32>
    %1433 = vector.extract_strided_slice %1398 {offsets = [0, 4], sizes = [16, 1], strides = [1, 1]} : vector<16x9xf32> to vector<16x1xf32>
    %cst_405 = arith.constant 0.000000e+00 : f32
    %1434 = vector.shape_cast %1433 : vector<16x1xf32> to vector<16x1xf32>
    %1435 = vector.broadcast %1434 : vector<16x1xf32> to vector<16x16xf32>
    %1436 = vector.broadcast %cst_405 : f32 to vector<16x16xf32>
    %1437 = arith.select %1432, %1435, %1436 : vector<16x16xi1>, vector<16x16xf32>
    %1438 = arith.addf %1430, %1437 : vector<16x16xf32>
    %c1_i32_406 = arith.constant 1 : i32
    %1439 = vector.broadcast %c1_i32_406 : i32 to vector<16x16xi32>
    %1440 = arith.cmpi eq, %26, %1439 : vector<16x16xi32>
    %1441 = vector.extract_strided_slice %1398 {offsets = [0, 5], sizes = [16, 1], strides = [1, 1]} : vector<16x9xf32> to vector<16x1xf32>
    %cst_407 = arith.constant 0.000000e+00 : f32
    %1442 = vector.shape_cast %1441 : vector<16x1xf32> to vector<16x1xf32>
    %1443 = vector.broadcast %1442 : vector<16x1xf32> to vector<16x16xf32>
    %1444 = vector.broadcast %cst_407 : f32 to vector<16x16xf32>
    %1445 = arith.select %1440, %1443, %1444 : vector<16x16xi1>, vector<16x16xf32>
    %1446 = arith.addf %1438, %1445 : vector<16x16xf32>
    %c2_i32_408 = arith.constant 2 : i32
    %1447 = vector.broadcast %c2_i32_408 : i32 to vector<16x16xi32>
    %1448 = arith.cmpi eq, %26, %1447 : vector<16x16xi32>
    %1449 = vector.extract_strided_slice %1398 {offsets = [0, 6], sizes = [16, 1], strides = [1, 1]} : vector<16x9xf32> to vector<16x1xf32>
    %cst_409 = arith.constant 0.000000e+00 : f32
    %1450 = vector.shape_cast %1449 : vector<16x1xf32> to vector<16x1xf32>
    %1451 = vector.broadcast %1450 : vector<16x1xf32> to vector<16x16xf32>
    %1452 = vector.broadcast %cst_409 : f32 to vector<16x16xf32>
    %1453 = arith.select %1448, %1451, %1452 : vector<16x16xi1>, vector<16x16xf32>
    %1454 = arith.addf %1446, %1453 : vector<16x16xf32>
    %c3_i32_410 = arith.constant 3 : i32
    %1455 = vector.broadcast %c3_i32_410 : i32 to vector<16x16xi32>
    %1456 = arith.cmpi eq, %26, %1455 : vector<16x16xi32>
    %1457 = vector.extract_strided_slice %1398 {offsets = [0, 7], sizes = [16, 1], strides = [1, 1]} : vector<16x9xf32> to vector<16x1xf32>
    %cst_411 = arith.constant 0.000000e+00 : f32
    %1458 = vector.shape_cast %1457 : vector<16x1xf32> to vector<16x1xf32>
    %1459 = vector.broadcast %1458 : vector<16x1xf32> to vector<16x16xf32>
    %1460 = vector.broadcast %cst_411 : f32 to vector<16x16xf32>
    %1461 = arith.select %1456, %1459, %1460 : vector<16x16xi1>, vector<16x16xf32>
    %1462 = arith.addf %1454, %1461 : vector<16x16xf32>
    %c4_i32_412 = arith.constant 4 : i32
    %1463 = vector.broadcast %c4_i32_412 : i32 to vector<16x16xi32>
    %1464 = arith.cmpi eq, %26, %1463 : vector<16x16xi32>
    %1465 = vector.extract_strided_slice %1398 {offsets = [0, 8], sizes = [16, 1], strides = [1, 1]} : vector<16x9xf32> to vector<16x1xf32>
    %cst_413 = arith.constant 0.000000e+00 : f32
    %1466 = vector.shape_cast %1465 : vector<16x1xf32> to vector<16x1xf32>
    %1467 = vector.broadcast %1466 : vector<16x1xf32> to vector<16x16xf32>
    %1468 = vector.broadcast %cst_413 : f32 to vector<16x16xf32>
    %1469 = arith.select %1464, %1467, %1468 : vector<16x16xi1>, vector<16x16xf32>
    %1470 = arith.addf %1462, %1469 : vector<16x16xf32>
    %1471 = arith.addf %1470, %816 : vector<16x16xf32>
    %cst_414 = arith.constant dense<0xFF800000> : vector<16xf32>
    %1472 = vector.multi_reduction <maximumf>, %1471, %cst_414 [1] : vector<16x16xf32> to vector<16xf32>
    %1473 = vector.shape_cast %1472 : vector<16xf32> to vector<16x1xf32>
    %1474 = vector.broadcast %1473 : vector<16x1xf32> to vector<16x16xf32>
    %1475 = arith.subf %1471, %1474 : vector<16x16xf32>
    %1476 = math.exp %1475 : vector<16x16xf32>
    %cst_415 = arith.constant dense<0.000000e+00> : vector<16xf32>
    %1477 = vector.multi_reduction <add>, %1476, %cst_415 [1] : vector<16x16xf32> to vector<16xf32>
    %1478 = vector.shape_cast %1477 : vector<16xf32> to vector<16x1xf32>
    %1479 = tpu.reciprocal %1478 {approx = true} : vector<16x1xf32> -> vector<16x1xf32>
    %1480 = vector.broadcast %1479 : vector<16x1xf32> to vector<16x16xf32>
    %1481 = arith.mulf %1476, %1480 : vector<16x16xf32>
    %cst_416 = arith.constant dense<0.000000e+00> : vector<16x8xf32>
    %1482 = tpu.matmul %1481, %1395, %cst_416 {dimension_numbers = #tpu.dot_dimension_numbers<[1], [0], [0], [1], [0, 0, 1, 1], [], []>} : vector<16x16xf32>, vector<16x8xf32>, vector<16x8xf32> -> vector<16x8xf32>
    %cst_417 = arith.constant 0.000000e+00 : f32
    %1483 = vector.broadcast %cst_417 : f32 to vector<16x8xf32>
    %c-4_i32_418 = arith.constant -4 : i32
    %1484 = vector.broadcast %c-4_i32_418 : i32 to vector<16x16xi32>
    %1485 = arith.cmpi eq, %26, %1484 : vector<16x16xi32>
    %cst_419 = arith.constant 0.000000e+00 : f32
    %1486 = vector.broadcast %cst_419 : f32 to vector<16x16xf32>
    %1487 = arith.select %1485, %1481, %1486 : vector<16x16xi1>, vector<16x16xf32>
    %cst_420 = arith.constant dense<0.000000e+00> : vector<16xf32>
    %1488 = vector.multi_reduction <add>, %1487, %cst_420 [1] : vector<16x16xf32> to vector<16xf32>
    %1489 = vector.shape_cast %1488 : vector<16xf32> to vector<16x1xf32>
    %1490 = vector.extract_strided_slice %23 {offsets = [0, 0], sizes = [1, 8], strides = [1, 1]} : vector<9x8xf32> to vector<1x8xf32>
    %1491 = vector.broadcast %1489 : vector<16x1xf32> to vector<16x8xf32>
    %1492 = vector.broadcast %1490 : vector<1x8xf32> to vector<16x8xf32>
    %1493 = arith.mulf %1491, %1492 : vector<16x8xf32>
    %1494 = arith.addf %1483, %1493 : vector<16x8xf32>
    %c-3_i32_421 = arith.constant -3 : i32
    %1495 = vector.broadcast %c-3_i32_421 : i32 to vector<16x16xi32>
    %1496 = arith.cmpi eq, %26, %1495 : vector<16x16xi32>
    %cst_422 = arith.constant 0.000000e+00 : f32
    %1497 = vector.broadcast %cst_422 : f32 to vector<16x16xf32>
    %1498 = arith.select %1496, %1481, %1497 : vector<16x16xi1>, vector<16x16xf32>
    %cst_423 = arith.constant dense<0.000000e+00> : vector<16xf32>
    %1499 = vector.multi_reduction <add>, %1498, %cst_423 [1] : vector<16x16xf32> to vector<16xf32>
    %1500 = vector.shape_cast %1499 : vector<16xf32> to vector<16x1xf32>
    %1501 = vector.extract_strided_slice %23 {offsets = [1, 0], sizes = [1, 8], strides = [1, 1]} : vector<9x8xf32> to vector<1x8xf32>
    %1502 = vector.broadcast %1500 : vector<16x1xf32> to vector<16x8xf32>
    %1503 = vector.broadcast %1501 : vector<1x8xf32> to vector<16x8xf32>
    %1504 = arith.mulf %1502, %1503 : vector<16x8xf32>
    %1505 = arith.addf %1494, %1504 : vector<16x8xf32>
    %c-2_i32_424 = arith.constant -2 : i32
    %1506 = vector.broadcast %c-2_i32_424 : i32 to vector<16x16xi32>
    %1507 = arith.cmpi eq, %26, %1506 : vector<16x16xi32>
    %cst_425 = arith.constant 0.000000e+00 : f32
    %1508 = vector.broadcast %cst_425 : f32 to vector<16x16xf32>
    %1509 = arith.select %1507, %1481, %1508 : vector<16x16xi1>, vector<16x16xf32>
    %cst_426 = arith.constant dense<0.000000e+00> : vector<16xf32>
    %1510 = vector.multi_reduction <add>, %1509, %cst_426 [1] : vector<16x16xf32> to vector<16xf32>
    %1511 = vector.shape_cast %1510 : vector<16xf32> to vector<16x1xf32>
    %1512 = vector.extract_strided_slice %23 {offsets = [2, 0], sizes = [1, 8], strides = [1, 1]} : vector<9x8xf32> to vector<1x8xf32>
    %1513 = vector.broadcast %1511 : vector<16x1xf32> to vector<16x8xf32>
    %1514 = vector.broadcast %1512 : vector<1x8xf32> to vector<16x8xf32>
    %1515 = arith.mulf %1513, %1514 : vector<16x8xf32>
    %1516 = arith.addf %1505, %1515 : vector<16x8xf32>
    %c-1_i32_427 = arith.constant -1 : i32
    %1517 = vector.broadcast %c-1_i32_427 : i32 to vector<16x16xi32>
    %1518 = arith.cmpi eq, %26, %1517 : vector<16x16xi32>
    %cst_428 = arith.constant 0.000000e+00 : f32
    %1519 = vector.broadcast %cst_428 : f32 to vector<16x16xf32>
    %1520 = arith.select %1518, %1481, %1519 : vector<16x16xi1>, vector<16x16xf32>
    %cst_429 = arith.constant dense<0.000000e+00> : vector<16xf32>
    %1521 = vector.multi_reduction <add>, %1520, %cst_429 [1] : vector<16x16xf32> to vector<16xf32>
    %1522 = vector.shape_cast %1521 : vector<16xf32> to vector<16x1xf32>
    %1523 = vector.extract_strided_slice %23 {offsets = [3, 0], sizes = [1, 8], strides = [1, 1]} : vector<9x8xf32> to vector<1x8xf32>
    %1524 = vector.broadcast %1522 : vector<16x1xf32> to vector<16x8xf32>
    %1525 = vector.broadcast %1523 : vector<1x8xf32> to vector<16x8xf32>
    %1526 = arith.mulf %1524, %1525 : vector<16x8xf32>
    %1527 = arith.addf %1516, %1526 : vector<16x8xf32>
    %c0_i32_430 = arith.constant 0 : i32
    %1528 = vector.broadcast %c0_i32_430 : i32 to vector<16x16xi32>
    %1529 = arith.cmpi eq, %26, %1528 : vector<16x16xi32>
    %cst_431 = arith.constant 0.000000e+00 : f32
    %1530 = vector.broadcast %cst_431 : f32 to vector<16x16xf32>
    %1531 = arith.select %1529, %1481, %1530 : vector<16x16xi1>, vector<16x16xf32>
    %cst_432 = arith.constant dense<0.000000e+00> : vector<16xf32>
    %1532 = vector.multi_reduction <add>, %1531, %cst_432 [1] : vector<16x16xf32> to vector<16xf32>
    %1533 = vector.shape_cast %1532 : vector<16xf32> to vector<16x1xf32>
    %1534 = vector.extract_strided_slice %23 {offsets = [4, 0], sizes = [1, 8], strides = [1, 1]} : vector<9x8xf32> to vector<1x8xf32>
    %1535 = vector.broadcast %1533 : vector<16x1xf32> to vector<16x8xf32>
    %1536 = vector.broadcast %1534 : vector<1x8xf32> to vector<16x8xf32>
    %1537 = arith.mulf %1535, %1536 : vector<16x8xf32>
    %1538 = arith.addf %1527, %1537 : vector<16x8xf32>
    %c1_i32_433 = arith.constant 1 : i32
    %1539 = vector.broadcast %c1_i32_433 : i32 to vector<16x16xi32>
    %1540 = arith.cmpi eq, %26, %1539 : vector<16x16xi32>
    %cst_434 = arith.constant 0.000000e+00 : f32
    %1541 = vector.broadcast %cst_434 : f32 to vector<16x16xf32>
    %1542 = arith.select %1540, %1481, %1541 : vector<16x16xi1>, vector<16x16xf32>
    %cst_435 = arith.constant dense<0.000000e+00> : vector<16xf32>
    %1543 = vector.multi_reduction <add>, %1542, %cst_435 [1] : vector<16x16xf32> to vector<16xf32>
    %1544 = vector.shape_cast %1543 : vector<16xf32> to vector<16x1xf32>
    %1545 = vector.extract_strided_slice %23 {offsets = [5, 0], sizes = [1, 8], strides = [1, 1]} : vector<9x8xf32> to vector<1x8xf32>
    %1546 = vector.broadcast %1544 : vector<16x1xf32> to vector<16x8xf32>
    %1547 = vector.broadcast %1545 : vector<1x8xf32> to vector<16x8xf32>
    %1548 = arith.mulf %1546, %1547 : vector<16x8xf32>
    %1549 = arith.addf %1538, %1548 : vector<16x8xf32>
    %c2_i32_436 = arith.constant 2 : i32
    %1550 = vector.broadcast %c2_i32_436 : i32 to vector<16x16xi32>
    %1551 = arith.cmpi eq, %26, %1550 : vector<16x16xi32>
    %cst_437 = arith.constant 0.000000e+00 : f32
    %1552 = vector.broadcast %cst_437 : f32 to vector<16x16xf32>
    %1553 = arith.select %1551, %1481, %1552 : vector<16x16xi1>, vector<16x16xf32>
    %cst_438 = arith.constant dense<0.000000e+00> : vector<16xf32>
    %1554 = vector.multi_reduction <add>, %1553, %cst_438 [1] : vector<16x16xf32> to vector<16xf32>
    %1555 = vector.shape_cast %1554 : vector<16xf32> to vector<16x1xf32>
    %1556 = vector.extract_strided_slice %23 {offsets = [6, 0], sizes = [1, 8], strides = [1, 1]} : vector<9x8xf32> to vector<1x8xf32>
    %1557 = vector.broadcast %1555 : vector<16x1xf32> to vector<16x8xf32>
    %1558 = vector.broadcast %1556 : vector<1x8xf32> to vector<16x8xf32>
    %1559 = arith.mulf %1557, %1558 : vector<16x8xf32>
    %1560 = arith.addf %1549, %1559 : vector<16x8xf32>
    %c3_i32_439 = arith.constant 3 : i32
    %1561 = vector.broadcast %c3_i32_439 : i32 to vector<16x16xi32>
    %1562 = arith.cmpi eq, %26, %1561 : vector<16x16xi32>
    %cst_440 = arith.constant 0.000000e+00 : f32
    %1563 = vector.broadcast %cst_440 : f32 to vector<16x16xf32>
    %1564 = arith.select %1562, %1481, %1563 : vector<16x16xi1>, vector<16x16xf32>
    %cst_441 = arith.constant dense<0.000000e+00> : vector<16xf32>
    %1565 = vector.multi_reduction <add>, %1564, %cst_441 [1] : vector<16x16xf32> to vector<16xf32>
    %1566 = vector.shape_cast %1565 : vector<16xf32> to vector<16x1xf32>
    %1567 = vector.extract_strided_slice %23 {offsets = [7, 0], sizes = [1, 8], strides = [1, 1]} : vector<9x8xf32> to vector<1x8xf32>
    %1568 = vector.broadcast %1566 : vector<16x1xf32> to vector<16x8xf32>
    %1569 = vector.broadcast %1567 : vector<1x8xf32> to vector<16x8xf32>
    %1570 = arith.mulf %1568, %1569 : vector<16x8xf32>
    %1571 = arith.addf %1560, %1570 : vector<16x8xf32>
    %c4_i32_442 = arith.constant 4 : i32
    %1572 = vector.broadcast %c4_i32_442 : i32 to vector<16x16xi32>
    %1573 = arith.cmpi eq, %26, %1572 : vector<16x16xi32>
    %cst_443 = arith.constant 0.000000e+00 : f32
    %1574 = vector.broadcast %cst_443 : f32 to vector<16x16xf32>
    %1575 = arith.select %1573, %1481, %1574 : vector<16x16xi1>, vector<16x16xf32>
    %cst_444 = arith.constant dense<0.000000e+00> : vector<16xf32>
    %1576 = vector.multi_reduction <add>, %1575, %cst_444 [1] : vector<16x16xf32> to vector<16xf32>
    %1577 = vector.shape_cast %1576 : vector<16xf32> to vector<16x1xf32>
    %1578 = vector.extract_strided_slice %23 {offsets = [8, 0], sizes = [1, 8], strides = [1, 1]} : vector<9x8xf32> to vector<1x8xf32>
    %1579 = vector.broadcast %1577 : vector<16x1xf32> to vector<16x8xf32>
    %1580 = vector.broadcast %1578 : vector<1x8xf32> to vector<16x8xf32>
    %1581 = arith.mulf %1579, %1580 : vector<16x8xf32>
    %1582 = arith.addf %1571, %1581 : vector<16x8xf32>
    %1583 = arith.addf %1482, %1582 : vector<16x8xf32>
    %c16_445 = arith.constant 16 : index
    %c24_446 = arith.constant 24 : index
    %1584 = vector.load %arg14[%c16_445, %c24_446] : memref<32x32xf32, #tpu.memory_space<vmem>>, vector<16x8xf32>
    tpu.vector_store %arg14[%c16_445, %c24_446], %1583 {strides = array<i32>} : memref<32x32xf32, #tpu.memory_space<vmem>>, vector<16x8xf32>,
    %c0_447 = arith.constant 0 : index
    %c0_448 = arith.constant 0 : index
    %1585 = vector.load %arg7[%c0_447, %c0_448] : memref<6x32xf32, #tpu.memory_space<vmem>>, vector<6x32xf32>
    %1586 = vector.extract_strided_slice %1585 {offsets = [0, 0], sizes = [1, 32], strides = [1, 1]} : vector<6x32xf32> to vector<1x32xf32>
    %1587 = vector.extract_strided_slice %1585 {offsets = [1, 0], sizes = [1, 32], strides = [1, 1]} : vector<6x32xf32> to vector<1x32xf32>
    %1588 = vector.extract_strided_slice %1585 {offsets = [2, 0], sizes = [1, 32], strides = [1, 1]} : vector<6x32xf32> to vector<1x32xf32>
    %1589 = vector.extract_strided_slice %1585 {offsets = [3, 0], sizes = [1, 32], strides = [1, 1]} : vector<6x32xf32> to vector<1x32xf32>
    %1590 = vector.extract_strided_slice %1585 {offsets = [4, 0], sizes = [1, 32], strides = [1, 1]} : vector<6x32xf32> to vector<1x32xf32>
    %1591 = vector.extract_strided_slice %1585 {offsets = [5, 0], sizes = [1, 32], strides = [1, 1]} : vector<6x32xf32> to vector<1x32xf32>
    %c0_449 = arith.constant 0 : index
    %c0_450 = arith.constant 0 : index
    %1592 = vector.load %arg14[%c0_449, %c0_450] : memref<32x32xf32, #tpu.memory_space<vmem>>, vector<32x32xf32>
    %c0_451 = arith.constant 0 : index
    %c0_452 = arith.constant 0 : index
    %1593 = vector.load %arg6[%c0_451, %c0_452] : memref<32x32xf32, #tpu.memory_space<vmem>>, vector<32x32xf32>
    %cst_453 = arith.constant dense<0.000000e+00> : vector<32x32xf32>
    %1594 = tpu.matmul %1592, %1593, %cst_453 {dimension_numbers = #tpu.dot_dimension_numbers<[1], [0], [0], [1], [0, 0, 1, 1], [], []>} : vector<32x32xf32>, vector<32x32xf32>, vector<32x32xf32> -> vector<32x32xf32>
    %1595 = vector.broadcast %1586 : vector<1x32xf32> to vector<32x32xf32>
    %1596 = arith.addf %1594, %1595 : vector<32x32xf32>
    %1597 = arith.addf %1596, %6 : vector<32x32xf32>
    %1598 = vector.broadcast %11 : vector<32x1xf32> to vector<32x32xf32>
    %1599 = arith.mulf %1597, %1598 : vector<32x32xf32>
    %cst_454 = arith.constant dense<0.000000e+00> : vector<32xf32>
    %1600 = vector.multi_reduction <add>, %1599, %cst_454 [1] : vector<32x32xf32> to vector<32xf32>
    %1601 = vector.shape_cast %1600 : vector<32xf32> to vector<32x1xf32>
    %cst_455 = arith.constant 3.200000e+01 : f32
    %1602 = vector.broadcast %cst_455 : f32 to vector<32x1xf32>
    %1603 = arith.divf %1601, %1602 : vector<32x1xf32>
    %1604 = vector.broadcast %1603 : vector<32x1xf32> to vector<32x32xf32>
    %1605 = arith.subf %1599, %1604 : vector<32x32xf32>
    %1606 = arith.mulf %1605, %1605 : vector<32x32xf32>
    %cst_456 = arith.constant dense<0.000000e+00> : vector<32xf32>
    %1607 = vector.multi_reduction <add>, %1606, %cst_456 [1] : vector<32x32xf32> to vector<32xf32>
    %1608 = vector.shape_cast %1607 : vector<32xf32> to vector<32x1xf32>
    %cst_457 = arith.constant 3.200000e+01 : f32
    %1609 = vector.broadcast %cst_457 : f32 to vector<32x1xf32>
    %1610 = arith.divf %1608, %1609 : vector<32x1xf32>
    %1611 = vector.broadcast %1603 : vector<32x1xf32> to vector<32x32xf32>
    %1612 = arith.subf %1599, %1611 : vector<32x32xf32>
    %cst_458 = arith.constant 9.99999974E-6 : f32
    %1613 = vector.broadcast %cst_458 : f32 to vector<32x1xf32>
    %1614 = arith.addf %1610, %1613 : vector<32x1xf32>
    %1615 = math.rsqrt %1614 : vector<32x1xf32>
    %1616 = vector.broadcast %1615 : vector<32x1xf32> to vector<32x32xf32>
    %1617 = arith.mulf %1612, %1616 : vector<32x32xf32>
    %1618 = vector.broadcast %1587 : vector<1x32xf32> to vector<32x32xf32>
    %1619 = arith.mulf %1617, %1618 : vector<32x32xf32>
    %1620 = vector.broadcast %1588 : vector<1x32xf32> to vector<32x32xf32>
    %1621 = arith.addf %1619, %1620 : vector<32x32xf32>
    %1622 = tpu.iota {dimensions = array<i32: 0>} : vector<16x1xi32>
    %1623 = tpu.concatenate %1622, %1622 in 0 : vector<16x1xi32>, vector<16x1xi32> -> vector<32x1xi32>
    %1624 = vector.broadcast %11 : vector<32x1xf32> to vector<32x32xf32>
    %1625 = arith.mulf %1621, %1624 : vector<32x32xf32>
    %cst_459 = arith.constant 0.000000e+00 : f32
    %1626 = vector.broadcast %cst_459 : f32 to vector<1x32xf32>
    %cst_460 = arith.constant 0.000000e+00 : f32
    %1627 = vector.broadcast %cst_460 : f32 to vector<1x32xf32>
    %1628 = tpu.concatenate %1626, %1625, %1627 in 0 : vector<1x32xf32>, vector<32x32xf32>, vector<1x32xf32> -> vector<34x32xf32>
    %1629 = vector.extract_strided_slice %1628 {offsets = [0, 0], sizes = [32, 32], strides = [1, 1]} : vector<34x32xf32> to vector<32x32xf32>
    %c-1_i32_461 = arith.constant -1 : i32
    %1630 = vector.broadcast %c-1_i32_461 : i32 to vector<32x1xi32>
    %1631 = arith.addi %1623, %1630 : vector<32x1xi32>
    %c0_i32_462 = arith.constant 0 : i32
    %1632 = vector.broadcast %c0_i32_462 : i32 to vector<32x1xi32>
    %1633 = arith.cmpi sge, %1631, %1632 : vector<32x1xi32>
    %c-1_i32_463 = arith.constant -1 : i32
    %1634 = vector.broadcast %c-1_i32_463 : i32 to vector<32x1xi32>
    %1635 = arith.addi %1623, %1634 : vector<32x1xi32>
    %c16_i32 = arith.constant 16 : i32
    %1636 = vector.broadcast %c16_i32 : i32 to vector<32x1xi32>
    %1637 = arith.cmpi slt, %1635, %1636 : vector<32x1xi32>
    %1638 = arith.andi %1633, %1637 : vector<32x1xi1>
    %cst_464 = arith.constant 0.000000e+00 : f32
    %1639 = vector.shape_cast %1638 : vector<32x1xi1> to vector<32x1xi1>
    %1640 = vector.broadcast %1639 : vector<32x1xi1> to vector<32x32xi1>
    %1641 = vector.broadcast %cst_464 : f32 to vector<32x32xf32>
    %1642 = arith.select %1640, %1629, %1641 : vector<32x32xi1>, vector<32x32xf32>
    %1643 = vector.extract_strided_slice %1628 {offsets = [1, 0], sizes = [32, 32], strides = [1, 1]} : vector<34x32xf32> to vector<32x32xf32>
    %1644 = vector.extract_strided_slice %1628 {offsets = [2, 0], sizes = [32, 32], strides = [1, 1]} : vector<34x32xf32> to vector<32x32xf32>
    %c1_i32_465 = arith.constant 1 : i32
    %1645 = vector.broadcast %c1_i32_465 : i32 to vector<32x1xi32>
    %1646 = arith.addi %1623, %1645 : vector<32x1xi32>
    %c0_i32_466 = arith.constant 0 : i32
    %1647 = vector.broadcast %c0_i32_466 : i32 to vector<32x1xi32>
    %1648 = arith.cmpi sge, %1646, %1647 : vector<32x1xi32>
    %c1_i32_467 = arith.constant 1 : i32
    %1649 = vector.broadcast %c1_i32_467 : i32 to vector<32x1xi32>
    %1650 = arith.addi %1623, %1649 : vector<32x1xi32>
    %c16_i32_468 = arith.constant 16 : i32
    %1651 = vector.broadcast %c16_i32_468 : i32 to vector<32x1xi32>
    %1652 = arith.cmpi slt, %1650, %1651 : vector<32x1xi32>
    %1653 = arith.andi %1648, %1652 : vector<32x1xi1>
    %cst_469 = arith.constant 0.000000e+00 : f32
    %1654 = vector.shape_cast %1653 : vector<32x1xi1> to vector<32x1xi1>
    %1655 = vector.broadcast %1654 : vector<32x1xi1> to vector<32x32xi1>
    %1656 = vector.broadcast %cst_469 : f32 to vector<32x32xf32>
    %1657 = arith.select %1655, %1644, %1656 : vector<32x32xi1>, vector<32x32xf32>
    %1658 = tpu.concatenate %1642, %1643, %1657 in 1 : vector<32x32xf32>, vector<32x32xf32>, vector<32x32xf32> -> vector<32x96xf32>
    %c0_470 = arith.constant 0 : index
    %c0_471 = arith.constant 0 : index
    %1659 = vector.load %arg8[%c0_470, %c0_471] : memref<96x64xf32, #tpu.memory_space<vmem>>, vector<96x64xf32>
    %cst_472 = arith.constant dense<0.000000e+00> : vector<32x64xf32>
    %1660 = tpu.matmul %1658, %1659, %cst_472 {dimension_numbers = #tpu.dot_dimension_numbers<[1], [0], [0], [1], [0, 0, 1, 1], [], []>} : vector<32x96xf32>, vector<96x64xf32>, vector<32x64xf32> -> vector<32x64xf32>
    %c0_473 = arith.constant 0 : index
    %c0_474 = arith.constant 0 : index
    %1661 = vector.load %arg9[%c0_473, %c0_474] : memref<1x64xf32, #tpu.memory_space<vmem>>, vector<1x64xf32>
    %1662 = vector.broadcast %1661 : vector<1x64xf32> to vector<32x64xf32>
    %1663 = arith.addf %1660, %1662 : vector<32x64xf32>
    %cst_475 = arith.constant 0.000000e+00 : f32
    %1664 = vector.broadcast %cst_475 : f32 to vector<32x64xf32>
    %1665 = arith.maximumf %1663, %1664 : vector<32x64xf32>
    %1666 = vector.broadcast %11 : vector<32x1xf32> to vector<32x64xf32>
    %1667 = arith.mulf %1665, %1666 : vector<32x64xf32>
    %cst_476 = arith.constant 0.000000e+00 : f32
    %1668 = vector.broadcast %cst_476 : f32 to vector<1x64xf32>
    %cst_477 = arith.constant 0.000000e+00 : f32
    %1669 = vector.broadcast %cst_477 : f32 to vector<1x64xf32>
    %1670 = tpu.concatenate %1668, %1667, %1669 in 0 : vector<1x64xf32>, vector<32x64xf32>, vector<1x64xf32> -> vector<34x64xf32>
    %1671 = vector.extract_strided_slice %1670 {offsets = [0, 0], sizes = [32, 64], strides = [1, 1]} : vector<34x64xf32> to vector<32x64xf32>
    %c-1_i32_478 = arith.constant -1 : i32
    %1672 = vector.broadcast %c-1_i32_478 : i32 to vector<32x1xi32>
    %1673 = arith.addi %1623, %1672 : vector<32x1xi32>
    %c0_i32_479 = arith.constant 0 : i32
    %1674 = vector.broadcast %c0_i32_479 : i32 to vector<32x1xi32>
    %1675 = arith.cmpi sge, %1673, %1674 : vector<32x1xi32>
    %c-1_i32_480 = arith.constant -1 : i32
    %1676 = vector.broadcast %c-1_i32_480 : i32 to vector<32x1xi32>
    %1677 = arith.addi %1623, %1676 : vector<32x1xi32>
    %c16_i32_481 = arith.constant 16 : i32
    %1678 = vector.broadcast %c16_i32_481 : i32 to vector<32x1xi32>
    %1679 = arith.cmpi slt, %1677, %1678 : vector<32x1xi32>
    %1680 = arith.andi %1675, %1679 : vector<32x1xi1>
    %cst_482 = arith.constant 0.000000e+00 : f32
    %1681 = vector.shape_cast %1680 : vector<32x1xi1> to vector<32x1xi1>
    %1682 = vector.broadcast %1681 : vector<32x1xi1> to vector<32x64xi1>
    %1683 = vector.broadcast %cst_482 : f32 to vector<32x64xf32>
    %1684 = arith.select %1682, %1671, %1683 : vector<32x64xi1>, vector<32x64xf32>
    %1685 = vector.extract_strided_slice %1670 {offsets = [1, 0], sizes = [32, 64], strides = [1, 1]} : vector<34x64xf32> to vector<32x64xf32>
    %1686 = vector.extract_strided_slice %1670 {offsets = [2, 0], sizes = [32, 64], strides = [1, 1]} : vector<34x64xf32> to vector<32x64xf32>
    %c1_i32_483 = arith.constant 1 : i32
    %1687 = vector.broadcast %c1_i32_483 : i32 to vector<32x1xi32>
    %1688 = arith.addi %1623, %1687 : vector<32x1xi32>
    %c0_i32_484 = arith.constant 0 : i32
    %1689 = vector.broadcast %c0_i32_484 : i32 to vector<32x1xi32>
    %1690 = arith.cmpi sge, %1688, %1689 : vector<32x1xi32>
    %c1_i32_485 = arith.constant 1 : i32
    %1691 = vector.broadcast %c1_i32_485 : i32 to vector<32x1xi32>
    %1692 = arith.addi %1623, %1691 : vector<32x1xi32>
    %c16_i32_486 = arith.constant 16 : i32
    %1693 = vector.broadcast %c16_i32_486 : i32 to vector<32x1xi32>
    %1694 = arith.cmpi slt, %1692, %1693 : vector<32x1xi32>
    %1695 = arith.andi %1690, %1694 : vector<32x1xi1>
    %cst_487 = arith.constant 0.000000e+00 : f32
    %1696 = vector.shape_cast %1695 : vector<32x1xi1> to vector<32x1xi1>
    %1697 = vector.broadcast %1696 : vector<32x1xi1> to vector<32x64xi1>
    %1698 = vector.broadcast %cst_487 : f32 to vector<32x64xf32>
    %1699 = arith.select %1697, %1686, %1698 : vector<32x64xi1>, vector<32x64xf32>
    %1700 = tpu.concatenate %1684, %1685, %1699 in 1 : vector<32x64xf32>, vector<32x64xf32>, vector<32x64xf32> -> vector<32x192xf32>
    %c0_488 = arith.constant 0 : index
    %c0_489 = arith.constant 0 : index
    %1701 = vector.load %arg10[%c0_488, %c0_489] : memref<192x32xf32, #tpu.memory_space<vmem>>, vector<192x32xf32>
    %cst_490 = arith.constant dense<0.000000e+00> : vector<32x32xf32>
    %1702 = tpu.matmul %1700, %1701, %cst_490 {dimension_numbers = #tpu.dot_dimension_numbers<[1], [0], [0], [1], [0, 0, 1, 1], [], []>} : vector<32x192xf32>, vector<192x32xf32>, vector<32x32xf32> -> vector<32x32xf32>
    %1703 = vector.broadcast %1591 : vector<1x32xf32> to vector<32x32xf32>
    %1704 = arith.addf %1702, %1703 : vector<32x32xf32>
    %1705 = arith.addf %1704, %1621 : vector<32x32xf32>
    %1706 = vector.broadcast %11 : vector<32x1xf32> to vector<32x32xf32>
    %1707 = arith.mulf %1705, %1706 : vector<32x32xf32>
    %cst_491 = arith.constant dense<0.000000e+00> : vector<32xf32>
    %1708 = vector.multi_reduction <add>, %1707, %cst_491 [1] : vector<32x32xf32> to vector<32xf32>
    %1709 = vector.shape_cast %1708 : vector<32xf32> to vector<32x1xf32>
    %cst_492 = arith.constant 3.200000e+01 : f32
    %1710 = vector.broadcast %cst_492 : f32 to vector<32x1xf32>
    %1711 = arith.divf %1709, %1710 : vector<32x1xf32>
    %1712 = vector.broadcast %1711 : vector<32x1xf32> to vector<32x32xf32>
    %1713 = arith.subf %1707, %1712 : vector<32x32xf32>
    %1714 = arith.mulf %1713, %1713 : vector<32x32xf32>
    %cst_493 = arith.constant dense<0.000000e+00> : vector<32xf32>
    %1715 = vector.multi_reduction <add>, %1714, %cst_493 [1] : vector<32x32xf32> to vector<32xf32>
    %1716 = vector.shape_cast %1715 : vector<32xf32> to vector<32x1xf32>
    %cst_494 = arith.constant 3.200000e+01 : f32
    %1717 = vector.broadcast %cst_494 : f32 to vector<32x1xf32>
    %1718 = arith.divf %1716, %1717 : vector<32x1xf32>
    %1719 = vector.broadcast %1711 : vector<32x1xf32> to vector<32x32xf32>
    %1720 = arith.subf %1707, %1719 : vector<32x32xf32>
    %cst_495 = arith.constant 9.99999974E-6 : f32
    %1721 = vector.broadcast %cst_495 : f32 to vector<32x1xf32>
    %1722 = arith.addf %1718, %1721 : vector<32x1xf32>
    %1723 = math.rsqrt %1722 : vector<32x1xf32>
    %1724 = vector.broadcast %1723 : vector<32x1xf32> to vector<32x32xf32>
    %1725 = arith.mulf %1720, %1724 : vector<32x32xf32>
    %1726 = vector.broadcast %1589 : vector<1x32xf32> to vector<32x32xf32>
    %1727 = arith.mulf %1725, %1726 : vector<32x32xf32>
    %1728 = vector.broadcast %1590 : vector<1x32xf32> to vector<32x32xf32>
    %1729 = arith.addf %1727, %1728 : vector<32x32xf32>
    %1730 = vector.extract_strided_slice %1729 {offsets = [0, 0], sizes = [16, 32], strides = [1, 1]} : vector<32x32xf32> to vector<16x32xf32>
    %1731 = tpu.transpose %1730, [1, 0] : vector<16x32xf32> -> vector<32x16xf32>
    %c0_496 = arith.constant 0 : index
    %c0_497 = arith.constant 0 : index
    %c0_498 = arith.constant 0 : index
    %1732 = vector.load %arg13[%c0_496, %c0_497, %c0_498] : memref<2x32x16xf32, #tpu.memory_space<vmem>>, vector<1x32x16xf32>
    %1733 = vector.shape_cast %1732 : vector<1x32x16xf32> to vector<32x16xf32>
    %1734 = vector.shape_cast %1731 : vector<32x16xf32> to vector<1x32x16xf32>
    tpu.vector_store %arg13[%c0_496, %c0_497, %c0_498], %1734 {strides = array<i32>} : memref<2x32x16xf32, #tpu.memory_space<vmem>>, vector<1x32x16xf32>,
    %1735 = vector.extract_strided_slice %1729 {offsets = [16, 0], sizes = [16, 32], strides = [1, 1]} : vector<32x32xf32> to vector<16x32xf32>
    %1736 = tpu.transpose %1735, [1, 0] : vector<16x32xf32> -> vector<32x16xf32>
    %c1_499 = arith.constant 1 : index
    %c0_500 = arith.constant 0 : index
    %c0_501 = arith.constant 0 : index
    %1737 = vector.load %arg13[%c1_499, %c0_500, %c0_501] : memref<2x32x16xf32, #tpu.memory_space<vmem>>, vector<1x32x16xf32>
    %1738 = vector.shape_cast %1737 : vector<1x32x16xf32> to vector<32x16xf32>
    %1739 = vector.shape_cast %1736 : vector<32x16xf32> to vector<1x32x16xf32>
    tpu.vector_store %arg13[%c1_499, %c0_500, %c0_501], %1739 {strides = array<i32>} : memref<2x32x16xf32, #tpu.memory_space<vmem>>, vector<1x32x16xf32>,
    return
  }
  func.func @transform_0(%arg0: i32) -> (i32, i32, i32) {
    %c0_i32 = arith.constant 0 : i32
    %c0_i32_0 = arith.constant 0 : i32
    %c0_i32_1 = arith.constant 0 : i32
    return %arg0, %c0_i32, %c0_i32_0 : i32, i32, i32
  }
  func.func @transform_1(%arg0: i32) -> (i32, i32, i32) {
    %c0_i32 = arith.constant 0 : i32
    %c0_i32_0 = arith.constant 0 : i32
    %c0_i32_1 = arith.constant 0 : i32
    return %arg0, %c0_i32, %c0_i32_0 : i32, i32, i32
  }
  func.func @transform_2(%arg0: i32) -> (i32, i32, i32) {
    %c0_i32 = arith.constant 0 : i32
    %c0_i32_0 = arith.constant 0 : i32
    %c0_i32_1 = arith.constant 0 : i32
    return %arg0, %c0_i32, %c0_i32_0 : i32, i32, i32
  }
  func.func @transform_3(%arg0: i32) -> (i32, i32) {
    %c0_i32 = arith.constant 0 : i32
    %c0_i32_0 = arith.constant 0 : i32
    %c0_i32_1 = arith.constant 0 : i32
    return %c0_i32, %c0_i32_0 : i32, i32
  }
  func.func @transform_4(%arg0: i32) -> (i32, i32) {
    %c0_i32 = arith.constant 0 : i32
    %c0_i32_0 = arith.constant 0 : i32
    %c0_i32_1 = arith.constant 0 : i32
    return %c0_i32, %c0_i32_0 : i32, i32
  }
  func.func @transform_5(%arg0: i32) -> (i32, i32) {
    %c0_i32 = arith.constant 0 : i32
    %c0_i32_0 = arith.constant 0 : i32
    %c0_i32_1 = arith.constant 0 : i32
    return %c0_i32, %c0_i32_0 : i32, i32
  }
  func.func @transform_6(%arg0: i32) -> (i32, i32) {
    %c0_i32 = arith.constant 0 : i32
    %c0_i32_0 = arith.constant 0 : i32
    %c0_i32_1 = arith.constant 0 : i32
    return %c0_i32, %c0_i32_0 : i32, i32
  }
  func.func @transform_7(%arg0: i32) -> (i32, i32) {
    %c0_i32 = arith.constant 0 : i32
    %c0_i32_0 = arith.constant 0 : i32
    %c0_i32_1 = arith.constant 0 : i32
    return %c0_i32, %c0_i32_0 : i32, i32
  }
  func.func @transform_8(%arg0: i32) -> (i32, i32) {
    %c0_i32 = arith.constant 0 : i32
    %c0_i32_0 = arith.constant 0 : i32
    %c0_i32_1 = arith.constant 0 : i32
    return %c0_i32, %c0_i32_0 : i32, i32
  }
  func.func @transform_9(%arg0: i32) -> (i32, i32) {
    %c0_i32 = arith.constant 0 : i32
    %c0_i32_0 = arith.constant 0 : i32
    %c0_i32_1 = arith.constant 0 : i32
    return %c0_i32, %c0_i32_0 : i32, i32
  }
  func.func @transform_10(%arg0: i32) -> (i32, i32) {
    %c0_i32 = arith.constant 0 : i32
    %c0_i32_0 = arith.constant 0 : i32
    %c0_i32_1 = arith.constant 0 : i32
    return %c0_i32, %c0_i32_0 : i32, i32
  }
  func.func @transform_11(%arg0: i32) -> (i32, i32) {
    %c0_i32 = arith.constant 0 : i32
    %c0_i32_0 = arith.constant 0 : i32
    %c0_i32_1 = arith.constant 0 : i32
    return %c0_i32, %c0_i32_0 : i32, i32
  }
  func.func @transform_12(%arg0: i32) -> (i32, i32, i32) {
    %c0_i32 = arith.constant 0 : i32
    %c0_i32_0 = arith.constant 0 : i32
    %c0_i32_1 = arith.constant 0 : i32
    return %arg0, %c0_i32, %c0_i32_0 : i32, i32, i32
  }
}

</mosaic_0001>

<llo_original>
// kernel: tpu_custom_call.1
$region0: #{tpu_custom_call.1}
  #allocation0 [shape = 'u32[]', space=smem, size = 0x4, offset = 0x4, fixed_abs, tag = 'smem constant byte address 0x4 - core index']
  #allocation1 [shape = 'u32[144,128]{1,0:T(1,128)}', space=vmem, size = 0x12000, scoped, tag = 'internal scratch']
  #allocation2 [shape = 'f32[32,32]{1,0:T(8,128)}', space=vmem, size = 0x4000, scoped, tag = 'scratch operand']
  %s0 = inlined_call_operand.vmem [shape: f32[2,32,16], index: 0, kind: input, shape index: {}]
  %s1 = inlined_call_operand.vmem [shape: f32[2,16,1], index: 1, kind: input, shape index: {}]
  %s2 = inlined_call_operand.vmem [shape: f32[2,1,16], index: 2, kind: input, shape index: {}]
  %s3 = inlined_call_operand.vmem [shape: f32[32,96], index: 3, kind: input, shape index: {}]
  %s4 = inlined_call_operand.vmem [shape: f32[1,96], index: 4, kind: input, shape index: {}]
  %s5 = inlined_call_operand.vmem [shape: f32[32,32], index: 5, kind: input, shape index: {}]
  %s6 = inlined_call_operand.vmem [shape: f32[6,32], index: 6, kind: input, shape index: {}]
  %s7 = inlined_call_operand.vmem [shape: f32[96,64], index: 7, kind: input, shape index: {}]
  %s8 = inlined_call_operand.vmem [shape: f32[1,64], index: 8, kind: input, shape index: {}]
  %s9 = inlined_call_operand.vmem [shape: f32[192,32], index: 9, kind: input, shape index: {}]
  %s10 = inlined_call_operand.vmem [shape: f32[8,9], index: 10, kind: input, shape index: {}]
  %s11 = inlined_call_operand.vmem [shape: f32[9,8], index: 11, kind: input, shape index: {}]
  %s12 = inlined_call_operand.vmem [shape: f32[2,32,16], index: 12, kind: output, shape index: {}]
  %s13 = sld [smem:[#allocation0]]
  $region58: #{tpu_custom_call.1} parent=0
    _
  %s15 = ssub.s32 1, %s13
  %s16 = scalar_select 0, %s15, %s13
  // Predicated region
  $region2: #{tpu_custom_call.1} parent=0 // pred_check
    _
  $region3: #{tpu_custom_call.1} parent=0 // pred_check_branch
    %18 = sbr.rel (0) target = $region5
  $region4: #{tpu_custom_call.1} parent=0 // pred_region
    _
  $region5: #{tpu_custom_call.1} parent=0 // pred_fallthru
    _
  // Predicated region
  $region6: #{tpu_custom_call.1} parent=0 // pred_check
    _
  $region7: #{tpu_custom_call.1} parent=0 // pred_check_branch
    %20 = sbr.rel (0) target = $region9
  $region8: #{tpu_custom_call.1} parent=0 // pred_region
    _
  $region9: #{tpu_custom_call.1} parent=0 // pred_fallthru
    _
  // Predicated region
  $region10: #{tpu_custom_call.1} parent=0 // pred_check
    _
  $region11: #{tpu_custom_call.1} parent=0 // pred_check_branch
    %22 = sbr.rel (0) target = $region13
  $region12: #{tpu_custom_call.1} parent=0 // pred_region
    _
  $region13: #{tpu_custom_call.1} parent=0 // pred_fallthru
    _
  // Predicated region
  $region14: #{tpu_custom_call.1} parent=0 // pred_check
    _
  $region15: #{tpu_custom_call.1} parent=0 // pred_check_branch
    %24 = sbr.rel (0) target = $region17
  $region16: #{tpu_custom_call.1} parent=0 // pred_region
    _
  $region17: #{tpu_custom_call.1} parent=0 // pred_fallthru
    _
  // Predicated region
  $region18: #{tpu_custom_call.1} parent=0 // pred_check
    _
  $region19: #{tpu_custom_call.1} parent=0 // pred_check_branch
    %26 = sbr.rel (0) target = $region21
  $region20: #{tpu_custom_call.1} parent=0 // pred_region
    _
  $region21: #{tpu_custom_call.1} parent=0 // pred_fallthru
    _
  // Predicated region
  $region22: #{tpu_custom_call.1} parent=0 // pred_check
    _
  $region23: #{tpu_custom_call.1} parent=0 // pred_check_branch
    %28 = sbr.rel (0) target = $region25
  $region24: #{tpu_custom_call.1} parent=0 // pred_region
    _
  $region25: #{tpu_custom_call.1} parent=0 // pred_fallthru
    _
  // Predicated region
  $region26: #{tpu_custom_call.1} parent=0 // pred_check
    _
  $region27: #{tpu_custom_call.1} parent=0 // pred_check_branch
    %30 = sbr.rel (0) target = $region29
  $region28: #{tpu_custom_call.1} parent=0 // pred_region
    _
  $region29: #{tpu_custom_call.1} parent=0 // pred_fallthru
    _
  // Predicated region
  $region30: #{tpu_custom_call.1} parent=0 // pred_check
    _
  $region31: #{tpu_custom_call.1} parent=0 // pred_check_branch
    %32 = sbr.rel (0) target = $region33
  $region32: #{tpu_custom_call.1} parent=0 // pred_region
    _
  $region33: #{tpu_custom_call.1} parent=0 // pred_fallthru
    _
  // Predicated region
  $region34: #{tpu_custom_call.1} parent=0 // pred_check
    _
  $region35: #{tpu_custom_call.1} parent=0 // pred_check_branch
    %34 = sbr.rel (0) target = $region37
  $region36: #{tpu_custom_call.1} parent=0 // pred_region
    _
  $region37: #{tpu_custom_call.1} parent=0 // pred_fallthru
    _
  // Predicated region
  $region38: #{tpu_custom_call.1} parent=0 // pred_check
    _
  $region39: #{tpu_custom_call.1} parent=0 // pred_check_branch
    %36 = sbr.rel (0) target = $region41
  $region40: #{tpu_custom_call.1} parent=0 // pred_region
    _
  $region41: #{tpu_custom_call.1} parent=0 // pred_fallthru
    _
  // Predicated region
  $region42: #{tpu_custom_call.1} parent=0 // pred_check
    _
  $region43: #{tpu_custom_call.1} parent=0 // pred_check_branch
    %38 = sbr.rel (0) target = $region45
  $region44: #{tpu_custom_call.1} parent=0 // pred_region
    _
  $region45: #{tpu_custom_call.1} parent=0 // pred_fallthru
    _
  // Predicated region
  $region46: #{tpu_custom_call.1} parent=0 // pred_check
    _
  $region47: #{tpu_custom_call.1} parent=0 // pred_check_branch
    %40 = sbr.rel (0) target = $region49
  $region48: #{tpu_custom_call.1} parent=0 // pred_region
    _
  $region49: #{tpu_custom_call.1} parent=0 // pred_fallthru
    _
  %v41 = vld [vmem:[%s0] sm:$0xff]
  %v42 = vld [vmem:[%s0 + $0x8] sm:$0xff]
  %v43 = vld [vmem:[%s0 + $0x10] sm:$0xff]
  %v44 = vld [vmem:[%s0 + $0x18] sm:$0xff]
  %45 = vxpose.xlu0.b32.start [1/16] %v41, 128
  %46 = vxpose.xlu0.b32.cont [2/16] %v42, 128
  %47 = vxpose.xlu0.b32.cont [3/16] %v43, 128
  %48 = vxpose.xlu0.b32.cont [4/16] %v44, 128
  %49 = vxpose.xlu0.b32.cont [5/16] 0.0, 128
  %50 = vxpose.xlu0.b32.cont [6/16] 0.0, 128
  %51 = vxpose.xlu0.b32.cont [7/16] 0.0, 128
  %52 = vxpose.xlu0.b32.cont [8/16] 0.0, 128
  %53 = vxpose.xlu0.b32.cont [9/16] 0.0, 128
  %54 = vxpose.xlu0.b32.cont [10/16] 0.0, 128
  %55 = vxpose.xlu0.b32.cont [11/16] 0.0, 128
  %56 = vxpose.xlu0.b32.cont [12/16] 0.0, 128
  %57 = vxpose.xlu0.b32.cont [13/16] 0.0, 128
  %58 = vxpose.xlu0.b32.cont [14/16] 0.0, 128
  %59 = vxpose.xlu0.b32.cont [15/16] 0.0, 128
  %60 = vxpose.xlu0.b32.end [16/16] 0.0, 128
  %v61 = vpop.trf.xlu0
  %v62 = vpop.trf.xlu0
  %v63 = vpop.trf.xlu0
  %v64 = vpop.trf.xlu0
  %v65 = vpop.trf.xlu0
  %v66 = vpop.trf.xlu0
  %v67 = vpop.trf.xlu0
  %v68 = vpop.trf.xlu0
  %v69 = vpop.trf.xlu0
  %v70 = vpop.trf.xlu0
  %v71 = vpop.trf.xlu0
  %v72 = vpop.trf.xlu0
  %v73 = vpop.trf.xlu0
  %v74 = vpop.trf.xlu0
  %v75 = vpop.trf.xlu0
  %v76 = vpop.trf.xlu0
  %s77 = scalar_lea.vmem %s0, 32
  %v78 = vld [vmem:[%s77] sm:$0xff]
  %v79 = vld [vmem:[%s77 + $0x8] sm:$0xff]
  %v80 = vld [vmem:[%s77 + $0x10] sm:$0xff]
  %v81 = vld [vmem:[%s77 + $0x18] sm:$0xff]
  %82 = vxpose.xlu0.b32.start [1/16] %v78, 128
  %83 = vxpose.xlu0.b32.cont [2/16] %v79, 128
  %84 = vxpose.xlu0.b32.cont [3/16] %v80, 128
  %85 = vxpose.xlu0.b32.cont [4/16] %v81, 128
  %86 = vxpose.xlu0.b32.cont [5/16] 0.0, 128
  %87 = vxpose.xlu0.b32.cont [6/16] 0.0, 128
  %88 = vxpose.xlu0.b32.cont [7/16] 0.0, 128
  %89 = vxpose.xlu0.b32.cont [8/16] 0.0, 128
  %90 = vxpose.xlu0.b32.cont [9/16] 0.0, 128
  %91 = vxpose.xlu0.b32.cont [10/16] 0.0, 128
  %92 = vxpose.xlu0.b32.cont [11/16] 0.0, 128
  %93 = vxpose.xlu0.b32.cont [12/16] 0.0, 128
  %94 = vxpose.xlu0.b32.cont [13/16] 0.0, 128
  %95 = vxpose.xlu0.b32.cont [14/16] 0.0, 128
  %96 = vxpose.xlu0.b32.cont [15/16] 0.0, 128
  %97 = vxpose.xlu0.b32.end [16/16] 0.0, 128
  %v98 = vpop.trf.xlu0
  %v99 = vpop.trf.xlu0
  %v100 = vpop.trf.xlu0
  %v101 = vpop.trf.xlu0
  %v102 = vpop.trf.xlu0
  %v103 = vpop.trf.xlu0
  %v104 = vpop.trf.xlu0
  %v105 = vpop.trf.xlu0
  %v106 = vpop.trf.xlu0
  %v107 = vpop.trf.xlu0
  %v108 = vpop.trf.xlu0
  %v109 = vpop.trf.xlu0
  %v110 = vpop.trf.xlu0
  %v111 = vpop.trf.xlu0
  %v112 = vpop.trf.xlu0
  %v113 = vpop.trf.xlu0
  %v114 = vld [vmem:[%s1] sm:$0xff]
  %v115 = vld [vmem:[%s1 + $0x8] sm:$0xff]
  %s116 = scalar_lea.vmem %s1, 16
  %v117 = vld [vmem:[%s116] sm:$0xff]
  %v118 = vld [vmem:[%s116 + $0x8] sm:$0xff]
  %v119 = vld [vmem:[%s3] sm:$0xff]
  %v120 = vld [vmem:[%s3 + $0x8] sm:$0xff]
  %v121 = vld [vmem:[%s3 + $0x10] sm:$0xff]
  %v122 = vld [vmem:[%s3 + $0x18] sm:$0xff]
  %v123 = vld [vmem:[%s4] sm:$0x1]
  %v125 = vlaneseq
  %v126 = vshrl.u32 %v125, 7
  %v127 = vsub.s32 0, %v126
  %v128 = vrot.slane %v123, %v127
  %vm130 = vcmask 261120
  %v132 = vsel %vm130, %v61, 0
  %v135 = vsel %vm130, %v62, 0
  %v138 = vsel %vm130, %v98, 0
  %v141 = vsel %vm130, %v99, 0
  %143 = vmatprep.subr.mxu0 0.0
  %144 = vmatpush1.msra.mxu0 %v119
  %145 = vmatprep.subr.mxu0 0.0
  %146 = vmatpush1.msra.mxu0 %v120
  %147 = vmatprep.subr.mxu0 0.0
  %148 = vmatpush1.msra.mxu0 %v121
  %149 = vmatprep.subr.mxu0 0.0
  %150 = vmatpush1.msra.mxu0 %v122
  %151 = vmatprep.subr.mxu0 0.0
  %152 = vmatpush1.msra.mxu0 0.0
  %153 = vmatprep.subr.mxu0 0.0
  %154 = vmatpush1.msra.mxu0 0.0
  %155 = vmatprep.subr.mxu0 0.0
  %156 = vmatpush1.msra.mxu0 0.0
  %157 = vmatprep.subr.mxu0 0.0
  %158 = vmatpush1.msra.mxu0 0.0
  %159 = vmatprep.subr.mxu0 0.0
  %160 = vmatpush1.msra.mxu0 0.0
  %161 = vmatprep.subr.mxu0 0.0
  %162 = vmatpush1.msra.mxu0 0.0
  %163 = vmatprep.subr.mxu0 0.0
  %164 = vmatpush1.msra.mxu0 0.0
  %165 = vmatprep.subr.mxu0 0.0
  %166 = vmatpush1.msra.mxu0 0.0
  %167 = vmatprep.subr.mxu0 0.0
  %168 = vmatpush1.msra.mxu0 0.0
  %169 = vmatprep.subr.mxu0 0.0
  %170 = vmatpush1.msra.mxu0 0.0
  %171 = vmatprep.subr.mxu0 0.0
  %172 = vmatpush1.msra.mxu0 0.0
  %173 = vmatprep.subr.mxu0 0.0
  %174 = vmatpush1.msra.mxu0 0.0
  %175 = vmatprep.subr.mxu0 0.0
  %176 = vmatpush1.msra.mxu0 0.0
  %177 = vmatprep.subr.mxu0 0.0
  %178 = vmatpush1.msra.mxu0 0.0
  %179 = vmatprep.subr.mxu0 0.0
  %180 = vmatpush1.msra.mxu0 0.0
  %181 = vmatprep.subr.mxu0 0.0
  %182 = vmatpush1.msra.mxu0 0.0
  %183 = vmatprep.subr.mxu0 0.0
  %184 = vmatpush1.msra.mxu0 0.0
  %185 = vmatprep.subr.mxu0 0.0
  %186 = vmatpush1.msra.mxu0 0.0
  %187 = vmatprep.subr.mxu0 0.0
  %188 = vmatpush1.msra.mxu0 0.0
  %189 = vmatprep.subr.mxu0 0.0
  %190 = vmatpush1.msra.mxu0 0.0
  %191 = vmatprep.subr.mxu0 0.0
  %192 = vmatpush1.msra.mxu0 0.0
  %193 = vmatprep.subr.mxu0 0.0
  %194 = vmatpush1.msra.mxu0 0.0
  %195 = vmatprep.subr.mxu0 0.0
  %196 = vmatpush1.msra.mxu0 0.0
  %197 = vmatprep.subr.mxu0 0.0
  %198 = vmatpush1.msra.mxu0 0.0
  %199 = vmatprep.subr.mxu0 0.0
  %200 = vmatpush1.msra.mxu0 0.0
  %201 = vmatprep.subr.mxu0 0.0
  %202 = vmatpush1.msra.mxu0 0.0
  %203 = vmatprep.subr.mxu0 0.0
  %204 = vmatpush1.msra.mxu0 0.0
  %205 = vmatprep.subr.mxu0 0.0
  %206 = vmatpush1.msra.mxu0 0.0
  %207 = vmatprep.mubr.f32.mxu0 0.0
  %208 = vmatmul.mubr.f32.gmra.mrb[0].mxu0 %v132
  %v209 = vpop.f32.mrb[0].mxu0
  %v210 = vadd.f32 %v128, %v209
  %v211 = vpop.f32.mrb[0].mxu0
  %212 = vmatprep.mubr.f32.mxu0 0.0
  %213 = vmatmul.mubr.f32.gmra.mrb[0].mxu0 %v135
  %v214 = vpop.f32.mrb[0].mxu0
  %v215 = vadd.f32 %v128, %v214
  %v216 = vpop.f32.mrb[0].mxu0
  %217 = vmatprep.mubr.f32.mxu0 0.0
  %218 = vmatmul.mubr.f32.gmra.mrb[0].mxu0 %v138
  %v219 = vpop.f32.mrb[0].mxu0
  %v220 = vadd.f32 %v128, %v219
  %v221 = vpop.f32.mrb[0].mxu0
  %222 = vmatprep.mubr.f32.mxu0 0.0
  %223 = vmatmul.mubr.f32.gmra.mrb[0].mxu0 %v141
  %v224 = vpop.f32.mrb[0].mxu0
  %v225 = vadd.f32 %v128, %v224
  %v226 = vpop.f32.mrb[0].mxu0
  %227 = vdwg.mxu0
  %v228 = vmul.f32 %v210, 0.35355338
  %v229 = vmul.f32 %v215, 0.35355338
  %v230 = vmul.f32 %v220, 0.35355338
  %v231 = vmul.f32 %v225, 0.35355338
  %v232 = vld [vmem:[%s10] sm:$0xff]
  %v233 = vld [vmem:[%s11] sm:$0xff]
  %v234 = vld [vmem:[%s11 + $0x8] sm:$0x1]
  %v235 = vlaneseq
  %v236 = vshrl.u32 %v235, 7
  %v237 = vadd.s32 %v236, 8
  %v238 = vlaneseq
  %v239 = vand.u32 %v238, 127
  %v240 = vsub.s32 %v239, %v236
  %v241 = vsub.s32 %v239, %v237
  %v242 = vld [vmem:[%s2] sm:$0x1]
  %244 = vset.pattern.permute.xlu0 0
  %245 = vperm.xlu0 %244, %v114
  %v246 = vpop.permute.xlu0 %245
  %249 = vset.pattern.permute.xlu0 0
  %250 = vperm.xlu0 %249, %v115
  %v251 = vpop.permute.xlu0 %250
  %v254 = vlaneseq
  %v255 = vshrl.u32 %v254, 7
  %v256 = vsub.s32 0, %v255
  %v257 = vrot.slane %v242, %v256
  %v259 = vmul.f32 %v246, %v257
  %v260 = vmul.f32 %v251, %v257
  %v261 = vsub.f32 %v259, 1.0
  %v262 = vsub.f32 %v260, 1.0
  %v263 = vmul.f32 %v261, 10000.0
  %v264 = vmul.f32 %v262, 10000.0
  %vm265 = vcmask 64512
  %v267 = vsel %vm265, %v228, 0
  %v270 = vsel %vm265, %v229, 0
  %272 = vmatprep.subr.mxu0 0.0
  %273 = vmatpush1.msra.mxu0 %v232
  %274 = vmatprep.subr.mxu0 0.0
  %275 = vmatpush1.msra.mxu0 0.0
  %276 = vmatprep.subr.mxu0 0.0
  %277 = vmatpush1.msra.mxu0 0.0
  %278 = vmatprep.subr.mxu0 0.0
  %279 = vmatpush1.msra.mxu0 0.0
  %280 = vmatprep.subr.mxu0 0.0
  %281 = vmatpush1.msra.mxu0 0.0
  %282 = vmatprep.subr.mxu0 0.0
  %283 = vmatpush1.msra.mxu0 0.0
  %284 = vmatprep.subr.mxu0 0.0
  %285 = vmatpush1.msra.mxu0 0.0
  %286 = vmatprep.subr.mxu0 0.0
  %287 = vmatpush1.msra.mxu0 0.0
  %288 = vmatprep.subr.mxu0 0.0
  %289 = vmatpush1.msra.mxu0 0.0
  %290 = vmatprep.subr.mxu0 0.0
  %291 = vmatpush1.msra.mxu0 0.0
  %292 = vmatprep.subr.mxu0 0.0
  %293 = vmatpush1.msra.mxu0 0.0
  %294 = vmatprep.subr.mxu0 0.0
  %295 = vmatpush1.msra.mxu0 0.0
  %296 = vmatprep.subr.mxu0 0.0
  %297 = vmatpush1.msra.mxu0 0.0
  %298 = vmatprep.subr.mxu0 0.0
  %299 = vmatpush1.msra.mxu0 0.0
  %300 = vmatprep.subr.mxu0 0.0
  %301 = vmatpush1.msra.mxu0 0.0
  %302 = vmatprep.subr.mxu0 0.0
  %303 = vmatpush1.msra.mxu0 0.0
  %304 = vmatprep.subr.mxu0 0.0
  %305 = vmatpush1.msra.mxu0 0.0
  %306 = vmatprep.subr.mxu0 0.0
  %307 = vmatpush1.msra.mxu0 0.0
  %308 = vmatprep.subr.mxu0 0.0
  %309 = vmatpush1.msra.mxu0 0.0
  %310 = vmatprep.subr.mxu0 0.0
  %311 = vmatpush1.msra.mxu0 0.0
  %312 = vmatprep.subr.mxu0 0.0
  %313 = vmatpush1.msra.mxu0 0.0
  %314 = vmatprep.subr.mxu0 0.0
  %315 = vmatpush1.msra.mxu0 0.0
  %316 = vmatprep.subr.mxu0 0.0
  %317 = vmatpush1.msra.mxu0 0.0
  %318 = vmatprep.subr.mxu0 0.0
  %319 = vmatpush1.msra.mxu0 0.0
  %320 = vmatprep.subr.mxu0 0.0
  %321 = vmatpush1.msra.mxu0 0.0
  %322 = vmatprep.subr.mxu0 0.0
  %323 = vmatpush1.msra.mxu0 0.0
  %324 = vmatprep.subr.mxu0 0.0
  %325 = vmatpush1.msra.mxu0 0.0
  %326 = vmatprep.subr.mxu0 0.0
  %327 = vmatpush1.msra.mxu0 0.0
  %328 = vmatprep.subr.mxu0 0.0
  %329 = vmatpush1.msra.mxu0 0.0
  %330 = vmatprep.subr.mxu0 0.0
  %331 = vmatpush1.msra.mxu0 0.0
  %332 = vmatprep.subr.mxu0 0.0
  %333 = vmatpush1.msra.mxu0 0.0
  %334 = vmatprep.subr.mxu0 0.0
  %335 = vmatpush1.msra.mxu0 0.0
  %336 = vmatprep.mubr.f32.mxu0 0.0
  %337 = vmatmul.mubr.f32.gmra.mrb[0].mxu0 %v267
  %v338 = vpop.f32.mrb[0].mxu0
  %v339 = vadd.f32 0.0, %v338
  %v340 = vpop.f32.mrb[0].mxu0
  %341 = vmatprep.mubr.f32.mxu0 0.0
  %342 = vmatmul.mubr.f32.gmra.mrb[0].mxu0 %v270
  %v343 = vpop.f32.mrb[0].mxu0
  %v344 = vadd.f32 0.0, %v343
  %v345 = vpop.f32.mrb[0].mxu0
  %346 = vdwg.mxu0
  %vm347 = vcmp.eq.s32.totalorder %v240, 4294967292
  %vm348 = vcmp.eq.s32.totalorder %v241, 4294967292
  %350 = vset.pattern.permute.xlu0 0
  %351 = vperm.xlu0 %350, %v339
  %v352 = vpop.permute.xlu0 %351
  %355 = vset.pattern.permute.xlu0 0
  %356 = vperm.xlu0 %355, %v344
  %v357 = vpop.permute.xlu0 %356
  %v359 = vsel %vm347, %v352, 0.0
  %v360 = vsel %vm348, %v357, 0.0
  %363 = vrot.lane.b32.xlu0 %v210, 96
  %v364 = vpop.permute.xlu0 %363
  %365 = vrot.lane.b32.xlu0 %v215, 96
  %v366 = vpop.permute.xlu0 %365
  %v367 = vsel %vm265, %v364, 0
  %v369 = vsel %vm265, %v366, 0
  %371 = vmatprep.subr.mxu0 0.0
  %372 = vmatpush1.xpose.msra.mxu0 %v367
  %373 = vmatprep.subr.mxu0 0.0
  %374 = vmatpush1.xpose.msra.mxu0 %v369
  %375 = vmatprep.subr.mxu0 0.0
  %376 = vmatpush1.xpose.msra.mxu0 0.0
  %377 = vmatprep.subr.mxu0 0.0
  %378 = vmatpush1.xpose.msra.mxu0 0.0
  %379 = vmatprep.subr.mxu0 0.0
  %380 = vmatpush1.xpose.msra.mxu0 0.0
  %381 = vmatprep.subr.mxu0 0.0
  %382 = vmatpush1.xpose.msra.mxu0 0.0
  %383 = vmatprep.subr.mxu0 0.0
  %384 = vmatpush1.xpose.msra.mxu0 0.0
  %385 = vmatprep.subr.mxu0 0.0
  %386 = vmatpush1.xpose.msra.mxu0 0.0
  %387 = vmatprep.subr.mxu0 0.0
  %388 = vmatpush1.xpose.msra.mxu0 0.0
  %389 = vmatprep.subr.mxu0 0.0
  %390 = vmatpush1.xpose.msra.mxu0 0.0
  %391 = vmatprep.subr.mxu0 0.0
  %392 = vmatpush1.xpose.msra.mxu0 0.0
  %393 = vmatprep.subr.mxu0 0.0
  %394 = vmatpush1.xpose.msra.mxu0 0.0
  %395 = vmatprep.subr.mxu0 0.0
  %396 = vmatpush1.xpose.msra.mxu0 0.0
  %397 = vmatprep.subr.mxu0 0.0
  %398 = vmatpush1.xpose.msra.mxu0 0.0
  %399 = vmatprep.subr.mxu0 0.0
  %400 = vmatpush1.xpose.msra.mxu0 0.0
  %401 = vmatprep.subr.mxu0 0.0
  %402 = vmatpush1.xpose.msra.mxu0 0.0
  %403 = vmatprep.subr.mxu0 0.0
  %404 = vmatpush1.xpose.msra.mxu0 0.0
  %405 = vmatprep.subr.mxu0 0.0
  %406 = vmatpush1.xpose.msra.mxu0 0.0
  %407 = vmatprep.subr.mxu0 0.0
  %408 = vmatpush1.xpose.msra.mxu0 0.0
  %409 = vmatprep.subr.mxu0 0.0
  %410 = vmatpush1.xpose.msra.mxu0 0.0
  %411 = vmatprep.subr.mxu0 0.0
  %412 = vmatpush1.xpose.msra.mxu0 0.0
  %413 = vmatprep.subr.mxu0 0.0
  %414 = vmatpush1.xpose.msra.mxu0 0.0
  %415 = vmatprep.subr.mxu0 0.0
  %416 = vmatpush1.xpose.msra.mxu0 0.0
  %417 = vmatprep.subr.mxu0 0.0
  %418 = vmatpush1.xpose.msra.mxu0 0.0
  %419 = vmatprep.subr.mxu0 0.0
  %420 = vmatpush1.xpose.msra.mxu0 0.0
  %421 = vmatprep.subr.mxu0 0.0
  %422 = vmatpush1.xpose.msra.mxu0 0.0
  %423 = vmatprep.subr.mxu0 0.0
  %424 = vmatpush1.xpose.msra.mxu0 0.0
  %425 = vmatprep.subr.mxu0 0.0
  %426 = vmatpush1.xpose.msra.mxu0 0.0
  %427 = vmatprep.subr.mxu0 0.0
  %428 = vmatpush1.xpose.msra.mxu0 0.0
  %429 = vmatprep.subr.mxu0 0.0
  %430 = vmatpush1.xpose.msra.mxu0 0.0
  %431 = vmatprep.subr.mxu0 0.0
  %432 = vmatpush1.xpose.msra.mxu0 0.0
  %433 = vmatprep.subr.mxu0 0.0
  %434 = vmatpush1.xpose.msra.mxu0 0.0
  %435 = vmatprep.mubr.f32.mxu0 0.0
  %436 = vmatmul.mubr.f32.gmra.mrb[0].mxu0 %v267
  %v437 = vpop.f32.mrb[0].mxu0
  %v438 = vadd.f32 %v359, %v437
  %v439 = vpop.f32.mrb[0].mxu0
  %440 = vmatprep.mubr.f32.mxu0 0.0
  %441 = vmatmul.mubr.f32.gmra.mrb[0].mxu0 %v270
  %v442 = vpop.f32.mrb[0].mxu0
  %v443 = vadd.f32 %v360, %v442
  %v444 = vpop.f32.mrb[0].mxu0
  %445 = vdwg.mxu0
  %vm446 = vcmp.eq.s32.totalorder %v240, 4294967293
  %vm447 = vcmp.eq.s32.totalorder %v241, 4294967293
  %448 = vset.pattern.permute.xlu0 1
  %449 = vperm.xlu0 %448, %v339
  %v450 = vpop.permute.xlu0 %449
  %452 = vset.pattern.permute.xlu0 1
  %453 = vperm.xlu0 %452, %v344
  %v454 = vpop.permute.xlu0 %453
  %v456 = vsel %vm446, %v450, 0.0
  %v457 = vsel %vm447, %v454, 0.0
  %v458 = vadd.f32 %v438, %v456
  %v459 = vadd.f32 %v443, %v457
  %vm460 = vcmp.eq.s32.totalorder %v240, 4294967294
  %vm461 = vcmp.eq.s32.totalorder %v241, 4294967294
  %462 = vset.pattern.permute.xlu0 2
  %463 = vperm.xlu0 %462, %v339
  %v464 = vpop.permute.xlu0 %463
  %466 = vset.pattern.permute.xlu0 2
  %467 = vperm.xlu0 %466, %v344
  %v468 = vpop.permute.xlu0 %467
  %v470 = vsel %vm460, %v464, 0.0
  %v471 = vsel %vm461, %v468, 0.0
  %v472 = vadd.f32 %v458, %v470
  %v473 = vadd.f32 %v459, %v471
  %vm474 = vcmp.eq.s32.totalorder %v240, 4294967295
  %vm475 = vcmp.eq.s32.totalorder %v241, 4294967295
  %476 = vset.pattern.permute.xlu0 3
  %477 = vperm.xlu0 %476, %v339
  %v478 = vpop.permute.xlu0 %477
  %480 = vset.pattern.permute.xlu0 3
  %481 = vperm.xlu0 %480, %v344
  %v482 = vpop.permute.xlu0 %481
  %v484 = vsel %vm474, %v478, 0.0
  %v485 = vsel %vm475, %v482, 0.0
  %v486 = vadd.f32 %v472, %v484
  %v487 = vadd.f32 %v473, %v485
  %vm488 = vcmp.eq.s32.totalorder %v240, 0
  %vm489 = vcmp.eq.s32.totalorder %v241, 0
  %490 = vset.pattern.permute.xlu0 4
  %491 = vperm.xlu0 %490, %v339
  %v492 = vpop.permute.xlu0 %491
  %494 = vset.pattern.permute.xlu0 4
  %495 = vperm.xlu0 %494, %v344
  %v496 = vpop.permute.xlu0 %495
  %v498 = vsel %vm488, %v492, 0.0
  %v499 = vsel %vm489, %v496, 0.0
  %v500 = vadd.f32 %v486, %v498
  %v501 = vadd.f32 %v487, %v499
  %vm502 = vcmp.eq.s32.totalorder %v240, 1
  %vm503 = vcmp.eq.s32.totalorder %v241, 1
  %504 = vset.pattern.permute.xlu0 5
  %505 = vperm.xlu0 %504, %v339
  %v506 = vpop.permute.xlu0 %505
  %508 = vset.pattern.permute.xlu0 5
  %509 = vperm.xlu0 %508, %v344
  %v510 = vpop.permute.xlu0 %509
  %v512 = vsel %vm502, %v506, 0.0
  %v513 = vsel %vm503, %v510, 0.0
  %v514 = vadd.f32 %v500, %v512
  %v515 = vadd.f32 %v501, %v513
  %vm516 = vcmp.eq.s32.totalorder %v240, 2
  %vm517 = vcmp.eq.s32.totalorder %v241, 2
  %518 = vset.pattern.permute.xlu0 6
  %519 = vperm.xlu0 %518, %v339
  %v520 = vpop.permute.xlu0 %519
  %522 = vset.pattern.permute.xlu0 6
  %523 = vperm.xlu0 %522, %v344
  %v524 = vpop.permute.xlu0 %523
  %v526 = vsel %vm516, %v520, 0.0
  %v527 = vsel %vm517, %v524, 0.0
  %v528 = vadd.f32 %v514, %v526
  %v529 = vadd.f32 %v515, %v527
  %vm530 = vcmp.eq.s32.totalorder %v240, 3
  %vm531 = vcmp.eq.s32.totalorder %v241, 3
  %532 = vset.pattern.permute.xlu0 7
  %533 = vperm.xlu0 %532, %v339
  %v534 = vpop.permute.xlu0 %533
  %536 = vset.pattern.permute.xlu0 7
  %537 = vperm.xlu0 %536, %v344
  %v538 = vpop.permute.xlu0 %537
  %v540 = vsel %vm530, %v534, 0.0
  %v541 = vsel %vm531, %v538, 0.0
  %v542 = vadd.f32 %v528, %v540
  %v543 = vadd.f32 %v529, %v541
  %vm544 = vcmp.eq.s32.totalorder %v240, 4
  %vm545 = vcmp.eq.s32.totalorder %v241, 4
  %546 = vset.pattern.permute.xlu0 8
  %547 = vperm.xlu0 %546, %v339
  %v548 = vpop.permute.xlu0 %547
  %550 = vset.pattern.permute.xlu0 8
  %551 = vperm.xlu0 %550, %v344
  %v552 = vpop.permute.xlu0 %551
  %v554 = vsel %vm544, %v548, 0.0
  %v555 = vsel %vm545, %v552, 0.0
  %v556 = vadd.f32 %v542, %v554
  %v557 = vadd.f32 %v543, %v555
  %v558 = vadd.f32 %v556, %v263
  %v559 = vadd.f32 %v557, %v264
  %vm560 = vcmask 130048
  %v561 = vsel %vm560, %v558, -inf
  %562 = vmax.xlane.f32.xlu0 %v561
  %v563 = vpop.xlane.xlu0 %562
  %v564 = vsel %vm560, %v559, -inf
  %565 = vmax.xlane.f32.xlu0 %v564
  %v566 = vpop.xlane.xlu0 %565
  %v567 = vsub.f32 %v558, %v563
  %v568 = vsub.f32 %v559, %v566
  %v569 = vmul.f32 %v567, 1.442695
  %v570 = vpow.pop %v569
  %v571 = vmul.f32 %v568, 1.442695
  %v572 = vpow.pop %v571
  %v573 = vsel %vm560, %v570, 0.0
  %574 = vadd.xlane.f32.xlu0 %v573
  %v575 = vpop.xlane.xlu0 %574
  %v576 = vsel %vm560, %v572, 0.0
  %577 = vadd.xlane.f32.xlu0 %v576
  %v578 = vpop.xlane.xlu0 %577
  %v579 = vrcp.pop %v575
  %v580 = vrcp.pop %v578
  %v581 = vmul.f32 %v570, %v579
  %v582 = vmul.f32 %v572, %v580
  %v583 = vsel %vm347, %v581, 0.0
  %v584 = vsel %vm348, %v582, 0.0
  %v585 = vsel %vm560, %v583, 0.0
  %586 = vadd.xlane.f32.xlu0 %v585
  %v587 = vpop.xlane.xlu0 %586
  %v588 = vsel %vm560, %v584, 0.0
  %589 = vadd.xlane.f32.xlu0 %v588
  %v590 = vpop.xlane.xlu0 %589
  %v591 = vlaneseq
  %v592 = vshrl.u32 %v591, 7
  %v593 = vsub.s32 0, %v592
  %v594 = vrot.slane %v233, %v593
  %v595 = vmul.f32 %v587, %v594
  %v596 = vmul.f32 %v590, %v594
  %v597 = vadd.f32 %v595, 0.0
  %v598 = vadd.f32 %v596, 0.0
  %v599 = vsel %vm446, %v581, 0.0
  %v600 = vsel %vm447, %v582, 0.0
  %v601 = vsel %vm560, %v599, 0.0
  %602 = vadd.xlane.f32.xlu0 %v601
  %v603 = vpop.xlane.xlu0 %602
  %v604 = vsel %vm560, %v600, 0.0
  %605 = vadd.xlane.f32.xlu0 %v604
  %v606 = vpop.xlane.xlu0 %605
  %v607 = vlaneseq
  %v608 = vshrl.u32 %v607, 7
  %v609 = vsub.s32 1, %v608
  %v610 = vrot.slane %v233, %v609
  %v611 = vmul.f32 %v603, %v610
  %v612 = vmul.f32 %v606, %v610
  %v613 = vadd.f32 %v597, %v611
  %v614 = vadd.f32 %v598, %v612
  %v615 = vsel %vm460, %v581, 0.0
  %v616 = vsel %vm461, %v582, 0.0
  %v617 = vsel %vm560, %v615, 0.0
  %618 = vadd.xlane.f32.xlu0 %v617
  %v619 = vpop.xlane.xlu0 %618
  %v620 = vsel %vm560, %v616, 0.0
  %621 = vadd.xlane.f32.xlu0 %v620
  %v622 = vpop.xlane.xlu0 %621
  %v623 = vlaneseq
  %v624 = vshrl.u32 %v623, 7
  %v625 = vsub.s32 2, %v624
  %v626 = vrot.slane %v233, %v625
  %v627 = vmul.f32 %v619, %v626
  %v628 = vmul.f32 %v622, %v626
  %v629 = vadd.f32 %v613, %v627
  %v630 = vadd.f32 %v614, %v628
  %v631 = vsel %vm474, %v581, 0.0
  %v632 = vsel %vm475, %v582, 0.0
  %v633 = vsel %vm560, %v631, 0.0
  %634 = vadd.xlane.f32.xlu0 %v633
  %v635 = vpop.xlane.xlu0 %634
  %v636 = vsel %vm560, %v632, 0.0
  %637 = vadd.xlane.f32.xlu0 %v636
  %v638 = vpop.xlane.xlu0 %637
  %v639 = vlaneseq
  %v640 = vshrl.u32 %v639, 7
  %v641 = vsub.s32 3, %v640
  %v642 = vrot.slane %v233, %v641
  %v643 = vmul.f32 %v635, %v642
  %v644 = vmul.f32 %v638, %v642
  %v645 = vadd.f32 %v629, %v643
  %v646 = vadd.f32 %v630, %v644
  %v647 = vsel %vm488, %v581, 0.0
  %v648 = vsel %vm489, %v582, 0.0
  %v649 = vsel %vm560, %v647, 0.0
  %650 = vadd.xlane.f32.xlu0 %v649
  %v651 = vpop.xlane.xlu0 %650
  %v652 = vsel %vm560, %v648, 0.0
  %653 = vadd.xlane.f32.xlu0 %v652
  %v654 = vpop.xlane.xlu0 %653
  %v655 = vlaneseq
  %v656 = vshrl.u32 %v655, 7
  %v657 = vsub.s32 4, %v656
  %v658 = vrot.slane %v233, %v657
  %v659 = vmul.f32 %v651, %v658
  %v660 = vmul.f32 %v654, %v658
  %v661 = vadd.f32 %v645, %v659
  %v662 = vadd.f32 %v646, %v660
  %v663 = vsel %vm502, %v581, 0.0
  %v664 = vsel %vm503, %v582, 0.0
  %v665 = vsel %vm560, %v663, 0.0
  %666 = vadd.xlane.f32.xlu0 %v665
  %v667 = vpop.xlane.xlu0 %666
  %v668 = vsel %vm560, %v664, 0.0
  %669 = vadd.xlane.f32.xlu0 %v668
  %v670 = vpop.xlane.xlu0 %669
  %v671 = vlaneseq
  %v672 = vshrl.u32 %v671, 7
  %v673 = vsub.s32 5, %v672
  %v674 = vrot.slane %v233, %v673
  %v675 = vmul.f32 %v667, %v674
  %v676 = vmul.f32 %v670, %v674
  %v677 = vadd.f32 %v661, %v675
  %v678 = vadd.f32 %v662, %v676
  %v679 = vsel %vm516, %v581, 0.0
  %v680 = vsel %vm517, %v582, 0.0
  %v681 = vsel %vm560, %v679, 0.0
  %682 = vadd.xlane.f32.xlu0 %v681
  %v683 = vpop.xlane.xlu0 %682
  %v684 = vsel %vm560, %v680, 0.0
  %685 = vadd.xlane.f32.xlu0 %v684
  %v686 = vpop.xlane.xlu0 %685
  %v687 = vlaneseq
  %v688 = vshrl.u32 %v687, 7
  %v689 = vsub.s32 6, %v688
  %v690 = vrot.slane %v233, %v689
  %v691 = vmul.f32 %v683, %v690
  %v692 = vmul.f32 %v686, %v690
  %v693 = vadd.f32 %v677, %v691
  %v694 = vadd.f32 %v678, %v692
  %v695 = vsel %vm530, %v581, 0.0
  %v696 = vsel %vm531, %v582, 0.0
  %v697 = vsel %vm560, %v695, 0.0
  %698 = vadd.xlane.f32.xlu0 %v697
  %v699 = vpop.xlane.xlu0 %698
  %v700 = vsel %vm560, %v696, 0.0
  %701 = vadd.xlane.f32.xlu0 %v700
  %v702 = vpop.xlane.xlu0 %701
  %v703 = vlaneseq
  %v704 = vshrl.u32 %v703, 7
  %v705 = vsub.s32 7, %v704
  %v706 = vrot.slane %v233, %v705
  %v707 = vmul.f32 %v699, %v706
  %v708 = vmul.f32 %v702, %v706
  %v709 = vadd.f32 %v693, %v707
  %v710 = vadd.f32 %v694, %v708
  %v711 = vsel %vm544, %v581, 0.0
  %v712 = vsel %vm545, %v582, 0.0
  %v713 = vsel %vm560, %v711, 0.0
  %714 = vadd.xlane.f32.xlu0 %v713
  %v715 = vpop.xlane.xlu0 %714
  %v716 = vsel %vm560, %v712, 0.0
  %717 = vadd.xlane.f32.xlu0 %v716
  %v718 = vpop.xlane.xlu0 %717
  %v719 = vlaneseq
  %v720 = vshrl.u32 %v719, 7
  %v721 = vsub.s32 0, %v720
  %v722 = vrot.slane %v234, %v721
  %v723 = vmul.f32 %v715, %v722
  %v724 = vmul.f32 %v718, %v722
  %v725 = vadd.f32 %v709, %v723
  %v726 = vadd.f32 %v710, %v724
  %727 = vrot.lane.b32.xlu0 %v210, 64
  %v728 = vpop.permute.xlu0 %727
  %729 = vrot.lane.b32.xlu0 %v215, 64
  %v730 = vpop.permute.xlu0 %729
  %v734 = vsel %vm560, %v581, 0
  %v737 = vsel %vm560, %v582, 0
  %739 = vmatprep.subr.mxu0 0.0
  %740 = vmatpush1.msra.mxu0 %v728
  %741 = vmatprep.subr.mxu0 0.0
  %742 = vmatpush1.msra.mxu0 %v730
  %743 = vmatprep.subr.mxu0 0.0
  %744 = vmatpush1.msra.mxu0 0.0
  %745 = vmatprep.subr.mxu0 0.0
  %746 = vmatpush1.msra.mxu0 0.0
  %747 = vmatprep.subr.mxu0 0.0
  %748 = vmatpush1.msra.mxu0 0.0
  %749 = vmatprep.subr.mxu0 0.0
  %750 = vmatpush1.msra.mxu0 0.0
  %751 = vmatprep.subr.mxu0 0.0
  %752 = vmatpush1.msra.mxu0 0.0
  %753 = vmatprep.subr.mxu0 0.0
  %754 = vmatpush1.msra.mxu0 0.0
  %755 = vmatprep.subr.mxu0 0.0
  %756 = vmatpush1.msra.mxu0 0.0
  %757 = vmatprep.subr.mxu0 0.0
  %758 = vmatpush1.msra.mxu0 0.0
  %759 = vmatprep.subr.mxu0 0.0
  %760 = vmatpush1.msra.mxu0 0.0
  %761 = vmatprep.subr.mxu0 0.0
  %762 = vmatpush1.msra.mxu0 0.0
  %763 = vmatprep.subr.mxu0 0.0
  %764 = vmatpush1.msra.mxu0 0.0
  %765 = vmatprep.subr.mxu0 0.0
  %766 = vmatpush1.msra.mxu0 0.0
  %767 = vmatprep.subr.mxu0 0.0
  %768 = vmatpush1.msra.mxu0 0.0
  %769 = vmatprep.subr.mxu0 0.0
  %770 = vmatpush1.msra.mxu0 0.0
  %771 = vmatprep.subr.mxu0 0.0
  %772 = vmatpush1.msra.mxu0 0.0
  %773 = vmatprep.subr.mxu0 0.0
  %774 = vmatpush1.msra.mxu0 0.0
  %775 = vmatprep.subr.mxu0 0.0
  %776 = vmatpush1.msra.mxu0 0.0
  %777 = vmatprep.subr.mxu0 0.0
  %778 = vmatpush1.msra.mxu0 0.0
  %779 = vmatprep.subr.mxu0 0.0
  %780 = vmatpush1.msra.mxu0 0.0
  %781 = vmatprep.subr.mxu0 0.0
  %782 = vmatpush1.msra.mxu0 0.0
  %783 = vmatprep.subr.mxu0 0.0
  %784 = vmatpush1.msra.mxu0 0.0
  %785 = vmatprep.subr.mxu0 0.0
  %786 = vmatpush1.msra.mxu0 0.0
  %787 = vmatprep.subr.mxu0 0.0
  %788 = vmatpush1.msra.mxu0 0.0
  %789 = vmatprep.subr.mxu0 0.0
  %790 = vmatpush1.msra.mxu0 0.0
  %791 = vmatprep.subr.mxu0 0.0
  %792 = vmatpush1.msra.mxu0 0.0
  %793 = vmatprep.subr.mxu0 0.0
  %794 = vmatpush1.msra.mxu0 0.0
  %795 = vmatprep.subr.mxu0 0.0
  %796 = vmatpush1.msra.mxu0 0.0
  %797 = vmatprep.subr.mxu0 0.0
  %798 = vmatpush1.msra.mxu0 0.0
  %799 = vmatprep.subr.mxu0 0.0
  %800 = vmatpush1.msra.mxu0 0.0
  %801 = vmatprep.subr.mxu0 0.0
  %802 = vmatpush1.msra.mxu0 0.0
  %803 = vmatprep.mubr.f32.mxu0 0.0
  %804 = vmatmul.mubr.f32.gmra.mrb[0].mxu0 %v734
  %v805 = vpop.f32.mrb[0].mxu0
  %v806 = vadd.f32 %v725, %v805
  %v807 = vpop.f32.mrb[0].mxu0
  %808 = vmatprep.mubr.f32.mxu0 0.0
  %809 = vmatmul.mubr.f32.gmra.mrb[0].mxu0 %v737
  %v810 = vpop.f32.mrb[0].mxu0
  %v811 = vadd.f32 %v726, %v810
  %v812 = vpop.f32.mrb[0].mxu0
  %813 = vdwg.mxu0
  %814 = vst.msk [vmem:[#allocation2] sm:$0xff] %vm265, %v806
  %815 = vst.msk [vmem:[#allocation2 + $0x8] sm:$0xff] %vm265, %v811
  %816 = vrot.lane.b32.xlu0 %v228, 120
  %v817 = vpop.permute.xlu0 %816
  %818 = vrot.lane.b32.xlu0 %v229, 120
  %v819 = vpop.permute.xlu0 %818
  %v820 = vsel %vm265, %v817, 0
  %v822 = vsel %vm265, %v819, 0
  %824 = vmatprep.subr.mxu0 0.0
  %825 = vmatpush1.msra.mxu0 %v232
  %826 = vmatprep.subr.mxu0 0.0
  %827 = vmatpush1.msra.mxu0 0.0
  %828 = vmatprep.subr.mxu0 0.0
  %829 = vmatpush1.msra.mxu0 0.0
  %830 = vmatprep.subr.mxu0 0.0
  %831 = vmatpush1.msra.mxu0 0.0
  %832 = vmatprep.subr.mxu0 0.0
  %833 = vmatpush1.msra.mxu0 0.0
  %834 = vmatprep.subr.mxu0 0.0
  %835 = vmatpush1.msra.mxu0 0.0
  %836 = vmatprep.subr.mxu0 0.0
  %837 = vmatpush1.msra.mxu0 0.0
  %838 = vmatprep.subr.mxu0 0.0
  %839 = vmatpush1.msra.mxu0 0.0
  %840 = vmatprep.subr.mxu0 0.0
  %841 = vmatpush1.msra.mxu0 0.0
  %842 = vmatprep.subr.mxu0 0.0
  %843 = vmatpush1.msra.mxu0 0.0
  %844 = vmatprep.subr.mxu0 0.0
  %845 = vmatpush1.msra.mxu0 0.0
  %846 = vmatprep.subr.mxu0 0.0
  %847 = vmatpush1.msra.mxu0 0.0
  %848 = vmatprep.subr.mxu0 0.0
  %849 = vmatpush1.msra.mxu0 0.0
  %850 = vmatprep.subr.mxu0 0.0
  %851 = vmatpush1.msra.mxu0 0.0
  %852 = vmatprep.subr.mxu0 0.0
  %853 = vmatpush1.msra.mxu0 0.0
  %854 = vmatprep.subr.mxu0 0.0
  %855 = vmatpush1.msra.mxu0 0.0
  %856 = vmatprep.subr.mxu0 0.0
  %857 = vmatpush1.msra.mxu0 0.0
  %858 = vmatprep.subr.mxu0 0.0
  %859 = vmatpush1.msra.mxu0 0.0
  %860 = vmatprep.subr.mxu0 0.0
  %861 = vmatpush1.msra.mxu0 0.0
  %862 = vmatprep.subr.mxu0 0.0
  %863 = vmatpush1.msra.mxu0 0.0
  %864 = vmatprep.subr.mxu0 0.0
  %865 = vmatpush1.msra.mxu0 0.0
  %866 = vmatprep.subr.mxu0 0.0
  %867 = vmatpush1.msra.mxu0 0.0
  %868 = vmatprep.subr.mxu0 0.0
  %869 = vmatpush1.msra.mxu0 0.0
  %870 = vmatprep.subr.mxu0 0.0
  %871 = vmatpush1.msra.mxu0 0.0
  %872 = vmatprep.subr.mxu0 0.0
  %873 = vmatpush1.msra.mxu0 0.0
  %874 = vmatprep.subr.mxu0 0.0
  %875 = vmatpush1.msra.mxu0 0.0
  %876 = vmatprep.subr.mxu0 0.0
  %877 = vmatpush1.msra.mxu0 0.0
  %878 = vmatprep.subr.mxu0 0.0
  %879 = vmatpush1.msra.mxu0 0.0
  %880 = vmatprep.subr.mxu0 0.0
  %881 = vmatpush1.msra.mxu0 0.0
  %882 = vmatprep.subr.mxu0 0.0
  %883 = vmatpush1.msra.mxu0 0.0
  %884 = vmatprep.subr.mxu0 0.0
  %885 = vmatpush1.msra.mxu0 0.0
  %886 = vmatprep.subr.mxu0 0.0
  %887 = vmatpush1.msra.mxu0 0.0
  %888 = vmatprep.mubr.f32.mxu0 0.0
  %889 = vmatmul.mubr.f32.gmra.mrb[0].mxu0 %v820
  %v890 = vpop.f32.mrb[0].mxu0
  %v891 = vadd.f32 0.0, %v890
  %v892 = vpop.f32.mrb[0].mxu0
  %893 = vmatprep.mubr.f32.mxu0 0.0
  %894 = vmatmul.mubr.f32.gmra.mrb[0].mxu0 %v822
  %v895 = vpop.f32.mrb[0].mxu0
  %v896 = vadd.f32 0.0, %v895
  %v897 = vpop.f32.mrb[0].mxu0
  %898 = vdwg.mxu0
  %900 = vset.pattern.permute.xlu0 0
  %901 = vperm.xlu0 %900, %v891
  %v902 = vpop.permute.xlu0 %901
  %905 = vset.pattern.permute.xlu0 0
  %906 = vperm.xlu0 %905, %v896
  %v907 = vpop.permute.xlu0 %906
  %v909 = vsel %vm347, %v902, 0.0
  %v910 = vsel %vm348, %v907, 0.0
  %911 = vrot.lane.b32.xlu0 %v210, 88
  %v912 = vpop.permute.xlu0 %911
  %913 = vrot.lane.b32.xlu0 %v215, 88
  %v914 = vpop.permute.xlu0 %913
  %v915 = vsel %vm265, %v912, 0
  %v917 = vsel %vm265, %v914, 0
  %919 = vmatprep.subr.mxu0 0.0
  %920 = vmatpush1.xpose.msra.mxu0 %v915
  %921 = vmatprep.subr.mxu0 0.0
  %922 = vmatpush1.xpose.msra.mxu0 %v917
  %923 = vmatprep.subr.mxu0 0.0
  %924 = vmatpush1.xpose.msra.mxu0 0.0
  %925 = vmatprep.subr.mxu0 0.0
  %926 = vmatpush1.xpose.msra.mxu0 0.0
  %927 = vmatprep.subr.mxu0 0.0
  %928 = vmatpush1.xpose.msra.mxu0 0.0
  %929 = vmatprep.subr.mxu0 0.0
  %930 = vmatpush1.xpose.msra.mxu0 0.0
  %931 = vmatprep.subr.mxu0 0.0
  %932 = vmatpush1.xpose.msra.mxu0 0.0
  %933 = vmatprep.subr.mxu0 0.0
  %934 = vmatpush1.xpose.msra.mxu0 0.0
  %935 = vmatprep.subr.mxu0 0.0
  %936 = vmatpush1.xpose.msra.mxu0 0.0
  %937 = vmatprep.subr.mxu0 0.0
  %938 = vmatpush1.xpose.msra.mxu0 0.0
  %939 = vmatprep.subr.mxu0 0.0
  %940 = vmatpush1.xpose.msra.mxu0 0.0
  %941 = vmatprep.subr.mxu0 0.0
  %942 = vmatpush1.xpose.msra.mxu0 0.0
  %943 = vmatprep.subr.mxu0 0.0
  %944 = vmatpush1.xpose.msra.mxu0 0.0
  %945 = vmatprep.subr.mxu0 0.0
  %946 = vmatpush1.xpose.msra.mxu0 0.0
  %947 = vmatprep.subr.mxu0 0.0
  %948 = vmatpush1.xpose.msra.mxu0 0.0
  %949 = vmatprep.subr.mxu0 0.0
  %950 = vmatpush1.xpose.msra.mxu0 0.0
  %951 = vmatprep.subr.mxu0 0.0
  %952 = vmatpush1.xpose.msra.mxu0 0.0
  %953 = vmatprep.subr.mxu0 0.0
  %954 = vmatpush1.xpose.msra.mxu0 0.0
  %955 = vmatprep.subr.mxu0 0.0
  %956 = vmatpush1.xpose.msra.mxu0 0.0
  %957 = vmatprep.subr.mxu0 0.0
  %958 = vmatpush1.xpose.msra.mxu0 0.0
  %959 = vmatprep.subr.mxu0 0.0
  %960 = vmatpush1.xpose.msra.mxu0 0.0
  %961 = vmatprep.subr.mxu0 0.0
  %962 = vmatpush1.xpose.msra.mxu0 0.0
  %963 = vmatprep.subr.mxu0 0.0
  %964 = vmatpush1.xpose.msra.mxu0 0.0
  %965 = vmatprep.subr.mxu0 0.0
  %966 = vmatpush1.xpose.msra.mxu0 0.0
  %967 = vmatprep.subr.mxu0 0.0
  %968 = vmatpush1.xpose.msra.mxu0 0.0
  %969 = vmatprep.subr.mxu0 0.0
  %970 = vmatpush1.xpose.msra.mxu0 0.0
  %971 = vmatprep.subr.mxu0 0.0
  %972 = vmatpush1.xpose.msra.mxu0 0.0
  %973 = vmatprep.subr.mxu0 0.0
  %974 = vmatpush1.xpose.msra.mxu0 0.0
  %975 = vmatprep.subr.mxu0 0.0
  %976 = vmatpush1.xpose.msra.mxu0 0.0
  %977 = vmatprep.subr.mxu0 0.0
  %978 = vmatpush1.xpose.msra.mxu0 0.0
  %979 = vmatprep.subr.mxu0 0.0
  %980 = vmatpush1.xpose.msra.mxu0 0.0
  %981 = vmatprep.subr.mxu0 0.0
  %982 = vmatpush1.xpose.msra.mxu0 0.0
  %983 = vmatprep.mubr.f32.mxu0 0.0
  %984 = vmatmul.mubr.f32.gmra.mrb[0].mxu0 %v820
  %v985 = vpop.f32.mrb[0].mxu0
  %v986 = vadd.f32 %v909, %v985
  %v987 = vpop.f32.mrb[0].mxu0
  %988 = vmatprep.mubr.f32.mxu0 0.0
  %989 = vmatmul.mubr.f32.gmra.mrb[0].mxu0 %v822
  %v990 = vpop.f32.mrb[0].mxu0
  %v991 = vadd.f32 %v910, %v990
  %v992 = vpop.f32.mrb[0].mxu0
  %993 = vdwg.mxu0
  %994 = vset.pattern.permute.xlu0 1
  %995 = vperm.xlu0 %994, %v891
  %v996 = vpop.permute.xlu0 %995
  %998 = vset.pattern.permute.xlu0 1
  %999 = vperm.xlu0 %998, %v896
  %v1000 = vpop.permute.xlu0 %999
  %v1002 = vsel %vm446, %v996, 0.0
  %v1003 = vsel %vm447, %v1000, 0.0
  %v1004 = vadd.f32 %v986, %v1002
  %v1005 = vadd.f32 %v991, %v1003
  %1006 = vset.pattern.permute.xlu0 2
  %1007 = vperm.xlu0 %1006, %v891
  %v1008 = vpop.permute.xlu0 %1007
  %1010 = vset.pattern.permute.xlu0 2
  %1011 = vperm.xlu0 %1010, %v896
  %v1012 = vpop.permute.xlu0 %1011
  %v1014 = vsel %vm460, %v1008, 0.0
  %v1015 = vsel %vm461, %v1012, 0.0
  %v1016 = vadd.f32 %v1004, %v1014
  %v1017 = vadd.f32 %v1005, %v1015
  %1018 = vset.pattern.permute.xlu0 3
  %1019 = vperm.xlu0 %1018, %v891
  %v1020 = vpop.permute.xlu0 %1019
  %1022 = vset.pattern.permute.xlu0 3
  %1023 = vperm.xlu0 %1022, %v896
  %v1024 = vpop.permute.xlu0 %1023
  %v1026 = vsel %vm474, %v1020, 0.0
  %v1027 = vsel %vm475, %v1024, 0.0
  %v1028 = vadd.f32 %v1016, %v1026
  %v1029 = vadd.f32 %v1017, %v1027
  %1030 = vset.pattern.permute.xlu0 4
  %1031 = vperm.xlu0 %1030, %v891
  %v1032 = vpop.permute.xlu0 %1031
  %1034 = vset.pattern.permute.xlu0 4
  %1035 = vperm.xlu0 %1034, %v896
  %v1036 = vpop.permute.xlu0 %1035
  %v1038 = vsel %vm488, %v1032, 0.0
  %v1039 = vsel %vm489, %v1036, 0.0
  %v1040 = vadd.f32 %v1028, %v1038
  %v1041 = vadd.f32 %v1029, %v1039
  %1042 = vset.pattern.permute.xlu0 5
  %1043 = vperm.xlu0 %1042, %v891
  %v1044 = vpop.permute.xlu0 %1043
  %1046 = vset.pattern.permute.xlu0 5
  %1047 = vperm.xlu0 %1046, %v896
  %v1048 = vpop.permute.xlu0 %1047
  %v1050 = vsel %vm502, %v1044, 0.0
  %v1051 = vsel %vm503, %v1048, 0.0
  %v1052 = vadd.f32 %v1040, %v1050
  %v1053 = vadd.f32 %v1041, %v1051
  %1054 = vset.pattern.permute.xlu0 6
  %1055 = vperm.xlu0 %1054, %v891
  %v1056 = vpop.permute.xlu0 %1055
  %1058 = vset.pattern.permute.xlu0 6
  %1059 = vperm.xlu0 %1058, %v896
  %v1060 = vpop.permute.xlu0 %1059
  %v1062 = vsel %vm516, %v1056, 0.0
  %v1063 = vsel %vm517, %v1060, 0.0
  %v1064 = vadd.f32 %v1052, %v1062
  %v1065 = vadd.f32 %v1053, %v1063
  %1066 = vset.pattern.permute.xlu0 7
  %1067 = vperm.xlu0 %1066, %v891
  %v1068 = vpop.permute.xlu0 %1067
  %1070 = vset.pattern.permute.xlu0 7
  %1071 = vperm.xlu0 %1070, %v896
  %v1072 = vpop.permute.xlu0 %1071
  %v1074 = vsel %vm530, %v1068, 0.0
  %v1075 = vsel %vm531, %v1072, 0.0
  %v1076 = vadd.f32 %v1064, %v1074
  %v1077 = vadd.f32 %v1065, %v1075
  %1078 = vset.pattern.permute.xlu0 8
  %1079 = vperm.xlu0 %1078, %v891
  %v1080 = vpop.permute.xlu0 %1079
  %1082 = vset.pattern.permute.xlu0 8
  %1083 = vperm.xlu0 %1082, %v896
  %v1084 = vpop.permute.xlu0 %1083
  %v1086 = vsel %vm544, %v1080, 0.0
  %v1087 = vsel %vm545, %v1084, 0.0
  %v1088 = vadd.f32 %v1076, %v1086
  %v1089 = vadd.f32 %v1077, %v1087
  %v1090 = vadd.f32 %v1088, %v263
  %v1091 = vadd.f32 %v1089, %v264
  %v1092 = vsel %vm560, %v1090, -inf
  %1093 = vmax.xlane.f32.xlu0 %v1092
  %v1094 = vpop.xlane.xlu0 %1093
  %v1095 = vsel %vm560, %v1091, -inf
  %1096 = vmax.xlane.f32.xlu0 %v1095
  %v1097 = vpop.xlane.xlu0 %1096
  %v1098 = vsub.f32 %v1090, %v1094
  %v1099 = vsub.f32 %v1091, %v1097
  %v1100 = vmul.f32 %v1098, 1.442695
  %v1101 = vpow.pop %v1100
  %v1102 = vmul.f32 %v1099, 1.442695
  %v1103 = vpow.pop %v1102
  %v1104 = vsel %vm560, %v1101, 0.0
  %1105 = vadd.xlane.f32.xlu0 %v1104
  %v1106 = vpop.xlane.xlu0 %1105
  %v1107 = vsel %vm560, %v1103, 0.0
  %1108 = vadd.xlane.f32.xlu0 %v1107
  %v1109 = vpop.xlane.xlu0 %1108
  %v1110 = vrcp.pop %v1106
  %v1111 = vrcp.pop %v1109
  %v1112 = vmul.f32 %v1101, %v1110
  %v1113 = vmul.f32 %v1103, %v1111
  %v1114 = vsel %vm347, %v1112, 0.0
  %v1115 = vsel %vm348, %v1113, 0.0
  %v1116 = vsel %vm560, %v1114, 0.0
  %1117 = vadd.xlane.f32.xlu0 %v1116
  %v1118 = vpop.xlane.xlu0 %1117
  %v1119 = vsel %vm560, %v1115, 0.0
  %1120 = vadd.xlane.f32.xlu0 %v1119
  %v1121 = vpop.xlane.xlu0 %1120
  %v1122 = vmul.f32 %v1118, %v594
  %v1123 = vmul.f32 %v1121, %v594
  %v1124 = vadd.f32 %v1122, 0.0
  %v1125 = vadd.f32 %v1123, 0.0
  %v1126 = vsel %vm446, %v1112, 0.0
  %v1127 = vsel %vm447, %v1113, 0.0
  %v1128 = vsel %vm560, %v1126, 0.0
  %1129 = vadd.xlane.f32.xlu0 %v1128
  %v1130 = vpop.xlane.xlu0 %1129
  %v1131 = vsel %vm560, %v1127, 0.0
  %1132 = vadd.xlane.f32.xlu0 %v1131
  %v1133 = vpop.xlane.xlu0 %1132
  %v1134 = vmul.f32 %v1130, %v610
  %v1135 = vmul.f32 %v1133, %v610
  %v1136 = vadd.f32 %v1124, %v1134
  %v1137 = vadd.f32 %v1125, %v1135
  %v1138 = vsel %vm460, %v1112, 0.0
  %v1139 = vsel %vm461, %v1113, 0.0
  %v1140 = vsel %vm560, %v1138, 0.0
  %1141 = vadd.xlane.f32.xlu0 %v1140
  %v1142 = vpop.xlane.xlu0 %1141
  %v1143 = vsel %vm560, %v1139, 0.0
  %1144 = vadd.xlane.f32.xlu0 %v1143
  %v1145 = vpop.xlane.xlu0 %1144
  %v1146 = vmul.f32 %v1142, %v626
  %v1147 = vmul.f32 %v1145, %v626
  %v1148 = vadd.f32 %v1136, %v1146
  %v1149 = vadd.f32 %v1137, %v1147
  %v1150 = vsel %vm474, %v1112, 0.0
  %v1151 = vsel %vm475, %v1113, 0.0
  %v1152 = vsel %vm560, %v1150, 0.0
  %1153 = vadd.xlane.f32.xlu0 %v1152
  %v1154 = vpop.xlane.xlu0 %1153
  %v1155 = vsel %vm560, %v1151, 0.0
  %1156 = vadd.xlane.f32.xlu0 %v1155
  %v1157 = vpop.xlane.xlu0 %1156
  %v1158 = vmul.f32 %v1154, %v642
  %v1159 = vmul.f32 %v1157, %v642
  %v1160 = vadd.f32 %v1148, %v1158
  %v1161 = vadd.f32 %v1149, %v1159
  %v1162 = vsel %vm488, %v1112, 0.0
  %v1163 = vsel %vm489, %v1113, 0.0
  %v1164 = vsel %vm560, %v1162, 0.0
  %1165 = vadd.xlane.f32.xlu0 %v1164
  %v1166 = vpop.xlane.xlu0 %1165
  %v1167 = vsel %vm560, %v1163, 0.0
  %1168 = vadd.xlane.f32.xlu0 %v1167
  %v1169 = vpop.xlane.xlu0 %1168
  %v1170 = vmul.f32 %v1166, %v658
  %v1171 = vmul.f32 %v1169, %v658
  %v1172 = vadd.f32 %v1160, %v1170
  %v1173 = vadd.f32 %v1161, %v1171
  %v1174 = vsel %vm502, %v1112, 0.0
  %v1175 = vsel %vm503, %v1113, 0.0
  %v1176 = vsel %vm560, %v1174, 0.0
  %1177 = vadd.xlane.f32.xlu0 %v1176
  %v1178 = vpop.xlane.xlu0 %1177
  %v1179 = vsel %vm560, %v1175, 0.0
  %1180 = vadd.xlane.f32.xlu0 %v1179
  %v1181 = vpop.xlane.xlu0 %1180
  %v1182 = vmul.f32 %v1178, %v674
  %v1183 = vmul.f32 %v1181, %v674
  %v1184 = vadd.f32 %v1172, %v1182
  %v1185 = vadd.f32 %v1173, %v1183
  %v1186 = vsel %vm516, %v1112, 0.0
  %v1187 = vsel %vm517, %v1113, 0.0
  %v1188 = vsel %vm560, %v1186, 0.0
  %1189 = vadd.xlane.f32.xlu0 %v1188
  %v1190 = vpop.xlane.xlu0 %1189
  %v1191 = vsel %vm560, %v1187, 0.0
  %1192 = vadd.xlane.f32.xlu0 %v1191
  %v1193 = vpop.xlane.xlu0 %1192
  %v1194 = vmul.f32 %v1190, %v690
  %v1195 = vmul.f32 %v1193, %v690
  %v1196 = vadd.f32 %v1184, %v1194
  %v1197 = vadd.f32 %v1185, %v1195
  %v1198 = vsel %vm530, %v1112, 0.0
  %v1199 = vsel %vm531, %v1113, 0.0
  %v1200 = vsel %vm560, %v1198, 0.0
  %1201 = vadd.xlane.f32.xlu0 %v1200
  %v1202 = vpop.xlane.xlu0 %1201
  %v1203 = vsel %vm560, %v1199, 0.0
  %1204 = vadd.xlane.f32.xlu0 %v1203
  %v1205 = vpop.xlane.xlu0 %1204
  %v1206 = vmul.f32 %v1202, %v706
  %v1207 = vmul.f32 %v1205, %v706
  %v1208 = vadd.f32 %v1196, %v1206
  %v1209 = vadd.f32 %v1197, %v1207
  %v1210 = vsel %vm544, %v1112, 0.0
  %v1211 = vsel %vm545, %v1113, 0.0
  %v1212 = vsel %vm560, %v1210, 0.0
  %1213 = vadd.xlane.f32.xlu0 %v1212
  %v1214 = vpop.xlane.xlu0 %1213
  %v1215 = vsel %vm560, %v1211, 0.0
  %1216 = vadd.xlane.f32.xlu0 %v1215
  %v1217 = vpop.xlane.xlu0 %1216
  %v1218 = vmul.f32 %v1214, %v722
  %v1219 = vmul.f32 %v1217, %v722
  %v1220 = vadd.f32 %v1208, %v1218
  %v1221 = vadd.f32 %v1209, %v1219
  %1222 = vrot.lane.b32.xlu0 %v210, 56
  %v1223 = vpop.permute.xlu0 %1222
  %1224 = vrot.lane.b32.xlu0 %v215, 56
  %v1225 = vpop.permute.xlu0 %1224
  %v1229 = vsel %vm560, %v1112, 0
  %v1232 = vsel %vm560, %v1113, 0
  %1234 = vmatprep.subr.mxu0 0.0
  %1235 = vmatpush1.msra.mxu0 %v1223
  %1236 = vmatprep.subr.mxu0 0.0
  %1237 = vmatpush1.msra.mxu0 %v1225
  %1238 = vmatprep.subr.mxu0 0.0
  %1239 = vmatpush1.msra.mxu0 0.0
  %1240 = vmatprep.subr.mxu0 0.0
  %1241 = vmatpush1.msra.mxu0 0.0
  %1242 = vmatprep.subr.mxu0 0.0
  %1243 = vmatpush1.msra.mxu0 0.0
  %1244 = vmatprep.subr.mxu0 0.0
  %1245 = vmatpush1.msra.mxu0 0.0
  %1246 = vmatprep.subr.mxu0 0.0
  %1247 = vmatpush1.msra.mxu0 0.0
  %1248 = vmatprep.subr.mxu0 0.0
  %1249 = vmatpush1.msra.mxu0 0.0
  %1250 = vmatprep.subr.mxu0 0.0
  %1251 = vmatpush1.msra.mxu0 0.0
  %1252 = vmatprep.subr.mxu0 0.0
  %1253 = vmatpush1.msra.mxu0 0.0
  %1254 = vmatprep.subr.mxu0 0.0
  %1255 = vmatpush1.msra.mxu0 0.0
  %1256 = vmatprep.subr.mxu0 0.0
  %1257 = vmatpush1.msra.mxu0 0.0
  %1258 = vmatprep.subr.mxu0 0.0
  %1259 = vmatpush1.msra.mxu0 0.0
  %1260 = vmatprep.subr.mxu0 0.0
  %1261 = vmatpush1.msra.mxu0 0.0
  %1262 = vmatprep.subr.mxu0 0.0
  %1263 = vmatpush1.msra.mxu0 0.0
  %1264 = vmatprep.subr.mxu0 0.0
  %1265 = vmatpush1.msra.mxu0 0.0
  %1266 = vmatprep.subr.mxu0 0.0
  %1267 = vmatpush1.msra.mxu0 0.0
  %1268 = vmatprep.subr.mxu0 0.0
  %1269 = vmatpush1.msra.mxu0 0.0
  %1270 = vmatprep.subr.mxu0 0.0
  %1271 = vmatpush1.msra.mxu0 0.0
  %1272 = vmatprep.subr.mxu0 0.0
  %1273 = vmatpush1.msra.mxu0 0.0
  %1274 = vmatprep.subr.mxu0 0.0
  %1275 = vmatpush1.msra.mxu0 0.0
  %1276 = vmatprep.subr.mxu0 0.0
  %1277 = vmatpush1.msra.mxu0 0.0
  %1278 = vmatprep.subr.mxu0 0.0
  %1279 = vmatpush1.msra.mxu0 0.0
  %1280 = vmatprep.subr.mxu0 0.0
  %1281 = vmatpush1.msra.mxu0 0.0
  %1282 = vmatprep.subr.mxu0 0.0
  %1283 = vmatpush1.msra.mxu0 0.0
  %1284 = vmatprep.subr.mxu0 0.0
  %1285 = vmatpush1.msra.mxu0 0.0
  %1286 = vmatprep.subr.mxu0 0.0
  %1287 = vmatpush1.msra.mxu0 0.0
  %1288 = vmatprep.subr.mxu0 0.0
  %1289 = vmatpush1.msra.mxu0 0.0
  %1290 = vmatprep.subr.mxu0 0.0
  %1291 = vmatpush1.msra.mxu0 0.0
  %1292 = vmatprep.subr.mxu0 0.0
  %1293 = vmatpush1.msra.mxu0 0.0
  %1294 = vmatprep.subr.mxu0 0.0
  %1295 = vmatpush1.msra.mxu0 0.0
  %1296 = vmatprep.subr.mxu0 0.0
  %1297 = vmatpush1.msra.mxu0 0.0
  %1298 = vmatprep.mubr.f32.mxu0 0.0
  %1299 = vmatmul.mubr.f32.gmra.mrb[0].mxu0 %v1229
  %v1300 = vpop.f32.mrb[0].mxu0
  %v1301 = vadd.f32 %v1220, %v1300
  %v1302 = vpop.f32.mrb[0].mxu0
  %1303 = vmatprep.mubr.f32.mxu0 0.0
  %1304 = vmatmul.mubr.f32.gmra.mrb[0].mxu0 %v1232
  %v1305 = vpop.f32.mrb[0].mxu0
  %v1306 = vadd.f32 %v1221, %v1305
  %v1307 = vpop.f32.mrb[0].mxu0
  %1308 = vdwg.mxu0
  %1311 = vrot.lane.b32.xlu0 %v1301, 8
  %v1312 = vpop.permute.xlu0 %1311
  %1313 = vrot.lane.b32.xlu0 %v1306, 8
  %v1314 = vpop.permute.xlu0 %1313
  %vm1317 = vcmask 130112
  %1318 = vst.msk [vmem:[#allocation2] sm:$0xff] %vm1317, %v1312
  %1319 = vst.msk [vmem:[#allocation2 + $0x8] sm:$0xff] %vm1317, %v1314
  %1320 = vrot.lane.b32.xlu0 %v228, 112
  %v1321 = vpop.permute.xlu0 %1320
  %1322 = vrot.lane.b32.xlu0 %v229, 112
  %v1323 = vpop.permute.xlu0 %1322
  %v1324 = vsel %vm265, %v1321, 0
  %v1326 = vsel %vm265, %v1323, 0
  %1328 = vmatprep.subr.mxu0 0.0
  %1329 = vmatpush1.msra.mxu0 %v232
  %1330 = vmatprep.subr.mxu0 0.0
  %1331 = vmatpush1.msra.mxu0 0.0
  %1332 = vmatprep.subr.mxu0 0.0
  %1333 = vmatpush1.msra.mxu0 0.0
  %1334 = vmatprep.subr.mxu0 0.0
  %1335 = vmatpush1.msra.mxu0 0.0
  %1336 = vmatprep.subr.mxu0 0.0
  %1337 = vmatpush1.msra.mxu0 0.0
  %1338 = vmatprep.subr.mxu0 0.0
  %1339 = vmatpush1.msra.mxu0 0.0
  %1340 = vmatprep.subr.mxu0 0.0
  %1341 = vmatpush1.msra.mxu0 0.0
  %1342 = vmatprep.subr.mxu0 0.0
  %1343 = vmatpush1.msra.mxu0 0.0
  %1344 = vmatprep.subr.mxu0 0.0
  %1345 = vmatpush1.msra.mxu0 0.0
  %1346 = vmatprep.subr.mxu0 0.0
  %1347 = vmatpush1.msra.mxu0 0.0
  %1348 = vmatprep.subr.mxu0 0.0
  %1349 = vmatpush1.msra.mxu0 0.0
  %1350 = vmatprep.subr.mxu0 0.0
  %1351 = vmatpush1.msra.mxu0 0.0
  %1352 = vmatprep.subr.mxu0 0.0
  %1353 = vmatpush1.msra.mxu0 0.0
  %1354 = vmatprep.subr.mxu0 0.0
  %1355 = vmatpush1.msra.mxu0 0.0
  %1356 = vmatprep.subr.mxu0 0.0
  %1357 = vmatpush1.msra.mxu0 0.0
  %1358 = vmatprep.subr.mxu0 0.0
  %1359 = vmatpush1.msra.mxu0 0.0
  %1360 = vmatprep.subr.mxu0 0.0
  %1361 = vmatpush1.msra.mxu0 0.0
  %1362 = vmatprep.subr.mxu0 0.0
  %1363 = vmatpush1.msra.mxu0 0.0
  %1364 = vmatprep.subr.mxu0 0.0
  %1365 = vmatpush1.msra.mxu0 0.0
  %1366 = vmatprep.subr.mxu0 0.0
  %1367 = vmatpush1.msra.mxu0 0.0
  %1368 = vmatprep.subr.mxu0 0.0
  %1369 = vmatpush1.msra.mxu0 0.0
  %1370 = vmatprep.subr.mxu0 0.0
  %1371 = vmatpush1.msra.mxu0 0.0
  %1372 = vmatprep.subr.mxu0 0.0
  %1373 = vmatpush1.msra.mxu0 0.0
  %1374 = vmatprep.subr.mxu0 0.0
  %1375 = vmatpush1.msra.mxu0 0.0
  %1376 = vmatprep.subr.mxu0 0.0
  %1377 = vmatpush1.msra.mxu0 0.0
  %1378 = vmatprep.subr.mxu0 0.0
  %1379 = vmatpush1.msra.mxu0 0.0
  %1380 = vmatprep.subr.mxu0 0.0
  %1381 = vmatpush1.msra.mxu0 0.0
  %1382 = vmatprep.subr.mxu0 0.0
  %1383 = vmatpush1.msra.mxu0 0.0
  %1384 = vmatprep.subr.mxu0 0.0
  %1385 = vmatpush1.msra.mxu0 0.0
  %1386 = vmatprep.subr.mxu0 0.0
  %1387 = vmatpush1.msra.mxu0 0.0
  %1388 = vmatprep.subr.mxu0 0.0
  %1389 = vmatpush1.msra.mxu0 0.0
  %1390 = vmatprep.subr.mxu0 0.0
  %1391 = vmatpush1.msra.mxu0 0.0
  %1392 = vmatprep.mubr.f32.mxu0 0.0
  %1393 = vmatmul.mubr.f32.gmra.mrb[0].mxu0 %v1324
  %v1394 = vpop.f32.mrb[0].mxu0
  %v1395 = vadd.f32 0.0, %v1394
  %v1396 = vpop.f32.mrb[0].mxu0
  %1397 = vmatprep.mubr.f32.mxu0 0.0
  %1398 = vmatmul.mubr.f32.gmra.mrb[0].mxu0 %v1326
  %v1399 = vpop.f32.mrb[0].mxu0
  %v1400 = vadd.f32 0.0, %v1399
  %v1401 = vpop.f32.mrb[0].mxu0
  %1402 = vdwg.mxu0
  %1404 = vset.pattern.permute.xlu0 0
  %1405 = vperm.xlu0 %1404, %v1395
  %v1406 = vpop.permute.xlu0 %1405
  %1409 = vset.pattern.permute.xlu0 0
  %1410 = vperm.xlu0 %1409, %v1400
  %v1411 = vpop.permute.xlu0 %1410
  %v1413 = vsel %vm347, %v1406, 0.0
  %v1414 = vsel %vm348, %v1411, 0.0
  %1415 = vrot.lane.b32.xlu0 %v210, 80
  %v1416 = vpop.permute.xlu0 %1415
  %1417 = vrot.lane.b32.xlu0 %v215, 80
  %v1418 = vpop.permute.xlu0 %1417
  %v1419 = vsel %vm265, %v1416, 0
  %v1421 = vsel %vm265, %v1418, 0
  %1423 = vmatprep.subr.mxu0 0.0
  %1424 = vmatpush1.xpose.msra.mxu0 %v1419
  %1425 = vmatprep.subr.mxu0 0.0
  %1426 = vmatpush1.xpose.msra.mxu0 %v1421
  %1427 = vmatprep.subr.mxu0 0.0
  %1428 = vmatpush1.xpose.msra.mxu0 0.0
  %1429 = vmatprep.subr.mxu0 0.0
  %1430 = vmatpush1.xpose.msra.mxu0 0.0
  %1431 = vmatprep.subr.mxu0 0.0
  %1432 = vmatpush1.xpose.msra.mxu0 0.0
  %1433 = vmatprep.subr.mxu0 0.0
  %1434 = vmatpush1.xpose.msra.mxu0 0.0
  %1435 = vmatprep.subr.mxu0 0.0
  %1436 = vmatpush1.xpose.msra.mxu0 0.0
  %1437 = vmatprep.subr.mxu0 0.0
  %1438 = vmatpush1.xpose.msra.mxu0 0.0
  %1439 = vmatprep.subr.mxu0 0.0
  %1440 = vmatpush1.xpose.msra.mxu0 0.0
  %1441 = vmatprep.subr.mxu0 0.0
  %1442 = vmatpush1.xpose.msra.mxu0 0.0
  %1443 = vmatprep.subr.mxu0 0.0
  %1444 = vmatpush1.xpose.msra.mxu0 0.0
  %1445 = vmatprep.subr.mxu0 0.0
  %1446 = vmatpush1.xpose.msra.mxu0 0.0
  %1447 = vmatprep.subr.mxu0 0.0
  %1448 = vmatpush1.xpose.msra.mxu0 0.0
  %1449 = vmatprep.subr.mxu0 0.0
  %1450 = vmatpush1.xpose.msra.mxu0 0.0
  %1451 = vmatprep.subr.mxu0 0.0
  %1452 = vmatpush1.xpose.msra.mxu0 0.0
  %1453 = vmatprep.subr.mxu0 0.0
  %1454 = vmatpush1.xpose.msra.mxu0 0.0
  %1455 = vmatprep.subr.mxu0 0.0
  %1456 = vmatpush1.xpose.msra.mxu0 0.0
  %1457 = vmatprep.subr.mxu0 0.0
  %1458 = vmatpush1.xpose.msra.mxu0 0.0
  %1459 = vmatprep.subr.mxu0 0.0
  %1460 = vmatpush1.xpose.msra.mxu0 0.0
  %1461 = vmatprep.subr.mxu0 0.0
  %1462 = vmatpush1.xpose.msra.mxu0 0.0
  %1463 = vmatprep.subr.mxu0 0.0
  %1464 = vmatpush1.xpose.msra.mxu0 0.0
  %1465 = vmatprep.subr.mxu0 0.0
  %1466 = vmatpush1.xpose.msra.mxu0 0.0
  %1467 = vmatprep.subr.mxu0 0.0
  %1468 = vmatpush1.xpose.msra.mxu0 0.0
  %1469 = vmatprep.subr.mxu0 0.0
  %1470 = vmatpush1.xpose.msra.mxu0 0.0
  %1471 = vmatprep.subr.mxu0 0.0
  %1472 = vmatpush1.xpose.msra.mxu0 0.0
  %1473 = vmatprep.subr.mxu0 0.0
  %1474 = vmatpush1.xpose.msra.mxu0 0.0
  %1475 = vmatprep.subr.mxu0 0.0
  %1476 = vmatpush1.xpose.msra.mxu0 0.0
  %1477 = vmatprep.subr.mxu0 0.0
  %1478 = vmatpush1.xpose.msra.mxu0 0.0
  %1479 = vmatprep.subr.mxu0 0.0
  %1480 = vmatpush1.xpose.msra.mxu0 0.0
  %1481 = vmatprep.subr.mxu0 0.0
  %1482 = vmatpush1.xpose.msra.mxu0 0.0
  %1483 = vmatprep.subr.mxu0 0.0
  %1484 = vmatpush1.xpose.msra.mxu0 0.0
  %1485 = vmatprep.subr.mxu0 0.0
  %1486 = vmatpush1.xpose.msra.mxu0 0.0
  %1487 = vmatprep.mubr.f32.mxu0 0.0
  %1488 = vmatmul.mubr.f32.gmra.mrb[0].mxu0 %v1324
  %v1489 = vpop.f32.mrb[0].mxu0
  %v1490 = vadd.f32 %v1413, %v1489
  %v1491 = vpop.f32.mrb[0].mxu0
  %1492 = vmatprep.mubr.f32.mxu0 0.0
  %1493 = vmatmul.mubr.f32.gmra.mrb[0].mxu0 %v1326
  %v1494 = vpop.f32.mrb[0].mxu0
  %v1495 = vadd.f32 %v1414, %v1494
  %v1496 = vpop.f32.mrb[0].mxu0
  %1497 = vdwg.mxu0
  %1498 = vset.pattern.permute.xlu0 1
  %1499 = vperm.xlu0 %1498, %v1395
  %v1500 = vpop.permute.xlu0 %1499
  %1502 = vset.pattern.permute.xlu0 1
  %1503 = vperm.xlu0 %1502, %v1400
  %v1504 = vpop.permute.xlu0 %1503
  %v1506 = vsel %vm446, %v1500, 0.0
  %v1507 = vsel %vm447, %v1504, 0.0
  %v1508 = vadd.f32 %v1490, %v1506
  %v1509 = vadd.f32 %v1495, %v1507
  %1510 = vset.pattern.permute.xlu0 2
  %1511 = vperm.xlu0 %1510, %v1395
  %v1512 = vpop.permute.xlu0 %1511
  %1514 = vset.pattern.permute.xlu0 2
  %1515 = vperm.xlu0 %1514, %v1400
  %v1516 = vpop.permute.xlu0 %1515
  %v1518 = vsel %vm460, %v1512, 0.0
  %v1519 = vsel %vm461, %v1516, 0.0
  %v1520 = vadd.f32 %v1508, %v1518
  %v1521 = vadd.f32 %v1509, %v1519
  %1522 = vset.pattern.permute.xlu0 3
  %1523 = vperm.xlu0 %1522, %v1395
  %v1524 = vpop.permute.xlu0 %1523
  %1526 = vset.pattern.permute.xlu0 3
  %1527 = vperm.xlu0 %1526, %v1400
  %v1528 = vpop.permute.xlu0 %1527
  %v1530 = vsel %vm474, %v1524, 0.0
  %v1531 = vsel %vm475, %v1528, 0.0
  %v1532 = vadd.f32 %v1520, %v1530
  %v1533 = vadd.f32 %v1521, %v1531
  %1534 = vset.pattern.permute.xlu0 4
  %1535 = vperm.xlu0 %1534, %v1395
  %v1536 = vpop.permute.xlu0 %1535
  %1538 = vset.pattern.permute.xlu0 4
  %1539 = vperm.xlu0 %1538, %v1400
  %v1540 = vpop.permute.xlu0 %1539
  %v1542 = vsel %vm488, %v1536, 0.0
  %v1543 = vsel %vm489, %v1540, 0.0
  %v1544 = vadd.f32 %v1532, %v1542
  %v1545 = vadd.f32 %v1533, %v1543
  %1546 = vset.pattern.permute.xlu0 5
  %1547 = vperm.xlu0 %1546, %v1395
  %v1548 = vpop.permute.xlu0 %1547
  %1550 = vset.pattern.permute.xlu0 5
  %1551 = vperm.xlu0 %1550, %v1400
  %v1552 = vpop.permute.xlu0 %1551
  %v1554 = vsel %vm502, %v1548, 0.0
  %v1555 = vsel %vm503, %v1552, 0.0
  %v1556 = vadd.f32 %v1544, %v1554
  %v1557 = vadd.f32 %v1545, %v1555
  %1558 = vset.pattern.permute.xlu0 6
  %1559 = vperm.xlu0 %1558, %v1395
  %v1560 = vpop.permute.xlu0 %1559
  %1562 = vset.pattern.permute.xlu0 6
  %1563 = vperm.xlu0 %1562, %v1400
  %v1564 = vpop.permute.xlu0 %1563
  %v1566 = vsel %vm516, %v1560, 0.0
  %v1567 = vsel %vm517, %v1564, 0.0
  %v1568 = vadd.f32 %v1556, %v1566
  %v1569 = vadd.f32 %v1557, %v1567
  %1570 = vset.pattern.permute.xlu0 7
  %1571 = vperm.xlu0 %1570, %v1395
  %v1572 = vpop.permute.xlu0 %1571
  %1574 = vset.pattern.permute.xlu0 7
  %1575 = vperm.xlu0 %1574, %v1400
  %v1576 = vpop.permute.xlu0 %1575
  %v1578 = vsel %vm530, %v1572, 0.0
  %v1579 = vsel %vm531, %v1576, 0.0
  %v1580 = vadd.f32 %v1568, %v1578
  %v1581 = vadd.f32 %v1569, %v1579
  %1582 = vset.pattern.permute.xlu0 8
  %1583 = vperm.xlu0 %1582, %v1395
  %v1584 = vpop.permute.xlu0 %1583
  %1586 = vset.pattern.permute.xlu0 8
  %1587 = vperm.xlu0 %1586, %v1400
  %v1588 = vpop.permute.xlu0 %1587
  %v1590 = vsel %vm544, %v1584, 0.0
  %v1591 = vsel %vm545, %v1588, 0.0
  %v1592 = vadd.f32 %v1580, %v1590
  %v1593 = vadd.f32 %v1581, %v1591
  %v1594 = vadd.f32 %v1592, %v263
  %v1595 = vadd.f32 %v1593, %v264
  %v1596 = vsel %vm560, %v1594, -inf
  %1597 = vmax.xlane.f32.xlu0 %v1596
  %v1598 = vpop.xlane.xlu0 %1597
  %v1599 = vsel %vm560, %v1595, -inf
  %1600 = vmax.xlane.f32.xlu0 %v1599
  %v1601 = vpop.xlane.xlu0 %1600
  %v1602 = vsub.f32 %v1594, %v1598
  %v1603 = vsub.f32 %v1595, %v1601
  %v1604 = vmul.f32 %v1602, 1.442695
  %v1605 = vpow.pop %v1604
  %v1606 = vmul.f32 %v1603, 1.442695
  %v1607 = vpow.pop %v1606
  %v1608 = vsel %vm560, %v1605, 0.0
  %1609 = vadd.xlane.f32.xlu0 %v1608
  %v1610 = vpop.xlane.xlu0 %1609
  %v1611 = vsel %vm560, %v1607, 0.0
  %1612 = vadd.xlane.f32.xlu0 %v1611
  %v1613 = vpop.xlane.xlu0 %1612
  %v1614 = vrcp.pop %v1610
  %v1615 = vrcp.pop %v1613
  %v1616 = vmul.f32 %v1605, %v1614
  %v1617 = vmul.f32 %v1607, %v1615
  %v1618 = vsel %vm347, %v1616, 0.0
  %v1619 = vsel %vm348, %v1617, 0.0
  %v1620 = vsel %vm560, %v1618, 0.0
  %1621 = vadd.xlane.f32.xlu0 %v1620
  %v1622 = vpop.xlane.xlu0 %1621
  %v1623 = vsel %vm560, %v1619, 0.0
  %1624 = vadd.xlane.f32.xlu0 %v1623
  %v1625 = vpop.xlane.xlu0 %1624
  %v1626 = vmul.f32 %v1622, %v594
  %v1627 = vmul.f32 %v1625, %v594
  %v1628 = vadd.f32 %v1626, 0.0
  %v1629 = vadd.f32 %v1627, 0.0
  %v1630 = vsel %vm446, %v1616, 0.0
  %v1631 = vsel %vm447, %v1617, 0.0
  %v1632 = vsel %vm560, %v1630, 0.0
  %1633 = vadd.xlane.f32.xlu0 %v1632
  %v1634 = vpop.xlane.xlu0 %1633
  %v1635 = vsel %vm560, %v1631, 0.0
  %1636 = vadd.xlane.f32.xlu0 %v1635
  %v1637 = vpop.xlane.xlu0 %1636
  %v1638 = vmul.f32 %v1634, %v610
  %v1639 = vmul.f32 %v1637, %v610
  %v1640 = vadd.f32 %v1628, %v1638
  %v1641 = vadd.f32 %v1629, %v1639
  %v1642 = vsel %vm460, %v1616, 0.0
  %v1643 = vsel %vm461, %v1617, 0.0
  %v1644 = vsel %vm560, %v1642, 0.0
  %1645 = vadd.xlane.f32.xlu0 %v1644
  %v1646 = vpop.xlane.xlu0 %1645
  %v1647 = vsel %vm560, %v1643, 0.0
  %1648 = vadd.xlane.f32.xlu0 %v1647
  %v1649 = vpop.xlane.xlu0 %1648
  %v1650 = vmul.f32 %v1646, %v626
  %v1651 = vmul.f32 %v1649, %v626
  %v1652 = vadd.f32 %v1640, %v1650
  %v1653 = vadd.f32 %v1641, %v1651
  %v1654 = vsel %vm474, %v1616, 0.0
  %v1655 = vsel %vm475, %v1617, 0.0
  %v1656 = vsel %vm560, %v1654, 0.0
  %1657 = vadd.xlane.f32.xlu0 %v1656
  %v1658 = vpop.xlane.xlu0 %1657
  %v1659 = vsel %vm560, %v1655, 0.0
  %1660 = vadd.xlane.f32.xlu0 %v1659
  %v1661 = vpop.xlane.xlu0 %1660
  %v1662 = vmul.f32 %v1658, %v642
  %v1663 = vmul.f32 %v1661, %v642
  %v1664 = vadd.f32 %v1652, %v1662
  %v1665 = vadd.f32 %v1653, %v1663
  %v1666 = vsel %vm488, %v1616, 0.0
  %v1667 = vsel %vm489, %v1617, 0.0
  %v1668 = vsel %vm560, %v1666, 0.0
  %1669 = vadd.xlane.f32.xlu0 %v1668
  %v1670 = vpop.xlane.xlu0 %1669
  %v1671 = vsel %vm560, %v1667, 0.0
  %1672 = vadd.xlane.f32.xlu0 %v1671
  %v1673 = vpop.xlane.xlu0 %1672
  %v1674 = vmul.f32 %v1670, %v658
  %v1675 = vmul.f32 %v1673, %v658
  %v1676 = vadd.f32 %v1664, %v1674
  %v1677 = vadd.f32 %v1665, %v1675
  %v1678 = vsel %vm502, %v1616, 0.0
  %v1679 = vsel %vm503, %v1617, 0.0
  %v1680 = vsel %vm560, %v1678, 0.0
  %1681 = vadd.xlane.f32.xlu0 %v1680
  %v1682 = vpop.xlane.xlu0 %1681
  %v1683 = vsel %vm560, %v1679, 0.0
  %1684 = vadd.xlane.f32.xlu0 %v1683
  %v1685 = vpop.xlane.xlu0 %1684
  %v1686 = vmul.f32 %v1682, %v674
  %v1687 = vmul.f32 %v1685, %v674
  %v1688 = vadd.f32 %v1676, %v1686
  %v1689 = vadd.f32 %v1677, %v1687
  %v1690 = vsel %vm516, %v1616, 0.0
  %v1691 = vsel %vm517, %v1617, 0.0
  %v1692 = vsel %vm560, %v1690, 0.0
  %1693 = vadd.xlane.f32.xlu0 %v1692
  %v1694 = vpop.xlane.xlu0 %1693
  %v1695 = vsel %vm560, %v1691, 0.0
  %1696 = vadd.xlane.f32.xlu0 %v1695
  %v1697 = vpop.xlane.xlu0 %1696
  %v1698 = vmul.f32 %v1694, %v690
  %v1699 = vmul.f32 %v1697, %v690
  %v1700 = vadd.f32 %v1688, %v1698
  %v1701 = vadd.f32 %v1689, %v1699
  %v1702 = vsel %vm530, %v1616, 0.0
  %v1703 = vsel %vm531, %v1617, 0.0
  %v1704 = vsel %vm560, %v1702, 0.0
  %1705 = vadd.xlane.f32.xlu0 %v1704
  %v1706 = vpop.xlane.xlu0 %1705
  %v1707 = vsel %vm560, %v1703, 0.0
  %1708 = vadd.xlane.f32.xlu0 %v1707
  %v1709 = vpop.xlane.xlu0 %1708
  %v1710 = vmul.f32 %v1706, %v706
  %v1711 = vmul.f32 %v1709, %v706
  %v1712 = vadd.f32 %v1700, %v1710
  %v1713 = vadd.f32 %v1701, %v1711
  %v1714 = vsel %vm544, %v1616, 0.0
  %v1715 = vsel %vm545, %v1617, 0.0
  %v1716 = vsel %vm560, %v1714, 0.0
  %1717 = vadd.xlane.f32.xlu0 %v1716
  %v1718 = vpop.xlane.xlu0 %1717
  %v1719 = vsel %vm560, %v1715, 0.0
  %1720 = vadd.xlane.f32.xlu0 %v1719
  %v1721 = vpop.xlane.xlu0 %1720
  %v1722 = vmul.f32 %v1718, %v722
  %v1723 = vmul.f32 %v1721, %v722
  %v1724 = vadd.f32 %v1712, %v1722
  %v1725 = vadd.f32 %v1713, %v1723
  %1726 = vrot.lane.b32.xlu0 %v210, 48
  %v1727 = vpop.permute.xlu0 %1726
  %1728 = vrot.lane.b32.xlu0 %v215, 48
  %v1729 = vpop.permute.xlu0 %1728
  %v1733 = vsel %vm560, %v1616, 0
  %v1736 = vsel %vm560, %v1617, 0
  %1738 = vmatprep.subr.mxu0 0.0
  %1739 = vmatpush1.msra.mxu0 %v1727
  %1740 = vmatprep.subr.mxu0 0.0
  %1741 = vmatpush1.msra.mxu0 %v1729
  %1742 = vmatprep.subr.mxu0 0.0
  %1743 = vmatpush1.msra.mxu0 0.0
  %1744 = vmatprep.subr.mxu0 0.0
  %1745 = vmatpush1.msra.mxu0 0.0
  %1746 = vmatprep.subr.mxu0 0.0
  %1747 = vmatpush1.msra.mxu0 0.0
  %1748 = vmatprep.subr.mxu0 0.0
  %1749 = vmatpush1.msra.mxu0 0.0
  %1750 = vmatprep.subr.mxu0 0.0
  %1751 = vmatpush1.msra.mxu0 0.0
  %1752 = vmatprep.subr.mxu0 0.0
  %1753 = vmatpush1.msra.mxu0 0.0
  %1754 = vmatprep.subr.mxu0 0.0
  %1755 = vmatpush1.msra.mxu0 0.0
  %1756 = vmatprep.subr.mxu0 0.0
  %1757 = vmatpush1.msra.mxu0 0.0
  %1758 = vmatprep.subr.mxu0 0.0
  %1759 = vmatpush1.msra.mxu0 0.0
  %1760 = vmatprep.subr.mxu0 0.0
  %1761 = vmatpush1.msra.mxu0 0.0
  %1762 = vmatprep.subr.mxu0 0.0
  %1763 = vmatpush1.msra.mxu0 0.0
  %1764 = vmatprep.subr.mxu0 0.0
  %1765 = vmatpush1.msra.mxu0 0.0
  %1766 = vmatprep.subr.mxu0 0.0
  %1767 = vmatpush1.msra.mxu0 0.0
  %1768 = vmatprep.subr.mxu0 0.0
  %1769 = vmatpush1.msra.mxu0 0.0
  %1770 = vmatprep.subr.mxu0 0.0
  %1771 = vmatpush1.msra.mxu0 0.0
  %1772 = vmatprep.subr.mxu0 0.0
  %1773 = vmatpush1.msra.mxu0 0.0
  %1774 = vmatprep.subr.mxu0 0.0
  %1775 = vmatpush1.msra.mxu0 0.0
  %1776 = vmatprep.subr.mxu0 0.0
  %1777 = vmatpush1.msra.mxu0 0.0
  %1778 = vmatprep.subr.mxu0 0.0
  %1779 = vmatpush1.msra.mxu0 0.0
  %1780 = vmatprep.subr.mxu0 0.0
  %1781 = vmatpush1.msra.mxu0 0.0
  %1782 = vmatprep.subr.mxu0 0.0
  %1783 = vmatpush1.msra.mxu0 0.0
  %1784 = vmatprep.subr.mxu0 0.0
  %1785 = vmatpush1.msra.mxu0 0.0
  %1786 = vmatprep.subr.mxu0 0.0
  %1787 = vmatpush1.msra.mxu0 0.0
  %1788 = vmatprep.subr.mxu0 0.0
  %1789 = vmatpush1.msra.mxu0 0.0
  %1790 = vmatprep.subr.mxu0 0.0
  %1791 = vmatpush1.msra.mxu0 0.0
  %1792 = vmatprep.subr.mxu0 0.0
  %1793 = vmatpush1.msra.mxu0 0.0
  %1794 = vmatprep.subr.mxu0 0.0
  %1795 = vmatpush1.msra.mxu0 0.0
  %1796 = vmatprep.subr.mxu0 0.0
  %1797 = vmatpush1.msra.mxu0 0.0
  %1798 = vmatprep.subr.mxu0 0.0
  %1799 = vmatpush1.msra.mxu0 0.0
  %1800 = vmatprep.subr.mxu0 0.0
  %1801 = vmatpush1.msra.mxu0 0.0
  %1802 = vmatprep.mubr.f32.mxu0 0.0
  %1803 = vmatmul.mubr.f32.gmra.mrb[0].mxu0 %v1733
  %v1804 = vpop.f32.mrb[0].mxu0
  %v1805 = vadd.f32 %v1724, %v1804
  %v1806 = vpop.f32.mrb[0].mxu0
  %1807 = vmatprep.mubr.f32.mxu0 0.0
  %1808 = vmatmul.mubr.f32.gmra.mrb[0].mxu0 %v1736
  %v1809 = vpop.f32.mrb[0].mxu0
  %v1810 = vadd.f32 %v1725, %v1809
  %v1811 = vpop.f32.mrb[0].mxu0
  %1812 = vdwg.mxu0
  %1815 = vrot.lane.b32.xlu0 %v1805, 16
  %v1816 = vpop.permute.xlu0 %1815
  %1817 = vrot.lane.b32.xlu0 %v1810, 16
  %v1818 = vpop.permute.xlu0 %1817
  %vm1821 = vcmask 195712
  %1822 = vst.msk [vmem:[#allocation2] sm:$0xff] %vm1821, %v1816
  %1823 = vst.msk [vmem:[#allocation2 + $0x8] sm:$0xff] %vm1821, %v1818
  %1824 = vrot.lane.b32.xlu0 %v228, 104
  %v1825 = vpop.permute.xlu0 %1824
  %1826 = vrot.lane.b32.xlu0 %v229, 104
  %v1827 = vpop.permute.xlu0 %1826
  %v1828 = vsel %vm265, %v1825, 0
  %v1830 = vsel %vm265, %v1827, 0
  %1832 = vmatprep.subr.mxu0 0.0
  %1833 = vmatpush1.msra.mxu0 %v232
  %1834 = vmatprep.subr.mxu0 0.0
  %1835 = vmatpush1.msra.mxu0 0.0
  %1836 = vmatprep.subr.mxu0 0.0
  %1837 = vmatpush1.msra.mxu0 0.0
  %1838 = vmatprep.subr.mxu0 0.0
  %1839 = vmatpush1.msra.mxu0 0.0
  %1840 = vmatprep.subr.mxu0 0.0
  %1841 = vmatpush1.msra.mxu0 0.0
  %1842 = vmatprep.subr.mxu0 0.0
  %1843 = vmatpush1.msra.mxu0 0.0
  %1844 = vmatprep.subr.mxu0 0.0
  %1845 = vmatpush1.msra.mxu0 0.0
  %1846 = vmatprep.subr.mxu0 0.0
  %1847 = vmatpush1.msra.mxu0 0.0
  %1848 = vmatprep.subr.mxu0 0.0
  %1849 = vmatpush1.msra.mxu0 0.0
  %1850 = vmatprep.subr.mxu0 0.0
  %1851 = vmatpush1.msra.mxu0 0.0
  %1852 = vmatprep.subr.mxu0 0.0
  %1853 = vmatpush1.msra.mxu0 0.0
  %1854 = vmatprep.subr.mxu0 0.0
  %1855 = vmatpush1.msra.mxu0 0.0
  %1856 = vmatprep.subr.mxu0 0.0
  %1857 = vmatpush1.msra.mxu0 0.0
  %1858 = vmatprep.subr.mxu0 0.0
  %1859 = vmatpush1.msra.mxu0 0.0
  %1860 = vmatprep.subr.mxu0 0.0
  %1861 = vmatpush1.msra.mxu0 0.0
  %1862 = vmatprep.subr.mxu0 0.0
  %1863 = vmatpush1.msra.mxu0 0.0
  %1864 = vmatprep.subr.mxu0 0.0
  %1865 = vmatpush1.msra.mxu0 0.0
  %1866 = vmatprep.subr.mxu0 0.0
  %1867 = vmatpush1.msra.mxu0 0.0
  %1868 = vmatprep.subr.mxu0 0.0
  %1869 = vmatpush1.msra.mxu0 0.0
  %1870 = vmatprep.subr.mxu0 0.0
  %1871 = vmatpush1.msra.mxu0 0.0
  %1872 = vmatprep.subr.mxu0 0.0
  %1873 = vmatpush1.msra.mxu0 0.0
  %1874 = vmatprep.subr.mxu0 0.0
  %1875 = vmatpush1.msra.mxu0 0.0
  %1876 = vmatprep.subr.mxu0 0.0
  %1877 = vmatpush1.msra.mxu0 0.0
  %1878 = vmatprep.subr.mxu0 0.0
  %1879 = vmatpush1.msra.mxu0 0.0
  %1880 = vmatprep.subr.mxu0 0.0
  %1881 = vmatpush1.msra.mxu0 0.0
  %1882 = vmatprep.subr.mxu0 0.0
  %1883 = vmatpush1.msra.mxu0 0.0
  %1884 = vmatprep.subr.mxu0 0.0
  %1885 = vmatpush1.msra.mxu0 0.0
  %1886 = vmatprep.subr.mxu0 0.0
  %1887 = vmatpush1.msra.mxu0 0.0
  %1888 = vmatprep.subr.mxu0 0.0
  %1889 = vmatpush1.msra.mxu0 0.0
  %1890 = vmatprep.subr.mxu0 0.0
  %1891 = vmatpush1.msra.mxu0 0.0
  %1892 = vmatprep.subr.mxu0 0.0
  %1893 = vmatpush1.msra.mxu0 0.0
  %1894 = vmatprep.subr.mxu0 0.0
  %1895 = vmatpush1.msra.mxu0 0.0
  %1896 = vmatprep.mubr.f32.mxu0 0.0
  %1897 = vmatmul.mubr.f32.gmra.mrb[0].mxu0 %v1828
  %v1898 = vpop.f32.mrb[0].mxu0
  %v1899 = vadd.f32 0.0, %v1898
  %v1900 = vpop.f32.mrb[0].mxu0
  %1901 = vmatprep.mubr.f32.mxu0 0.0
  %1902 = vmatmul.mubr.f32.gmra.mrb[0].mxu0 %v1830
  %v1903 = vpop.f32.mrb[0].mxu0
  %v1904 = vadd.f32 0.0, %v1903
  %v1905 = vpop.f32.mrb[0].mxu0
  %1906 = vdwg.mxu0
  %1908 = vset.pattern.permute.xlu0 0
  %1909 = vperm.xlu0 %1908, %v1899
  %v1910 = vpop.permute.xlu0 %1909
  %1913 = vset.pattern.permute.xlu0 0
  %1914 = vperm.xlu0 %1913, %v1904
  %v1915 = vpop.permute.xlu0 %1914
  %v1917 = vsel %vm347, %v1910, 0.0
  %v1918 = vsel %vm348, %v1915, 0.0
  %1919 = vrot.lane.b32.xlu0 %v210, 72
  %v1920 = vpop.permute.xlu0 %1919
  %1921 = vrot.lane.b32.xlu0 %v215, 72
  %v1922 = vpop.permute.xlu0 %1921
  %v1923 = vsel %vm265, %v1920, 0
  %v1925 = vsel %vm265, %v1922, 0
  %1927 = vmatprep.subr.mxu0 0.0
  %1928 = vmatpush1.xpose.msra.mxu0 %v1923
  %1929 = vmatprep.subr.mxu0 0.0
  %1930 = vmatpush1.xpose.msra.mxu0 %v1925
  %1931 = vmatprep.subr.mxu0 0.0
  %1932 = vmatpush1.xpose.msra.mxu0 0.0
  %1933 = vmatprep.subr.mxu0 0.0
  %1934 = vmatpush1.xpose.msra.mxu0 0.0
  %1935 = vmatprep.subr.mxu0 0.0
  %1936 = vmatpush1.xpose.msra.mxu0 0.0
  %1937 = vmatprep.subr.mxu0 0.0
  %1938 = vmatpush1.xpose.msra.mxu0 0.0
  %1939 = vmatprep.subr.mxu0 0.0
  %1940 = vmatpush1.xpose.msra.mxu0 0.0
  %1941 = vmatprep.subr.mxu0 0.0
  %1942 = vmatpush1.xpose.msra.mxu0 0.0
  %1943 = vmatprep.subr.mxu0 0.0
  %1944 = vmatpush1.xpose.msra.mxu0 0.0
  %1945 = vmatprep.subr.mxu0 0.0
  %1946 = vmatpush1.xpose.msra.mxu0 0.0
  %1947 = vmatprep.subr.mxu0 0.0
  %1948 = vmatpush1.xpose.msra.mxu0 0.0
  %1949 = vmatprep.subr.mxu0 0.0
  %1950 = vmatpush1.xpose.msra.mxu0 0.0
  %1951 = vmatprep.subr.mxu0 0.0
  %1952 = vmatpush1.xpose.msra.mxu0 0.0
  %1953 = vmatprep.subr.mxu0 0.0
  %1954 = vmatpush1.xpose.msra.mxu0 0.0
  %1955 = vmatprep.subr.mxu0 0.0
  %1956 = vmatpush1.xpose.msra.mxu0 0.0
  %1957 = vmatprep.subr.mxu0 0.0
  %1958 = vmatpush1.xpose.msra.mxu0 0.0
  %1959 = vmatprep.subr.mxu0 0.0
  %1960 = vmatpush1.xpose.msra.mxu0 0.0
  %1961 = vmatprep.subr.mxu0 0.0
  %1962 = vmatpush1.xpose.msra.mxu0 0.0
  %1963 = vmatprep.subr.mxu0 0.0
  %1964 = vmatpush1.xpose.msra.mxu0 0.0
  %1965 = vmatprep.subr.mxu0 0.0
  %1966 = vmatpush1.xpose.msra.mxu0 0.0
  %1967 = vmatprep.subr.mxu0 0.0
  %1968 = vmatpush1.xpose.msra.mxu0 0.0
  %1969 = vmatprep.subr.mxu0 0.0
  %1970 = vmatpush1.xpose.msra.mxu0 0.0
  %1971 = vmatprep.subr.mxu0 0.0
  %1972 = vmatpush1.xpose.msra.mxu0 0.0
  %1973 = vmatprep.subr.mxu0 0.0
  %1974 = vmatpush1.xpose.msra.mxu0 0.0
  %1975 = vmatprep.subr.mxu0 0.0
  %1976 = vmatpush1.xpose.msra.mxu0 0.0
  %1977 = vmatprep.subr.mxu0 0.0
  %1978 = vmatpush1.xpose.msra.mxu0 0.0
  %1979 = vmatprep.subr.mxu0 0.0
  %1980 = vmatpush1.xpose.msra.mxu0 0.0
  %1981 = vmatprep.subr.mxu0 0.0
  %1982 = vmatpush1.xpose.msra.mxu0 0.0
  %1983 = vmatprep.subr.mxu0 0.0
  %1984 = vmatpush1.xpose.msra.mxu0 0.0
  %1985 = vmatprep.subr.mxu0 0.0
  %1986 = vmatpush1.xpose.msra.mxu0 0.0
  %1987 = vmatprep.subr.mxu0 0.0
  %1988 = vmatpush1.xpose.msra.mxu0 0.0
  %1989 = vmatprep.subr.mxu0 0.0
  %1990 = vmatpush1.xpose.msra.mxu0 0.0
  %1991 = vmatprep.mubr.f32.mxu0 0.0
  %1992 = vmatmul.mubr.f32.gmra.mrb[0].mxu0 %v1828
  %v1993 = vpop.f32.mrb[0].mxu0
  %v1994 = vadd.f32 %v1917, %v1993
  %v1995 = vpop.f32.mrb[0].mxu0
  %1996 = vmatprep.mubr.f32.mxu0 0.0
  %1997 = vmatmul.mubr.f32.gmra.mrb[0].mxu0 %v1830
  %v1998 = vpop.f32.mrb[0].mxu0
  %v1999 = vadd.f32 %v1918, %v1998
  %v2000 = vpop.f32.mrb[0].mxu0
  %2001 = vdwg.mxu0
  %2002 = vset.pattern.permute.xlu0 1
  %2003 = vperm.xlu0 %2002, %v1899
  %v2004 = vpop.permute.xlu0 %2003
  %2006 = vset.pattern.permute.xlu0 1
  %2007 = vperm.xlu0 %2006, %v1904
  %v2008 = vpop.permute.xlu0 %2007
  %v2010 = vsel %vm446, %v2004, 0.0
  %v2011 = vsel %vm447, %v2008, 0.0
  %v2012 = vadd.f32 %v1994, %v2010
  %v2013 = vadd.f32 %v1999, %v2011
  %2014 = vset.pattern.permute.xlu0 2
  %2015 = vperm.xlu0 %2014, %v1899
  %v2016 = vpop.permute.xlu0 %2015
  %2018 = vset.pattern.permute.xlu0 2
  %2019 = vperm.xlu0 %2018, %v1904
  %v2020 = vpop.permute.xlu0 %2019
  %v2022 = vsel %vm460, %v2016, 0.0
  %v2023 = vsel %vm461, %v2020, 0.0
  %v2024 = vadd.f32 %v2012, %v2022
  %v2025 = vadd.f32 %v2013, %v2023
  %2026 = vset.pattern.permute.xlu0 3
  %2027 = vperm.xlu0 %2026, %v1899
  %v2028 = vpop.permute.xlu0 %2027
  %2030 = vset.pattern.permute.xlu0 3
  %2031 = vperm.xlu0 %2030, %v1904
  %v2032 = vpop.permute.xlu0 %2031
  %v2034 = vsel %vm474, %v2028, 0.0
  %v2035 = vsel %vm475, %v2032, 0.0
  %v2036 = vadd.f32 %v2024, %v2034
  %v2037 = vadd.f32 %v2025, %v2035
  %2038 = vset.pattern.permute.xlu0 4
  %2039 = vperm.xlu0 %2038, %v1899
  %v2040 = vpop.permute.xlu0 %2039
  %2042 = vset.pattern.permute.xlu0 4
  %2043 = vperm.xlu0 %2042, %v1904
  %v2044 = vpop.permute.xlu0 %2043
  %v2046 = vsel %vm488, %v2040, 0.0
  %v2047 = vsel %vm489, %v2044, 0.0
  %v2048 = vadd.f32 %v2036, %v2046
  %v2049 = vadd.f32 %v2037, %v2047
  %2050 = vset.pattern.permute.xlu0 5
  %2051 = vperm.xlu0 %2050, %v1899
  %v2052 = vpop.permute.xlu0 %2051
  %2054 = vset.pattern.permute.xlu0 5
  %2055 = vperm.xlu0 %2054, %v1904
  %v2056 = vpop.permute.xlu0 %2055
  %v2058 = vsel %vm502, %v2052, 0.0
  %v2059 = vsel %vm503, %v2056, 0.0
  %v2060 = vadd.f32 %v2048, %v2058
  %v2061 = vadd.f32 %v2049, %v2059
  %2062 = vset.pattern.permute.xlu0 6
  %2063 = vperm.xlu0 %2062, %v1899
  %v2064 = vpop.permute.xlu0 %2063
  %2066 = vset.pattern.permute.xlu0 6
  %2067 = vperm.xlu0 %2066, %v1904
  %v2068 = vpop.permute.xlu0 %2067
  %v2070 = vsel %vm516, %v2064, 0.0
  %v2071 = vsel %vm517, %v2068, 0.0
  %v2072 = vadd.f32 %v2060, %v2070
  %v2073 = vadd.f32 %v2061, %v2071
  %2074 = vset.pattern.permute.xlu0 7
  %2075 = vperm.xlu0 %2074, %v1899
  %v2076 = vpop.permute.xlu0 %2075
  %2078 = vset.pattern.permute.xlu0 7
  %2079 = vperm.xlu0 %2078, %v1904
  %v2080 = vpop.permute.xlu0 %2079
  %v2082 = vsel %vm530, %v2076, 0.0
  %v2083 = vsel %vm531, %v2080, 0.0
  %v2084 = vadd.f32 %v2072, %v2082
  %v2085 = vadd.f32 %v2073, %v2083
  %2086 = vset.pattern.permute.xlu0 8
  %2087 = vperm.xlu0 %2086, %v1899
  %v2088 = vpop.permute.xlu0 %2087
  %2090 = vset.pattern.permute.xlu0 8
  %2091 = vperm.xlu0 %2090, %v1904
  %v2092 = vpop.permute.xlu0 %2091
  %v2094 = vsel %vm544, %v2088, 0.0
  %v2095 = vsel %vm545, %v2092, 0.0
  %v2096 = vadd.f32 %v2084, %v2094
  %v2097 = vadd.f32 %v2085, %v2095
  %v2098 = vadd.f32 %v2096, %v263
  %v2099 = vadd.f32 %v2097, %v264
  %v2100 = vsel %vm560, %v2098, -inf
  %2101 = vmax.xlane.f32.xlu0 %v2100
  %v2102 = vpop.xlane.xlu0 %2101
  %v2103 = vsel %vm560, %v2099, -inf
  %2104 = vmax.xlane.f32.xlu0 %v2103
  %v2105 = vpop.xlane.xlu0 %2104
  %v2106 = vsub.f32 %v2098, %v2102
  %v2107 = vsub.f32 %v2099, %v2105
  %v2108 = vmul.f32 %v2106, 1.442695
  %v2109 = vpow.pop %v2108
  %v2110 = vmul.f32 %v2107, 1.442695
  %v2111 = vpow.pop %v2110
  %v2112 = vsel %vm560, %v2109, 0.0
  %2113 = vadd.xlane.f32.xlu0 %v2112
  %v2114 = vpop.xlane.xlu0 %2113
  %v2115 = vsel %vm560, %v2111, 0.0
  %2116 = vadd.xlane.f32.xlu0 %v2115
  %v2117 = vpop.xlane.xlu0 %2116
  %v2118 = vrcp.pop %v2114
  %v2119 = vrcp.pop %v2117
  %v2120 = vmul.f32 %v2109, %v2118
  %v2121 = vmul.f32 %v2111, %v2119
  %v2122 = vsel %vm347, %v2120, 0.0
  %v2123 = vsel %vm348, %v2121, 0.0
  %v2124 = vsel %vm560, %v2122, 0.0
  %2125 = vadd.xlane.f32.xlu0 %v2124
  %v2126 = vpop.xlane.xlu0 %2125
  %v2127 = vsel %vm560, %v2123, 0.0
  %2128 = vadd.xlane.f32.xlu0 %v2127
  %v2129 = vpop.xlane.xlu0 %2128
  %v2130 = vmul.f32 %v2126, %v594
  %v2131 = vmul.f32 %v2129, %v594
  %v2132 = vadd.f32 %v2130, 0.0
  %v2133 = vadd.f32 %v2131, 0.0
  %v2134 = vsel %vm446, %v2120, 0.0
  %v2135 = vsel %vm447, %v2121, 0.0
  %v2136 = vsel %vm560, %v2134, 0.0
  %2137 = vadd.xlane.f32.xlu0 %v2136
  %v2138 = vpop.xlane.xlu0 %2137
  %v2139 = vsel %vm560, %v2135, 0.0
  %2140 = vadd.xlane.f32.xlu0 %v2139
  %v2141 = vpop.xlane.xlu0 %2140
  %v2142 = vmul.f32 %v2138, %v610
  %v2143 = vmul.f32 %v2141, %v610
  %v2144 = vadd.f32 %v2132, %v2142
  %v2145 = vadd.f32 %v2133, %v2143
  %v2146 = vsel %vm460, %v2120, 0.0
  %v2147 = vsel %vm461, %v2121, 0.0
  %v2148 = vsel %vm560, %v2146, 0.0
  %2149 = vadd.xlane.f32.xlu0 %v2148
  %v2150 = vpop.xlane.xlu0 %2149
  %v2151 = vsel %vm560, %v2147, 0.0
  %2152 = vadd.xlane.f32.xlu0 %v2151
  %v2153 = vpop.xlane.xlu0 %2152
  %v2154 = vmul.f32 %v2150, %v626
  %v2155 = vmul.f32 %v2153, %v626
  %v2156 = vadd.f32 %v2144, %v2154
  %v2157 = vadd.f32 %v2145, %v2155
  %v2158 = vsel %vm474, %v2120, 0.0
  %v2159 = vsel %vm475, %v2121, 0.0
  %v2160 = vsel %vm560, %v2158, 0.0
  %2161 = vadd.xlane.f32.xlu0 %v2160
  %v2162 = vpop.xlane.xlu0 %2161
  %v2163 = vsel %vm560, %v2159, 0.0
  %2164 = vadd.xlane.f32.xlu0 %v2163
  %v2165 = vpop.xlane.xlu0 %2164
  %v2166 = vmul.f32 %v2162, %v642
  %v2167 = vmul.f32 %v2165, %v642
  %v2168 = vadd.f32 %v2156, %v2166
  %v2169 = vadd.f32 %v2157, %v2167
  %v2170 = vsel %vm488, %v2120, 0.0
  %v2171 = vsel %vm489, %v2121, 0.0
  %v2172 = vsel %vm560, %v2170, 0.0
  %2173 = vadd.xlane.f32.xlu0 %v2172
  %v2174 = vpop.xlane.xlu0 %2173
  %v2175 = vsel %vm560, %v2171, 0.0
  %2176 = vadd.xlane.f32.xlu0 %v2175
  %v2177 = vpop.xlane.xlu0 %2176
  %v2178 = vmul.f32 %v2174, %v658
  %v2179 = vmul.f32 %v2177, %v658
  %v2180 = vadd.f32 %v2168, %v2178
  %v2181 = vadd.f32 %v2169, %v2179
  %v2182 = vsel %vm502, %v2120, 0.0
  %v2183 = vsel %vm503, %v2121, 0.0
  %v2184 = vsel %vm560, %v2182, 0.0
  %2185 = vadd.xlane.f32.xlu0 %v2184
  %v2186 = vpop.xlane.xlu0 %2185
  %v2187 = vsel %vm560, %v2183, 0.0
  %2188 = vadd.xlane.f32.xlu0 %v2187
  %v2189 = vpop.xlane.xlu0 %2188
  %v2190 = vmul.f32 %v2186, %v674
  %v2191 = vmul.f32 %v2189, %v674
  %v2192 = vadd.f32 %v2180, %v2190
  %v2193 = vadd.f32 %v2181, %v2191
  %v2194 = vsel %vm516, %v2120, 0.0
  %v2195 = vsel %vm517, %v2121, 0.0
  %v2196 = vsel %vm560, %v2194, 0.0
  %2197 = vadd.xlane.f32.xlu0 %v2196
  %v2198 = vpop.xlane.xlu0 %2197
  %v2199 = vsel %vm560, %v2195, 0.0
  %2200 = vadd.xlane.f32.xlu0 %v2199
  %v2201 = vpop.xlane.xlu0 %2200
  %v2202 = vmul.f32 %v2198, %v690
  %v2203 = vmul.f32 %v2201, %v690
  %v2204 = vadd.f32 %v2192, %v2202
  %v2205 = vadd.f32 %v2193, %v2203
  %v2206 = vsel %vm530, %v2120, 0.0
  %v2207 = vsel %vm531, %v2121, 0.0
  %v2208 = vsel %vm560, %v2206, 0.0
  %2209 = vadd.xlane.f32.xlu0 %v2208
  %v2210 = vpop.xlane.xlu0 %2209
  %v2211 = vsel %vm560, %v2207, 0.0
  %2212 = vadd.xlane.f32.xlu0 %v2211
  %v2213 = vpop.xlane.xlu0 %2212
  %v2214 = vmul.f32 %v2210, %v706
  %v2215 = vmul.f32 %v2213, %v706
  %v2216 = vadd.f32 %v2204, %v2214
  %v2217 = vadd.f32 %v2205, %v2215
  %v2218 = vsel %vm544, %v2120, 0.0
  %v2219 = vsel %vm545, %v2121, 0.0
  %v2220 = vsel %vm560, %v2218, 0.0
  %2221 = vadd.xlane.f32.xlu0 %v2220
  %v2222 = vpop.xlane.xlu0 %2221
  %v2223 = vsel %vm560, %v2219, 0.0
  %2224 = vadd.xlane.f32.xlu0 %v2223
  %v2225 = vpop.xlane.xlu0 %2224
  %v2226 = vmul.f32 %v2222, %v722
  %v2227 = vmul.f32 %v2225, %v722
  %v2228 = vadd.f32 %v2216, %v2226
  %v2229 = vadd.f32 %v2217, %v2227
  %2230 = vrot.lane.b32.xlu0 %v210, 40
  %v2231 = vpop.permute.xlu0 %2230
  %2232 = vrot.lane.b32.xlu0 %v215, 40
  %v2233 = vpop.permute.xlu0 %2232
  %v2237 = vsel %vm560, %v2120, 0
  %v2240 = vsel %vm560, %v2121, 0
  %2242 = vmatprep.subr.mxu0 0.0
  %2243 = vmatpush1.msra.mxu0 %v2231
  %2244 = vmatprep.subr.mxu0 0.0
  %2245 = vmatpush1.msra.mxu0 %v2233
  %2246 = vmatprep.subr.mxu0 0.0
  %2247 = vmatpush1.msra.mxu0 0.0
  %2248 = vmatprep.subr.mxu0 0.0
  %2249 = vmatpush1.msra.mxu0 0.0
  %2250 = vmatprep.subr.mxu0 0.0
  %2251 = vmatpush1.msra.mxu0 0.0
  %2252 = vmatprep.subr.mxu0 0.0
  %2253 = vmatpush1.msra.mxu0 0.0
  %2254 = vmatprep.subr.mxu0 0.0
  %2255 = vmatpush1.msra.mxu0 0.0
  %2256 = vmatprep.subr.mxu0 0.0
  %2257 = vmatpush1.msra.mxu0 0.0
  %2258 = vmatprep.subr.mxu0 0.0
  %2259 = vmatpush1.msra.mxu0 0.0
  %2260 = vmatprep.subr.mxu0 0.0
  %2261 = vmatpush1.msra.mxu0 0.0
  %2262 = vmatprep.subr.mxu0 0.0
  %2263 = vmatpush1.msra.mxu0 0.0
  %2264 = vmatprep.subr.mxu0 0.0
  %2265 = vmatpush1.msra.mxu0 0.0
  %2266 = vmatprep.subr.mxu0 0.0
  %2267 = vmatpush1.msra.mxu0 0.0
  %2268 = vmatprep.subr.mxu0 0.0
  %2269 = vmatpush1.msra.mxu0 0.0
  %2270 = vmatprep.subr.mxu0 0.0
  %2271 = vmatpush1.msra.mxu0 0.0
  %2272 = vmatprep.subr.mxu0 0.0
  %2273 = vmatpush1.msra.mxu0 0.0
  %2274 = vmatprep.subr.mxu0 0.0
  %2275 = vmatpush1.msra.mxu0 0.0
  %2276 = vmatprep.subr.mxu0 0.0
  %2277 = vmatpush1.msra.mxu0 0.0
  %2278 = vmatprep.subr.mxu0 0.0
  %2279 = vmatpush1.msra.mxu0 0.0
  %2280 = vmatprep.subr.mxu0 0.0
  %2281 = vmatpush1.msra.mxu0 0.0
  %2282 = vmatprep.subr.mxu0 0.0
  %2283 = vmatpush1.msra.mxu0 0.0
  %2284 = vmatprep.subr.mxu0 0.0
  %2285 = vmatpush1.msra.mxu0 0.0
  %2286 = vmatprep.subr.mxu0 0.0
  %2287 = vmatpush1.msra.mxu0 0.0
  %2288 = vmatprep.subr.mxu0 0.0
  %2289 = vmatpush1.msra.mxu0 0.0
  %2290 = vmatprep.subr.mxu0 0.0
  %2291 = vmatpush1.msra.mxu0 0.0
  %2292 = vmatprep.subr.mxu0 0.0
  %2293 = vmatpush1.msra.mxu0 0.0
  %2294 = vmatprep.subr.mxu0 0.0
  %2295 = vmatpush1.msra.mxu0 0.0
  %2296 = vmatprep.subr.mxu0 0.0
  %2297 = vmatpush1.msra.mxu0 0.0
  %2298 = vmatprep.subr.mxu0 0.0
  %2299 = vmatpush1.msra.mxu0 0.0
  %2300 = vmatprep.subr.mxu0 0.0
  %2301 = vmatpush1.msra.mxu0 0.0
  %2302 = vmatprep.subr.mxu0 0.0
  %2303 = vmatpush1.msra.mxu0 0.0
  %2304 = vmatprep.subr.mxu0 0.0
  %2305 = vmatpush1.msra.mxu0 0.0
  %2306 = vmatprep.mubr.f32.mxu0 0.0
  %2307 = vmatmul.mubr.f32.gmra.mrb[0].mxu0 %v2237
  %v2308 = vpop.f32.mrb[0].mxu0
  %v2309 = vadd.f32 %v2228, %v2308
  %v2310 = vpop.f32.mrb[0].mxu0
  %2311 = vmatprep.mubr.f32.mxu0 0.0
  %2312 = vmatmul.mubr.f32.gmra.mrb[0].mxu0 %v2240
  %v2313 = vpop.f32.mrb[0].mxu0
  %v2314 = vadd.f32 %v2229, %v2313
  %v2315 = vpop.f32.mrb[0].mxu0
  %2316 = vdwg.mxu0
  %2319 = vrot.lane.b32.xlu0 %v2309, 24
  %v2320 = vpop.permute.xlu0 %2319
  %2321 = vrot.lane.b32.xlu0 %v2314, 24
  %v2322 = vpop.permute.xlu0 %2321
  %vm2325 = vcmask 261312
  %2326 = vst.msk [vmem:[#allocation2] sm:$0xff] %vm2325, %v2320
  %2327 = vst.msk [vmem:[#allocation2 + $0x8] sm:$0xff] %vm2325, %v2322
  %v2328 = vld [vmem:[%s116] sm:$0xff]
  %v2329 = vld [vmem:[%s116 + $0x8] sm:$0xff]
  %s2330 = scalar_lea.vmem %s2, 1
  %v2331 = vld [vmem:[%s2330] sm:$0x1]
  %2333 = vset.pattern.permute.xlu0 0
  %2334 = vperm.xlu0 %2333, %v2328
  %v2335 = vpop.permute.xlu0 %2334
  %2338 = vset.pattern.permute.xlu0 0
  %2339 = vperm.xlu0 %2338, %v2329
  %v2340 = vpop.permute.xlu0 %2339
  %v2343 = vlaneseq
  %v2344 = vshrl.u32 %v2343, 7
  %v2345 = vsub.s32 0, %v2344
  %v2346 = vrot.slane %v2331, %v2345
  %v2348 = vmul.f32 %v2335, %v2346
  %v2349 = vmul.f32 %v2340, %v2346
  %v2350 = vsub.f32 %v2348, 1.0
  %v2351 = vsub.f32 %v2349, 1.0
  %v2352 = vmul.f32 %v2350, 10000.0
  %v2353 = vmul.f32 %v2351, 10000.0
  %v2355 = vsel %vm265, %v230, 0
  %v2358 = vsel %vm265, %v231, 0
  %2360 = vmatprep.subr.mxu0 0.0
  %2361 = vmatpush1.msra.mxu0 %v232
  %2362 = vmatprep.subr.mxu0 0.0
  %2363 = vmatpush1.msra.mxu0 0.0
  %2364 = vmatprep.subr.mxu0 0.0
  %2365 = vmatpush1.msra.mxu0 0.0
  %2366 = vmatprep.subr.mxu0 0.0
  %2367 = vmatpush1.msra.mxu0 0.0
  %2368 = vmatprep.subr.mxu0 0.0
  %2369 = vmatpush1.msra.mxu0 0.0
  %2370 = vmatprep.subr.mxu0 0.0
  %2371 = vmatpush1.msra.mxu0 0.0
  %2372 = vmatprep.subr.mxu0 0.0
  %2373 = vmatpush1.msra.mxu0 0.0
  %2374 = vmatprep.subr.mxu0 0.0
  %2375 = vmatpush1.msra.mxu0 0.0
  %2376 = vmatprep.subr.mxu0 0.0
  %2377 = vmatpush1.msra.mxu0 0.0
  %2378 = vmatprep.subr.mxu0 0.0
  %2379 = vmatpush1.msra.mxu0 0.0
  %2380 = vmatprep.subr.mxu0 0.0
  %2381 = vmatpush1.msra.mxu0 0.0
  %2382 = vmatprep.subr.mxu0 0.0
  %2383 = vmatpush1.msra.mxu0 0.0
  %2384 = vmatprep.subr.mxu0 0.0
  %2385 = vmatpush1.msra.mxu0 0.0
  %2386 = vmatprep.subr.mxu0 0.0
  %2387 = vmatpush1.msra.mxu0 0.0
  %2388 = vmatprep.subr.mxu0 0.0
  %2389 = vmatpush1.msra.mxu0 0.0
  %2390 = vmatprep.subr.mxu0 0.0
  %2391 = vmatpush1.msra.mxu0 0.0
  %2392 = vmatprep.subr.mxu0 0.0
  %2393 = vmatpush1.msra.mxu0 0.0
  %2394 = vmatprep.subr.mxu0 0.0
  %2395 = vmatpush1.msra.mxu0 0.0
  %2396 = vmatprep.subr.mxu0 0.0
  %2397 = vmatpush1.msra.mxu0 0.0
  %2398 = vmatprep.subr.mxu0 0.0
  %2399 = vmatpush1.msra.mxu0 0.0
  %2400 = vmatprep.subr.mxu0 0.0
  %2401 = vmatpush1.msra.mxu0 0.0
  %2402 = vmatprep.subr.mxu0 0.0
  %2403 = vmatpush1.msra.mxu0 0.0
  %2404 = vmatprep.subr.mxu0 0.0
  %2405 = vmatpush1.msra.mxu0 0.0
  %2406 = vmatprep.subr.mxu0 0.0
  %2407 = vmatpush1.msra.mxu0 0.0
  %2408 = vmatprep.subr.mxu0 0.0
  %2409 = vmatpush1.msra.mxu0 0.0
  %2410 = vmatprep.subr.mxu0 0.0
  %2411 = vmatpush1.msra.mxu0 0.0
  %2412 = vmatprep.subr.mxu0 0.0
  %2413 = vmatpush1.msra.mxu0 0.0
  %2414 = vmatprep.subr.mxu0 0.0
  %2415 = vmatpush1.msra.mxu0 0.0
  %2416 = vmatprep.subr.mxu0 0.0
  %2417 = vmatpush1.msra.mxu0 0.0
  %2418 = vmatprep.subr.mxu0 0.0
  %2419 = vmatpush1.msra.mxu0 0.0
  %2420 = vmatprep.subr.mxu0 0.0
  %2421 = vmatpush1.msra.mxu0 0.0
  %2422 = vmatprep.subr.mxu0 0.0
  %2423 = vmatpush1.msra.mxu0 0.0
  %2424 = vmatprep.mubr.f32.mxu0 0.0
  %2425 = vmatmul.mubr.f32.gmra.mrb[0].mxu0 %v2355
  %v2426 = vpop.f32.mrb[0].mxu0
  %v2427 = vadd.f32 0.0, %v2426
  %v2428 = vpop.f32.mrb[0].mxu0
  %2429 = vmatprep.mubr.f32.mxu0 0.0
  %2430 = vmatmul.mubr.f32.gmra.mrb[0].mxu0 %v2358
  %v2431 = vpop.f32.mrb[0].mxu0
  %v2432 = vadd.f32 0.0, %v2431
  %v2433 = vpop.f32.mrb[0].mxu0
  %2434 = vdwg.mxu0
  %2436 = vset.pattern.permute.xlu0 0
  %2437 = vperm.xlu0 %2436, %v2427
  %v2438 = vpop.permute.xlu0 %2437
  %2441 = vset.pattern.permute.xlu0 0
  %2442 = vperm.xlu0 %2441, %v2432
  %v2443 = vpop.permute.xlu0 %2442
  %v2445 = vsel %vm347, %v2438, 0.0
  %v2446 = vsel %vm348, %v2443, 0.0
  %2449 = vrot.lane.b32.xlu0 %v220, 96
  %v2450 = vpop.permute.xlu0 %2449
  %2451 = vrot.lane.b32.xlu0 %v225, 96
  %v2452 = vpop.permute.xlu0 %2451
  %v2453 = vsel %vm265, %v2450, 0
  %v2455 = vsel %vm265, %v2452, 0
  %2457 = vmatprep.subr.mxu0 0.0
  %2458 = vmatpush1.xpose.msra.mxu0 %v2453
  %2459 = vmatprep.subr.mxu0 0.0
  %2460 = vmatpush1.xpose.msra.mxu0 %v2455
  %2461 = vmatprep.subr.mxu0 0.0
  %2462 = vmatpush1.xpose.msra.mxu0 0.0
  %2463 = vmatprep.subr.mxu0 0.0
  %2464 = vmatpush1.xpose.msra.mxu0 0.0
  %2465 = vmatprep.subr.mxu0 0.0
  %2466 = vmatpush1.xpose.msra.mxu0 0.0
  %2467 = vmatprep.subr.mxu0 0.0
  %2468 = vmatpush1.xpose.msra.mxu0 0.0
  %2469 = vmatprep.subr.mxu0 0.0
  %2470 = vmatpush1.xpose.msra.mxu0 0.0
  %2471 = vmatprep.subr.mxu0 0.0
  %2472 = vmatpush1.xpose.msra.mxu0 0.0
  %2473 = vmatprep.subr.mxu0 0.0
  %2474 = vmatpush1.xpose.msra.mxu0 0.0
  %2475 = vmatprep.subr.mxu0 0.0
  %2476 = vmatpush1.xpose.msra.mxu0 0.0
  %2477 = vmatprep.subr.mxu0 0.0
  %2478 = vmatpush1.xpose.msra.mxu0 0.0
  %2479 = vmatprep.subr.mxu0 0.0
  %2480 = vmatpush1.xpose.msra.mxu0 0.0
  %2481 = vmatprep.subr.mxu0 0.0
  %2482 = vmatpush1.xpose.msra.mxu0 0.0
  %2483 = vmatprep.subr.mxu0 0.0
  %2484 = vmatpush1.xpose.msra.mxu0 0.0
  %2485 = vmatprep.subr.mxu0 0.0
  %2486 = vmatpush1.xpose.msra.mxu0 0.0
  %2487 = vmatprep.subr.mxu0 0.0
  %2488 = vmatpush1.xpose.msra.mxu0 0.0
  %2489 = vmatprep.subr.mxu0 0.0
  %2490 = vmatpush1.xpose.msra.mxu0 0.0
  %2491 = vmatprep.subr.mxu0 0.0
  %2492 = vmatpush1.xpose.msra.mxu0 0.0
  %2493 = vmatprep.subr.mxu0 0.0
  %2494 = vmatpush1.xpose.msra.mxu0 0.0
  %2495 = vmatprep.subr.mxu0 0.0
  %2496 = vmatpush1.xpose.msra.mxu0 0.0
  %2497 = vmatprep.subr.mxu0 0.0
  %2498 = vmatpush1.xpose.msra.mxu0 0.0
  %2499 = vmatprep.subr.mxu0 0.0
  %2500 = vmatpush1.xpose.msra.mxu0 0.0
  %2501 = vmatprep.subr.mxu0 0.0
  %2502 = vmatpush1.xpose.msra.mxu0 0.0
  %2503 = vmatprep.subr.mxu0 0.0
  %2504 = vmatpush1.xpose.msra.mxu0 0.0
  %2505 = vmatprep.subr.mxu0 0.0
  %2506 = vmatpush1.xpose.msra.mxu0 0.0
  %2507 = vmatprep.subr.mxu0 0.0
  %2508 = vmatpush1.xpose.msra.mxu0 0.0
  %2509 = vmatprep.subr.mxu0 0.0
  %2510 = vmatpush1.xpose.msra.mxu0 0.0
  %2511 = vmatprep.subr.mxu0 0.0
  %2512 = vmatpush1.xpose.msra.mxu0 0.0
  %2513 = vmatprep.subr.mxu0 0.0
  %2514 = vmatpush1.xpose.msra.mxu0 0.0
  %2515 = vmatprep.subr.mxu0 0.0
  %2516 = vmatpush1.xpose.msra.mxu0 0.0
  %2517 = vmatprep.subr.mxu0 0.0
  %2518 = vmatpush1.xpose.msra.mxu0 0.0
  %2519 = vmatprep.subr.mxu0 0.0
  %2520 = vmatpush1.xpose.msra.mxu0 0.0
  %2521 = vmatprep.mubr.f32.mxu0 0.0
  %2522 = vmatmul.mubr.f32.gmra.mrb[0].mxu0 %v2355
  %v2523 = vpop.f32.mrb[0].mxu0
  %v2524 = vadd.f32 %v2445, %v2523
  %v2525 = vpop.f32.mrb[0].mxu0
  %2526 = vmatprep.mubr.f32.mxu0 0.0
  %2527 = vmatmul.mubr.f32.gmra.mrb[0].mxu0 %v2358
  %v2528 = vpop.f32.mrb[0].mxu0
  %v2529 = vadd.f32 %v2446, %v2528
  %v2530 = vpop.f32.mrb[0].mxu0
  %2531 = vdwg.mxu0
  %2532 = vset.pattern.permute.xlu0 1
  %2533 = vperm.xlu0 %2532, %v2427
  %v2534 = vpop.permute.xlu0 %2533
  %2536 = vset.pattern.permute.xlu0 1
  %2537 = vperm.xlu0 %2536, %v2432
  %v2538 = vpop.permute.xlu0 %2537
  %v2540 = vsel %vm446, %v2534, 0.0
  %v2541 = vsel %vm447, %v2538, 0.0
  %v2542 = vadd.f32 %v2524, %v2540
  %v2543 = vadd.f32 %v2529, %v2541
  %2544 = vset.pattern.permute.xlu0 2
  %2545 = vperm.xlu0 %2544, %v2427
  %v2546 = vpop.permute.xlu0 %2545
  %2548 = vset.pattern.permute.xlu0 2
  %2549 = vperm.xlu0 %2548, %v2432
  %v2550 = vpop.permute.xlu0 %2549
  %v2552 = vsel %vm460, %v2546, 0.0
  %v2553 = vsel %vm461, %v2550, 0.0
  %v2554 = vadd.f32 %v2542, %v2552
  %v2555 = vadd.f32 %v2543, %v2553
  %2556 = vset.pattern.permute.xlu0 3
  %2557 = vperm.xlu0 %2556, %v2427
  %v2558 = vpop.permute.xlu0 %2557
  %2560 = vset.pattern.permute.xlu0 3
  %2561 = vperm.xlu0 %2560, %v2432
  %v2562 = vpop.permute.xlu0 %2561
  %v2564 = vsel %vm474, %v2558, 0.0
  %v2565 = vsel %vm475, %v2562, 0.0
  %v2566 = vadd.f32 %v2554, %v2564
  %v2567 = vadd.f32 %v2555, %v2565
  %2568 = vset.pattern.permute.xlu0 4
  %2569 = vperm.xlu0 %2568, %v2427
  %v2570 = vpop.permute.xlu0 %2569
  %2572 = vset.pattern.permute.xlu0 4
  %2573 = vperm.xlu0 %2572, %v2432
  %v2574 = vpop.permute.xlu0 %2573
  %v2576 = vsel %vm488, %v2570, 0.0
  %v2577 = vsel %vm489, %v2574, 0.0
  %v2578 = vadd.f32 %v2566, %v2576
  %v2579 = vadd.f32 %v2567, %v2577
  %2580 = vset.pattern.permute.xlu0 5
  %2581 = vperm.xlu0 %2580, %v2427
  %v2582 = vpop.permute.xlu0 %2581
  %2584 = vset.pattern.permute.xlu0 5
  %2585 = vperm.xlu0 %2584, %v2432
  %v2586 = vpop.permute.xlu0 %2585
  %v2588 = vsel %vm502, %v2582, 0.0
  %v2589 = vsel %vm503, %v2586, 0.0
  %v2590 = vadd.f32 %v2578, %v2588
  %v2591 = vadd.f32 %v2579, %v2589
  %2592 = vset.pattern.permute.xlu0 6
  %2593 = vperm.xlu0 %2592, %v2427
  %v2594 = vpop.permute.xlu0 %2593
  %2596 = vset.pattern.permute.xlu0 6
  %2597 = vperm.xlu0 %2596, %v2432
  %v2598 = vpop.permute.xlu0 %2597
  %v2600 = vsel %vm516, %v2594, 0.0
  %v2601 = vsel %vm517, %v2598, 0.0
  %v2602 = vadd.f32 %v2590, %v2600
  %v2603 = vadd.f32 %v2591, %v2601
  %2604 = vset.pattern.permute.xlu0 7
  %2605 = vperm.xlu0 %2604, %v2427
  %v2606 = vpop.permute.xlu0 %2605
  %2608 = vset.pattern.permute.xlu0 7
  %2609 = vperm.xlu0 %2608, %v2432
  %v2610 = vpop.permute.xlu0 %2609
  %v2612 = vsel %vm530, %v2606, 0.0
  %v2613 = vsel %vm531, %v2610, 0.0
  %v2614 = vadd.f32 %v2602, %v2612
  %v2615 = vadd.f32 %v2603, %v2613
  %2616 = vset.pattern.permute.xlu0 8
  %2617 = vperm.xlu0 %2616, %v2427
  %v2618 = vpop.permute.xlu0 %2617
  %2620 = vset.pattern.permute.xlu0 8
  %2621 = vperm.xlu0 %2620, %v2432
  %v2622 = vpop.permute.xlu0 %2621
  %v2624 = vsel %vm544, %v2618, 0.0
  %v2625 = vsel %vm545, %v2622, 0.0
  %v2626 = vadd.f32 %v2614, %v2624
  %v2627 = vadd.f32 %v2615, %v2625
  %v2628 = vadd.f32 %v2626, %v2352
  %v2629 = vadd.f32 %v2627, %v2353
  %v2630 = vsel %vm560, %v2628, -inf
  %2631 = vmax.xlane.f32.xlu0 %v2630
  %v2632 = vpop.xlane.xlu0 %2631
  %v2633 = vsel %vm560, %v2629, -inf
  %2634 = vmax.xlane.f32.xlu0 %v2633
  %v2635 = vpop.xlane.xlu0 %2634
  %v2636 = vsub.f32 %v2628, %v2632
  %v2637 = vsub.f32 %v2629, %v2635
  %v2638 = vmul.f32 %v2636, 1.442695
  %v2639 = vpow.pop %v2638
  %v2640 = vmul.f32 %v2637, 1.442695
  %v2641 = vpow.pop %v2640
  %v2642 = vsel %vm560, %v2639, 0.0
  %2643 = vadd.xlane.f32.xlu0 %v2642
  %v2644 = vpop.xlane.xlu0 %2643
  %v2645 = vsel %vm560, %v2641, 0.0
  %2646 = vadd.xlane.f32.xlu0 %v2645
  %v2647 = vpop.xlane.xlu0 %2646
  %v2648 = vrcp.pop %v2644
  %v2649 = vrcp.pop %v2647
  %v2650 = vmul.f32 %v2639, %v2648
  %v2651 = vmul.f32 %v2641, %v2649
  %v2652 = vsel %vm347, %v2650, 0.0
  %v2653 = vsel %vm348, %v2651, 0.0
  %v2654 = vsel %vm560, %v2652, 0.0
  %2655 = vadd.xlane.f32.xlu0 %v2654
  %v2656 = vpop.xlane.xlu0 %2655
  %v2657 = vsel %vm560, %v2653, 0.0
  %2658 = vadd.xlane.f32.xlu0 %v2657
  %v2659 = vpop.xlane.xlu0 %2658
  %v2660 = vmul.f32 %v2656, %v594
  %v2661 = vmul.f32 %v2659, %v594
  %v2662 = vadd.f32 %v2660, 0.0
  %v2663 = vadd.f32 %v2661, 0.0
  %v2664 = vsel %vm446, %v2650, 0.0
  %v2665 = vsel %vm447, %v2651, 0.0
  %v2666 = vsel %vm560, %v2664, 0.0
  %2667 = vadd.xlane.f32.xlu0 %v2666
  %v2668 = vpop.xlane.xlu0 %2667
  %v2669 = vsel %vm560, %v2665, 0.0
  %2670 = vadd.xlane.f32.xlu0 %v2669
  %v2671 = vpop.xlane.xlu0 %2670
  %v2672 = vmul.f32 %v2668, %v610
  %v2673 = vmul.f32 %v2671, %v610
  %v2674 = vadd.f32 %v2662, %v2672
  %v2675 = vadd.f32 %v2663, %v2673
  %v2676 = vsel %vm460, %v2650, 0.0
  %v2677 = vsel %vm461, %v2651, 0.0
  %v2678 = vsel %vm560, %v2676, 0.0
  %2679 = vadd.xlane.f32.xlu0 %v2678
  %v2680 = vpop.xlane.xlu0 %2679
  %v2681 = vsel %vm560, %v2677, 0.0
  %2682 = vadd.xlane.f32.xlu0 %v2681
  %v2683 = vpop.xlane.xlu0 %2682
  %v2684 = vmul.f32 %v2680, %v626
  %v2685 = vmul.f32 %v2683, %v626
  %v2686 = vadd.f32 %v2674, %v2684
  %v2687 = vadd.f32 %v2675, %v2685
  %v2688 = vsel %vm474, %v2650, 0.0
  %v2689 = vsel %vm475, %v2651, 0.0
  %v2690 = vsel %vm560, %v2688, 0.0
  %2691 = vadd.xlane.f32.xlu0 %v2690
  %v2692 = vpop.xlane.xlu0 %2691
  %v2693 = vsel %vm560, %v2689, 0.0
  %2694 = vadd.xlane.f32.xlu0 %v2693
  %v2695 = vpop.xlane.xlu0 %2694
  %v2696 = vmul.f32 %v2692, %v642
  %v2697 = vmul.f32 %v2695, %v642
  %v2698 = vadd.f32 %v2686, %v2696
  %v2699 = vadd.f32 %v2687, %v2697
  %v2700 = vsel %vm488, %v2650, 0.0
  %v2701 = vsel %vm489, %v2651, 0.0
  %v2702 = vsel %vm560, %v2700, 0.0
  %2703 = vadd.xlane.f32.xlu0 %v2702
  %v2704 = vpop.xlane.xlu0 %2703
  %v2705 = vsel %vm560, %v2701, 0.0
  %2706 = vadd.xlane.f32.xlu0 %v2705
  %v2707 = vpop.xlane.xlu0 %2706
  %v2708 = vmul.f32 %v2704, %v658
  %v2709 = vmul.f32 %v2707, %v658
  %v2710 = vadd.f32 %v2698, %v2708
  %v2711 = vadd.f32 %v2699, %v2709
  %v2712 = vsel %vm502, %v2650, 0.0
  %v2713 = vsel %vm503, %v2651, 0.0
  %v2714 = vsel %vm560, %v2712, 0.0
  %2715 = vadd.xlane.f32.xlu0 %v2714
  %v2716 = vpop.xlane.xlu0 %2715
  %v2717 = vsel %vm560, %v2713, 0.0
  %2718 = vadd.xlane.f32.xlu0 %v2717
  %v2719 = vpop.xlane.xlu0 %2718
  %v2720 = vmul.f32 %v2716, %v674
  %v2721 = vmul.f32 %v2719, %v674
  %v2722 = vadd.f32 %v2710, %v2720
  %v2723 = vadd.f32 %v2711, %v2721
  %v2724 = vsel %vm516, %v2650, 0.0
  %v2725 = vsel %vm517, %v2651, 0.0
  %v2726 = vsel %vm560, %v2724, 0.0
  %2727 = vadd.xlane.f32.xlu0 %v2726
  %v2728 = vpop.xlane.xlu0 %2727
  %v2729 = vsel %vm560, %v2725, 0.0
  %2730 = vadd.xlane.f32.xlu0 %v2729
  %v2731 = vpop.xlane.xlu0 %2730
  %v2732 = vmul.f32 %v2728, %v690
  %v2733 = vmul.f32 %v2731, %v690
  %v2734 = vadd.f32 %v2722, %v2732
  %v2735 = vadd.f32 %v2723, %v2733
  %v2736 = vsel %vm530, %v2650, 0.0
  %v2737 = vsel %vm531, %v2651, 0.0
  %v2738 = vsel %vm560, %v2736, 0.0
  %2739 = vadd.xlane.f32.xlu0 %v2738
  %v2740 = vpop.xlane.xlu0 %2739
  %v2741 = vsel %vm560, %v2737, 0.0
  %2742 = vadd.xlane.f32.xlu0 %v2741
  %v2743 = vpop.xlane.xlu0 %2742
  %v2744 = vmul.f32 %v2740, %v706
  %v2745 = vmul.f32 %v2743, %v706
  %v2746 = vadd.f32 %v2734, %v2744
  %v2747 = vadd.f32 %v2735, %v2745
  %v2748 = vsel %vm544, %v2650, 0.0
  %v2749 = vsel %vm545, %v2651, 0.0
  %v2750 = vsel %vm560, %v2748, 0.0
  %2751 = vadd.xlane.f32.xlu0 %v2750
  %v2752 = vpop.xlane.xlu0 %2751
  %v2753 = vsel %vm560, %v2749, 0.0
  %2754 = vadd.xlane.f32.xlu0 %v2753
  %v2755 = vpop.xlane.xlu0 %2754
  %v2756 = vmul.f32 %v2752, %v722
  %v2757 = vmul.f32 %v2755, %v722
  %v2758 = vadd.f32 %v2746, %v2756
  %v2759 = vadd.f32 %v2747, %v2757
  %2760 = vrot.lane.b32.xlu0 %v220, 64
  %v2761 = vpop.permute.xlu0 %2760
  %2762 = vrot.lane.b32.xlu0 %v225, 64
  %v2763 = vpop.permute.xlu0 %2762
  %v2767 = vsel %vm560, %v2650, 0
  %v2770 = vsel %vm560, %v2651, 0
  %2772 = vmatprep.subr.mxu0 0.0
  %2773 = vmatpush1.msra.mxu0 %v2761
  %2774 = vmatprep.subr.mxu0 0.0
  %2775 = vmatpush1.msra.mxu0 %v2763
  %2776 = vmatprep.subr.mxu0 0.0
  %2777 = vmatpush1.msra.mxu0 0.0
  %2778 = vmatprep.subr.mxu0 0.0
  %2779 = vmatpush1.msra.mxu0 0.0
  %2780 = vmatprep.subr.mxu0 0.0
  %2781 = vmatpush1.msra.mxu0 0.0
  %2782 = vmatprep.subr.mxu0 0.0
  %2783 = vmatpush1.msra.mxu0 0.0
  %2784 = vmatprep.subr.mxu0 0.0
  %2785 = vmatpush1.msra.mxu0 0.0
  %2786 = vmatprep.subr.mxu0 0.0
  %2787 = vmatpush1.msra.mxu0 0.0
  %2788 = vmatprep.subr.mxu0 0.0
  %2789 = vmatpush1.msra.mxu0 0.0
  %2790 = vmatprep.subr.mxu0 0.0
  %2791 = vmatpush1.msra.mxu0 0.0
  %2792 = vmatprep.subr.mxu0 0.0
  %2793 = vmatpush1.msra.mxu0 0.0
  %2794 = vmatprep.subr.mxu0 0.0
  %2795 = vmatpush1.msra.mxu0 0.0
  %2796 = vmatprep.subr.mxu0 0.0
  %2797 = vmatpush1.msra.mxu0 0.0
  %2798 = vmatprep.subr.mxu0 0.0
  %2799 = vmatpush1.msra.mxu0 0.0
  %2800 = vmatprep.subr.mxu0 0.0
  %2801 = vmatpush1.msra.mxu0 0.0
  %2802 = vmatprep.subr.mxu0 0.0
  %2803 = vmatpush1.msra.mxu0 0.0
  %2804 = vmatprep.subr.mxu0 0.0
  %2805 = vmatpush1.msra.mxu0 0.0
  %2806 = vmatprep.subr.mxu0 0.0
  %2807 = vmatpush1.msra.mxu0 0.0
  %2808 = vmatprep.subr.mxu0 0.0
  %2809 = vmatpush1.msra.mxu0 0.0
  %2810 = vmatprep.subr.mxu0 0.0
  %2811 = vmatpush1.msra.mxu0 0.0
  %2812 = vmatprep.subr.mxu0 0.0
  %2813 = vmatpush1.msra.mxu0 0.0
  %2814 = vmatprep.subr.mxu0 0.0
  %2815 = vmatpush1.msra.mxu0 0.0
  %2816 = vmatprep.subr.mxu0 0.0
  %2817 = vmatpush1.msra.mxu0 0.0
  %2818 = vmatprep.subr.mxu0 0.0
  %2819 = vmatpush1.msra.mxu0 0.0
  %2820 = vmatprep.subr.mxu0 0.0
  %2821 = vmatpush1.msra.mxu0 0.0
  %2822 = vmatprep.subr.mxu0 0.0
  %2823 = vmatpush1.msra.mxu0 0.0
  %2824 = vmatprep.subr.mxu0 0.0
  %2825 = vmatpush1.msra.mxu0 0.0
  %2826 = vmatprep.subr.mxu0 0.0
  %2827 = vmatpush1.msra.mxu0 0.0
  %2828 = vmatprep.subr.mxu0 0.0
  %2829 = vmatpush1.msra.mxu0 0.0
  %2830 = vmatprep.subr.mxu0 0.0
  %2831 = vmatpush1.msra.mxu0 0.0
  %2832 = vmatprep.subr.mxu0 0.0
  %2833 = vmatpush1.msra.mxu0 0.0
  %2834 = vmatprep.subr.mxu0 0.0
  %2835 = vmatpush1.msra.mxu0 0.0
  %2836 = vmatprep.mubr.f32.mxu0 0.0
  %2837 = vmatmul.mubr.f32.gmra.mrb[0].mxu0 %v2767
  %v2838 = vpop.f32.mrb[0].mxu0
  %v2839 = vadd.f32 %v2758, %v2838
  %v2840 = vpop.f32.mrb[0].mxu0
  %2841 = vmatprep.mubr.f32.mxu0 0.0
  %2842 = vmatmul.mubr.f32.gmra.mrb[0].mxu0 %v2770
  %v2843 = vpop.f32.mrb[0].mxu0
  %v2844 = vadd.f32 %v2759, %v2843
  %v2845 = vpop.f32.mrb[0].mxu0
  %2846 = vdwg.mxu0
  %2847 = vst.msk [vmem:[#allocation2 + $0x10] sm:$0xff] %vm265, %v2839
  %2848 = vst.msk [vmem:[#allocation2 + $0x18] sm:$0xff] %vm265, %v2844
  %2849 = vrot.lane.b32.xlu0 %v230, 120
  %v2850 = vpop.permute.xlu0 %2849
  %2851 = vrot.lane.b32.xlu0 %v231, 120
  %v2852 = vpop.permute.xlu0 %2851
  %v2853 = vsel %vm265, %v2850, 0
  %v2855 = vsel %vm265, %v2852, 0
  %2857 = vmatprep.subr.mxu0 0.0
  %2858 = vmatpush1.msra.mxu0 %v232
  %2859 = vmatprep.subr.mxu0 0.0
  %2860 = vmatpush1.msra.mxu0 0.0
  %2861 = vmatprep.subr.mxu0 0.0
  %2862 = vmatpush1.msra.mxu0 0.0
  %2863 = vmatprep.subr.mxu0 0.0
  %2864 = vmatpush1.msra.mxu0 0.0
  %2865 = vmatprep.subr.mxu0 0.0
  %2866 = vmatpush1.msra.mxu0 0.0
  %2867 = vmatprep.subr.mxu0 0.0
  %2868 = vmatpush1.msra.mxu0 0.0
  %2869 = vmatprep.subr.mxu0 0.0
  %2870 = vmatpush1.msra.mxu0 0.0
  %2871 = vmatprep.subr.mxu0 0.0
  %2872 = vmatpush1.msra.mxu0 0.0
  %2873 = vmatprep.subr.mxu0 0.0
  %2874 = vmatpush1.msra.mxu0 0.0
  %2875 = vmatprep.subr.mxu0 0.0
  %2876 = vmatpush1.msra.mxu0 0.0
  %2877 = vmatprep.subr.mxu0 0.0
  %2878 = vmatpush1.msra.mxu0 0.0
  %2879 = vmatprep.subr.mxu0 0.0
  %2880 = vmatpush1.msra.mxu0 0.0
  %2881 = vmatprep.subr.mxu0 0.0
  %2882 = vmatpush1.msra.mxu0 0.0
  %2883 = vmatprep.subr.mxu0 0.0
  %2884 = vmatpush1.msra.mxu0 0.0
  %2885 = vmatprep.subr.mxu0 0.0
  %2886 = vmatpush1.msra.mxu0 0.0
  %2887 = vmatprep.subr.mxu0 0.0
  %2888 = vmatpush1.msra.mxu0 0.0
  %2889 = vmatprep.subr.mxu0 0.0
  %2890 = vmatpush1.msra.mxu0 0.0
  %2891 = vmatprep.subr.mxu0 0.0
  %2892 = vmatpush1.msra.mxu0 0.0
  %2893 = vmatprep.subr.mxu0 0.0
  %2894 = vmatpush1.msra.mxu0 0.0
  %2895 = vmatprep.subr.mxu0 0.0
  %2896 = vmatpush1.msra.mxu0 0.0
  %2897 = vmatprep.subr.mxu0 0.0
  %2898 = vmatpush1.msra.mxu0 0.0
  %2899 = vmatprep.subr.mxu0 0.0
  %2900 = vmatpush1.msra.mxu0 0.0
  %2901 = vmatprep.subr.mxu0 0.0
  %2902 = vmatpush1.msra.mxu0 0.0
  %2903 = vmatprep.subr.mxu0 0.0
  %2904 = vmatpush1.msra.mxu0 0.0
  %2905 = vmatprep.subr.mxu0 0.0
  %2906 = vmatpush1.msra.mxu0 0.0
  %2907 = vmatprep.subr.mxu0 0.0
  %2908 = vmatpush1.msra.mxu0 0.0
  %2909 = vmatprep.subr.mxu0 0.0
  %2910 = vmatpush1.msra.mxu0 0.0
  %2911 = vmatprep.subr.mxu0 0.0
  %2912 = vmatpush1.msra.mxu0 0.0
  %2913 = vmatprep.subr.mxu0 0.0
  %2914 = vmatpush1.msra.mxu0 0.0
  %2915 = vmatprep.subr.mxu0 0.0
  %2916 = vmatpush1.msra.mxu0 0.0
  %2917 = vmatprep.subr.mxu0 0.0
  %2918 = vmatpush1.msra.mxu0 0.0
  %2919 = vmatprep.subr.mxu0 0.0
  %2920 = vmatpush1.msra.mxu0 0.0
  %2921 = vmatprep.mubr.f32.mxu0 0.0
  %2922 = vmatmul.mubr.f32.gmra.mrb[0].mxu0 %v2853
  %v2923 = vpop.f32.mrb[0].mxu0
  %v2924 = vadd.f32 0.0, %v2923
  %v2925 = vpop.f32.mrb[0].mxu0
  %2926 = vmatprep.mubr.f32.mxu0 0.0
  %2927 = vmatmul.mubr.f32.gmra.mrb[0].mxu0 %v2855
  %v2928 = vpop.f32.mrb[0].mxu0
  %v2929 = vadd.f32 0.0, %v2928
  %v2930 = vpop.f32.mrb[0].mxu0
  %2931 = vdwg.mxu0
  %2933 = vset.pattern.permute.xlu0 0
  %2934 = vperm.xlu0 %2933, %v2924
  %v2935 = vpop.permute.xlu0 %2934
  %2938 = vset.pattern.permute.xlu0 0
  %2939 = vperm.xlu0 %2938, %v2929
  %v2940 = vpop.permute.xlu0 %2939
  %v2942 = vsel %vm347, %v2935, 0.0
  %v2943 = vsel %vm348, %v2940, 0.0
  %2944 = vrot.lane.b32.xlu0 %v220, 88
  %v2945 = vpop.permute.xlu0 %2944
  %2946 = vrot.lane.b32.xlu0 %v225, 88
  %v2947 = vpop.permute.xlu0 %2946
  %v2948 = vsel %vm265, %v2945, 0
  %v2950 = vsel %vm265, %v2947, 0
  %2952 = vmatprep.subr.mxu0 0.0
  %2953 = vmatpush1.xpose.msra.mxu0 %v2948
  %2954 = vmatprep.subr.mxu0 0.0
  %2955 = vmatpush1.xpose.msra.mxu0 %v2950
  %2956 = vmatprep.subr.mxu0 0.0
  %2957 = vmatpush1.xpose.msra.mxu0 0.0
  %2958 = vmatprep.subr.mxu0 0.0
  %2959 = vmatpush1.xpose.msra.mxu0 0.0
  %2960 = vmatprep.subr.mxu0 0.0
  %2961 = vmatpush1.xpose.msra.mxu0 0.0
  %2962 = vmatprep.subr.mxu0 0.0
  %2963 = vmatpush1.xpose.msra.mxu0 0.0
  %2964 = vmatprep.subr.mxu0 0.0
  %2965 = vmatpush1.xpose.msra.mxu0 0.0
  %2966 = vmatprep.subr.mxu0 0.0
  %2967 = vmatpush1.xpose.msra.mxu0 0.0
  %2968 = vmatprep.subr.mxu0 0.0
  %2969 = vmatpush1.xpose.msra.mxu0 0.0
  %2970 = vmatprep.subr.mxu0 0.0
  %2971 = vmatpush1.xpose.msra.mxu0 0.0
  %2972 = vmatprep.subr.mxu0 0.0
  %2973 = vmatpush1.xpose.msra.mxu0 0.0
  %2974 = vmatprep.subr.mxu0 0.0
  %2975 = vmatpush1.xpose.msra.mxu0 0.0
  %2976 = vmatprep.subr.mxu0 0.0
  %2977 = vmatpush1.xpose.msra.mxu0 0.0
  %2978 = vmatprep.subr.mxu0 0.0
  %2979 = vmatpush1.xpose.msra.mxu0 0.0
  %2980 = vmatprep.subr.mxu0 0.0
  %2981 = vmatpush1.xpose.msra.mxu0 0.0
  %2982 = vmatprep.subr.mxu0 0.0
  %2983 = vmatpush1.xpose.msra.mxu0 0.0
  %2984 = vmatprep.subr.mxu0 0.0
  %2985 = vmatpush1.xpose.msra.mxu0 0.0
  %2986 = vmatprep.subr.mxu0 0.0
  %2987 = vmatpush1.xpose.msra.mxu0 0.0
  %2988 = vmatprep.subr.mxu0 0.0
  %2989 = vmatpush1.xpose.msra.mxu0 0.0
  %2990 = vmatprep.subr.mxu0 0.0
  %2991 = vmatpush1.xpose.msra.mxu0 0.0
  %2992 = vmatprep.subr.mxu0 0.0
  %2993 = vmatpush1.xpose.msra.mxu0 0.0
  %2994 = vmatprep.subr.mxu0 0.0
  %2995 = vmatpush1.xpose.msra.mxu0 0.0
  %2996 = vmatprep.subr.mxu0 0.0
  %2997 = vmatpush1.xpose.msra.mxu0 0.0
  %2998 = vmatprep.subr.mxu0 0.0
  %2999 = vmatpush1.xpose.msra.mxu0 0.0
  %3000 = vmatprep.subr.mxu0 0.0
  %3001 = vmatpush1.xpose.msra.mxu0 0.0
  %3002 = vmatprep.subr.mxu0 0.0
  %3003 = vmatpush1.xpose.msra.mxu0 0.0
  %3004 = vmatprep.subr.mxu0 0.0
  %3005 = vmatpush1.xpose.msra.mxu0 0.0
  %3006 = vmatprep.subr.mxu0 0.0
  %3007 = vmatpush1.xpose.msra.mxu0 0.0
  %3008 = vmatprep.subr.mxu0 0.0
  %3009 = vmatpush1.xpose.msra.mxu0 0.0
  %3010 = vmatprep.subr.mxu0 0.0
  %3011 = vmatpush1.xpose.msra.mxu0 0.0
  %3012 = vmatprep.subr.mxu0 0.0
  %3013 = vmatpush1.xpose.msra.mxu0 0.0
  %3014 = vmatprep.subr.mxu0 0.0
  %3015 = vmatpush1.xpose.msra.mxu0 0.0
  %3016 = vmatprep.mubr.f32.mxu0 0.0
  %3017 = vmatmul.mubr.f32.gmra.mrb[0].mxu0 %v2853
  %v3018 = vpop.f32.mrb[0].mxu0
  %v3019 = vadd.f32 %v2942, %v3018
  %v3020 = vpop.f32.mrb[0].mxu0
  %3021 = vmatprep.mubr.f32.mxu0 0.0
  %3022 = vmatmul.mubr.f32.gmra.mrb[0].mxu0 %v2855
  %v3023 = vpop.f32.mrb[0].mxu0
  %v3024 = vadd.f32 %v2943, %v3023
  %v3025 = vpop.f32.mrb[0].mxu0
  %3026 = vdwg.mxu0
  %3027 = vset.pattern.permute.xlu0 1
  %3028 = vperm.xlu0 %3027, %v2924
  %v3029 = vpop.permute.xlu0 %3028
  %3031 = vset.pattern.permute.xlu0 1
  %3032 = vperm.xlu0 %3031, %v2929
  %v3033 = vpop.permute.xlu0 %3032
  %v3035 = vsel %vm446, %v3029, 0.0
  %v3036 = vsel %vm447, %v3033, 0.0
  %v3037 = vadd.f32 %v3019, %v3035
  %v3038 = vadd.f32 %v3024, %v3036
  %3039 = vset.pattern.permute.xlu0 2
  %3040 = vperm.xlu0 %3039, %v2924
  %v3041 = vpop.permute.xlu0 %3040
  %3043 = vset.pattern.permute.xlu0 2
  %3044 = vperm.xlu0 %3043, %v2929
  %v3045 = vpop.permute.xlu0 %3044
  %v3047 = vsel %vm460, %v3041, 0.0
  %v3048 = vsel %vm461, %v3045, 0.0
  %v3049 = vadd.f32 %v3037, %v3047
  %v3050 = vadd.f32 %v3038, %v3048
  %3051 = vset.pattern.permute.xlu0 3
  %3052 = vperm.xlu0 %3051, %v2924
  %v3053 = vpop.permute.xlu0 %3052
  %3055 = vset.pattern.permute.xlu0 3
  %3056 = vperm.xlu0 %3055, %v2929
  %v3057 = vpop.permute.xlu0 %3056
  %v3059 = vsel %vm474, %v3053, 0.0
  %v3060 = vsel %vm475, %v3057, 0.0
  %v3061 = vadd.f32 %v3049, %v3059
  %v3062 = vadd.f32 %v3050, %v3060
  %3063 = vset.pattern.permute.xlu0 4
  %3064 = vperm.xlu0 %3063, %v2924
  %v3065 = vpop.permute.xlu0 %3064
  %3067 = vset.pattern.permute.xlu0 4
  %3068 = vperm.xlu0 %3067, %v2929
  %v3069 = vpop.permute.xlu0 %3068
  %v3071 = vsel %vm488, %v3065, 0.0
  %v3072 = vsel %vm489, %v3069, 0.0
  %v3073 = vadd.f32 %v3061, %v3071
  %v3074 = vadd.f32 %v3062, %v3072
  %3075 = vset.pattern.permute.xlu0 5
  %3076 = vperm.xlu0 %3075, %v2924
  %v3077 = vpop.permute.xlu0 %3076
  %3079 = vset.pattern.permute.xlu0 5
  %3080 = vperm.xlu0 %3079, %v2929
  %v3081 = vpop.permute.xlu0 %3080
  %v3083 = vsel %vm502, %v3077, 0.0
  %v3084 = vsel %vm503, %v3081, 0.0
  %v3085 = vadd.f32 %v3073, %v3083
  %v3086 = vadd.f32 %v3074, %v3084
  %3087 = vset.pattern.permute.xlu0 6
  %3088 = vperm.xlu0 %3087, %v2924
  %v3089 = vpop.permute.xlu0 %3088
  %3091 = vset.pattern.permute.xlu0 6
  %3092 = vperm.xlu0 %3091, %v2929
  %v3093 = vpop.permute.xlu0 %3092
  %v3095 = vsel %vm516, %v3089, 0.0
  %v3096 = vsel %vm517, %v3093, 0.0
  %v3097 = vadd.f32 %v3085, %v3095
  %v3098 = vadd.f32 %v3086, %v3096
  %3099 = vset.pattern.permute.xlu0 7
  %3100 = vperm.xlu0 %3099, %v2924
  %v3101 = vpop.permute.xlu0 %3100
  %3103 = vset.pattern.permute.xlu0 7
  %3104 = vperm.xlu0 %3103, %v2929
  %v3105 = vpop.permute.xlu0 %3104
  %v3107 = vsel %vm530, %v3101, 0.0
  %v3108 = vsel %vm531, %v3105, 0.0
  %v3109 = vadd.f32 %v3097, %v3107
  %v3110 = vadd.f32 %v3098, %v3108
  %3111 = vset.pattern.permute.xlu0 8
  %3112 = vperm.xlu0 %3111, %v2924
  %v3113 = vpop.permute.xlu0 %3112
  %3115 = vset.pattern.permute.xlu0 8
  %3116 = vperm.xlu0 %3115, %v2929
  %v3117 = vpop.permute.xlu0 %3116
  %v3119 = vsel %vm544, %v3113, 0.0
  %v3120 = vsel %vm545, %v3117, 0.0
  %v3121 = vadd.f32 %v3109, %v3119
  %v3122 = vadd.f32 %v3110, %v3120
  %v3123 = vadd.f32 %v3121, %v2352
  %v3124 = vadd.f32 %v3122, %v2353
  %v3125 = vsel %vm560, %v3123, -inf
  %3126 = vmax.xlane.f32.xlu0 %v3125
  %v3127 = vpop.xlane.xlu0 %3126
  %v3128 = vsel %vm560, %v3124, -inf
  %3129 = vmax.xlane.f32.xlu0 %v3128
  %v3130 = vpop.xlane.xlu0 %3129
  %v3131 = vsub.f32 %v3123, %v3127
  %v3132 = vsub.f32 %v3124, %v3130
  %v3133 = vmul.f32 %v3131, 1.442695
  %v3134 = vpow.pop %v3133
  %v3135 = vmul.f32 %v3132, 1.442695
  %v3136 = vpow.pop %v3135
  %v3137 = vsel %vm560, %v3134, 0.0
  %3138 = vadd.xlane.f32.xlu0 %v3137
  %v3139 = vpop.xlane.xlu0 %3138
  %v3140 = vsel %vm560, %v3136, 0.0
  %3141 = vadd.xlane.f32.xlu0 %v3140
  %v3142 = vpop.xlane.xlu0 %3141
  %v3143 = vrcp.pop %v3139
  %v3144 = vrcp.pop %v3142
  %v3145 = vmul.f32 %v3134, %v3143
  %v3146 = vmul.f32 %v3136, %v3144
  %v3147 = vsel %vm347, %v3145, 0.0
  %v3148 = vsel %vm348, %v3146, 0.0
  %v3149 = vsel %vm560, %v3147, 0.0
  %3150 = vadd.xlane.f32.xlu0 %v3149
  %v3151 = vpop.xlane.xlu0 %3150
  %v3152 = vsel %vm560, %v3148, 0.0
  %3153 = vadd.xlane.f32.xlu0 %v3152
  %v3154 = vpop.xlane.xlu0 %3153
  %v3155 = vmul.f32 %v3151, %v594
  %v3156 = vmul.f32 %v3154, %v594
  %v3157 = vadd.f32 %v3155, 0.0
  %v3158 = vadd.f32 %v3156, 0.0
  %v3159 = vsel %vm446, %v3145, 0.0
  %v3160 = vsel %vm447, %v3146, 0.0
  %v3161 = vsel %vm560, %v3159, 0.0
  %3162 = vadd.xlane.f32.xlu0 %v3161
  %v3163 = vpop.xlane.xlu0 %3162
  %v3164 = vsel %vm560, %v3160, 0.0
  %3165 = vadd.xlane.f32.xlu0 %v3164
  %v3166 = vpop.xlane.xlu0 %3165
  %v3167 = vmul.f32 %v3163, %v610
  %v3168 = vmul.f32 %v3166, %v610
  %v3169 = vadd.f32 %v3157, %v3167
  %v3170 = vadd.f32 %v3158, %v3168
  %v3171 = vsel %vm460, %v3145, 0.0
  %v3172 = vsel %vm461, %v3146, 0.0
  %v3173 = vsel %vm560, %v3171, 0.0
  %3174 = vadd.xlane.f32.xlu0 %v3173
  %v3175 = vpop.xlane.xlu0 %3174
  %v3176 = vsel %vm560, %v3172, 0.0
  %3177 = vadd.xlane.f32.xlu0 %v3176
  %v3178 = vpop.xlane.xlu0 %3177
  %v3179 = vmul.f32 %v3175, %v626
  %v3180 = vmul.f32 %v3178, %v626
  %v3181 = vadd.f32 %v3169, %v3179
  %v3182 = vadd.f32 %v3170, %v3180
  %v3183 = vsel %vm474, %v3145, 0.0
  %v3184 = vsel %vm475, %v3146, 0.0
  %v3185 = vsel %vm560, %v3183, 0.0
  %3186 = vadd.xlane.f32.xlu0 %v3185
  %v3187 = vpop.xlane.xlu0 %3186
  %v3188 = vsel %vm560, %v3184, 0.0
  %3189 = vadd.xlane.f32.xlu0 %v3188
  %v3190 = vpop.xlane.xlu0 %3189
  %v3191 = vmul.f32 %v3187, %v642
  %v3192 = vmul.f32 %v3190, %v642
  %v3193 = vadd.f32 %v3181, %v3191
  %v3194 = vadd.f32 %v3182, %v3192
  %v3195 = vsel %vm488, %v3145, 0.0
  %v3196 = vsel %vm489, %v3146, 0.0
  %v3197 = vsel %vm560, %v3195, 0.0
  %3198 = vadd.xlane.f32.xlu0 %v3197
  %v3199 = vpop.xlane.xlu0 %3198
  %v3200 = vsel %vm560, %v3196, 0.0
  %3201 = vadd.xlane.f32.xlu0 %v3200
  %v3202 = vpop.xlane.xlu0 %3201
  %v3203 = vmul.f32 %v3199, %v658
  %v3204 = vmul.f32 %v3202, %v658
  %v3205 = vadd.f32 %v3193, %v3203
  %v3206 = vadd.f32 %v3194, %v3204
  %v3207 = vsel %vm502, %v3145, 0.0
  %v3208 = vsel %vm503, %v3146, 0.0
  %v3209 = vsel %vm560, %v3207, 0.0
  %3210 = vadd.xlane.f32.xlu0 %v3209
  %v3211 = vpop.xlane.xlu0 %3210
  %v3212 = vsel %vm560, %v3208, 0.0
  %3213 = vadd.xlane.f32.xlu0 %v3212
  %v3214 = vpop.xlane.xlu0 %3213
  %v3215 = vmul.f32 %v3211, %v674
  %v3216 = vmul.f32 %v3214, %v674
  %v3217 = vadd.f32 %v3205, %v3215
  %v3218 = vadd.f32 %v3206, %v3216
  %v3219 = vsel %vm516, %v3145, 0.0
  %v3220 = vsel %vm517, %v3146, 0.0
  %v3221 = vsel %vm560, %v3219, 0.0
  %3222 = vadd.xlane.f32.xlu0 %v3221
  %v3223 = vpop.xlane.xlu0 %3222
  %v3224 = vsel %vm560, %v3220, 0.0
  %3225 = vadd.xlane.f32.xlu0 %v3224
  %v3226 = vpop.xlane.xlu0 %3225
  %v3227 = vmul.f32 %v3223, %v690
  %v3228 = vmul.f32 %v3226, %v690
  %v3229 = vadd.f32 %v3217, %v3227
  %v3230 = vadd.f32 %v3218, %v3228
  %v3231 = vsel %vm530, %v3145, 0.0
  %v3232 = vsel %vm531, %v3146, 0.0
  %v3233 = vsel %vm560, %v3231, 0.0
  %3234 = vadd.xlane.f32.xlu0 %v3233
  %v3235 = vpop.xlane.xlu0 %3234
  %v3236 = vsel %vm560, %v3232, 0.0
  %3237 = vadd.xlane.f32.xlu0 %v3236
  %v3238 = vpop.xlane.xlu0 %3237
  %v3239 = vmul.f32 %v3235, %v706
  %v3240 = vmul.f32 %v3238, %v706
  %v3241 = vadd.f32 %v3229, %v3239
  %v3242 = vadd.f32 %v3230, %v3240
  %v3243 = vsel %vm544, %v3145, 0.0
  %v3244 = vsel %vm545, %v3146, 0.0
  %v3245 = vsel %vm560, %v3243, 0.0
  %3246 = vadd.xlane.f32.xlu0 %v3245
  %v3247 = vpop.xlane.xlu0 %3246
  %v3248 = vsel %vm560, %v3244, 0.0
  %3249 = vadd.xlane.f32.xlu0 %v3248
  %v3250 = vpop.xlane.xlu0 %3249
  %v3251 = vmul.f32 %v3247, %v722
  %v3252 = vmul.f32 %v3250, %v722
  %v3253 = vadd.f32 %v3241, %v3251
  %v3254 = vadd.f32 %v3242, %v3252
  %3255 = vrot.lane.b32.xlu0 %v220, 56
  %v3256 = vpop.permute.xlu0 %3255
  %3257 = vrot.lane.b32.xlu0 %v225, 56
  %v3258 = vpop.permute.xlu0 %3257
  %v3262 = vsel %vm560, %v3145, 0
  %v3265 = vsel %vm560, %v3146, 0
  %3267 = vmatprep.subr.mxu0 0.0
  %3268 = vmatpush1.msra.mxu0 %v3256
  %3269 = vmatprep.subr.mxu0 0.0
  %3270 = vmatpush1.msra.mxu0 %v3258
  %3271 = vmatprep.subr.mxu0 0.0
  %3272 = vmatpush1.msra.mxu0 0.0
  %3273 = vmatprep.subr.mxu0 0.0
  %3274 = vmatpush1.msra.mxu0 0.0
  %3275 = vmatprep.subr.mxu0 0.0
  %3276 = vmatpush1.msra.mxu0 0.0
  %3277 = vmatprep.subr.mxu0 0.0
  %3278 = vmatpush1.msra.mxu0 0.0
  %3279 = vmatprep.subr.mxu0 0.0
  %3280 = vmatpush1.msra.mxu0 0.0
  %3281 = vmatprep.subr.mxu0 0.0
  %3282 = vmatpush1.msra.mxu0 0.0
  %3283 = vmatprep.subr.mxu0 0.0
  %3284 = vmatpush1.msra.mxu0 0.0
  %3285 = vmatprep.subr.mxu0 0.0
  %3286 = vmatpush1.msra.mxu0 0.0
  %3287 = vmatprep.subr.mxu0 0.0
  %3288 = vmatpush1.msra.mxu0 0.0
  %3289 = vmatprep.subr.mxu0 0.0
  %3290 = vmatpush1.msra.mxu0 0.0
  %3291 = vmatprep.subr.mxu0 0.0
  %3292 = vmatpush1.msra.mxu0 0.0
  %3293 = vmatprep.subr.mxu0 0.0
  %3294 = vmatpush1.msra.mxu0 0.0
  %3295 = vmatprep.subr.mxu0 0.0
  %3296 = vmatpush1.msra.mxu0 0.0
  %3297 = vmatprep.subr.mxu0 0.0
  %3298 = vmatpush1.msra.mxu0 0.0
  %3299 = vmatprep.subr.mxu0 0.0
  %3300 = vmatpush1.msra.mxu0 0.0
  %3301 = vmatprep.subr.mxu0 0.0
  %3302 = vmatpush1.msra.mxu0 0.0
  %3303 = vmatprep.subr.mxu0 0.0
  %3304 = vmatpush1.msra.mxu0 0.0
  %3305 = vmatprep.subr.mxu0 0.0
  %3306 = vmatpush1.msra.mxu0 0.0
  %3307 = vmatprep.subr.mxu0 0.0
  %3308 = vmatpush1.msra.mxu0 0.0
  %3309 = vmatprep.subr.mxu0 0.0
  %3310 = vmatpush1.msra.mxu0 0.0
  %3311 = vmatprep.subr.mxu0 0.0
  %3312 = vmatpush1.msra.mxu0 0.0
  %3313 = vmatprep.subr.mxu0 0.0
  %3314 = vmatpush1.msra.mxu0 0.0
  %3315 = vmatprep.subr.mxu0 0.0
  %3316 = vmatpush1.msra.mxu0 0.0
  %3317 = vmatprep.subr.mxu0 0.0
  %3318 = vmatpush1.msra.mxu0 0.0
  %3319 = vmatprep.subr.mxu0 0.0
  %3320 = vmatpush1.msra.mxu0 0.0
  %3321 = vmatprep.subr.mxu0 0.0
  %3322 = vmatpush1.msra.mxu0 0.0
  %3323 = vmatprep.subr.mxu0 0.0
  %3324 = vmatpush1.msra.mxu0 0.0
  %3325 = vmatprep.subr.mxu0 0.0
  %3326 = vmatpush1.msra.mxu0 0.0
  %3327 = vmatprep.subr.mxu0 0.0
  %3328 = vmatpush1.msra.mxu0 0.0
  %3329 = vmatprep.subr.mxu0 0.0
  %3330 = vmatpush1.msra.mxu0 0.0
  %3331 = vmatprep.mubr.f32.mxu0 0.0
  %3332 = vmatmul.mubr.f32.gmra.mrb[0].mxu0 %v3262
  %v3333 = vpop.f32.mrb[0].mxu0
  %v3334 = vadd.f32 %v3253, %v3333
  %v3335 = vpop.f32.mrb[0].mxu0
  %3336 = vmatprep.mubr.f32.mxu0 0.0
  %3337 = vmatmul.mubr.f32.gmra.mrb[0].mxu0 %v3265
  %v3338 = vpop.f32.mrb[0].mxu0
  %v3339 = vadd.f32 %v3254, %v3338
  %v3340 = vpop.f32.mrb[0].mxu0
  %3341 = vdwg.mxu0
  %3344 = vrot.lane.b32.xlu0 %v3334, 8
  %v3345 = vpop.permute.xlu0 %3344
  %3346 = vrot.lane.b32.xlu0 %v3339, 8
  %v3347 = vpop.permute.xlu0 %3346
  %3350 = vst.msk [vmem:[#allocation2 + $0x10] sm:$0xff] %vm1317, %v3345
  %3351 = vst.msk [vmem:[#allocation2 + $0x18] sm:$0xff] %vm1317, %v3347
  %3352 = vrot.lane.b32.xlu0 %v230, 112
  %v3353 = vpop.permute.xlu0 %3352
  %3354 = vrot.lane.b32.xlu0 %v231, 112
  %v3355 = vpop.permute.xlu0 %3354
  %v3356 = vsel %vm265, %v3353, 0
  %v3358 = vsel %vm265, %v3355, 0
  %3360 = vmatprep.subr.mxu0 0.0
  %3361 = vmatpush1.msra.mxu0 %v232
  %3362 = vmatprep.subr.mxu0 0.0
  %3363 = vmatpush1.msra.mxu0 0.0
  %3364 = vmatprep.subr.mxu0 0.0
  %3365 = vmatpush1.msra.mxu0 0.0
  %3366 = vmatprep.subr.mxu0 0.0
  %3367 = vmatpush1.msra.mxu0 0.0
  %3368 = vmatprep.subr.mxu0 0.0
  %3369 = vmatpush1.msra.mxu0 0.0
  %3370 = vmatprep.subr.mxu0 0.0
  %3371 = vmatpush1.msra.mxu0 0.0
  %3372 = vmatprep.subr.mxu0 0.0
  %3373 = vmatpush1.msra.mxu0 0.0
  %3374 = vmatprep.subr.mxu0 0.0
  %3375 = vmatpush1.msra.mxu0 0.0
  %3376 = vmatprep.subr.mxu0 0.0
  %3377 = vmatpush1.msra.mxu0 0.0
  %3378 = vmatprep.subr.mxu0 0.0
  %3379 = vmatpush1.msra.mxu0 0.0
  %3380 = vmatprep.subr.mxu0 0.0
  %3381 = vmatpush1.msra.mxu0 0.0
  %3382 = vmatprep.subr.mxu0 0.0
  %3383 = vmatpush1.msra.mxu0 0.0
  %3384 = vmatprep.subr.mxu0 0.0
  %3385 = vmatpush1.msra.mxu0 0.0
  %3386 = vmatprep.subr.mxu0 0.0
  %3387 = vmatpush1.msra.mxu0 0.0
  %3388 = vmatprep.subr.mxu0 0.0
  %3389 = vmatpush1.msra.mxu0 0.0
  %3390 = vmatprep.subr.mxu0 0.0
  %3391 = vmatpush1.msra.mxu0 0.0
  %3392 = vmatprep.subr.mxu0 0.0
  %3393 = vmatpush1.msra.mxu0 0.0
  %3394 = vmatprep.subr.mxu0 0.0
  %3395 = vmatpush1.msra.mxu0 0.0
  %3396 = vmatprep.subr.mxu0 0.0
  %3397 = vmatpush1.msra.mxu0 0.0
  %3398 = vmatprep.subr.mxu0 0.0
  %3399 = vmatpush1.msra.mxu0 0.0
  %3400 = vmatprep.subr.mxu0 0.0
  %3401 = vmatpush1.msra.mxu0 0.0
  %3402 = vmatprep.subr.mxu0 0.0
  %3403 = vmatpush1.msra.mxu0 0.0
  %3404 = vmatprep.subr.mxu0 0.0
  %3405 = vmatpush1.msra.mxu0 0.0
  %3406 = vmatprep.subr.mxu0 0.0
  %3407 = vmatpush1.msra.mxu0 0.0
  %3408 = vmatprep.subr.mxu0 0.0
  %3409 = vmatpush1.msra.mxu0 0.0
  %3410 = vmatprep.subr.mxu0 0.0
  %3411 = vmatpush1.msra.mxu0 0.0
  %3412 = vmatprep.subr.mxu0 0.0
  %3413 = vmatpush1.msra.mxu0 0.0
  %3414 = vmatprep.subr.mxu0 0.0
  %3415 = vmatpush1.msra.mxu0 0.0
  %3416 = vmatprep.subr.mxu0 0.0
  %3417 = vmatpush1.msra.mxu0 0.0
  %3418 = vmatprep.subr.mxu0 0.0
  %3419 = vmatpush1.msra.mxu0 0.0
  %3420 = vmatprep.subr.mxu0 0.0
  %3421 = vmatpush1.msra.mxu0 0.0
  %3422 = vmatprep.subr.mxu0 0.0
  %3423 = vmatpush1.msra.mxu0 0.0
  %3424 = vmatprep.mubr.f32.mxu0 0.0
  %3425 = vmatmul.mubr.f32.gmra.mrb[0].mxu0 %v3356
  %v3426 = vpop.f32.mrb[0].mxu0
  %v3427 = vadd.f32 0.0, %v3426
  %v3428 = vpop.f32.mrb[0].mxu0
  %3429 = vmatprep.mubr.f32.mxu0 0.0
  %3430 = vmatmul.mubr.f32.gmra.mrb[0].mxu0 %v3358
  %v3431 = vpop.f32.mrb[0].mxu0
  %v3432 = vadd.f32 0.0, %v3431
  %v3433 = vpop.f32.mrb[0].mxu0
  %3434 = vdwg.mxu0
  %3436 = vset.pattern.permute.xlu0 0
  %3437 = vperm.xlu0 %3436, %v3427
  %v3438 = vpop.permute.xlu0 %3437
  %3441 = vset.pattern.permute.xlu0 0
  %3442 = vperm.xlu0 %3441, %v3432
  %v3443 = vpop.permute.xlu0 %3442
  %v3445 = vsel %vm347, %v3438, 0.0
  %v3446 = vsel %vm348, %v3443, 0.0
  %3447 = vrot.lane.b32.xlu0 %v220, 80
  %v3448 = vpop.permute.xlu0 %3447
  %3449 = vrot.lane.b32.xlu0 %v225, 80
  %v3450 = vpop.permute.xlu0 %3449
  %v3451 = vsel %vm265, %v3448, 0
  %v3453 = vsel %vm265, %v3450, 0
  %3455 = vmatprep.subr.mxu0 0.0
  %3456 = vmatpush1.xpose.msra.mxu0 %v3451
  %3457 = vmatprep.subr.mxu0 0.0
  %3458 = vmatpush1.xpose.msra.mxu0 %v3453
  %3459 = vmatprep.subr.mxu0 0.0
  %3460 = vmatpush1.xpose.msra.mxu0 0.0
  %3461 = vmatprep.subr.mxu0 0.0
  %3462 = vmatpush1.xpose.msra.mxu0 0.0
  %3463 = vmatprep.subr.mxu0 0.0
  %3464 = vmatpush1.xpose.msra.mxu0 0.0
  %3465 = vmatprep.subr.mxu0 0.0
  %3466 = vmatpush1.xpose.msra.mxu0 0.0
  %3467 = vmatprep.subr.mxu0 0.0
  %3468 = vmatpush1.xpose.msra.mxu0 0.0
  %3469 = vmatprep.subr.mxu0 0.0
  %3470 = vmatpush1.xpose.msra.mxu0 0.0
  %3471 = vmatprep.subr.mxu0 0.0
  %3472 = vmatpush1.xpose.msra.mxu0 0.0
  %3473 = vmatprep.subr.mxu0 0.0
  %3474 = vmatpush1.xpose.msra.mxu0 0.0
  %3475 = vmatprep.subr.mxu0 0.0
  %3476 = vmatpush1.xpose.msra.mxu0 0.0
  %3477 = vmatprep.subr.mxu0 0.0
  %3478 = vmatpush1.xpose.msra.mxu0 0.0
  %3479 = vmatprep.subr.mxu0 0.0
  %3480 = vmatpush1.xpose.msra.mxu0 0.0
  %3481 = vmatprep.subr.mxu0 0.0
  %3482 = vmatpush1.xpose.msra.mxu0 0.0
  %3483 = vmatprep.subr.mxu0 0.0
  %3484 = vmatpush1.xpose.msra.mxu0 0.0
  %3485 = vmatprep.subr.mxu0 0.0
  %3486 = vmatpush1.xpose.msra.mxu0 0.0
  %3487 = vmatprep.subr.mxu0 0.0
  %3488 = vmatpush1.xpose.msra.mxu0 0.0
  %3489 = vmatprep.subr.mxu0 0.0
  %3490 = vmatpush1.xpose.msra.mxu0 0.0
  %3491 = vmatprep.subr.mxu0 0.0
  %3492 = vmatpush1.xpose.msra.mxu0 0.0
  %3493 = vmatprep.subr.mxu0 0.0
  %3494 = vmatpush1.xpose.msra.mxu0 0.0
  %3495 = vmatprep.subr.mxu0 0.0
  %3496 = vmatpush1.xpose.msra.mxu0 0.0
  %3497 = vmatprep.subr.mxu0 0.0
  %3498 = vmatpush1.xpose.msra.mxu0 0.0
  %3499 = vmatprep.subr.mxu0 0.0
  %3500 = vmatpush1.xpose.msra.mxu0 0.0
  %3501 = vmatprep.subr.mxu0 0.0
  %3502 = vmatpush1.xpose.msra.mxu0 0.0
  %3503 = vmatprep.subr.mxu0 0.0
  %3504 = vmatpush1.xpose.msra.mxu0 0.0
  %3505 = vmatprep.subr.mxu0 0.0
  %3506 = vmatpush1.xpose.msra.mxu0 0.0
  %3507 = vmatprep.subr.mxu0 0.0
  %3508 = vmatpush1.xpose.msra.mxu0 0.0
  %3509 = vmatprep.subr.mxu0 0.0
  %3510 = vmatpush1.xpose.msra.mxu0 0.0
  %3511 = vmatprep.subr.mxu0 0.0
  %3512 = vmatpush1.xpose.msra.mxu0 0.0
  %3513 = vmatprep.subr.mxu0 0.0
  %3514 = vmatpush1.xpose.msra.mxu0 0.0
  %3515 = vmatprep.subr.mxu0 0.0
  %3516 = vmatpush1.xpose.msra.mxu0 0.0
  %3517 = vmatprep.subr.mxu0 0.0
  %3518 = vmatpush1.xpose.msra.mxu0 0.0
  %3519 = vmatprep.mubr.f32.mxu0 0.0
  %3520 = vmatmul.mubr.f32.gmra.mrb[0].mxu0 %v3356
  %v3521 = vpop.f32.mrb[0].mxu0
  %v3522 = vadd.f32 %v3445, %v3521
  %v3523 = vpop.f32.mrb[0].mxu0
  %3524 = vmatprep.mubr.f32.mxu0 0.0
  %3525 = vmatmul.mubr.f32.gmra.mrb[0].mxu0 %v3358
  %v3526 = vpop.f32.mrb[0].mxu0
  %v3527 = vadd.f32 %v3446, %v3526
  %v3528 = vpop.f32.mrb[0].mxu0
  %3529 = vdwg.mxu0
  %3530 = vset.pattern.permute.xlu0 1
  %3531 = vperm.xlu0 %3530, %v3427
  %v3532 = vpop.permute.xlu0 %3531
  %3534 = vset.pattern.permute.xlu0 1
  %3535 = vperm.xlu0 %3534, %v3432
  %v3536 = vpop.permute.xlu0 %3535
  %v3538 = vsel %vm446, %v3532, 0.0
  %v3539 = vsel %vm447, %v3536, 0.0
  %v3540 = vadd.f32 %v3522, %v3538
  %v3541 = vadd.f32 %v3527, %v3539
  %3542 = vset.pattern.permute.xlu0 2
  %3543 = vperm.xlu0 %3542, %v3427
  %v3544 = vpop.permute.xlu0 %3543
  %3546 = vset.pattern.permute.xlu0 2
  %3547 = vperm.xlu0 %3546, %v3432
  %v3548 = vpop.permute.xlu0 %3547
  %v3550 = vsel %vm460, %v3544, 0.0
  %v3551 = vsel %vm461, %v3548, 0.0
  %v3552 = vadd.f32 %v3540, %v3550
  %v3553 = vadd.f32 %v3541, %v3551
  %3554 = vset.pattern.permute.xlu0 3
  %3555 = vperm.xlu0 %3554, %v3427
  %v3556 = vpop.permute.xlu0 %3555
  %3558 = vset.pattern.permute.xlu0 3
  %3559 = vperm.xlu0 %3558, %v3432
  %v3560 = vpop.permute.xlu0 %3559
  %v3562 = vsel %vm474, %v3556, 0.0
  %v3563 = vsel %vm475, %v3560, 0.0
  %v3564 = vadd.f32 %v3552, %v3562
  %v3565 = vadd.f32 %v3553, %v3563
  %3566 = vset.pattern.permute.xlu0 4
  %3567 = vperm.xlu0 %3566, %v3427
  %v3568 = vpop.permute.xlu0 %3567
  %3570 = vset.pattern.permute.xlu0 4
  %3571 = vperm.xlu0 %3570, %v3432
  %v3572 = vpop.permute.xlu0 %3571
  %v3574 = vsel %vm488, %v3568, 0.0
  %v3575 = vsel %vm489, %v3572, 0.0
  %v3576 = vadd.f32 %v3564, %v3574
  %v3577 = vadd.f32 %v3565, %v3575
  %3578 = vset.pattern.permute.xlu0 5
  %3579 = vperm.xlu0 %3578, %v3427
  %v3580 = vpop.permute.xlu0 %3579
  %3582 = vset.pattern.permute.xlu0 5
  %3583 = vperm.xlu0 %3582, %v3432
  %v3584 = vpop.permute.xlu0 %3583
  %v3586 = vsel %vm502, %v3580, 0.0
  %v3587 = vsel %vm503, %v3584, 0.0
  %v3588 = vadd.f32 %v3576, %v3586
  %v3589 = vadd.f32 %v3577, %v3587
  %3590 = vset.pattern.permute.xlu0 6
  %3591 = vperm.xlu0 %3590, %v3427
  %v3592 = vpop.permute.xlu0 %3591
  %3594 = vset.pattern.permute.xlu0 6
  %3595 = vperm.xlu0 %3594, %v3432
  %v3596 = vpop.permute.xlu0 %3595
  %v3598 = vsel %vm516, %v3592, 0.0
  %v3599 = vsel %vm517, %v3596, 0.0
  %v3600 = vadd.f32 %v3588, %v3598
  %v3601 = vadd.f32 %v3589, %v3599
  %3602 = vset.pattern.permute.xlu0 7
  %3603 = vperm.xlu0 %3602, %v3427
  %v3604 = vpop.permute.xlu0 %3603
  %3606 = vset.pattern.permute.xlu0 7
  %3607 = vperm.xlu0 %3606, %v3432
  %v3608 = vpop.permute.xlu0 %3607
  %v3610 = vsel %vm530, %v3604, 0.0
  %v3611 = vsel %vm531, %v3608, 0.0
  %v3612 = vadd.f32 %v3600, %v3610
  %v3613 = vadd.f32 %v3601, %v3611
  %3614 = vset.pattern.permute.xlu0 8
  %3615 = vperm.xlu0 %3614, %v3427
  %v3616 = vpop.permute.xlu0 %3615
  %3618 = vset.pattern.permute.xlu0 8
  %3619 = vperm.xlu0 %3618, %v3432
  %v3620 = vpop.permute.xlu0 %3619
  %v3622 = vsel %vm544, %v3616, 0.0
  %v3623 = vsel %vm545, %v3620, 0.0
  %v3624 = vadd.f32 %v3612, %v3622
  %v3625 = vadd.f32 %v3613, %v3623
  %v3626 = vadd.f32 %v3624, %v2352
  %v3627 = vadd.f32 %v3625, %v2353
  %v3628 = vsel %vm560, %v3626, -inf
  %3629 = vmax.xlane.f32.xlu0 %v3628
  %v3630 = vpop.xlane.xlu0 %3629
  %v3631 = vsel %vm560, %v3627, -inf
  %3632 = vmax.xlane.f32.xlu0 %v3631
  %v3633 = vpop.xlane.xlu0 %3632
  %v3634 = vsub.f32 %v3626, %v3630
  %v3635 = vsub.f32 %v3627, %v3633
  %v3636 = vmul.f32 %v3634, 1.442695
  %v3637 = vpow.pop %v3636
  %v3638 = vmul.f32 %v3635, 1.442695
  %v3639 = vpow.pop %v3638
  %v3640 = vsel %vm560, %v3637, 0.0
  %3641 = vadd.xlane.f32.xlu0 %v3640
  %v3642 = vpop.xlane.xlu0 %3641
  %v3643 = vsel %vm560, %v3639, 0.0
  %3644 = vadd.xlane.f32.xlu0 %v3643
  %v3645 = vpop.xlane.xlu0 %3644
  %v3646 = vrcp.pop %v3642
  %v3647 = vrcp.pop %v3645
  %v3648 = vmul.f32 %v3637, %v3646
  %v3649 = vmul.f32 %v3639, %v3647
  %v3650 = vsel %vm347, %v3648, 0.0
  %v3651 = vsel %vm348, %v3649, 0.0
  %v3652 = vsel %vm560, %v3650, 0.0
  %3653 = vadd.xlane.f32.xlu0 %v3652
  %v3654 = vpop.xlane.xlu0 %3653
  %v3655 = vsel %vm560, %v3651, 0.0
  %3656 = vadd.xlane.f32.xlu0 %v3655
  %v3657 = vpop.xlane.xlu0 %3656
  %v3658 = vmul.f32 %v3654, %v594
  %v3659 = vmul.f32 %v3657, %v594
  %v3660 = vadd.f32 %v3658, 0.0
  %v3661 = vadd.f32 %v3659, 0.0
  %v3662 = vsel %vm446, %v3648, 0.0
  %v3663 = vsel %vm447, %v3649, 0.0
  %v3664 = vsel %vm560, %v3662, 0.0
  %3665 = vadd.xlane.f32.xlu0 %v3664
  %v3666 = vpop.xlane.xlu0 %3665
  %v3667 = vsel %vm560, %v3663, 0.0
  %3668 = vadd.xlane.f32.xlu0 %v3667
  %v3669 = vpop.xlane.xlu0 %3668
  %v3670 = vmul.f32 %v3666, %v610
  %v3671 = vmul.f32 %v3669, %v610
  %v3672 = vadd.f32 %v3660, %v3670
  %v3673 = vadd.f32 %v3661, %v3671
  %v3674 = vsel %vm460, %v3648, 0.0
  %v3675 = vsel %vm461, %v3649, 0.0
  %v3676 = vsel %vm560, %v3674, 0.0
  %3677 = vadd.xlane.f32.xlu0 %v3676
  %v3678 = vpop.xlane.xlu0 %3677
  %v3679 = vsel %vm560, %v3675, 0.0
  %3680 = vadd.xlane.f32.xlu0 %v3679
  %v3681 = vpop.xlane.xlu0 %3680
  %v3682 = vmul.f32 %v3678, %v626
  %v3683 = vmul.f32 %v3681, %v626
  %v3684 = vadd.f32 %v3672, %v3682
  %v3685 = vadd.f32 %v3673, %v3683
  %v3686 = vsel %vm474, %v3648, 0.0
  %v3687 = vsel %vm475, %v3649, 0.0
  %v3688 = vsel %vm560, %v3686, 0.0
  %3689 = vadd.xlane.f32.xlu0 %v3688
  %v3690 = vpop.xlane.xlu0 %3689
  %v3691 = vsel %vm560, %v3687, 0.0
  %3692 = vadd.xlane.f32.xlu0 %v3691
  %v3693 = vpop.xlane.xlu0 %3692
  %v3694 = vmul.f32 %v3690, %v642
  %v3695 = vmul.f32 %v3693, %v642
  %v3696 = vadd.f32 %v3684, %v3694
  %v3697 = vadd.f32 %v3685, %v3695
  %v3698 = vsel %vm488, %v3648, 0.0
  %v3699 = vsel %vm489, %v3649, 0.0
  %v3700 = vsel %vm560, %v3698, 0.0
  %3701 = vadd.xlane.f32.xlu0 %v3700
  %v3702 = vpop.xlane.xlu0 %3701
  %v3703 = vsel %vm560, %v3699, 0.0
  %3704 = vadd.xlane.f32.xlu0 %v3703
  %v3705 = vpop.xlane.xlu0 %3704
  %v3706 = vmul.f32 %v3702, %v658
  %v3707 = vmul.f32 %v3705, %v658
  %v3708 = vadd.f32 %v3696, %v3706
  %v3709 = vadd.f32 %v3697, %v3707
  %v3710 = vsel %vm502, %v3648, 0.0
  %v3711 = vsel %vm503, %v3649, 0.0
  %v3712 = vsel %vm560, %v3710, 0.0
  %3713 = vadd.xlane.f32.xlu0 %v3712
  %v3714 = vpop.xlane.xlu0 %3713
  %v3715 = vsel %vm560, %v3711, 0.0
  %3716 = vadd.xlane.f32.xlu0 %v3715
  %v3717 = vpop.xlane.xlu0 %3716
  %v3718 = vmul.f32 %v3714, %v674
  %v3719 = vmul.f32 %v3717, %v674
  %v3720 = vadd.f32 %v3708, %v3718
  %v3721 = vadd.f32 %v3709, %v3719
  %v3722 = vsel %vm516, %v3648, 0.0
  %v3723 = vsel %vm517, %v3649, 0.0
  %v3724 = vsel %vm560, %v3722, 0.0
  %3725 = vadd.xlane.f32.xlu0 %v3724
  %v3726 = vpop.xlane.xlu0 %3725
  %v3727 = vsel %vm560, %v3723, 0.0
  %3728 = vadd.xlane.f32.xlu0 %v3727
  %v3729 = vpop.xlane.xlu0 %3728
  %v3730 = vmul.f32 %v3726, %v690
  %v3731 = vmul.f32 %v3729, %v690
  %v3732 = vadd.f32 %v3720, %v3730
  %v3733 = vadd.f32 %v3721, %v3731
  %v3734 = vsel %vm530, %v3648, 0.0
  %v3735 = vsel %vm531, %v3649, 0.0
  %v3736 = vsel %vm560, %v3734, 0.0
  %3737 = vadd.xlane.f32.xlu0 %v3736
  %v3738 = vpop.xlane.xlu0 %3737
  %v3739 = vsel %vm560, %v3735, 0.0
  %3740 = vadd.xlane.f32.xlu0 %v3739
  %v3741 = vpop.xlane.xlu0 %3740
  %v3742 = vmul.f32 %v3738, %v706
  %v3743 = vmul.f32 %v3741, %v706
  %v3744 = vadd.f32 %v3732, %v3742
  %v3745 = vadd.f32 %v3733, %v3743
  %v3746 = vsel %vm544, %v3648, 0.0
  %v3747 = vsel %vm545, %v3649, 0.0
  %v3748 = vsel %vm560, %v3746, 0.0
  %3749 = vadd.xlane.f32.xlu0 %v3748
  %v3750 = vpop.xlane.xlu0 %3749
  %v3751 = vsel %vm560, %v3747, 0.0
  %3752 = vadd.xlane.f32.xlu0 %v3751
  %v3753 = vpop.xlane.xlu0 %3752
  %v3754 = vmul.f32 %v3750, %v722
  %v3755 = vmul.f32 %v3753, %v722
  %v3756 = vadd.f32 %v3744, %v3754
  %v3757 = vadd.f32 %v3745, %v3755
  %3758 = vrot.lane.b32.xlu0 %v220, 48
  %v3759 = vpop.permute.xlu0 %3758
  %3760 = vrot.lane.b32.xlu0 %v225, 48
  %v3761 = vpop.permute.xlu0 %3760
  %v3765 = vsel %vm560, %v3648, 0
  %v3768 = vsel %vm560, %v3649, 0
  %3770 = vmatprep.subr.mxu0 0.0
  %3771 = vmatpush1.msra.mxu0 %v3759
  %3772 = vmatprep.subr.mxu0 0.0
  %3773 = vmatpush1.msra.mxu0 %v3761
  %3774 = vmatprep.subr.mxu0 0.0
  %3775 = vmatpush1.msra.mxu0 0.0
  %3776 = vmatprep.subr.mxu0 0.0
  %3777 = vmatpush1.msra.mxu0 0.0
  %3778 = vmatprep.subr.mxu0 0.0
  %3779 = vmatpush1.msra.mxu0 0.0
  %3780 = vmatprep.subr.mxu0 0.0
  %3781 = vmatpush1.msra.mxu0 0.0
  %3782 = vmatprep.subr.mxu0 0.0
  %3783 = vmatpush1.msra.mxu0 0.0
  %3784 = vmatprep.subr.mxu0 0.0
  %3785 = vmatpush1.msra.mxu0 0.0
  %3786 = vmatprep.subr.mxu0 0.0
  %3787 = vmatpush1.msra.mxu0 0.0
  %3788 = vmatprep.subr.mxu0 0.0
  %3789 = vmatpush1.msra.mxu0 0.0
  %3790 = vmatprep.subr.mxu0 0.0
  %3791 = vmatpush1.msra.mxu0 0.0
  %3792 = vmatprep.subr.mxu0 0.0
  %3793 = vmatpush1.msra.mxu0 0.0
  %3794 = vmatprep.subr.mxu0 0.0
  %3795 = vmatpush1.msra.mxu0 0.0
  %3796 = vmatprep.subr.mxu0 0.0
  %3797 = vmatpush1.msra.mxu0 0.0
  %3798 = vmatprep.subr.mxu0 0.0
  %3799 = vmatpush1.msra.mxu0 0.0
  %3800 = vmatprep.subr.mxu0 0.0
  %3801 = vmatpush1.msra.mxu0 0.0
  %3802 = vmatprep.subr.mxu0 0.0
  %3803 = vmatpush1.msra.mxu0 0.0
  %3804 = vmatprep.subr.mxu0 0.0
  %3805 = vmatpush1.msra.mxu0 0.0
  %3806 = vmatprep.subr.mxu0 0.0
  %3807 = vmatpush1.msra.mxu0 0.0
  %3808 = vmatprep.subr.mxu0 0.0
  %3809 = vmatpush1.msra.mxu0 0.0
  %3810 = vmatprep.subr.mxu0 0.0
  %3811 = vmatpush1.msra.mxu0 0.0
  %3812 = vmatprep.subr.mxu0 0.0
  %3813 = vmatpush1.msra.mxu0 0.0
  %3814 = vmatprep.subr.mxu0 0.0
  %3815 = vmatpush1.msra.mxu0 0.0
  %3816 = vmatprep.subr.mxu0 0.0
  %3817 = vmatpush1.msra.mxu0 0.0
  %3818 = vmatprep.subr.mxu0 0.0
  %3819 = vmatpush1.msra.mxu0 0.0
  %3820 = vmatprep.subr.mxu0 0.0
  %3821 = vmatpush1.msra.mxu0 0.0
  %3822 = vmatprep.subr.mxu0 0.0
  %3823 = vmatpush1.msra.mxu0 0.0
  %3824 = vmatprep.subr.mxu0 0.0
  %3825 = vmatpush1.msra.mxu0 0.0
  %3826 = vmatprep.subr.mxu0 0.0
  %3827 = vmatpush1.msra.mxu0 0.0
  %3828 = vmatprep.subr.mxu0 0.0
  %3829 = vmatpush1.msra.mxu0 0.0
  %3830 = vmatprep.subr.mxu0 0.0
  %3831 = vmatpush1.msra.mxu0 0.0
  %3832 = vmatprep.subr.mxu0 0.0
  %3833 = vmatpush1.msra.mxu0 0.0
  %3834 = vmatprep.mubr.f32.mxu0 0.0
  %3835 = vmatmul.mubr.f32.gmra.mrb[0].mxu0 %v3765
  %v3836 = vpop.f32.mrb[0].mxu0
  %v3837 = vadd.f32 %v3756, %v3836
  %v3838 = vpop.f32.mrb[0].mxu0
  %3839 = vmatprep.mubr.f32.mxu0 0.0
  %3840 = vmatmul.mubr.f32.gmra.mrb[0].mxu0 %v3768
  %v3841 = vpop.f32.mrb[0].mxu0
  %v3842 = vadd.f32 %v3757, %v3841
  %v3843 = vpop.f32.mrb[0].mxu0
  %3844 = vdwg.mxu0
  %3847 = vrot.lane.b32.xlu0 %v3837, 16
  %v3848 = vpop.permute.xlu0 %3847
  %3849 = vrot.lane.b32.xlu0 %v3842, 16
  %v3850 = vpop.permute.xlu0 %3849
  %3853 = vst.msk [vmem:[#allocation2 + $0x10] sm:$0xff] %vm1821, %v3848
  %3854 = vst.msk [vmem:[#allocation2 + $0x18] sm:$0xff] %vm1821, %v3850
  %3855 = vrot.lane.b32.xlu0 %v230, 104
  %v3856 = vpop.permute.xlu0 %3855
  %3857 = vrot.lane.b32.xlu0 %v231, 104
  %v3858 = vpop.permute.xlu0 %3857
  %v3859 = vsel %vm265, %v3856, 0
  %v3861 = vsel %vm265, %v3858, 0
  %3863 = vmatprep.subr.mxu0 0.0
  %3864 = vmatpush1.msra.mxu0 %v232
  %3865 = vmatprep.subr.mxu0 0.0
  %3866 = vmatpush1.msra.mxu0 0.0
  %3867 = vmatprep.subr.mxu0 0.0
  %3868 = vmatpush1.msra.mxu0 0.0
  %3869 = vmatprep.subr.mxu0 0.0
  %3870 = vmatpush1.msra.mxu0 0.0
  %3871 = vmatprep.subr.mxu0 0.0
  %3872 = vmatpush1.msra.mxu0 0.0
  %3873 = vmatprep.subr.mxu0 0.0
  %3874 = vmatpush1.msra.mxu0 0.0
  %3875 = vmatprep.subr.mxu0 0.0
  %3876 = vmatpush1.msra.mxu0 0.0
  %3877 = vmatprep.subr.mxu0 0.0
  %3878 = vmatpush1.msra.mxu0 0.0
  %3879 = vmatprep.subr.mxu0 0.0
  %3880 = vmatpush1.msra.mxu0 0.0
  %3881 = vmatprep.subr.mxu0 0.0
  %3882 = vmatpush1.msra.mxu0 0.0
  %3883 = vmatprep.subr.mxu0 0.0
  %3884 = vmatpush1.msra.mxu0 0.0
  %3885 = vmatprep.subr.mxu0 0.0
  %3886 = vmatpush1.msra.mxu0 0.0
  %3887 = vmatprep.subr.mxu0 0.0
  %3888 = vmatpush1.msra.mxu0 0.0
  %3889 = vmatprep.subr.mxu0 0.0
  %3890 = vmatpush1.msra.mxu0 0.0
  %3891 = vmatprep.subr.mxu0 0.0
  %3892 = vmatpush1.msra.mxu0 0.0
  %3893 = vmatprep.subr.mxu0 0.0
  %3894 = vmatpush1.msra.mxu0 0.0
  %3895 = vmatprep.subr.mxu0 0.0
  %3896 = vmatpush1.msra.mxu0 0.0
  %3897 = vmatprep.subr.mxu0 0.0
  %3898 = vmatpush1.msra.mxu0 0.0
  %3899 = vmatprep.subr.mxu0 0.0
  %3900 = vmatpush1.msra.mxu0 0.0
  %3901 = vmatprep.subr.mxu0 0.0
  %3902 = vmatpush1.msra.mxu0 0.0
  %3903 = vmatprep.subr.mxu0 0.0
  %3904 = vmatpush1.msra.mxu0 0.0
  %3905 = vmatprep.subr.mxu0 0.0
  %3906 = vmatpush1.msra.mxu0 0.0
  %3907 = vmatprep.subr.mxu0 0.0
  %3908 = vmatpush1.msra.mxu0 0.0
  %3909 = vmatprep.subr.mxu0 0.0
  %3910 = vmatpush1.msra.mxu0 0.0
  %3911 = vmatprep.subr.mxu0 0.0
  %3912 = vmatpush1.msra.mxu0 0.0
  %3913 = vmatprep.subr.mxu0 0.0
  %3914 = vmatpush1.msra.mxu0 0.0
  %3915 = vmatprep.subr.mxu0 0.0
  %3916 = vmatpush1.msra.mxu0 0.0
  %3917 = vmatprep.subr.mxu0 0.0
  %3918 = vmatpush1.msra.mxu0 0.0
  %3919 = vmatprep.subr.mxu0 0.0
  %3920 = vmatpush1.msra.mxu0 0.0
  %3921 = vmatprep.subr.mxu0 0.0
  %3922 = vmatpush1.msra.mxu0 0.0
  %3923 = vmatprep.subr.mxu0 0.0
  %3924 = vmatpush1.msra.mxu0 0.0
  %3925 = vmatprep.subr.mxu0 0.0
  %3926 = vmatpush1.msra.mxu0 0.0
  %3927 = vmatprep.mubr.f32.mxu0 0.0
  %3928 = vmatmul.mubr.f32.gmra.mrb[0].mxu0 %v3859
  %v3929 = vpop.f32.mrb[0].mxu0
  %v3930 = vadd.f32 0.0, %v3929
  %v3931 = vpop.f32.mrb[0].mxu0
  %3932 = vmatprep.mubr.f32.mxu0 0.0
  %3933 = vmatmul.mubr.f32.gmra.mrb[0].mxu0 %v3861
  %v3934 = vpop.f32.mrb[0].mxu0
  %v3935 = vadd.f32 0.0, %v3934
  %v3936 = vpop.f32.mrb[0].mxu0
  %3937 = vdwg.mxu0
  %3939 = vset.pattern.permute.xlu0 0
  %3940 = vperm.xlu0 %3939, %v3930
  %v3941 = vpop.permute.xlu0 %3940
  %3944 = vset.pattern.permute.xlu0 0
  %3945 = vperm.xlu0 %3944, %v3935
  %v3946 = vpop.permute.xlu0 %3945
  %v3948 = vsel %vm347, %v3941, 0.0
  %v3949 = vsel %vm348, %v3946, 0.0
  %3950 = vrot.lane.b32.xlu0 %v220, 72
  %v3951 = vpop.permute.xlu0 %3950
  %3952 = vrot.lane.b32.xlu0 %v225, 72
  %v3953 = vpop.permute.xlu0 %3952
  %v3954 = vsel %vm265, %v3951, 0
  %v3956 = vsel %vm265, %v3953, 0
  %3958 = vmatprep.subr.mxu0 0.0
  %3959 = vmatpush1.xpose.msra.mxu0 %v3954
  %3960 = vmatprep.subr.mxu0 0.0
  %3961 = vmatpush1.xpose.msra.mxu0 %v3956
  %3962 = vmatprep.subr.mxu0 0.0
  %3963 = vmatpush1.xpose.msra.mxu0 0.0
  %3964 = vmatprep.subr.mxu0 0.0
  %3965 = vmatpush1.xpose.msra.mxu0 0.0
  %3966 = vmatprep.subr.mxu0 0.0
  %3967 = vmatpush1.xpose.msra.mxu0 0.0
  %3968 = vmatprep.subr.mxu0 0.0
  %3969 = vmatpush1.xpose.msra.mxu0 0.0
  %3970 = vmatprep.subr.mxu0 0.0
  %3971 = vmatpush1.xpose.msra.mxu0 0.0
  %3972 = vmatprep.subr.mxu0 0.0
  %3973 = vmatpush1.xpose.msra.mxu0 0.0
  %3974 = vmatprep.subr.mxu0 0.0
  %3975 = vmatpush1.xpose.msra.mxu0 0.0
  %3976 = vmatprep.subr.mxu0 0.0
  %3977 = vmatpush1.xpose.msra.mxu0 0.0
  %3978 = vmatprep.subr.mxu0 0.0
  %3979 = vmatpush1.xpose.msra.mxu0 0.0
  %3980 = vmatprep.subr.mxu0 0.0
  %3981 = vmatpush1.xpose.msra.mxu0 0.0
  %3982 = vmatprep.subr.mxu0 0.0
  %3983 = vmatpush1.xpose.msra.mxu0 0.0
  %3984 = vmatprep.subr.mxu0 0.0
  %3985 = vmatpush1.xpose.msra.mxu0 0.0
  %3986 = vmatprep.subr.mxu0 0.0
  %3987 = vmatpush1.xpose.msra.mxu0 0.0
  %3988 = vmatprep.subr.mxu0 0.0
  %3989 = vmatpush1.xpose.msra.mxu0 0.0
  %3990 = vmatprep.subr.mxu0 0.0
  %3991 = vmatpush1.xpose.msra.mxu0 0.0
  %3992 = vmatprep.subr.mxu0 0.0
  %3993 = vmatpush1.xpose.msra.mxu0 0.0
  %3994 = vmatprep.subr.mxu0 0.0
  %3995 = vmatpush1.xpose.msra.mxu0 0.0
  %3996 = vmatprep.subr.mxu0 0.0
  %3997 = vmatpush1.xpose.msra.mxu0 0.0
  %3998 = vmatprep.subr.mxu0 0.0
  %3999 = vmatpush1.xpose.msra.mxu0 0.0
  %4000 = vmatprep.subr.mxu0 0.0
  %4001 = vmatpush1.xpose.msra.mxu0 0.0
  %4002 = vmatprep.subr.mxu0 0.0
  %4003 = vmatpush1.xpose.msra.mxu0 0.0
  %4004 = vmatprep.subr.mxu0 0.0
  %4005 = vmatpush1.xpose.msra.mxu0 0.0
  %4006 = vmatprep.subr.mxu0 0.0
  %4007 = vmatpush1.xpose.msra.mxu0 0.0
  %4008 = vmatprep.subr.mxu0 0.0
  %4009 = vmatpush1.xpose.msra.mxu0 0.0
  %4010 = vmatprep.subr.mxu0 0.0
  %4011 = vmatpush1.xpose.msra.mxu0 0.0
  %4012 = vmatprep.subr.mxu0 0.0
  %4013 = vmatpush1.xpose.msra.mxu0 0.0
  %4014 = vmatprep.subr.mxu0 0.0
  %4015 = vmatpush1.xpose.msra.mxu0 0.0
  %4016 = vmatprep.subr.mxu0 0.0
  %4017 = vmatpush1.xpose.msra.mxu0 0.0
  %4018 = vmatprep.subr.mxu0 0.0
  %4019 = vmatpush1.xpose.msra.mxu0 0.0
  %4020 = vmatprep.subr.mxu0 0.0
  %4021 = vmatpush1.xpose.msra.mxu0 0.0
  %4022 = vmatprep.mubr.f32.mxu0 0.0
  %4023 = vmatmul.mubr.f32.gmra.mrb[0].mxu0 %v3859
  %v4024 = vpop.f32.mrb[0].mxu0
  %v4025 = vadd.f32 %v3948, %v4024
  %v4026 = vpop.f32.mrb[0].mxu0
  %4027 = vmatprep.mubr.f32.mxu0 0.0
  %4028 = vmatmul.mubr.f32.gmra.mrb[0].mxu0 %v3861
  %v4029 = vpop.f32.mrb[0].mxu0
  %v4030 = vadd.f32 %v3949, %v4029
  %v4031 = vpop.f32.mrb[0].mxu0
  %4032 = vdwg.mxu0
  %4033 = vset.pattern.permute.xlu0 1
  %4034 = vperm.xlu0 %4033, %v3930
  %v4035 = vpop.permute.xlu0 %4034
  %4037 = vset.pattern.permute.xlu0 1
  %4038 = vperm.xlu0 %4037, %v3935
  %v4039 = vpop.permute.xlu0 %4038
  %v4041 = vsel %vm446, %v4035, 0.0
  %v4042 = vsel %vm447, %v4039, 0.0
  %v4043 = vadd.f32 %v4025, %v4041
  %v4044 = vadd.f32 %v4030, %v4042
  %4045 = vset.pattern.permute.xlu0 2
  %4046 = vperm.xlu0 %4045, %v3930
  %v4047 = vpop.permute.xlu0 %4046
  %4049 = vset.pattern.permute.xlu0 2
  %4050 = vperm.xlu0 %4049, %v3935
  %v4051 = vpop.permute.xlu0 %4050
  %v4053 = vsel %vm460, %v4047, 0.0
  %v4054 = vsel %vm461, %v4051, 0.0
  %v4055 = vadd.f32 %v4043, %v4053
  %v4056 = vadd.f32 %v4044, %v4054
  %4057 = vset.pattern.permute.xlu0 3
  %4058 = vperm.xlu0 %4057, %v3930
  %v4059 = vpop.permute.xlu0 %4058
  %4061 = vset.pattern.permute.xlu0 3
  %4062 = vperm.xlu0 %4061, %v3935
  %v4063 = vpop.permute.xlu0 %4062
  %v4065 = vsel %vm474, %v4059, 0.0
  %v4066 = vsel %vm475, %v4063, 0.0
  %v4067 = vadd.f32 %v4055, %v4065
  %v4068 = vadd.f32 %v4056, %v4066
  %4069 = vset.pattern.permute.xlu0 4
  %4070 = vperm.xlu0 %4069, %v3930
  %v4071 = vpop.permute.xlu0 %4070
  %4073 = vset.pattern.permute.xlu0 4
  %4074 = vperm.xlu0 %4073, %v3935
  %v4075 = vpop.permute.xlu0 %4074
  %v4077 = vsel %vm488, %v4071, 0.0
  %v4078 = vsel %vm489, %v4075, 0.0
  %v4079 = vadd.f32 %v4067, %v4077
  %v4080 = vadd.f32 %v4068, %v4078
  %4081 = vset.pattern.permute.xlu0 5
  %4082 = vperm.xlu0 %4081, %v3930
  %v4083 = vpop.permute.xlu0 %4082
  %4085 = vset.pattern.permute.xlu0 5
  %4086 = vperm.xlu0 %4085, %v3935
  %v4087 = vpop.permute.xlu0 %4086
  %v4089 = vsel %vm502, %v4083, 0.0
  %v4090 = vsel %vm503, %v4087, 0.0
  %v4091 = vadd.f32 %v4079, %v4089
  %v4092 = vadd.f32 %v4080, %v4090
  %4093 = vset.pattern.permute.xlu0 6
  %4094 = vperm.xlu0 %4093, %v3930
  %v4095 = vpop.permute.xlu0 %4094
  %4097 = vset.pattern.permute.xlu0 6
  %4098 = vperm.xlu0 %4097, %v3935
  %v4099 = vpop.permute.xlu0 %4098
  %v4101 = vsel %vm516, %v4095, 0.0
  %v4102 = vsel %vm517, %v4099, 0.0
  %v4103 = vadd.f32 %v4091, %v4101
  %v4104 = vadd.f32 %v4092, %v4102
  %4105 = vset.pattern.permute.xlu0 7
  %4106 = vperm.xlu0 %4105, %v3930
  %v4107 = vpop.permute.xlu0 %4106
  %4109 = vset.pattern.permute.xlu0 7
  %4110 = vperm.xlu0 %4109, %v3935
  %v4111 = vpop.permute.xlu0 %4110
  %v4113 = vsel %vm530, %v4107, 0.0
  %v4114 = vsel %vm531, %v4111, 0.0
  %v4115 = vadd.f32 %v4103, %v4113
  %v4116 = vadd.f32 %v4104, %v4114
  %4117 = vset.pattern.permute.xlu0 8
  %4118 = vperm.xlu0 %4117, %v3930
  %v4119 = vpop.permute.xlu0 %4118
  %4121 = vset.pattern.permute.xlu0 8
  %4122 = vperm.xlu0 %4121, %v3935
  %v4123 = vpop.permute.xlu0 %4122
  %v4125 = vsel %vm544, %v4119, 0.0
  %v4126 = vsel %vm545, %v4123, 0.0
  %v4127 = vadd.f32 %v4115, %v4125
  %v4128 = vadd.f32 %v4116, %v4126
  %v4129 = vadd.f32 %v4127, %v2352
  %v4130 = vadd.f32 %v4128, %v2353
  %v4131 = vsel %vm560, %v4129, -inf
  %4132 = vmax.xlane.f32.xlu0 %v4131
  %v4133 = vpop.xlane.xlu0 %4132
  %v4134 = vsel %vm560, %v4130, -inf
  %4135 = vmax.xlane.f32.xlu0 %v4134
  %v4136 = vpop.xlane.xlu0 %4135
  %v4137 = vsub.f32 %v4129, %v4133
  %v4138 = vsub.f32 %v4130, %v4136
  %v4139 = vmul.f32 %v4137, 1.442695
  %v4140 = vpow.pop %v4139
  %v4141 = vmul.f32 %v4138, 1.442695
  %v4142 = vpow.pop %v4141
  %v4143 = vsel %vm560, %v4140, 0.0
  %4144 = vadd.xlane.f32.xlu0 %v4143
  %v4145 = vpop.xlane.xlu0 %4144
  %v4146 = vsel %vm560, %v4142, 0.0
  %4147 = vadd.xlane.f32.xlu0 %v4146
  %v4148 = vpop.xlane.xlu0 %4147
  %v4149 = vrcp.pop %v4145
  %v4150 = vrcp.pop %v4148
  %v4151 = vmul.f32 %v4140, %v4149
  %v4152 = vmul.f32 %v4142, %v4150
  %v4153 = vsel %vm347, %v4151, 0.0
  %v4154 = vsel %vm348, %v4152, 0.0
  %v4155 = vsel %vm560, %v4153, 0.0
  %4156 = vadd.xlane.f32.xlu0 %v4155
  %v4157 = vpop.xlane.xlu0 %4156
  %v4158 = vsel %vm560, %v4154, 0.0
  %4159 = vadd.xlane.f32.xlu0 %v4158
  %v4160 = vpop.xlane.xlu0 %4159
  %v4161 = vmul.f32 %v4157, %v594
  %v4162 = vmul.f32 %v4160, %v594
  %v4163 = vadd.f32 %v4161, 0.0
  %v4164 = vadd.f32 %v4162, 0.0
  %v4165 = vsel %vm446, %v4151, 0.0
  %v4166 = vsel %vm447, %v4152, 0.0
  %v4167 = vsel %vm560, %v4165, 0.0
  %4168 = vadd.xlane.f32.xlu0 %v4167
  %v4169 = vpop.xlane.xlu0 %4168
  %v4170 = vsel %vm560, %v4166, 0.0
  %4171 = vadd.xlane.f32.xlu0 %v4170
  %v4172 = vpop.xlane.xlu0 %4171
  %v4173 = vmul.f32 %v4169, %v610
  %v4174 = vmul.f32 %v4172, %v610
  %v4175 = vadd.f32 %v4163, %v4173
  %v4176 = vadd.f32 %v4164, %v4174
  %v4177 = vsel %vm460, %v4151, 0.0
  %v4178 = vsel %vm461, %v4152, 0.0
  %v4179 = vsel %vm560, %v4177, 0.0
  %4180 = vadd.xlane.f32.xlu0 %v4179
  %v4181 = vpop.xlane.xlu0 %4180
  %v4182 = vsel %vm560, %v4178, 0.0
  %4183 = vadd.xlane.f32.xlu0 %v4182
  %v4184 = vpop.xlane.xlu0 %4183
  %v4185 = vmul.f32 %v4181, %v626
  %v4186 = vmul.f32 %v4184, %v626
  %v4187 = vadd.f32 %v4175, %v4185
  %v4188 = vadd.f32 %v4176, %v4186
  %v4189 = vsel %vm474, %v4151, 0.0
  %v4190 = vsel %vm475, %v4152, 0.0
  %v4191 = vsel %vm560, %v4189, 0.0
  %4192 = vadd.xlane.f32.xlu0 %v4191
  %v4193 = vpop.xlane.xlu0 %4192
  %v4194 = vsel %vm560, %v4190, 0.0
  %4195 = vadd.xlane.f32.xlu0 %v4194
  %v4196 = vpop.xlane.xlu0 %4195
  %v4197 = vmul.f32 %v4193, %v642
  %v4198 = vmul.f32 %v4196, %v642
  %v4199 = vadd.f32 %v4187, %v4197
  %v4200 = vadd.f32 %v4188, %v4198
  %v4201 = vsel %vm488, %v4151, 0.0
  %v4202 = vsel %vm489, %v4152, 0.0
  %v4203 = vsel %vm560, %v4201, 0.0
  %4204 = vadd.xlane.f32.xlu0 %v4203
  %v4205 = vpop.xlane.xlu0 %4204
  %v4206 = vsel %vm560, %v4202, 0.0
  %4207 = vadd.xlane.f32.xlu0 %v4206
  %v4208 = vpop.xlane.xlu0 %4207
  %v4209 = vmul.f32 %v4205, %v658
  %v4210 = vmul.f32 %v4208, %v658
  %v4211 = vadd.f32 %v4199, %v4209
  %v4212 = vadd.f32 %v4200, %v4210
  %v4213 = vsel %vm502, %v4151, 0.0
  %v4214 = vsel %vm503, %v4152, 0.0
  %v4215 = vsel %vm560, %v4213, 0.0
  %4216 = vadd.xlane.f32.xlu0 %v4215
  %v4217 = vpop.xlane.xlu0 %4216
  %v4218 = vsel %vm560, %v4214, 0.0
  %4219 = vadd.xlane.f32.xlu0 %v4218
  %v4220 = vpop.xlane.xlu0 %4219
  %v4221 = vmul.f32 %v4217, %v674
  %v4222 = vmul.f32 %v4220, %v674
  %v4223 = vadd.f32 %v4211, %v4221
  %v4224 = vadd.f32 %v4212, %v4222
  %v4225 = vsel %vm516, %v4151, 0.0
  %v4226 = vsel %vm517, %v4152, 0.0
  %v4227 = vsel %vm560, %v4225, 0.0
  %4228 = vadd.xlane.f32.xlu0 %v4227
  %v4229 = vpop.xlane.xlu0 %4228
  %v4230 = vsel %vm560, %v4226, 0.0
  %4231 = vadd.xlane.f32.xlu0 %v4230
  %v4232 = vpop.xlane.xlu0 %4231
  %v4233 = vmul.f32 %v4229, %v690
  %v4234 = vmul.f32 %v4232, %v690
  %v4235 = vadd.f32 %v4223, %v4233
  %v4236 = vadd.f32 %v4224, %v4234
  %v4237 = vsel %vm530, %v4151, 0.0
  %v4238 = vsel %vm531, %v4152, 0.0
  %v4239 = vsel %vm560, %v4237, 0.0
  %4240 = vadd.xlane.f32.xlu0 %v4239
  %v4241 = vpop.xlane.xlu0 %4240
  %v4242 = vsel %vm560, %v4238, 0.0
  %4243 = vadd.xlane.f32.xlu0 %v4242
  %v4244 = vpop.xlane.xlu0 %4243
  %v4245 = vmul.f32 %v4241, %v706
  %v4246 = vmul.f32 %v4244, %v706
  %v4247 = vadd.f32 %v4235, %v4245
  %v4248 = vadd.f32 %v4236, %v4246
  %v4249 = vsel %vm544, %v4151, 0.0
  %v4250 = vsel %vm545, %v4152, 0.0
  %v4251 = vsel %vm560, %v4249, 0.0
  %4252 = vadd.xlane.f32.xlu0 %v4251
  %v4253 = vpop.xlane.xlu0 %4252
  %v4254 = vsel %vm560, %v4250, 0.0
  %4255 = vadd.xlane.f32.xlu0 %v4254
  %v4256 = vpop.xlane.xlu0 %4255
  %v4257 = vmul.f32 %v4253, %v722
  %v4258 = vmul.f32 %v4256, %v722
  %v4259 = vadd.f32 %v4247, %v4257
  %v4260 = vadd.f32 %v4248, %v4258
  %4261 = vrot.lane.b32.xlu0 %v220, 40
  %v4262 = vpop.permute.xlu0 %4261
  %4263 = vrot.lane.b32.xlu0 %v225, 40
  %v4264 = vpop.permute.xlu0 %4263
  %v4268 = vsel %vm560, %v4151, 0
  %v4271 = vsel %vm560, %v4152, 0
  %4273 = vmatprep.subr.mxu0 0.0
  %4274 = vmatpush1.msra.mxu0 %v4262
  %4275 = vmatprep.subr.mxu0 0.0
  %4276 = vmatpush1.msra.mxu0 %v4264
  %4277 = vmatprep.subr.mxu0 0.0
  %4278 = vmatpush1.msra.mxu0 0.0
  %4279 = vmatprep.subr.mxu0 0.0
  %4280 = vmatpush1.msra.mxu0 0.0
  %4281 = vmatprep.subr.mxu0 0.0
  %4282 = vmatpush1.msra.mxu0 0.0
  %4283 = vmatprep.subr.mxu0 0.0
  %4284 = vmatpush1.msra.mxu0 0.0
  %4285 = vmatprep.subr.mxu0 0.0
  %4286 = vmatpush1.msra.mxu0 0.0
  %4287 = vmatprep.subr.mxu0 0.0
  %4288 = vmatpush1.msra.mxu0 0.0
  %4289 = vmatprep.subr.mxu0 0.0
  %4290 = vmatpush1.msra.mxu0 0.0
  %4291 = vmatprep.subr.mxu0 0.0
  %4292 = vmatpush1.msra.mxu0 0.0
  %4293 = vmatprep.subr.mxu0 0.0
  %4294 = vmatpush1.msra.mxu0 0.0
  %4295 = vmatprep.subr.mxu0 0.0
  %4296 = vmatpush1.msra.mxu0 0.0
  %4297 = vmatprep.subr.mxu0 0.0
  %4298 = vmatpush1.msra.mxu0 0.0
  %4299 = vmatprep.subr.mxu0 0.0
  %4300 = vmatpush1.msra.mxu0 0.0
  %4301 = vmatprep.subr.mxu0 0.0
  %4302 = vmatpush1.msra.mxu0 0.0
  %4303 = vmatprep.subr.mxu0 0.0
  %4304 = vmatpush1.msra.mxu0 0.0
  %4305 = vmatprep.subr.mxu0 0.0
  %4306 = vmatpush1.msra.mxu0 0.0
  %4307 = vmatprep.subr.mxu0 0.0
  %4308 = vmatpush1.msra.mxu0 0.0
  %4309 = vmatprep.subr.mxu0 0.0
  %4310 = vmatpush1.msra.mxu0 0.0
  %4311 = vmatprep.subr.mxu0 0.0
  %4312 = vmatpush1.msra.mxu0 0.0
  %4313 = vmatprep.subr.mxu0 0.0
  %4314 = vmatpush1.msra.mxu0 0.0
  %4315 = vmatprep.subr.mxu0 0.0
  %4316 = vmatpush1.msra.mxu0 0.0
  %4317 = vmatprep.subr.mxu0 0.0
  %4318 = vmatpush1.msra.mxu0 0.0
  %4319 = vmatprep.subr.mxu0 0.0
  %4320 = vmatpush1.msra.mxu0 0.0
  %4321 = vmatprep.subr.mxu0 0.0
  %4322 = vmatpush1.msra.mxu0 0.0
  %4323 = vmatprep.subr.mxu0 0.0
  %4324 = vmatpush1.msra.mxu0 0.0
  %4325 = vmatprep.subr.mxu0 0.0
  %4326 = vmatpush1.msra.mxu0 0.0
  %4327 = vmatprep.subr.mxu0 0.0
  %4328 = vmatpush1.msra.mxu0 0.0
  %4329 = vmatprep.subr.mxu0 0.0
  %4330 = vmatpush1.msra.mxu0 0.0
  %4331 = vmatprep.subr.mxu0 0.0
  %4332 = vmatpush1.msra.mxu0 0.0
  %4333 = vmatprep.subr.mxu0 0.0
  %4334 = vmatpush1.msra.mxu0 0.0
  %4335 = vmatprep.subr.mxu0 0.0
  %4336 = vmatpush1.msra.mxu0 0.0
  %4337 = vmatprep.mubr.f32.mxu0 0.0
  %4338 = vmatmul.mubr.f32.gmra.mrb[0].mxu0 %v4268
  %v4339 = vpop.f32.mrb[0].mxu0
  %v4340 = vadd.f32 %v4259, %v4339
  %v4341 = vpop.f32.mrb[0].mxu0
  %4342 = vmatprep.mubr.f32.mxu0 0.0
  %4343 = vmatmul.mubr.f32.gmra.mrb[0].mxu0 %v4271
  %v4344 = vpop.f32.mrb[0].mxu0
  %v4345 = vadd.f32 %v4260, %v4344
  %v4346 = vpop.f32.mrb[0].mxu0
  %4347 = vdwg.mxu0
  %4350 = vrot.lane.b32.xlu0 %v4340, 24
  %v4351 = vpop.permute.xlu0 %4350
  %4352 = vrot.lane.b32.xlu0 %v4345, 24
  %v4353 = vpop.permute.xlu0 %4352
  %4356 = vst.msk [vmem:[#allocation2 + $0x10] sm:$0xff] %vm2325, %v4351
  %4357 = vst.msk [vmem:[#allocation2 + $0x18] sm:$0xff] %vm2325, %v4353
  %v4358 = vld [vmem:[%s6] sm:$0x3f]
  %v4359 = vld [vmem:[#allocation2] sm:$0xff]
  %v4360 = vld [vmem:[#allocation2 + $0x8] sm:$0xff]
  %v4361 = vld [vmem:[#allocation2 + $0x10] sm:$0xff]
  %v4362 = vld [vmem:[#allocation2 + $0x18] sm:$0xff]
  %v4363 = vld [vmem:[%s5] sm:$0xff]
  %v4364 = vld [vmem:[%s5 + $0x8] sm:$0xff]
  %v4365 = vld [vmem:[%s5 + $0x10] sm:$0xff]
  %v4366 = vld [vmem:[%s5 + $0x18] sm:$0xff]
  %v4367 = vlaneseq
  %v4368 = vshrl.u32 %v4367, 7
  %v4369 = vsub.s32 0, %v4368
  %v4370 = vrot.slane %v4358, %v4369
  %v4372 = vsel %vm130, %v4359, 0
  %v4375 = vsel %vm130, %v4360, 0
  %v4378 = vsel %vm130, %v4361, 0
  %v4381 = vsel %vm130, %v4362, 0
  %4383 = vmatprep.subr.mxu0 0.0
  %4384 = vmatpush1.msra.mxu0 %v4363
  %4385 = vmatprep.subr.mxu0 0.0
  %4386 = vmatpush1.msra.mxu0 %v4364
  %4387 = vmatprep.subr.mxu0 0.0
  %4388 = vmatpush1.msra.mxu0 %v4365
  %4389 = vmatprep.subr.mxu0 0.0
  %4390 = vmatpush1.msra.mxu0 %v4366
  %4391 = vmatprep.subr.mxu0 0.0
  %4392 = vmatpush1.msra.mxu0 0.0
  %4393 = vmatprep.subr.mxu0 0.0
  %4394 = vmatpush1.msra.mxu0 0.0
  %4395 = vmatprep.subr.mxu0 0.0
  %4396 = vmatpush1.msra.mxu0 0.0
  %4397 = vmatprep.subr.mxu0 0.0
  %4398 = vmatpush1.msra.mxu0 0.0
  %4399 = vmatprep.subr.mxu0 0.0
  %4400 = vmatpush1.msra.mxu0 0.0
  %4401 = vmatprep.subr.mxu0 0.0
  %4402 = vmatpush1.msra.mxu0 0.0
  %4403 = vmatprep.subr.mxu0 0.0
  %4404 = vmatpush1.msra.mxu0 0.0
  %4405 = vmatprep.subr.mxu0 0.0
  %4406 = vmatpush1.msra.mxu0 0.0
  %4407 = vmatprep.subr.mxu0 0.0
  %4408 = vmatpush1.msra.mxu0 0.0
  %4409 = vmatprep.subr.mxu0 0.0
  %4410 = vmatpush1.msra.mxu0 0.0
  %4411 = vmatprep.subr.mxu0 0.0
  %4412 = vmatpush1.msra.mxu0 0.0
  %4413 = vmatprep.subr.mxu0 0.0
  %4414 = vmatpush1.msra.mxu0 0.0
  %4415 = vmatprep.subr.mxu0 0.0
  %4416 = vmatpush1.msra.mxu0 0.0
  %4417 = vmatprep.subr.mxu0 0.0
  %4418 = vmatpush1.msra.mxu0 0.0
  %4419 = vmatprep.subr.mxu0 0.0
  %4420 = vmatpush1.msra.mxu0 0.0
  %4421 = vmatprep.subr.mxu0 0.0
  %4422 = vmatpush1.msra.mxu0 0.0
  %4423 = vmatprep.subr.mxu0 0.0
  %4424 = vmatpush1.msra.mxu0 0.0
  %4425 = vmatprep.subr.mxu0 0.0
  %4426 = vmatpush1.msra.mxu0 0.0
  %4427 = vmatprep.subr.mxu0 0.0
  %4428 = vmatpush1.msra.mxu0 0.0
  %4429 = vmatprep.subr.mxu0 0.0
  %4430 = vmatpush1.msra.mxu0 0.0
  %4431 = vmatprep.subr.mxu0 0.0
  %4432 = vmatpush1.msra.mxu0 0.0
  %4433 = vmatprep.subr.mxu0 0.0
  %4434 = vmatpush1.msra.mxu0 0.0
  %4435 = vmatprep.subr.mxu0 0.0
  %4436 = vmatpush1.msra.mxu0 0.0
  %4437 = vmatprep.subr.mxu0 0.0
  %4438 = vmatpush1.msra.mxu0 0.0
  %4439 = vmatprep.subr.mxu0 0.0
  %4440 = vmatpush1.msra.mxu0 0.0
  %4441 = vmatprep.subr.mxu0 0.0
  %4442 = vmatpush1.msra.mxu0 0.0
  %4443 = vmatprep.subr.mxu0 0.0
  %4444 = vmatpush1.msra.mxu0 0.0
  %4445 = vmatprep.subr.mxu0 0.0
  %4446 = vmatpush1.msra.mxu0 0.0
  %4447 = vmatprep.mubr.f32.mxu0 0.0
  %4448 = vmatmul.mubr.f32.gmra.mrb[0].mxu0 %v4372
  %v4449 = vpop.f32.mrb[0].mxu0
  %v4450 = vadd.f32 %v4370, %v4449
  %v4451 = vpop.f32.mrb[0].mxu0
  %4452 = vmatprep.mubr.f32.mxu0 0.0
  %4453 = vmatmul.mubr.f32.gmra.mrb[0].mxu0 %v4375
  %v4454 = vpop.f32.mrb[0].mxu0
  %v4455 = vadd.f32 %v4370, %v4454
  %v4456 = vpop.f32.mrb[0].mxu0
  %4457 = vmatprep.mubr.f32.mxu0 0.0
  %4458 = vmatmul.mubr.f32.gmra.mrb[0].mxu0 %v4378
  %v4459 = vpop.f32.mrb[0].mxu0
  %v4460 = vadd.f32 %v4370, %v4459
  %v4461 = vpop.f32.mrb[0].mxu0
  %4462 = vmatprep.mubr.f32.mxu0 0.0
  %4463 = vmatmul.mubr.f32.gmra.mrb[0].mxu0 %v4381
  %v4464 = vpop.f32.mrb[0].mxu0
  %v4465 = vadd.f32 %v4370, %v4464
  %v4466 = vpop.f32.mrb[0].mxu0
  %4467 = vdwg.mxu0
  %v4468 = vadd.f32 %v4450, %v61
  %v4469 = vadd.f32 %v4455, %v62
  %v4470 = vadd.f32 %v4460, %v98
  %v4471 = vadd.f32 %v4465, %v99
  %4473 = vset.pattern.permute.xlu0 0
  %4474 = vperm.xlu0 %4473, %v117
  %v4475 = vpop.permute.xlu0 %4474
  %4478 = vset.pattern.permute.xlu0 0
  %4479 = vperm.xlu0 %4478, %v118
  %v4480 = vpop.permute.xlu0 %4479
  %v4482 = vmul.f32 %v4468, %v246
  %v4483 = vmul.f32 %v4469, %v251
  %v4484 = vmul.f32 %v4470, %v4475
  %v4485 = vmul.f32 %v4471, %v4480
  %v4486 = vsel %vm130, %v4482, 0.0
  %4487 = vadd.xlane.f32.xlu0 %v4486
  %v4488 = vpop.xlane.xlu0 %4487
  %v4489 = vsel %vm130, %v4483, 0.0
  %4490 = vadd.xlane.f32.xlu0 %v4489
  %v4491 = vpop.xlane.xlu0 %4490
  %v4492 = vsel %vm130, %v4484, 0.0
  %4493 = vadd.xlane.f32.xlu0 %v4492
  %v4494 = vpop.xlane.xlu0 %4493
  %v4495 = vsel %vm130, %v4485, 0.0
  %4496 = vadd.xlane.f32.xlu0 %v4495
  %v4497 = vpop.xlane.xlu0 %4496
  %v4498 = vrcp.pop 32.0
  %v4499 = vmul.f32 %v4488, %v4498
  %v4500 = vmul.f32 %v4491, %v4498
  %v4501 = vmul.f32 %v4494, %v4498
  %v4502 = vmul.f32 %v4497, %v4498
  %v4503 = vsub.f32 %v4482, %v4499
  %v4504 = vsub.f32 %v4483, %v4500
  %v4505 = vsub.f32 %v4484, %v4501
  %v4506 = vsub.f32 %v4485, %v4502
  %v4507 = vmul.f32 %v4503, %v4503
  %v4508 = vmul.f32 %v4504, %v4504
  %v4509 = vmul.f32 %v4505, %v4505
  %v4510 = vmul.f32 %v4506, %v4506
  %v4511 = vsel %vm130, %v4507, 0.0
  %4512 = vadd.xlane.f32.xlu0 %v4511
  %v4513 = vpop.xlane.xlu0 %4512
  %v4514 = vsel %vm130, %v4508, 0.0
  %4515 = vadd.xlane.f32.xlu0 %v4514
  %v4516 = vpop.xlane.xlu0 %4515
  %v4517 = vsel %vm130, %v4509, 0.0
  %4518 = vadd.xlane.f32.xlu0 %v4517
  %v4519 = vpop.xlane.xlu0 %4518
  %v4520 = vsel %vm130, %v4510, 0.0
  %4521 = vadd.xlane.f32.xlu0 %v4520
  %v4522 = vpop.xlane.xlu0 %4521
  %v4523 = vmul.f32 %v4513, %v4498
  %v4524 = vmul.f32 %v4516, %v4498
  %v4525 = vmul.f32 %v4519, %v4498
  %v4526 = vmul.f32 %v4522, %v4498
  %v4527 = vadd.f32 %v4523, 1e-05
  %v4528 = vadd.f32 %v4524, 1e-05
  %v4529 = vadd.f32 %v4525, 1e-05
  %v4530 = vadd.f32 %v4526, 1e-05
  %v4531 = vrsqrt.pop %v4527
  %v4532 = vrsqrt.pop %v4528
  %v4533 = vrsqrt.pop %v4529
  %v4534 = vrsqrt.pop %v4530
  %v4535 = vmul.f32 %v4503, %v4531
  %v4536 = vmul.f32 %v4504, %v4532
  %v4537 = vmul.f32 %v4505, %v4533
  %v4538 = vmul.f32 %v4506, %v4534
  %v4539 = vlaneseq
  %v4540 = vshrl.u32 %v4539, 7
  %v4541 = vsub.s32 1, %v4540
  %v4542 = vrot.slane %v4358, %v4541
  %v4543 = vmul.f32 %v4535, %v4542
  %v4544 = vmul.f32 %v4536, %v4542
  %v4545 = vmul.f32 %v4537, %v4542
  %v4546 = vmul.f32 %v4538, %v4542
  %v4547 = vlaneseq
  %v4548 = vshrl.u32 %v4547, 7
  %v4549 = vsub.s32 2, %v4548
  %v4550 = vrot.slane %v4358, %v4549
  %v4551 = vadd.f32 %v4543, %v4550
  %v4552 = vadd.f32 %v4544, %v4550
  %v4553 = vadd.f32 %v4545, %v4550
  %v4554 = vadd.f32 %v4546, %v4550
  %v4555 = vmul.f32 %v4551, %v246
  %v4556 = vmul.f32 %v4552, %v251
  %v4557 = vmul.f32 %v4553, %v4475
  %v4558 = vmul.f32 %v4554, %v4480
  %vm4563 = vcmask 1040384
  %v4564 = vrot.slane %v4555, 7
  %v4565 = vrot.slane %v4556, 7
  %v4566 = vsel %vm4563, %v4564, %v4565
  %v4567 = vrot.slane %v4557, 7
  %v4568 = vsel %vm4563, %v4565, %v4567
  %v4569 = vrot.slane %v4558, 7
  %v4570 = vsel %vm4563, %v4567, %v4569
  %v4576 = vsel %vm4563, 0.0, %v4564
  %v4577 = vsel %vm4563, %v4569, 0.0
  %v4578 = vadd.s32 %v236, 4294967295
  %v4579 = vadd.s32 %v237, 4294967295
  %vm4580 = vcmp.ge.s32.totalorder %v4578, 0
  %vm4581 = vcmp.ge.s32.totalorder %v4579, 0
  %vm4582 = vcmp.lt.s32.totalorder %v4578, 16
  %vm4583 = vcmp.lt.s32.totalorder %v4579, 16
  %vm4584 = vmand %vm4580, %vm4582
  %vm4585 = vmand %vm4581, %vm4583
  %v4586 = vsel %vm4584, 1, 0
  %v4587 = vsel %vm4585, 1, 0
  %4588 = vset.pattern.permute.xlu0 0
  %4589 = vperm.xlu0 %4588, %v4586
  %v4590 = vpop.permute.xlu0 %4589
  %4591 = vset.pattern.permute.xlu0 0
  %4592 = vperm.xlu0 %4591, %v4587
  %v4593 = vpop.permute.xlu0 %4592
  %vm4594 = vcmp.eq.s32.totalorder %v4590, 1
  %vm4595 = vcmp.eq.s32.totalorder %v4593, 1
  %v4596 = vsel %vm4594, %v4576, 0.0
  %v4597 = vsel %vm4595, %v4566, 0.0
  %v4598 = vsel %vm4594, %v4568, 0.0
  %v4599 = vsel %vm4595, %v4570, 0.0
  %v4600 = vadd.s32 %v236, 1
  %v4601 = vadd.s32 %v237, 1
  %vm4602 = vcmp.ge.s32.totalorder %v4600, 0
  %vm4603 = vcmp.ge.s32.totalorder %v4601, 0
  %vm4604 = vcmp.lt.s32.totalorder %v4600, 16
  %vm4605 = vcmp.lt.s32.totalorder %v4601, 16
  %vm4606 = vmand %vm4602, %vm4604
  %vm4607 = vmand %vm4603, %vm4605
  %v4608 = vsel %vm4606, 1, 0
  %v4609 = vsel %vm4607, 1, 0
  %4610 = vset.pattern.permute.xlu0 0
  %4611 = vperm.xlu0 %4610, %v4608
  %v4612 = vpop.permute.xlu0 %4611
  %4613 = vset.pattern.permute.xlu0 0
  %4614 = vperm.xlu0 %4613, %v4609
  %v4615 = vpop.permute.xlu0 %4614
  %vm4616 = vcmp.eq.s32.totalorder %v4612, 1
  %vm4617 = vcmp.eq.s32.totalorder %v4615, 1
  %vm4620 = vcmask 1045504
  %v4621 = vrot.slane %v4576, 2
  %v4622 = vrot.slane %v4566, 2
  %v4623 = vsel %vm4620, %v4621, %v4622
  %v4624 = vrot.slane %v4568, 2
  %v4625 = vsel %vm4620, %v4622, %v4624
  %v4626 = vrot.slane %v4570, 2
  %v4627 = vsel %vm4620, %v4624, %v4626
  %v4628 = vrot.slane %v4577, 2
  %v4629 = vsel %vm4620, %v4626, %v4628
  %v4634 = vsel %vm4616, %v4623, 0.0
  %v4635 = vsel %vm4617, %v4625, 0.0
  %v4636 = vsel %vm4616, %v4627, 0.0
  %v4637 = vsel %vm4617, %v4629, 0.0
  %vm4638 = vcmask 1046528
  %v4639 = vrot.slane %v4576, 1
  %v4640 = vrot.slane %v4566, 1
  %v4641 = vsel %vm4638, %v4639, %v4640
  %v4642 = vrot.slane %v4568, 1
  %v4643 = vsel %vm4638, %v4640, %v4642
  %v4644 = vrot.slane %v4570, 1
  %v4645 = vsel %vm4638, %v4642, %v4644
  %v4646 = vrot.slane %v4577, 1
  %v4647 = vsel %vm4638, %v4644, %v4646
  %4648 = vrot.lane.b32.xlu0 %v4641, 32
  %v4649 = vpop.permute.xlu0 %4648
  %4650 = vrot.lane.b32.xlu0 %v4643, 32
  %v4651 = vpop.permute.xlu0 %4650
  %4652 = vrot.lane.b32.xlu0 %v4645, 32
  %v4653 = vpop.permute.xlu0 %4652
  %4654 = vrot.lane.b32.xlu0 %v4647, 32
  %v4655 = vpop.permute.xlu0 %4654
  %4664 = vrot.lane.b32.xlu0 %v4634, 64
  %v4665 = vpop.permute.xlu0 %4664
  %4666 = vrot.lane.b32.xlu0 %v4635, 64
  %v4667 = vpop.permute.xlu0 %4666
  %4668 = vrot.lane.b32.xlu0 %v4636, 64
  %v4669 = vpop.permute.xlu0 %4668
  %4670 = vrot.lane.b32.xlu0 %v4637, 64
  %v4671 = vpop.permute.xlu0 %4670
  %v4676 = vsel %vm130, %v4596, %v4649
  %v4677 = vsel %vm130, %v4597, %v4651
  %v4678 = vsel %vm130, %v4598, %v4653
  %v4679 = vsel %vm130, %v4599, %v4655
  %vm4680 = vcmask 523264
  %v4681 = vsel %vm4680, %v4676, %v4665
  %v4682 = vsel %vm4680, %v4677, %v4667
  %v4683 = vsel %vm4680, %v4678, %v4669
  %v4684 = vsel %vm4680, %v4679, %v4671
  %v4685 = vld [vmem:[%s7] sm:$0xff]
  %v4686 = vld [vmem:[%s7 + $0x8] sm:$0xff]
  %v4687 = vld [vmem:[%s7 + $0x10] sm:$0xff]
  %v4688 = vld [vmem:[%s7 + $0x18] sm:$0xff]
  %v4689 = vld [vmem:[%s7 + $0x20] sm:$0xff]
  %v4690 = vld [vmem:[%s7 + $0x28] sm:$0xff]
  %v4691 = vld [vmem:[%s7 + $0x30] sm:$0xff]
  %v4692 = vld [vmem:[%s7 + $0x38] sm:$0xff]
  %v4693 = vld [vmem:[%s7 + $0x40] sm:$0xff]
  %v4694 = vld [vmem:[%s7 + $0x48] sm:$0xff]
  %v4695 = vld [vmem:[%s7 + $0x50] sm:$0xff]
  %v4696 = vld [vmem:[%s7 + $0x58] sm:$0xff]
  %v4697 = vld [vmem:[%s8] sm:$0x1]
  %v4699 = vlaneseq
  %v4700 = vshrl.u32 %v4699, 7
  %v4701 = vsub.s32 0, %v4700
  %v4702 = vrot.slane %v4697, %v4701
  %vm4704 = vcmask 785408
  %v4706 = vsel %vm4704, %v4681, 0
  %v4709 = vsel %vm4704, %v4682, 0
  %v4712 = vsel %vm4704, %v4683, 0
  %v4715 = vsel %vm4704, %v4684, 0
  %4717 = vmatprep.subr.mxu0 0.0
  %4718 = vmatpush1.msra.mxu0 %v4685
  %4719 = vmatprep.subr.mxu0 0.0
  %4720 = vmatpush1.msra.mxu0 %v4686
  %4721 = vmatprep.subr.mxu0 0.0
  %4722 = vmatpush1.msra.mxu0 %v4687
  %4723 = vmatprep.subr.mxu0 0.0
  %4724 = vmatpush1.msra.mxu0 %v4688
  %4725 = vmatprep.subr.mxu0 0.0
  %4726 = vmatpush1.msra.mxu0 %v4689
  %4727 = vmatprep.subr.mxu0 0.0
  %4728 = vmatpush1.msra.mxu0 %v4690
  %4729 = vmatprep.subr.mxu0 0.0
  %4730 = vmatpush1.msra.mxu0 %v4691
  %4731 = vmatprep.subr.mxu0 0.0
  %4732 = vmatpush1.msra.mxu0 %v4692
  %4733 = vmatprep.subr.mxu0 0.0
  %4734 = vmatpush1.msra.mxu0 %v4693
  %4735 = vmatprep.subr.mxu0 0.0
  %4736 = vmatpush1.msra.mxu0 %v4694
  %4737 = vmatprep.subr.mxu0 0.0
  %4738 = vmatpush1.msra.mxu0 %v4695
  %4739 = vmatprep.subr.mxu0 0.0
  %4740 = vmatpush1.msra.mxu0 %v4696
  %4741 = vmatprep.subr.mxu0 0.0
  %4742 = vmatpush1.msra.mxu0 0.0
  %4743 = vmatprep.subr.mxu0 0.0
  %4744 = vmatpush1.msra.mxu0 0.0
  %4745 = vmatprep.subr.mxu0 0.0
  %4746 = vmatpush1.msra.mxu0 0.0
  %4747 = vmatprep.subr.mxu0 0.0
  %4748 = vmatpush1.msra.mxu0 0.0
  %4749 = vmatprep.subr.mxu0 0.0
  %4750 = vmatpush1.msra.mxu0 0.0
  %4751 = vmatprep.subr.mxu0 0.0
  %4752 = vmatpush1.msra.mxu0 0.0
  %4753 = vmatprep.subr.mxu0 0.0
  %4754 = vmatpush1.msra.mxu0 0.0
  %4755 = vmatprep.subr.mxu0 0.0
  %4756 = vmatpush1.msra.mxu0 0.0
  %4757 = vmatprep.subr.mxu0 0.0
  %4758 = vmatpush1.msra.mxu0 0.0
  %4759 = vmatprep.subr.mxu0 0.0
  %4760 = vmatpush1.msra.mxu0 0.0
  %4761 = vmatprep.subr.mxu0 0.0
  %4762 = vmatpush1.msra.mxu0 0.0
  %4763 = vmatprep.subr.mxu0 0.0
  %4764 = vmatpush1.msra.mxu0 0.0
  %4765 = vmatprep.subr.mxu0 0.0
  %4766 = vmatpush1.msra.mxu0 0.0
  %4767 = vmatprep.subr.mxu0 0.0
  %4768 = vmatpush1.msra.mxu0 0.0
  %4769 = vmatprep.subr.mxu0 0.0
  %4770 = vmatpush1.msra.mxu0 0.0
  %4771 = vmatprep.subr.mxu0 0.0
  %4772 = vmatpush1.msra.mxu0 0.0
  %4773 = vmatprep.subr.mxu0 0.0
  %4774 = vmatpush1.msra.mxu0 0.0
  %4775 = vmatprep.subr.mxu0 0.0
  %4776 = vmatpush1.msra.mxu0 0.0
  %4777 = vmatprep.subr.mxu0 0.0
  %4778 = vmatpush1.msra.mxu0 0.0
  %4779 = vmatprep.subr.mxu0 0.0
  %4780 = vmatpush1.msra.mxu0 0.0
  %4781 = vmatprep.mubr.f32.mxu0 0.0
  %4782 = vmatmul.mubr.f32.gmra.mrb[0].mxu0 %v4706
  %v4783 = vpop.f32.mrb[0].mxu0
  %v4784 = vadd.f32 %v4702, %v4783
  %v4785 = vpop.f32.mrb[0].mxu0
  %4786 = vmatprep.mubr.f32.mxu0 0.0
  %4787 = vmatmul.mubr.f32.gmra.mrb[0].mxu0 %v4709
  %v4788 = vpop.f32.mrb[0].mxu0
  %v4789 = vadd.f32 %v4702, %v4788
  %v4790 = vpop.f32.mrb[0].mxu0
  %4791 = vmatprep.mubr.f32.mxu0 0.0
  %4792 = vmatmul.mubr.f32.gmra.mrb[0].mxu0 %v4712
  %v4793 = vpop.f32.mrb[0].mxu0
  %v4794 = vadd.f32 %v4702, %v4793
  %v4795 = vpop.f32.mrb[0].mxu0
  %4796 = vmatprep.mubr.f32.mxu0 0.0
  %4797 = vmatmul.mubr.f32.gmra.mrb[0].mxu0 %v4715
  %v4798 = vpop.f32.mrb[0].mxu0
  %v4799 = vadd.f32 %v4702, %v4798
  %v4800 = vpop.f32.mrb[0].mxu0
  %4801 = vdwg.mxu0
  %v4802 = vmax.f32 %v4784, 0.0
  %v4803 = vmax.f32 %v4789, 0.0
  %v4804 = vmax.f32 %v4794, 0.0
  %v4805 = vmax.f32 %v4799, 0.0
  %v4806 = vmul.f32 %v4802, %v246
  %v4807 = vmul.f32 %v4803, %v251
  %v4808 = vmul.f32 %v4804, %v4475
  %v4809 = vmul.f32 %v4805, %v4480
  %v4814 = vrot.slane %v4806, 7
  %v4815 = vrot.slane %v4807, 7
  %v4816 = vsel %vm4563, %v4814, %v4815
  %v4817 = vrot.slane %v4808, 7
  %v4818 = vsel %vm4563, %v4815, %v4817
  %v4819 = vrot.slane %v4809, 7
  %v4820 = vsel %vm4563, %v4817, %v4819
  %v4826 = vsel %vm4563, 0.0, %v4814
  %v4827 = vsel %vm4563, %v4819, 0.0
  %v4828 = vsel %vm4594, %v4826, 0.0
  %v4829 = vsel %vm4595, %v4816, 0.0
  %v4830 = vsel %vm4594, %v4818, 0.0
  %v4831 = vsel %vm4595, %v4820, 0.0
  %v4834 = vrot.slane %v4826, 2
  %v4835 = vrot.slane %v4816, 2
  %v4836 = vsel %vm4620, %v4834, %v4835
  %v4837 = vrot.slane %v4818, 2
  %v4838 = vsel %vm4620, %v4835, %v4837
  %v4839 = vrot.slane %v4820, 2
  %v4840 = vsel %vm4620, %v4837, %v4839
  %v4841 = vrot.slane %v4827, 2
  %v4842 = vsel %vm4620, %v4839, %v4841
  %v4847 = vsel %vm4616, %v4836, 0.0
  %v4848 = vsel %vm4617, %v4838, 0.0
  %v4849 = vsel %vm4616, %v4840, 0.0
  %v4850 = vsel %vm4617, %v4842, 0.0
  %v4851 = vrot.slane %v4826, 1
  %v4852 = vrot.slane %v4816, 1
  %v4853 = vsel %vm4638, %v4851, %v4852
  %v4854 = vrot.slane %v4818, 1
  %v4855 = vsel %vm4638, %v4852, %v4854
  %v4856 = vrot.slane %v4820, 1
  %v4857 = vsel %vm4638, %v4854, %v4856
  %v4858 = vrot.slane %v4827, 1
  %v4859 = vsel %vm4638, %v4856, %v4858
  %4860 = vrot.lane.b32.xlu0 %v4853, 64
  %v4861 = vpop.permute.xlu0 %4860
  %4862 = vrot.lane.b32.xlu0 %v4855, 64
  %v4863 = vpop.permute.xlu0 %4862
  %4864 = vrot.lane.b32.xlu0 %v4857, 64
  %v4865 = vpop.permute.xlu0 %4864
  %4866 = vrot.lane.b32.xlu0 %v4859, 64
  %v4867 = vpop.permute.xlu0 %4866
  %v4872 = vsel %vm4680, %v4828, %v4861
  %v4873 = vsel %vm4680, %v4829, %v4863
  %v4874 = vsel %vm4680, %v4830, %v4865
  %v4875 = vsel %vm4680, %v4831, %v4867
  %v4876 = vld [vmem:[%s9] sm:$0xff]
  %v4877 = vld [vmem:[%s9 + $0x8] sm:$0xff]
  %v4878 = vld [vmem:[%s9 + $0x10] sm:$0xff]
  %v4879 = vld [vmem:[%s9 + $0x18] sm:$0xff]
  %v4880 = vld [vmem:[%s9 + $0x20] sm:$0xff]
  %v4881 = vld [vmem:[%s9 + $0x28] sm:$0xff]
  %v4882 = vld [vmem:[%s9 + $0x30] sm:$0xff]
  %v4883 = vld [vmem:[%s9 + $0x38] sm:$0xff]
  %v4884 = vld [vmem:[%s9 + $0x40] sm:$0xff]
  %v4885 = vld [vmem:[%s9 + $0x48] sm:$0xff]
  %v4886 = vld [vmem:[%s9 + $0x50] sm:$0xff]
  %v4887 = vld [vmem:[%s9 + $0x58] sm:$0xff]
  %v4888 = vld [vmem:[%s9 + $0x60] sm:$0xff]
  %v4889 = vld [vmem:[%s9 + $0x68] sm:$0xff]
  %v4890 = vld [vmem:[%s9 + $0x70] sm:$0xff]
  %v4891 = vld [vmem:[%s9 + $0x78] sm:$0xff]
  %v4892 = vld [vmem:[%s9 + $0x80] sm:$0xff]
  %v4893 = vld [vmem:[%s9 + $0x88] sm:$0xff]
  %v4894 = vld [vmem:[%s9 + $0x90] sm:$0xff]
  %v4895 = vld [vmem:[%s9 + $0x98] sm:$0xff]
  %v4896 = vld [vmem:[%s9 + $0xa0] sm:$0xff]
  %v4897 = vld [vmem:[%s9 + $0xa8] sm:$0xff]
  %v4898 = vld [vmem:[%s9 + $0xb0] sm:$0xff]
  %v4899 = vld [vmem:[%s9 + $0xb8] sm:$0xff]
  %v4900 = vlaneseq
  %v4901 = vshrl.u32 %v4900, 7
  %v4902 = vsub.s32 5, %v4901
  %v4903 = vrot.slane %v4358, %v4902
  %v4905 = vsel %vm4680, %v4847, 0
  %v4908 = vsel %vm4680, %v4848, 0
  %v4911 = vsel %vm4680, %v4849, 0
  %v4914 = vsel %vm4680, %v4850, 0
  %4916 = vmatprep.subr.mxu0 0.0
  %4917 = vmatpush1.msra.mxu0 %v4876
  %4918 = vmatprep.subr.mxu0 0.0
  %4919 = vmatpush1.msra.mxu0 %v4877
  %4920 = vmatprep.subr.mxu0 0.0
  %4921 = vmatpush1.msra.mxu0 %v4878
  %4922 = vmatprep.subr.mxu0 0.0
  %4923 = vmatpush1.msra.mxu0 %v4879
  %4924 = vmatprep.subr.mxu0 0.0
  %4925 = vmatpush1.msra.mxu0 %v4880
  %4926 = vmatprep.subr.mxu0 0.0
  %4927 = vmatpush1.msra.mxu0 %v4881
  %4928 = vmatprep.subr.mxu0 0.0
  %4929 = vmatpush1.msra.mxu0 %v4882
  %4930 = vmatprep.subr.mxu0 0.0
  %4931 = vmatpush1.msra.mxu0 %v4883
  %4932 = vmatprep.subr.mxu0 0.0
  %4933 = vmatpush1.msra.mxu0 %v4884
  %4934 = vmatprep.subr.mxu0 0.0
  %4935 = vmatpush1.msra.mxu0 %v4885
  %4936 = vmatprep.subr.mxu0 0.0
  %4937 = vmatpush1.msra.mxu0 %v4886
  %4938 = vmatprep.subr.mxu0 0.0
  %4939 = vmatpush1.msra.mxu0 %v4887
  %4940 = vmatprep.subr.mxu0 0.0
  %4941 = vmatpush1.msra.mxu0 %v4888
  %4942 = vmatprep.subr.mxu0 0.0
  %4943 = vmatpush1.msra.mxu0 %v4889
  %4944 = vmatprep.subr.mxu0 0.0
  %4945 = vmatpush1.msra.mxu0 %v4890
  %4946 = vmatprep.subr.mxu0 0.0
  %4947 = vmatpush1.msra.mxu0 %v4891
  %4948 = vmatprep.subr.mxu0 0.0
  %4949 = vmatpush1.msra.mxu0 %v4892
  %4950 = vmatprep.subr.mxu0 0.0
  %4951 = vmatpush1.msra.mxu0 %v4893
  %4952 = vmatprep.subr.mxu0 0.0
  %4953 = vmatpush1.msra.mxu0 %v4894
  %4954 = vmatprep.subr.mxu0 0.0
  %4955 = vmatpush1.msra.mxu0 %v4895
  %4956 = vmatprep.subr.mxu0 0.0
  %4957 = vmatpush1.msra.mxu0 %v4896
  %4958 = vmatprep.subr.mxu0 0.0
  %4959 = vmatpush1.msra.mxu0 %v4897
  %4960 = vmatprep.subr.mxu0 0.0
  %4961 = vmatpush1.msra.mxu0 %v4898
  %4962 = vmatprep.subr.mxu0 0.0
  %4963 = vmatpush1.msra.mxu0 %v4899
  %4964 = vmatprep.subr.mxu0 0.0
  %4965 = vmatpush1.msra.mxu0 0.0
  %4966 = vmatprep.subr.mxu0 0.0
  %4967 = vmatpush1.msra.mxu0 0.0
  %4968 = vmatprep.subr.mxu0 0.0
  %4969 = vmatpush1.msra.mxu0 0.0
  %4970 = vmatprep.subr.mxu0 0.0
  %4971 = vmatpush1.msra.mxu0 0.0
  %4972 = vmatprep.subr.mxu0 0.0
  %4973 = vmatpush1.msra.mxu0 0.0
  %4974 = vmatprep.subr.mxu0 0.0
  %4975 = vmatpush1.msra.mxu0 0.0
  %4976 = vmatprep.subr.mxu0 0.0
  %4977 = vmatpush1.msra.mxu0 0.0
  %4978 = vmatprep.subr.mxu0 0.0
  %4979 = vmatpush1.msra.mxu0 0.0
  %4980 = vmatprep.mubr.f32.mxu0 %v4905
  %4981 = vmatmul.mubr.f32.gmra.mrb[0].mxu0 %v4872
  %v4982 = vpop.f32.mrb[0].mxu0
  %v4983 = vadd.f32 %v4903, %v4982
  %v4984 = vpop.f32.mrb[0].mxu0
  %4985 = vmatprep.mubr.f32.mxu0 %v4908
  %4986 = vmatmul.mubr.f32.gmra.mrb[0].mxu0 %v4873
  %v4987 = vpop.f32.mrb[0].mxu0
  %v4988 = vadd.f32 %v4903, %v4987
  %v4989 = vpop.f32.mrb[0].mxu0
  %4990 = vmatprep.mubr.f32.mxu0 %v4911
  %4991 = vmatmul.mubr.f32.gmra.mrb[0].mxu0 %v4874
  %v4992 = vpop.f32.mrb[0].mxu0
  %v4993 = vadd.f32 %v4903, %v4992
  %v4994 = vpop.f32.mrb[0].mxu0
  %4995 = vmatprep.mubr.f32.mxu0 %v4914
  %4996 = vmatmul.mubr.f32.gmra.mrb[0].mxu0 %v4875
  %v4997 = vpop.f32.mrb[0].mxu0
  %v4998 = vadd.f32 %v4903, %v4997
  %v4999 = vpop.f32.mrb[0].mxu0
  %5000 = vdwg.mxu0
  %v5001 = vadd.f32 %v4983, %v4551
  %v5002 = vadd.f32 %v4988, %v4552
  %v5003 = vadd.f32 %v4993, %v4553
  %v5004 = vadd.f32 %v4998, %v4554
  %v5005 = vmul.f32 %v5001, %v246
  %v5006 = vmul.f32 %v5002, %v251
  %v5007 = vmul.f32 %v5003, %v4475
  %v5008 = vmul.f32 %v5004, %v4480
  %v5009 = vsel %vm130, %v5005, 0.0
  %5010 = vadd.xlane.f32.xlu0 %v5009
  %v5011 = vpop.xlane.xlu0 %5010
  %v5012 = vsel %vm130, %v5006, 0.0
  %5013 = vadd.xlane.f32.xlu0 %v5012
  %v5014 = vpop.xlane.xlu0 %5013
  %v5015 = vsel %vm130, %v5007, 0.0
  %5016 = vadd.xlane.f32.xlu0 %v5015
  %v5017 = vpop.xlane.xlu0 %5016
  %v5018 = vsel %vm130, %v5008, 0.0
  %5019 = vadd.xlane.f32.xlu0 %v5018
  %v5020 = vpop.xlane.xlu0 %5019
  %v5021 = vmul.f32 %v5011, %v4498
  %v5022 = vmul.f32 %v5014, %v4498
  %v5023 = vmul.f32 %v5017, %v4498
  %v5024 = vmul.f32 %v5020, %v4498
  %v5025 = vsub.f32 %v5005, %v5021
  %v5026 = vsub.f32 %v5006, %v5022
  %v5027 = vsub.f32 %v5007, %v5023
  %v5028 = vsub.f32 %v5008, %v5024
  %v5029 = vmul.f32 %v5025, %v5025
  %v5030 = vmul.f32 %v5026, %v5026
  %v5031 = vmul.f32 %v5027, %v5027
  %v5032 = vmul.f32 %v5028, %v5028
  %v5033 = vsel %vm130, %v5029, 0.0
  %5034 = vadd.xlane.f32.xlu0 %v5033
  %v5035 = vpop.xlane.xlu0 %5034
  %v5036 = vsel %vm130, %v5030, 0.0
  %5037 = vadd.xlane.f32.xlu0 %v5036
  %v5038 = vpop.xlane.xlu0 %5037
  %v5039 = vsel %vm130, %v5031, 0.0
  %5040 = vadd.xlane.f32.xlu0 %v5039
  %v5041 = vpop.xlane.xlu0 %5040
  %v5042 = vsel %vm130, %v5032, 0.0
  %5043 = vadd.xlane.f32.xlu0 %v5042
  %v5044 = vpop.xlane.xlu0 %5043
  %v5045 = vmul.f32 %v5035, %v4498
  %v5046 = vmul.f32 %v5038, %v4498
  %v5047 = vmul.f32 %v5041, %v4498
  %v5048 = vmul.f32 %v5044, %v4498
  %v5049 = vadd.f32 %v5045, 1e-05
  %v5050 = vadd.f32 %v5046, 1e-05
  %v5051 = vadd.f32 %v5047, 1e-05
  %v5052 = vadd.f32 %v5048, 1e-05
  %v5053 = vrsqrt.pop %v5049
  %v5054 = vrsqrt.pop %v5050
  %v5055 = vrsqrt.pop %v5051
  %v5056 = vrsqrt.pop %v5052
  %v5057 = vmul.f32 %v5025, %v5053
  %v5058 = vmul.f32 %v5026, %v5054
  %v5059 = vmul.f32 %v5027, %v5055
  %v5060 = vmul.f32 %v5028, %v5056
  %v5061 = vlaneseq
  %v5062 = vshrl.u32 %v5061, 7
  %v5063 = vsub.s32 3, %v5062
  %v5064 = vrot.slane %v4358, %v5063
  %v5065 = vmul.f32 %v5057, %v5064
  %v5066 = vmul.f32 %v5058, %v5064
  %v5067 = vmul.f32 %v5059, %v5064
  %v5068 = vmul.f32 %v5060, %v5064
  %v5069 = vlaneseq
  %v5070 = vshrl.u32 %v5069, 7
  %v5071 = vsub.s32 4, %v5070
  %v5072 = vrot.slane %v4358, %v5071
  %v5073 = vadd.f32 %v5065, %v5072
  %v5074 = vadd.f32 %v5066, %v5072
  %v5075 = vadd.f32 %v5067, %v5072
  %v5076 = vadd.f32 %v5068, %v5072
  %5077 = vxpose.xlu0.b32.start [1/16] %v5073, 128
  %5078 = vxpose.xlu0.b32.cont [2/16] %v5074, 128
  %5079 = vxpose.xlu0.b32.cont [3/16] 0.0, 128
  %5080 = vxpose.xlu0.b32.cont [4/16] 0.0, 128
  %5081 = vxpose.xlu0.b32.cont [5/16] 0.0, 128
  %5082 = vxpose.xlu0.b32.cont [6/16] 0.0, 128
  %5083 = vxpose.xlu0.b32.cont [7/16] 0.0, 128
  %5084 = vxpose.xlu0.b32.cont [8/16] 0.0, 128
  %5085 = vxpose.xlu0.b32.cont [9/16] 0.0, 128
  %5086 = vxpose.xlu0.b32.cont [10/16] 0.0, 128
  %5087 = vxpose.xlu0.b32.cont [11/16] 0.0, 128
  %5088 = vxpose.xlu0.b32.cont [12/16] 0.0, 128
  %5089 = vxpose.xlu0.b32.cont [13/16] 0.0, 128
  %5090 = vxpose.xlu0.b32.cont [14/16] 0.0, 128
  %5091 = vxpose.xlu0.b32.cont [15/16] 0.0, 128
  %5092 = vxpose.xlu0.b32.end [16/16] 0.0, 128
  %v5093 = vpop.trf.xlu0
  %v5094 = vpop.trf.xlu0
  %v5095 = vpop.trf.xlu0
  %v5096 = vpop.trf.xlu0
  %v5097 = vpop.trf.xlu0
  %v5098 = vpop.trf.xlu0
  %v5099 = vpop.trf.xlu0
  %v5100 = vpop.trf.xlu0
  %v5101 = vpop.trf.xlu0
  %v5102 = vpop.trf.xlu0
  %v5103 = vpop.trf.xlu0
  %v5104 = vpop.trf.xlu0
  %v5105 = vpop.trf.xlu0
  %v5106 = vpop.trf.xlu0
  %v5107 = vpop.trf.xlu0
  %v5108 = vpop.trf.xlu0
  %5109 = vst.msk [vmem:[%s12] sm:$0xff] %vm560, %v5093
  %5110 = vst.msk [vmem:[%s12 + $0x8] sm:$0xff] %vm560, %v5094
  %5111 = vst.msk [vmem:[%s12 + $0x10] sm:$0xff] %vm560, %v5095
  %5112 = vst.msk [vmem:[%s12 + $0x18] sm:$0xff] %vm560, %v5096
  %5113 = vxpose.xlu0.b32.start [1/16] %v5075, 128
  %5114 = vxpose.xlu0.b32.cont [2/16] %v5076, 128
  %5115 = vxpose.xlu0.b32.cont [3/16] 0.0, 128
  %5116 = vxpose.xlu0.b32.cont [4/16] 0.0, 128
  %5117 = vxpose.xlu0.b32.cont [5/16] 0.0, 128
  %5118 = vxpose.xlu0.b32.cont [6/16] 0.0, 128
  %5119 = vxpose.xlu0.b32.cont [7/16] 0.0, 128
  %5120 = vxpose.xlu0.b32.cont [8/16] 0.0, 128
  %5121 = vxpose.xlu0.b32.cont [9/16] 0.0, 128
  %5122 = vxpose.xlu0.b32.cont [10/16] 0.0, 128
  %5123 = vxpose.xlu0.b32.cont [11/16] 0.0, 128
  %5124 = vxpose.xlu0.b32.cont [12/16] 0.0, 128
  %5125 = vxpose.xlu0.b32.cont [13/16] 0.0, 128
  %5126 = vxpose.xlu0.b32.cont [14/16] 0.0, 128
  %5127 = vxpose.xlu0.b32.cont [15/16] 0.0, 128
  %5128 = vxpose.xlu0.b32.end [16/16] 0.0, 128
  %v5129 = vpop.trf.xlu0
  %v5130 = vpop.trf.xlu0
  %v5131 = vpop.trf.xlu0
  %v5132 = vpop.trf.xlu0
  %v5133 = vpop.trf.xlu0
  %v5134 = vpop.trf.xlu0
  %v5135 = vpop.trf.xlu0
  %v5136 = vpop.trf.xlu0
  %v5137 = vpop.trf.xlu0
  %v5138 = vpop.trf.xlu0
  %v5139 = vpop.trf.xlu0
  %v5140 = vpop.trf.xlu0
  %v5141 = vpop.trf.xlu0
  %v5142 = vpop.trf.xlu0
  %v5143 = vpop.trf.xlu0
  %v5144 = vpop.trf.xlu0
  %s5145 = scalar_lea.vmem %s12, 32
  %5146 = vst.msk [vmem:[%s5145] sm:$0xff] %vm560, %v5129
  %5147 = vst.msk [vmem:[%s5145 + $0x8] sm:$0xff] %vm560, %v5130
  %5148 = vst.msk [vmem:[%s5145 + $0x10] sm:$0xff] %vm560, %v5131
  %5149 = vst.msk [vmem:[%s5145 + $0x18] sm:$0xff] %vm560, %v5132
  // Predicated region
  $region50: #{tpu_custom_call.1} parent=0 // pred_check
    _
  $region51: #{tpu_custom_call.1} parent=0 // pred_check_branch
    %5151 = sbr.rel (0) target = $region53
  $region52: #{tpu_custom_call.1} parent=0 // pred_region
    _
  $region53: #{tpu_custom_call.1} parent=0 // pred_fallthru
    _
  // Predicated region
  $region54: #{tpu_custom_call.1} parent=0 // pred_check
    _
  $region55: #{tpu_custom_call.1} parent=0 // pred_check_branch
    %5153 = sbr.rel (0) target = $region57
  $region56: #{tpu_custom_call.1} parent=0 // pred_region
    _
  $region57: #{tpu_custom_call.1} parent=0 // pred_fallthru
    _

</llo_original>
